<compile_context>
chip_gen: v5e
topology: v5e:2x2
jax: 0.10.0
libtpu: 0.0.40
codegen_flags: <defaults>
</compile_context>

<pallas_src>
import collections
import functools
import math

import numpy as np
import jax
import jax.numpy as jnp
from jax.experimental import pallas as pl
from jax.experimental.pallas import tpu as pltpu

BN_EPS = 1e-5
LN_EPS = 1e-5
N_STAGES = 6
CHANNELS = [1, 4, 8, 16, 32, 64, 128]

Stage = collections.namedtuple("Stage", ["cin", "cout", "l_in", "l_out", "tl", "ntiles", "kw"])


def _round_up(x, m):
    return ((x + m - 1) // m) * m


# ----------------------------------------------------------------------------
# Static per-stage geometry for the block-banded conv lowering
# ----------------------------------------------------------------------------
def _stage_geometry(input_size):
    assert input_size % 64 == 0, "input_size must be a multiple of 64"
    geo, l_in = [], input_size
    for s in range(N_STAGES):
        cin, cout = CHANNELS[s], CHANNELS[s + 1]
        l_out = l_in // 2
        tl = 128 // cout                       # output positions per tile  ->  N = tl*cout = 128
        assert tl * cout == 128 and l_out % tl == 0
        kw = (2 * tl + 3) * cin                # input window lanes per tile (stride 2, k = 5)
        geo.append(Stage(cin, cout, l_in, l_out, tl, l_out // tl, kw))
        l_in = l_out
    return tuple(geo)


# ----------------------------------------------------------------------------
# Pallas kernel
# ----------------------------------------------------------------------------
def _make_kernel(geo):
    n_stages = len(geo)

    def kernel(*refs):
        x_ref = refs[0]
        w_refs = refs[1:1 + n_stages]                       # banded conv(+BN) weights (bf16)
        bv_refs = refs[1 + n_stages:1 + 2 * n_stages]        # folded biases, position-major (f32)
        lw_refs = refs[1 + 2 * n_stages:1 + 3 * n_stages]    # LayerNorm weight, position-major (f32)
        lb_refs = refs[1 + 3 * n_stages:1 + 4 * n_stages]    # LayerNorm bias,   position-major (f32)
        wf_ref = refs[1 + 4 * n_stages]                      # fused pool+linear weight (bf16)
        bf_ref = refs[2 + 4 * n_stages]                      # linear bias (f32, lane-padded)
        o_ref = refs[3 + 4 * n_stages]

        h = x_ref[...]                                       # (block_n, input_size) bf16
        bn = h.shape[0]
        for s in range(n_stages):
            g = geo[s]
            # Zero-pad 2 positions on each side (conv padding=2) along the lane axis.
            zpad = jnp.zeros((bn, 2 * g.cin), jnp.bfloat16)
            hpad = jnp.concatenate([zpad, h, zpad], axis=-1)
            wb = w_refs[s][...]                              # (kw, 128) bf16 banded block
            tiles = []
            for t in range(g.ntiles):
                start = 2 * t * g.tl * g.cin
                win = hpad[:, start:start + g.kw]            # contiguous lane window
                tiles.append(jnp.dot(win, wb, preferred_element_type=jnp.float32))
            acc = tiles[0] if g.ntiles == 1 else jnp.concatenate(tiles, axis=-1)
            acc = acc + bv_refs[s][...]
            # ELU (alpha=1), f32 elementwise math (exp(min(x,0))-1 always lowers on Mosaic).
            acc = jnp.where(acc > 0, acc, jnp.exp(jnp.minimum(acc, 0.0)) - 1.0)
            # LayerNorm over the full (L, C) slab; one-pass mean / E[x^2] reductions.
            mu = jnp.mean(acc, axis=-1, keepdims=True)
            ex2 = jnp.mean(acc * acc, axis=-1, keepdims=True)
            var = jnp.maximum(ex2 - mu * mu, 0.0)
            acc = (acc - mu) * jax.lax.rsqrt(var + LN_EPS)
            acc = acc * lw_refs[s][...] + lb_refs[s][...]
            h = acc.astype(jnp.bfloat16)                     # next matmul operand in bf16
        # AdaptiveAvgPool1d(1) + Flatten + Linear fused into one matmul.
        out = jnp.dot(h, wf_ref[...], preferred_element_type=jnp.float32) + bf_ref[...]
        o_ref[...] = out.astype(o_ref.dtype)

    return kernel


# ----------------------------------------------------------------------------
# Parameter initialization (deterministic, synthetic)
# ----------------------------------------------------------------------------
def init_params(key, input_size, output_size):
    params = {"stages": []}
    keys = jax.random.split(key, N_STAGES * 8 + 2)
    ki = 0
    for s in range(N_STAGES):
        cin, cout = CHANNELS[s], CHANNELS[s + 1]
        lout = input_size // (2 ** (s + 1))
        fan_in = cin * 5
        w = jax.random.normal(keys[ki], (cout, cin, 5), jnp.float32) / math.sqrt(fan_in); ki += 1
        b = 0.1 * jax.random.normal(keys[ki], (cout,), jnp.float32); ki += 1
        gamma = 1.0 + 0.1 * jax.random.normal(keys[ki], (cout,), jnp.float32); ki += 1
        beta = 0.1 * jax.random.normal(keys[ki], (cout,), jnp.float32); ki += 1
        rmean = 0.1 * jax.random.normal(keys[ki], (cout,), jnp.float32); ki += 1
        rvar = jax.random.uniform(keys[ki], (cout,), jnp.float32, 0.5, 1.5); ki += 1
        lnw = 1.0 + 0.1 * jax.random.normal(keys[ki], (cout, lout), jnp.float32); ki += 1
        lnb = 0.1 * jax.random.normal(keys[ki], (cout, lout), jnp.float32); ki += 1
        params["stages"].append(dict(w=w, b=b, gamma=gamma, beta=beta,
                                     rmean=rmean, rvar=rvar, lnw=lnw, lnb=lnb))
    params["lin_w"] = jax.random.normal(keys[ki], (output_size, 128), jnp.float32) / math.sqrt(128.0); ki += 1
    params["lin_b"] = 0.1 * jax.random.normal(keys[ki], (output_size,), jnp.float32)
    return params


# ----------------------------------------------------------------------------
# Glue: fold BN, build banded conv blocks / fused head (cached across calls)
# ----------------------------------------------------------------------------
def _fold_bn(p):
    w = np.asarray(p["w"], np.float64)
    b = np.asarray(p["b"], np.float64)
    scale = np.asarray(p["gamma"], np.float64) / np.sqrt(np.asarray(p["rvar"], np.float64) + BN_EPS)
    shift = np.asarray(p["beta"], np.float64) - np.asarray(p["rmean"], np.float64) * scale
    return w * scale[:, None, None], b * scale + shift


def _banded_weight(wf, tl):
    # Wband[(2*lo + k)*cin + ci, lo*cout + co] = wf[co, ci, k]   (stride=2, pad=2, k=5)
    cout, cin, k = wf.shape
    m = np.zeros(((2 * tl + 3) * cin, tl * cout), np.float64)
    for lo in range(tl):
        for kk in range(k):
            p = 2 * lo + kk
            m[p * cin:(p + 1) * cin, lo * cout:(lo + 1) * cout] += wf[:, :, kk].T
    return m


def prepare_kernel_params(params, input_size, output_size):
    cache = params.setdefault("_prepared", {})
    ck = (input_size, output_size)
    if ck in cache:
        return cache[ck]
    geo = _stage_geometry(input_size)
    Ws, bvs, lws, lbs = [], [], [], []
    for s, g in enumerate(geo):
        p = params["stages"][s]
        wf, bf = _fold_bn(p)
        Ws.append(jnp.asarray(_banded_weight(wf, g.tl), jnp.bfloat16))                # (kw, 128)
        bvs.append(jnp.asarray(np.tile(bf, g.l_out)[None, :], jnp.float32))           # position-major
        lws.append(jnp.asarray(np.asarray(p["lnw"], np.float64).T.reshape(1, -1), jnp.float32))
        lbs.append(jnp.asarray(np.asarray(p["lnb"], np.float64).T.reshape(1, -1), jnp.float32))
    l_fin = input_size // 64
    out_pad = _round_up(output_size, 128)                    # lane-dense, unmasked output stores
    lin_w = np.asarray(params["lin_w"], np.float64)          # (output_size, 128)
    w_head = np.zeros((128 * l_fin, out_pad), np.float64)    # pool(mean over l) fused into Linear
    w_head[:, :output_size] = np.tile(lin_w.T / l_fin, (l_fin, 1))
    b_head = np.zeros((1, out_pad), np.float64)
    b_head[0, :output_size] = np.asarray(params["lin_b"], np.float64)
    result = (geo, tuple(Ws), tuple(bvs), tuple(lws), tuple(lbs),
              jnp.asarray(w_head, jnp.bfloat16), jnp.asarray(b_head, jnp.float32), out_pad)
    cache[ck] = result
    return result


# ----------------------------------------------------------------------------
# Hardware defaults
# ----------------------------------------------------------------------------
def _device_kind():
    try:
        return jax.devices()[0].device_kind.lower()
    except Exception:
        return ""


def _default_block_n():
    kind = _device_kind()
    # v6e / v7x: 256-wide MXU M dim; v5e (128-wide) gains nothing from M > 128.
    return 256 if ("v6" in kind or "v7" in kind) else 128


def _vmem_capacity_bytes():
    try:
        return int(pltpu.get_tpu_info().vmem_capacity_bytes)
    except Exception:
        return (64 << 20) if "v7" in _device_kind() else (128 << 20)


# ----------------------------------------------------------------------------
# pallas_call builder (cached -> compiled once per static configuration)
# ----------------------------------------------------------------------------
@functools.lru_cache(maxsize=None)
def _build_call(geo, input_size, out_pad, block_n, n_total, param_meta):
    param_bytes = sum(int(np.prod(shape)) * isz for shape, isz in param_meta)

    # Cost estimate with the banded matmul FLOPs actually issued.
    flops_row, trans_row = 0, 0
    for g in geo:
        flops_row += 2 * g.kw * 128 * g.ntiles
        trans_row += g.l_out * g.cout
    flops_row += 2 * (128 * (input_size // 64)) * out_pad
    cost = pl.CostEstimate(
        flops=flops_row * n_total,
        transcendentals=trans_row * n_total,
        bytes_accessed=n_total * input_size * 2 + n_total * out_pad * 4 + param_bytes,
    )

    # VMEM budget: double-buffered x/out blocks + (small) resident params + f32 slab slack,
    # capped at ~85% of physical VMEM (64 MiB/TC on v7x, 128 MiB on v5e/v6e).
    act_lanes = 2 * input_size
    need = (2 * param_bytes
            + 2 * block_n * input_size * 2
            + 2 * block_n * out_pad * 4
            + 24 * block_n * act_lanes * 4
            + (8 << 20))
    vmem_limit = int(min(max(need, 32 << 20), int(0.85 * _vmem_capacity_bytes())))

    in_specs = [pl.BlockSpec((block_n, input_size), lambda i: (i, 0))]
    in_specs += [pl.BlockSpec(shape, lambda i: (0, 0)) for shape, _ in param_meta]

    call = pl.pallas_call(
        _make_kernel(geo),
        out_shape=jax.ShapeDtypeStruct((n_total, out_pad), jnp.float32),
        grid_spec=pltpu.PrefetchScalarGridSpec(
            num_scalar_prefetch=0,
            grid=(n_total // block_n,),
            in_specs=in_specs,
            out_specs=pl.BlockSpec((block_n, out_pad), lambda i: (i, 0)),
        ),
        compiler_params=pltpu.CompilerParams(
            dimension_semantics=("parallel",),
            vmem_limit_bytes=vmem_limit,
        ),
        cost_estimate=cost,
    )
    return jax.jit(call)


# ----------------------------------------------------------------------------
# Wrapper
# ----------------------------------------------------------------------------
def tokenizer_forward(x, params, input_size, output_size, block_n=None):
    assert x.ndim == 3
    B, C, T = x.shape
    assert T % input_size == 0 and input_size % 64 == 0
    S = T // input_size
    N = B * C * S
    segs = jnp.asarray(x, jnp.bfloat16).reshape(N, input_size)

    if block_n is None:
        block_n = _default_block_n()
    # Small-N clamp: never pad past the next multiple of 128.
    block_n = min(block_n, max(128, _round_up(N, 128)))
    if block_n > 128 and pl.cdiv(N, block_n) == 1 and pl.cdiv(N, 128) >= 2:
        # Prefer >=2 grid steps (keeps both v7x TensorCores busy) when N allows it.
        block_n = 128
    n_pad = (-N) % block_n
    if n_pad:
        # Edge-replicate real rows (zero rows would hit LayerNorm with var == 0).
        segs = jnp.pad(segs, ((0, n_pad), (0, 0)), mode="edge")
    n_total = N + n_pad

    geo, Ws, bvs, lws, lbs, wfin, bfin, out_pad = prepare_kernel_params(params, input_size, output_size)
    param_arrays = list(Ws) + list(bvs) + list(lws) + list(lbs) + [wfin, bfin]
    param_meta = tuple((tuple(map(int, a.shape)), int(a.dtype.itemsize)) for a in param_arrays)

    call = _build_call(geo, input_size, out_pad, block_n, n_total, param_meta)
    out = call(segs, *param_arrays)
    return out[:N, :output_size].reshape(B, C, S, output_size)


# ----------------------------------------------------------------------------
# Pure numpy (float64) reference of the PyTorch forward (eval-mode BN)
# ----------------------------------------------------------------------------
def reference_forward(x, params, input_size, output_size):
    x = np.asarray(x, np.float64)
    B, C, T = x.shape
    S = T // input_size
    h = x.reshape(B * C * S, 1, input_size)
    for p in params["stages"]:
        w = np.asarray(p["w"], np.float64)
        b = np.asarray(p["b"], np.float64)
        n, cin, lin = h.shape
        cout = w.shape[0]
        lout = lin // 2
        hp = np.pad(h, ((0, 0), (0, 0), (2, 2)))
        y = np.zeros((n, cout, lout))
        for l in range(lout):
            win = hp[:, :, 2 * l:2 * l + 5]                 # (n, cin, 5)
            y[:, :, l] = np.einsum("nik,oik->no", win, w) + b
        scale = np.asarray(p["gamma"], np.float64) / np.sqrt(np.asarray(p["rvar"], np.float64) + BN_EPS)
        shift = np.asarray(p["beta"], np.float64) - np.asarray(p["rmean"], np.float64) * scale
        y = y * scale[None, :, None] + shift[None, :, None]
        y = np.where(y > 0, y, np.expm1(y))
        mu = y.reshape(n, -1).mean(-1)[:, None, None]
        var = ((y - mu) ** 2).reshape(n, -1).mean(-1)[:, None, None]
        y = (y - mu) / np.sqrt(var + LN_EPS)
        y = y * np.asarray(p["lnw"], np.float64)[None] + np.asarray(p["lnb"], np.float64)[None]
        h = y
    pooled = h.mean(-1)                                      # (n, 128)
    out = pooled @ np.asarray(params["lin_w"], np.float64).T + np.asarray(params["lin_b"], np.float64)
    return out.reshape(B, C, S, output_size)


if __name__ == "__main__":
    input_size, output_size = 128, 32     # small, 64-divisible version of the defaults (640, 128)
    B, C, S = 2, 4, 2
    T = S * input_size                     # x: (B, C, T) = (2, 4, 256)

    key = jax.random.PRNGKey(0)
    kx, kp = jax.random.split(key)
    x = jax.random.normal(kx, (B, C, T), jnp.float32)
    params = init_params(kp, input_size, output_size)

    out = jax.block_until_ready(tokenizer_forward(x, params, input_size, output_size))

    assert out.shape == (B, C, S, output_size)
    ref = reference_forward(np.asarray(x), params, input_size, output_size)
    err = float(np.max(np.abs(np.asarray(out, np.float64) - ref)))
    # Tolerance accounts for bf16 MXU operands across 7 chained matmuls (f64 reference).
    assert np.isfinite(err) and err < 2e-1, f"max abs err {err}"
    print("KERNEL_OK")
</pallas_src>

<mosaic_0001>
module attributes {stable_mosaic.version = 11 : i64} {
  func.func @kernel(%arg0: i32, %arg1: memref<128x128xbf16, #tpu.memory_space<vmem>>, %arg2: memref<67x128xbf16, #tpu.memory_space<vmem>>, %arg3: memref<140x128xbf16, #tpu.memory_space<vmem>>, %arg4: memref<152x128xbf16, #tpu.memory_space<vmem>>, %arg5: memref<176x128xbf16, #tpu.memory_space<vmem>>, %arg6: memref<224x128xbf16, #tpu.memory_space<vmem>>, %arg7: memref<320x128xbf16, #tpu.memory_space<vmem>>, %arg8: memref<1x256xf32, #tpu.memory_space<vmem>>, %arg9: memref<1x256xf32, #tpu.memory_space<vmem>>, %arg10: memref<1x256xf32, #tpu.memory_space<vmem>>, %arg11: memref<1x256xf32, #tpu.memory_space<vmem>>, %arg12: memref<1x256xf32, #tpu.memory_space<vmem>>, %arg13: memref<1x256xf32, #tpu.memory_space<vmem>>, %arg14: memref<1x256xf32, #tpu.memory_space<vmem>>, %arg15: memref<1x256xf32, #tpu.memory_space<vmem>>, %arg16: memref<1x256xf32, #tpu.memory_space<vmem>>, %arg17: memref<1x256xf32, #tpu.memory_space<vmem>>, %arg18: memref<1x256xf32, #tpu.memory_space<vmem>>, %arg19: memref<1x256xf32, #tpu.memory_space<vmem>>, %arg20: memref<1x256xf32, #tpu.memory_space<vmem>>, %arg21: memref<1x256xf32, #tpu.memory_space<vmem>>, %arg22: memref<1x256xf32, #tpu.memory_space<vmem>>, %arg23: memref<1x256xf32, #tpu.memory_space<vmem>>, %arg24: memref<1x256xf32, #tpu.memory_space<vmem>>, %arg25: memref<1x256xf32, #tpu.memory_space<vmem>>, %arg26: memref<256x128xbf16, #tpu.memory_space<vmem>>, %arg27: memref<1x128xf32, #tpu.memory_space<vmem>>, %arg28: memref<128x128xf32, #tpu.memory_space<vmem>>) attributes {dimension_semantics = [#tpu.dimension_semantics<parallel>], iteration_bounds = array<i64: 1>, scalar_prefetch = 0 : i64, scratch_operands = 0 : i64, tpu.core_type = #tpu.core_type<tc>, window_params = [{transform_indices = @transform_0, window_bounds = array<i64: 128, 128>}, {pipeline_mode = #tpu.pipeline_mode<synchronous>, transform_indices = @transform_1, window_bounds = array<i64: 67, 128>}, {pipeline_mode = #tpu.pipeline_mode<synchronous>, transform_indices = @transform_2, window_bounds = array<i64: 140, 128>}, {pipeline_mode = #tpu.pipeline_mode<synchronous>, transform_indices = @transform_3, window_bounds = array<i64: 152, 128>}, {pipeline_mode = #tpu.pipeline_mode<synchronous>, transform_indices = @transform_4, window_bounds = array<i64: 176, 128>}, {pipeline_mode = #tpu.pipeline_mode<synchronous>, transform_indices = @transform_5, window_bounds = array<i64: 224, 128>}, {pipeline_mode = #tpu.pipeline_mode<synchronous>, transform_indices = @transform_6, window_bounds = array<i64: 320, 128>}, {pipeline_mode = #tpu.pipeline_mode<synchronous>, transform_indices = @transform_7, window_bounds = array<i64: 1, 256>}, {pipeline_mode = #tpu.pipeline_mode<synchronous>, transform_indices = @transform_8, window_bounds = array<i64: 1, 256>}, {pipeline_mode = #tpu.pipeline_mode<synchronous>, transform_indices = @transform_9, window_bounds = array<i64: 1, 256>}, {pipeline_mode = #tpu.pipeline_mode<synchronous>, transform_indices = @transform_10, window_bounds = array<i64: 1, 256>}, {pipeline_mode = #tpu.pipeline_mode<synchronous>, transform_indices = @transform_11, window_bounds = array<i64: 1, 256>}, {pipeline_mode = #tpu.pipeline_mode<synchronous>, transform_indices = @transform_12, window_bounds = array<i64: 1, 256>}, {pipeline_mode = #tpu.pipeline_mode<synchronous>, transform_indices = @transform_13, window_bounds = array<i64: 1, 256>}, {pipeline_mode = #tpu.pipeline_mode<synchronous>, transform_indices = @transform_14, window_bounds = array<i64: 1, 256>}, {pipeline_mode = #tpu.pipeline_mode<synchronous>, transform_indices = @transform_15, window_bounds = array<i64: 1, 256>}, {pipeline_mode = #tpu.pipeline_mode<synchronous>, transform_indices = @transform_16, window_bounds = array<i64: 1, 256>}, {pipeline_mode = #tpu.pipeline_mode<synchronous>, transform_indices = @transform_17, window_bounds = array<i64: 1, 256>}, {pipeline_mode = #tpu.pipeline_mode<synchronous>, transform_indices = @transform_18, window_bounds = array<i64: 1, 256>}, {pipeline_mode = #tpu.pipeline_mode<synchronous>, transform_indices = @transform_19, window_bounds = array<i64: 1, 256>}, {pipeline_mode = #tpu.pipeline_mode<synchronous>, transform_indices = @transform_20, window_bounds = array<i64: 1, 256>}, {pipeline_mode = #tpu.pipeline_mode<synchronous>, transform_indices = @transform_21, window_bounds = array<i64: 1, 256>}, {pipeline_mode = #tpu.pipeline_mode<synchronous>, transform_indices = @transform_22, window_bounds = array<i64: 1, 256>}, {pipeline_mode = #tpu.pipeline_mode<synchronous>, transform_indices = @transform_23, window_bounds = array<i64: 1, 256>}, {pipeline_mode = #tpu.pipeline_mode<synchronous>, transform_indices = @transform_24, window_bounds = array<i64: 1, 256>}, {pipeline_mode = #tpu.pipeline_mode<synchronous>, transform_indices = @transform_25, window_bounds = array<i64: 256, 128>}, {pipeline_mode = #tpu.pipeline_mode<synchronous>, transform_indices = @transform_26, window_bounds = array<i64: 1, 128>}, {transform_indices = @transform_27, window_bounds = array<i64: 128, 128>}]} {
    %c0 = arith.constant 0 : index
    %c0_0 = arith.constant 0 : index
    %0 = vector.load %arg1[%c0, %c0_0] : memref<128x128xbf16, #tpu.memory_space<vmem>>, vector<128x128xbf16>
    %cst = arith.constant 0.000000e+00 : bf16
    %1 = vector.broadcast %cst : bf16 to vector<128x2xbf16>
    %2 = tpu.concatenate %1, %0, %1 in 1 : vector<128x2xbf16>, vector<128x128xbf16>, vector<128x2xbf16> -> vector<128x132xbf16>
    %c0_1 = arith.constant 0 : index
    %c0_2 = arith.constant 0 : index
    %3 = vector.load %arg2[%c0_1, %c0_2] : memref<67x128xbf16, #tpu.memory_space<vmem>>, vector<67x128xbf16>
    %4 = vector.extract_strided_slice %2 {offsets = [0, 0], sizes = [128, 67], strides = [1, 1]} : vector<128x132xbf16> to vector<128x67xbf16>
    %cst_3 = arith.constant dense<0.000000e+00> : vector<128x128xf32>
    %5 = tpu.matmul %4, %3, %cst_3 {dimension_numbers = #tpu.dot_dimension_numbers<[1], [0], [0], [1], [0, 0, 1, 1], [], []>} : vector<128x67xbf16>, vector<67x128xbf16>, vector<128x128xf32> -> vector<128x128xf32>
    %6 = vector.extract_strided_slice %2 {offsets = [0, 64], sizes = [128, 67], strides = [1, 1]} : vector<128x132xbf16> to vector<128x67xbf16>
    %cst_4 = arith.constant dense<0.000000e+00> : vector<128x128xf32>
    %7 = tpu.matmul %6, %3, %cst_4 {dimension_numbers = #tpu.dot_dimension_numbers<[1], [0], [0], [1], [0, 0, 1, 1], [], []>} : vector<128x67xbf16>, vector<67x128xbf16>, vector<128x128xf32> -> vector<128x128xf32>
    %8 = tpu.concatenate %5, %7 in 1 : vector<128x128xf32>, vector<128x128xf32> -> vector<128x256xf32>
    %c0_5 = arith.constant 0 : index
    %c0_6 = arith.constant 0 : index
    %9 = vector.load %arg8[%c0_5, %c0_6] : memref<1x256xf32, #tpu.memory_space<vmem>>, vector<1x256xf32>
    %10 = vector.broadcast %9 : vector<1x256xf32> to vector<128x256xf32>
    %11 = arith.addf %8, %10 : vector<128x256xf32>
    %cst_7 = arith.constant 0.000000e+00 : f32
    %12 = vector.broadcast %cst_7 : f32 to vector<128x256xf32>
    %13 = arith.cmpf ogt, %11, %12 : vector<128x256xf32>
    %cst_8 = arith.constant 0.000000e+00 : f32
    %14 = vector.broadcast %cst_8 : f32 to vector<128x256xf32>
    %15 = arith.minimumf %11, %14 : vector<128x256xf32>
    %16 = math.exp %15 : vector<128x256xf32>
    %cst_9 = arith.constant 1.000000e+00 : f32
    %17 = vector.broadcast %cst_9 : f32 to vector<128x256xf32>
    %18 = arith.subf %16, %17 : vector<128x256xf32>
    %19 = arith.select %13, %11, %18 : vector<128x256xi1>, vector<128x256xf32>
    %cst_10 = arith.constant dense<0.000000e+00> : vector<128xf32>
    %20 = vector.multi_reduction <add>, %19, %cst_10 [1] : vector<128x256xf32> to vector<128xf32>
    %21 = vector.shape_cast %20 : vector<128xf32> to vector<128x1xf32>
    %cst_11 = arith.constant 2.560000e+02 : f32
    %22 = vector.broadcast %cst_11 : f32 to vector<128x1xf32>
    %23 = arith.divf %21, %22 : vector<128x1xf32>
    %24 = arith.mulf %19, %19 : vector<128x256xf32>
    %cst_12 = arith.constant dense<0.000000e+00> : vector<128xf32>
    %25 = vector.multi_reduction <add>, %24, %cst_12 [1] : vector<128x256xf32> to vector<128xf32>
    %26 = vector.shape_cast %25 : vector<128xf32> to vector<128x1xf32>
    %cst_13 = arith.constant 2.560000e+02 : f32
    %27 = vector.broadcast %cst_13 : f32 to vector<128x1xf32>
    %28 = arith.divf %26, %27 : vector<128x1xf32>
    %29 = arith.mulf %23, %23 : vector<128x1xf32>
    %30 = arith.subf %28, %29 : vector<128x1xf32>
    %cst_14 = arith.constant 0.000000e+00 : f32
    %31 = vector.broadcast %cst_14 : f32 to vector<128x1xf32>
    %32 = arith.maximumf %30, %31 : vector<128x1xf32>
    %33 = vector.broadcast %23 : vector<128x1xf32> to vector<128x256xf32>
    %34 = arith.subf %19, %33 : vector<128x256xf32>
    %cst_15 = arith.constant 9.99999974E-6 : f32
    %35 = vector.broadcast %cst_15 : f32 to vector<128x1xf32>
    %36 = arith.addf %32, %35 : vector<128x1xf32>
    %37 = math.rsqrt %36 : vector<128x1xf32>
    %38 = vector.broadcast %37 : vector<128x1xf32> to vector<128x256xf32>
    %39 = arith.mulf %34, %38 : vector<128x256xf32>
    %c0_16 = arith.constant 0 : index
    %c0_17 = arith.constant 0 : index
    %40 = vector.load %arg14[%c0_16, %c0_17] : memref<1x256xf32, #tpu.memory_space<vmem>>, vector<1x256xf32>
    %41 = vector.broadcast %40 : vector<1x256xf32> to vector<128x256xf32>
    %42 = arith.mulf %39, %41 : vector<128x256xf32>
    %c0_18 = arith.constant 0 : index
    %c0_19 = arith.constant 0 : index
    %43 = vector.load %arg20[%c0_18, %c0_19] : memref<1x256xf32, #tpu.memory_space<vmem>>, vector<1x256xf32>
    %44 = vector.broadcast %43 : vector<1x256xf32> to vector<128x256xf32>
    %45 = arith.addf %42, %44 : vector<128x256xf32>
    %46 = arith.truncf %45 : vector<128x256xf32> to vector<128x256xbf16>
    %cst_20 = arith.constant 0.000000e+00 : bf16
    %47 = vector.broadcast %cst_20 : bf16 to vector<128x8xbf16>
    %48 = tpu.concatenate %47, %46, %47 in 1 : vector<128x8xbf16>, vector<128x256xbf16>, vector<128x8xbf16> -> vector<128x272xbf16>
    %c0_21 = arith.constant 0 : index
    %c0_22 = arith.constant 0 : index
    %49 = vector.load %arg3[%c0_21, %c0_22] : memref<140x128xbf16, #tpu.memory_space<vmem>>, vector<140x128xbf16>
    %50 = vector.extract_strided_slice %48 {offsets = [0, 0], sizes = [128, 140], strides = [1, 1]} : vector<128x272xbf16> to vector<128x140xbf16>
    %cst_23 = arith.constant dense<0.000000e+00> : vector<128x128xf32>
    %51 = tpu.matmul %50, %49, %cst_23 {dimension_numbers = #tpu.dot_dimension_numbers<[1], [0], [0], [1], [0, 0, 1, 1], [], []>} : vector<128x140xbf16>, vector<140x128xbf16>, vector<128x128xf32> -> vector<128x128xf32>
    %52 = vector.extract_strided_slice %48 {offsets = [0, 128], sizes = [128, 140], strides = [1, 1]} : vector<128x272xbf16> to vector<128x140xbf16>
    %cst_24 = arith.constant dense<0.000000e+00> : vector<128x128xf32>
    %53 = tpu.matmul %52, %49, %cst_24 {dimension_numbers = #tpu.dot_dimension_numbers<[1], [0], [0], [1], [0, 0, 1, 1], [], []>} : vector<128x140xbf16>, vector<140x128xbf16>, vector<128x128xf32> -> vector<128x128xf32>
    %54 = tpu.concatenate %51, %53 in 1 : vector<128x128xf32>, vector<128x128xf32> -> vector<128x256xf32>
    %c0_25 = arith.constant 0 : index
    %c0_26 = arith.constant 0 : index
    %55 = vector.load %arg9[%c0_25, %c0_26] : memref<1x256xf32, #tpu.memory_space<vmem>>, vector<1x256xf32>
    %56 = vector.broadcast %55 : vector<1x256xf32> to vector<128x256xf32>
    %57 = arith.addf %54, %56 : vector<128x256xf32>
    %cst_27 = arith.constant 0.000000e+00 : f32
    %58 = vector.broadcast %cst_27 : f32 to vector<128x256xf32>
    %59 = arith.cmpf ogt, %57, %58 : vector<128x256xf32>
    %cst_28 = arith.constant 0.000000e+00 : f32
    %60 = vector.broadcast %cst_28 : f32 to vector<128x256xf32>
    %61 = arith.minimumf %57, %60 : vector<128x256xf32>
    %62 = math.exp %61 : vector<128x256xf32>
    %cst_29 = arith.constant 1.000000e+00 : f32
    %63 = vector.broadcast %cst_29 : f32 to vector<128x256xf32>
    %64 = arith.subf %62, %63 : vector<128x256xf32>
    %65 = arith.select %59, %57, %64 : vector<128x256xi1>, vector<128x256xf32>
    %cst_30 = arith.constant dense<0.000000e+00> : vector<128xf32>
    %66 = vector.multi_reduction <add>, %65, %cst_30 [1] : vector<128x256xf32> to vector<128xf32>
    %67 = vector.shape_cast %66 : vector<128xf32> to vector<128x1xf32>
    %cst_31 = arith.constant 2.560000e+02 : f32
    %68 = vector.broadcast %cst_31 : f32 to vector<128x1xf32>
    %69 = arith.divf %67, %68 : vector<128x1xf32>
    %70 = arith.mulf %65, %65 : vector<128x256xf32>
    %cst_32 = arith.constant dense<0.000000e+00> : vector<128xf32>
    %71 = vector.multi_reduction <add>, %70, %cst_32 [1] : vector<128x256xf32> to vector<128xf32>
    %72 = vector.shape_cast %71 : vector<128xf32> to vector<128x1xf32>
    %cst_33 = arith.constant 2.560000e+02 : f32
    %73 = vector.broadcast %cst_33 : f32 to vector<128x1xf32>
    %74 = arith.divf %72, %73 : vector<128x1xf32>
    %75 = arith.mulf %69, %69 : vector<128x1xf32>
    %76 = arith.subf %74, %75 : vector<128x1xf32>
    %cst_34 = arith.constant 0.000000e+00 : f32
    %77 = vector.broadcast %cst_34 : f32 to vector<128x1xf32>
    %78 = arith.maximumf %76, %77 : vector<128x1xf32>
    %79 = vector.broadcast %69 : vector<128x1xf32> to vector<128x256xf32>
    %80 = arith.subf %65, %79 : vector<128x256xf32>
    %cst_35 = arith.constant 9.99999974E-6 : f32
    %81 = vector.broadcast %cst_35 : f32 to vector<128x1xf32>
    %82 = arith.addf %78, %81 : vector<128x1xf32>
    %83 = math.rsqrt %82 : vector<128x1xf32>
    %84 = vector.broadcast %83 : vector<128x1xf32> to vector<128x256xf32>
    %85 = arith.mulf %80, %84 : vector<128x256xf32>
    %c0_36 = arith.constant 0 : index
    %c0_37 = arith.constant 0 : index
    %86 = vector.load %arg15[%c0_36, %c0_37] : memref<1x256xf32, #tpu.memory_space<vmem>>, vector<1x256xf32>
    %87 = vector.broadcast %86 : vector<1x256xf32> to vector<128x256xf32>
    %88 = arith.mulf %85, %87 : vector<128x256xf32>
    %c0_38 = arith.constant 0 : index
    %c0_39 = arith.constant 0 : index
    %89 = vector.load %arg21[%c0_38, %c0_39] : memref<1x256xf32, #tpu.memory_space<vmem>>, vector<1x256xf32>
    %90 = vector.broadcast %89 : vector<1x256xf32> to vector<128x256xf32>
    %91 = arith.addf %88, %90 : vector<128x256xf32>
    %92 = arith.truncf %91 : vector<128x256xf32> to vector<128x256xbf16>
    %cst_40 = arith.constant 0.000000e+00 : bf16
    %93 = vector.broadcast %cst_40 : bf16 to vector<128x16xbf16>
    %94 = tpu.concatenate %93, %92, %93 in 1 : vector<128x16xbf16>, vector<128x256xbf16>, vector<128x16xbf16> -> vector<128x288xbf16>
    %c0_41 = arith.constant 0 : index
    %c0_42 = arith.constant 0 : index
    %95 = vector.load %arg4[%c0_41, %c0_42] : memref<152x128xbf16, #tpu.memory_space<vmem>>, vector<152x128xbf16>
    %96 = vector.extract_strided_slice %94 {offsets = [0, 0], sizes = [128, 152], strides = [1, 1]} : vector<128x288xbf16> to vector<128x152xbf16>
    %cst_43 = arith.constant dense<0.000000e+00> : vector<128x128xf32>
    %97 = tpu.matmul %96, %95, %cst_43 {dimension_numbers = #tpu.dot_dimension_numbers<[1], [0], [0], [1], [0, 0, 1, 1], [], []>} : vector<128x152xbf16>, vector<152x128xbf16>, vector<128x128xf32> -> vector<128x128xf32>
    %98 = vector.extract_strided_slice %94 {offsets = [0, 128], sizes = [128, 152], strides = [1, 1]} : vector<128x288xbf16> to vector<128x152xbf16>
    %cst_44 = arith.constant dense<0.000000e+00> : vector<128x128xf32>
    %99 = tpu.matmul %98, %95, %cst_44 {dimension_numbers = #tpu.dot_dimension_numbers<[1], [0], [0], [1], [0, 0, 1, 1], [], []>} : vector<128x152xbf16>, vector<152x128xbf16>, vector<128x128xf32> -> vector<128x128xf32>
    %100 = tpu.concatenate %97, %99 in 1 : vector<128x128xf32>, vector<128x128xf32> -> vector<128x256xf32>
    %c0_45 = arith.constant 0 : index
    %c0_46 = arith.constant 0 : index
    %101 = vector.load %arg10[%c0_45, %c0_46] : memref<1x256xf32, #tpu.memory_space<vmem>>, vector<1x256xf32>
    %102 = vector.broadcast %101 : vector<1x256xf32> to vector<128x256xf32>
    %103 = arith.addf %100, %102 : vector<128x256xf32>
    %cst_47 = arith.constant 0.000000e+00 : f32
    %104 = vector.broadcast %cst_47 : f32 to vector<128x256xf32>
    %105 = arith.cmpf ogt, %103, %104 : vector<128x256xf32>
    %cst_48 = arith.constant 0.000000e+00 : f32
    %106 = vector.broadcast %cst_48 : f32 to vector<128x256xf32>
    %107 = arith.minimumf %103, %106 : vector<128x256xf32>
    %108 = math.exp %107 : vector<128x256xf32>
    %cst_49 = arith.constant 1.000000e+00 : f32
    %109 = vector.broadcast %cst_49 : f32 to vector<128x256xf32>
    %110 = arith.subf %108, %109 : vector<128x256xf32>
    %111 = arith.select %105, %103, %110 : vector<128x256xi1>, vector<128x256xf32>
    %cst_50 = arith.constant dense<0.000000e+00> : vector<128xf32>
    %112 = vector.multi_reduction <add>, %111, %cst_50 [1] : vector<128x256xf32> to vector<128xf32>
    %113 = vector.shape_cast %112 : vector<128xf32> to vector<128x1xf32>
    %cst_51 = arith.constant 2.560000e+02 : f32
    %114 = vector.broadcast %cst_51 : f32 to vector<128x1xf32>
    %115 = arith.divf %113, %114 : vector<128x1xf32>
    %116 = arith.mulf %111, %111 : vector<128x256xf32>
    %cst_52 = arith.constant dense<0.000000e+00> : vector<128xf32>
    %117 = vector.multi_reduction <add>, %116, %cst_52 [1] : vector<128x256xf32> to vector<128xf32>
    %118 = vector.shape_cast %117 : vector<128xf32> to vector<128x1xf32>
    %cst_53 = arith.constant 2.560000e+02 : f32
    %119 = vector.broadcast %cst_53 : f32 to vector<128x1xf32>
    %120 = arith.divf %118, %119 : vector<128x1xf32>
    %121 = arith.mulf %115, %115 : vector<128x1xf32>
    %122 = arith.subf %120, %121 : vector<128x1xf32>
    %cst_54 = arith.constant 0.000000e+00 : f32
    %123 = vector.broadcast %cst_54 : f32 to vector<128x1xf32>
    %124 = arith.maximumf %122, %123 : vector<128x1xf32>
    %125 = vector.broadcast %115 : vector<128x1xf32> to vector<128x256xf32>
    %126 = arith.subf %111, %125 : vector<128x256xf32>
    %cst_55 = arith.constant 9.99999974E-6 : f32
    %127 = vector.broadcast %cst_55 : f32 to vector<128x1xf32>
    %128 = arith.addf %124, %127 : vector<128x1xf32>
    %129 = math.rsqrt %128 : vector<128x1xf32>
    %130 = vector.broadcast %129 : vector<128x1xf32> to vector<128x256xf32>
    %131 = arith.mulf %126, %130 : vector<128x256xf32>
    %c0_56 = arith.constant 0 : index
    %c0_57 = arith.constant 0 : index
    %132 = vector.load %arg16[%c0_56, %c0_57] : memref<1x256xf32, #tpu.memory_space<vmem>>, vector<1x256xf32>
    %133 = vector.broadcast %132 : vector<1x256xf32> to vector<128x256xf32>
    %134 = arith.mulf %131, %133 : vector<128x256xf32>
    %c0_58 = arith.constant 0 : index
    %c0_59 = arith.constant 0 : index
    %135 = vector.load %arg22[%c0_58, %c0_59] : memref<1x256xf32, #tpu.memory_space<vmem>>, vector<1x256xf32>
    %136 = vector.broadcast %135 : vector<1x256xf32> to vector<128x256xf32>
    %137 = arith.addf %134, %136 : vector<128x256xf32>
    %138 = arith.truncf %137 : vector<128x256xf32> to vector<128x256xbf16>
    %cst_60 = arith.constant 0.000000e+00 : bf16
    %139 = vector.broadcast %cst_60 : bf16 to vector<128x32xbf16>
    %140 = tpu.concatenate %139, %138, %139 in 1 : vector<128x32xbf16>, vector<128x256xbf16>, vector<128x32xbf16> -> vector<128x320xbf16>
    %c0_61 = arith.constant 0 : index
    %c0_62 = arith.constant 0 : index
    %141 = vector.load %arg5[%c0_61, %c0_62] : memref<176x128xbf16, #tpu.memory_space<vmem>>, vector<176x128xbf16>
    %142 = vector.extract_strided_slice %140 {offsets = [0, 0], sizes = [128, 176], strides = [1, 1]} : vector<128x320xbf16> to vector<128x176xbf16>
    %cst_63 = arith.constant dense<0.000000e+00> : vector<128x128xf32>
    %143 = tpu.matmul %142, %141, %cst_63 {dimension_numbers = #tpu.dot_dimension_numbers<[1], [0], [0], [1], [0, 0, 1, 1], [], []>} : vector<128x176xbf16>, vector<176x128xbf16>, vector<128x128xf32> -> vector<128x128xf32>
    %144 = vector.extract_strided_slice %140 {offsets = [0, 128], sizes = [128, 176], strides = [1, 1]} : vector<128x320xbf16> to vector<128x176xbf16>
    %cst_64 = arith.constant dense<0.000000e+00> : vector<128x128xf32>
    %145 = tpu.matmul %144, %141, %cst_64 {dimension_numbers = #tpu.dot_dimension_numbers<[1], [0], [0], [1], [0, 0, 1, 1], [], []>} : vector<128x176xbf16>, vector<176x128xbf16>, vector<128x128xf32> -> vector<128x128xf32>
    %146 = tpu.concatenate %143, %145 in 1 : vector<128x128xf32>, vector<128x128xf32> -> vector<128x256xf32>
    %c0_65 = arith.constant 0 : index
    %c0_66 = arith.constant 0 : index
    %147 = vector.load %arg11[%c0_65, %c0_66] : memref<1x256xf32, #tpu.memory_space<vmem>>, vector<1x256xf32>
    %148 = vector.broadcast %147 : vector<1x256xf32> to vector<128x256xf32>
    %149 = arith.addf %146, %148 : vector<128x256xf32>
    %cst_67 = arith.constant 0.000000e+00 : f32
    %150 = vector.broadcast %cst_67 : f32 to vector<128x256xf32>
    %151 = arith.cmpf ogt, %149, %150 : vector<128x256xf32>
    %cst_68 = arith.constant 0.000000e+00 : f32
    %152 = vector.broadcast %cst_68 : f32 to vector<128x256xf32>
    %153 = arith.minimumf %149, %152 : vector<128x256xf32>
    %154 = math.exp %153 : vector<128x256xf32>
    %cst_69 = arith.constant 1.000000e+00 : f32
    %155 = vector.broadcast %cst_69 : f32 to vector<128x256xf32>
    %156 = arith.subf %154, %155 : vector<128x256xf32>
    %157 = arith.select %151, %149, %156 : vector<128x256xi1>, vector<128x256xf32>
    %cst_70 = arith.constant dense<0.000000e+00> : vector<128xf32>
    %158 = vector.multi_reduction <add>, %157, %cst_70 [1] : vector<128x256xf32> to vector<128xf32>
    %159 = vector.shape_cast %158 : vector<128xf32> to vector<128x1xf32>
    %cst_71 = arith.constant 2.560000e+02 : f32
    %160 = vector.broadcast %cst_71 : f32 to vector<128x1xf32>
    %161 = arith.divf %159, %160 : vector<128x1xf32>
    %162 = arith.mulf %157, %157 : vector<128x256xf32>
    %cst_72 = arith.constant dense<0.000000e+00> : vector<128xf32>
    %163 = vector.multi_reduction <add>, %162, %cst_72 [1] : vector<128x256xf32> to vector<128xf32>
    %164 = vector.shape_cast %163 : vector<128xf32> to vector<128x1xf32>
    %cst_73 = arith.constant 2.560000e+02 : f32
    %165 = vector.broadcast %cst_73 : f32 to vector<128x1xf32>
    %166 = arith.divf %164, %165 : vector<128x1xf32>
    %167 = arith.mulf %161, %161 : vector<128x1xf32>
    %168 = arith.subf %166, %167 : vector<128x1xf32>
    %cst_74 = arith.constant 0.000000e+00 : f32
    %169 = vector.broadcast %cst_74 : f32 to vector<128x1xf32>
    %170 = arith.maximumf %168, %169 : vector<128x1xf32>
    %171 = vector.broadcast %161 : vector<128x1xf32> to vector<128x256xf32>
    %172 = arith.subf %157, %171 : vector<128x256xf32>
    %cst_75 = arith.constant 9.99999974E-6 : f32
    %173 = vector.broadcast %cst_75 : f32 to vector<128x1xf32>
    %174 = arith.addf %170, %173 : vector<128x1xf32>
    %175 = math.rsqrt %174 : vector<128x1xf32>
    %176 = vector.broadcast %175 : vector<128x1xf32> to vector<128x256xf32>
    %177 = arith.mulf %172, %176 : vector<128x256xf32>
    %c0_76 = arith.constant 0 : index
    %c0_77 = arith.constant 0 : index
    %178 = vector.load %arg17[%c0_76, %c0_77] : memref<1x256xf32, #tpu.memory_space<vmem>>, vector<1x256xf32>
    %179 = vector.broadcast %178 : vector<1x256xf32> to vector<128x256xf32>
    %180 = arith.mulf %177, %179 : vector<128x256xf32>
    %c0_78 = arith.constant 0 : index
    %c0_79 = arith.constant 0 : index
    %181 = vector.load %arg23[%c0_78, %c0_79] : memref<1x256xf32, #tpu.memory_space<vmem>>, vector<1x256xf32>
    %182 = vector.broadcast %181 : vector<1x256xf32> to vector<128x256xf32>
    %183 = arith.addf %180, %182 : vector<128x256xf32>
    %184 = arith.truncf %183 : vector<128x256xf32> to vector<128x256xbf16>
    %cst_80 = arith.constant 0.000000e+00 : bf16
    %185 = vector.broadcast %cst_80 : bf16 to vector<128x64xbf16>
    %186 = tpu.concatenate %185, %184, %185 in 1 : vector<128x64xbf16>, vector<128x256xbf16>, vector<128x64xbf16> -> vector<128x384xbf16>
    %c0_81 = arith.constant 0 : index
    %c0_82 = arith.constant 0 : index
    %187 = vector.load %arg6[%c0_81, %c0_82] : memref<224x128xbf16, #tpu.memory_space<vmem>>, vector<224x128xbf16>
    %188 = vector.extract_strided_slice %186 {offsets = [0, 0], sizes = [128, 224], strides = [1, 1]} : vector<128x384xbf16> to vector<128x224xbf16>
    %cst_83 = arith.constant dense<0.000000e+00> : vector<128x128xf32>
    %189 = tpu.matmul %188, %187, %cst_83 {dimension_numbers = #tpu.dot_dimension_numbers<[1], [0], [0], [1], [0, 0, 1, 1], [], []>} : vector<128x224xbf16>, vector<224x128xbf16>, vector<128x128xf32> -> vector<128x128xf32>
    %190 = vector.extract_strided_slice %186 {offsets = [0, 128], sizes = [128, 224], strides = [1, 1]} : vector<128x384xbf16> to vector<128x224xbf16>
    %cst_84 = arith.constant dense<0.000000e+00> : vector<128x128xf32>
    %191 = tpu.matmul %190, %187, %cst_84 {dimension_numbers = #tpu.dot_dimension_numbers<[1], [0], [0], [1], [0, 0, 1, 1], [], []>} : vector<128x224xbf16>, vector<224x128xbf16>, vector<128x128xf32> -> vector<128x128xf32>
    %192 = tpu.concatenate %189, %191 in 1 : vector<128x128xf32>, vector<128x128xf32> -> vector<128x256xf32>
    %c0_85 = arith.constant 0 : index
    %c0_86 = arith.constant 0 : index
    %193 = vector.load %arg12[%c0_85, %c0_86] : memref<1x256xf32, #tpu.memory_space<vmem>>, vector<1x256xf32>
    %194 = vector.broadcast %193 : vector<1x256xf32> to vector<128x256xf32>
    %195 = arith.addf %192, %194 : vector<128x256xf32>
    %cst_87 = arith.constant 0.000000e+00 : f32
    %196 = vector.broadcast %cst_87 : f32 to vector<128x256xf32>
    %197 = arith.cmpf ogt, %195, %196 : vector<128x256xf32>
    %cst_88 = arith.constant 0.000000e+00 : f32
    %198 = vector.broadcast %cst_88 : f32 to vector<128x256xf32>
    %199 = arith.minimumf %195, %198 : vector<128x256xf32>
    %200 = math.exp %199 : vector<128x256xf32>
    %cst_89 = arith.constant 1.000000e+00 : f32
    %201 = vector.broadcast %cst_89 : f32 to vector<128x256xf32>
    %202 = arith.subf %200, %201 : vector<128x256xf32>
    %203 = arith.select %197, %195, %202 : vector<128x256xi1>, vector<128x256xf32>
    %cst_90 = arith.constant dense<0.000000e+00> : vector<128xf32>
    %204 = vector.multi_reduction <add>, %203, %cst_90 [1] : vector<128x256xf32> to vector<128xf32>
    %205 = vector.shape_cast %204 : vector<128xf32> to vector<128x1xf32>
    %cst_91 = arith.constant 2.560000e+02 : f32
    %206 = vector.broadcast %cst_91 : f32 to vector<128x1xf32>
    %207 = arith.divf %205, %206 : vector<128x1xf32>
    %208 = arith.mulf %203, %203 : vector<128x256xf32>
    %cst_92 = arith.constant dense<0.000000e+00> : vector<128xf32>
    %209 = vector.multi_reduction <add>, %208, %cst_92 [1] : vector<128x256xf32> to vector<128xf32>
    %210 = vector.shape_cast %209 : vector<128xf32> to vector<128x1xf32>
    %cst_93 = arith.constant 2.560000e+02 : f32
    %211 = vector.broadcast %cst_93 : f32 to vector<128x1xf32>
    %212 = arith.divf %210, %211 : vector<128x1xf32>
    %213 = arith.mulf %207, %207 : vector<128x1xf32>
    %214 = arith.subf %212, %213 : vector<128x1xf32>
    %cst_94 = arith.constant 0.000000e+00 : f32
    %215 = vector.broadcast %cst_94 : f32 to vector<128x1xf32>
    %216 = arith.maximumf %214, %215 : vector<128x1xf32>
    %217 = vector.broadcast %207 : vector<128x1xf32> to vector<128x256xf32>
    %218 = arith.subf %203, %217 : vector<128x256xf32>
    %cst_95 = arith.constant 9.99999974E-6 : f32
    %219 = vector.broadcast %cst_95 : f32 to vector<128x1xf32>
    %220 = arith.addf %216, %219 : vector<128x1xf32>
    %221 = math.rsqrt %220 : vector<128x1xf32>
    %222 = vector.broadcast %221 : vector<128x1xf32> to vector<128x256xf32>
    %223 = arith.mulf %218, %222 : vector<128x256xf32>
    %c0_96 = arith.constant 0 : index
    %c0_97 = arith.constant 0 : index
    %224 = vector.load %arg18[%c0_96, %c0_97] : memref<1x256xf32, #tpu.memory_space<vmem>>, vector<1x256xf32>
    %225 = vector.broadcast %224 : vector<1x256xf32> to vector<128x256xf32>
    %226 = arith.mulf %223, %225 : vector<128x256xf32>
    %c0_98 = arith.constant 0 : index
    %c0_99 = arith.constant 0 : index
    %227 = vector.load %arg24[%c0_98, %c0_99] : memref<1x256xf32, #tpu.memory_space<vmem>>, vector<1x256xf32>
    %228 = vector.broadcast %227 : vector<1x256xf32> to vector<128x256xf32>
    %229 = arith.addf %226, %228 : vector<128x256xf32>
    %230 = arith.truncf %229 : vector<128x256xf32> to vector<128x256xbf16>
    %cst_100 = arith.constant 0.000000e+00 : bf16
    %231 = vector.broadcast %cst_100 : bf16 to vector<128x128xbf16>
    %232 = tpu.concatenate %231, %230, %231 in 1 : vector<128x128xbf16>, vector<128x256xbf16>, vector<128x128xbf16> -> vector<128x512xbf16>
    %c0_101 = arith.constant 0 : index
    %c0_102 = arith.constant 0 : index
    %233 = vector.load %arg7[%c0_101, %c0_102] : memref<320x128xbf16, #tpu.memory_space<vmem>>, vector<320x128xbf16>
    %234 = vector.extract_strided_slice %232 {offsets = [0, 0], sizes = [128, 320], strides = [1, 1]} : vector<128x512xbf16> to vector<128x320xbf16>
    %cst_103 = arith.constant dense<0.000000e+00> : vector<128x128xf32>
    %235 = tpu.matmul %234, %233, %cst_103 {dimension_numbers = #tpu.dot_dimension_numbers<[1], [0], [0], [1], [0, 0, 1, 1], [], []>} : vector<128x320xbf16>, vector<320x128xbf16>, vector<128x128xf32> -> vector<128x128xf32>
    %236 = vector.extract_strided_slice %232 {offsets = [0, 128], sizes = [128, 320], strides = [1, 1]} : vector<128x512xbf16> to vector<128x320xbf16>
    %cst_104 = arith.constant dense<0.000000e+00> : vector<128x128xf32>
    %237 = tpu.matmul %236, %233, %cst_104 {dimension_numbers = #tpu.dot_dimension_numbers<[1], [0], [0], [1], [0, 0, 1, 1], [], []>} : vector<128x320xbf16>, vector<320x128xbf16>, vector<128x128xf32> -> vector<128x128xf32>
    %238 = tpu.concatenate %235, %237 in 1 : vector<128x128xf32>, vector<128x128xf32> -> vector<128x256xf32>
    %c0_105 = arith.constant 0 : index
    %c0_106 = arith.constant 0 : index
    %239 = vector.load %arg13[%c0_105, %c0_106] : memref<1x256xf32, #tpu.memory_space<vmem>>, vector<1x256xf32>
    %240 = vector.broadcast %239 : vector<1x256xf32> to vector<128x256xf32>
    %241 = arith.addf %238, %240 : vector<128x256xf32>
    %cst_107 = arith.constant 0.000000e+00 : f32
    %242 = vector.broadcast %cst_107 : f32 to vector<128x256xf32>
    %243 = arith.cmpf ogt, %241, %242 : vector<128x256xf32>
    %cst_108 = arith.constant 0.000000e+00 : f32
    %244 = vector.broadcast %cst_108 : f32 to vector<128x256xf32>
    %245 = arith.minimumf %241, %244 : vector<128x256xf32>
    %246 = math.exp %245 : vector<128x256xf32>
    %cst_109 = arith.constant 1.000000e+00 : f32
    %247 = vector.broadcast %cst_109 : f32 to vector<128x256xf32>
    %248 = arith.subf %246, %247 : vector<128x256xf32>
    %249 = arith.select %243, %241, %248 : vector<128x256xi1>, vector<128x256xf32>
    %cst_110 = arith.constant dense<0.000000e+00> : vector<128xf32>
    %250 = vector.multi_reduction <add>, %249, %cst_110 [1] : vector<128x256xf32> to vector<128xf32>
    %251 = vector.shape_cast %250 : vector<128xf32> to vector<128x1xf32>
    %cst_111 = arith.constant 2.560000e+02 : f32
    %252 = vector.broadcast %cst_111 : f32 to vector<128x1xf32>
    %253 = arith.divf %251, %252 : vector<128x1xf32>
    %254 = arith.mulf %249, %249 : vector<128x256xf32>
    %cst_112 = arith.constant dense<0.000000e+00> : vector<128xf32>
    %255 = vector.multi_reduction <add>, %254, %cst_112 [1] : vector<128x256xf32> to vector<128xf32>
    %256 = vector.shape_cast %255 : vector<128xf32> to vector<128x1xf32>
    %cst_113 = arith.constant 2.560000e+02 : f32
    %257 = vector.broadcast %cst_113 : f32 to vector<128x1xf32>
    %258 = arith.divf %256, %257 : vector<128x1xf32>
    %259 = arith.mulf %253, %253 : vector<128x1xf32>
    %260 = arith.subf %258, %259 : vector<128x1xf32>
    %cst_114 = arith.constant 0.000000e+00 : f32
    %261 = vector.broadcast %cst_114 : f32 to vector<128x1xf32>
    %262 = arith.maximumf %260, %261 : vector<128x1xf32>
    %263 = vector.broadcast %253 : vector<128x1xf32> to vector<128x256xf32>
    %264 = arith.subf %249, %263 : vector<128x256xf32>
    %cst_115 = arith.constant 9.99999974E-6 : f32
    %265 = vector.broadcast %cst_115 : f32 to vector<128x1xf32>
    %266 = arith.addf %262, %265 : vector<128x1xf32>
    %267 = math.rsqrt %266 : vector<128x1xf32>
    %268 = vector.broadcast %267 : vector<128x1xf32> to vector<128x256xf32>
    %269 = arith.mulf %264, %268 : vector<128x256xf32>
    %c0_116 = arith.constant 0 : index
    %c0_117 = arith.constant 0 : index
    %270 = vector.load %arg19[%c0_116, %c0_117] : memref<1x256xf32, #tpu.memory_space<vmem>>, vector<1x256xf32>
    %271 = vector.broadcast %270 : vector<1x256xf32> to vector<128x256xf32>
    %272 = arith.mulf %269, %271 : vector<128x256xf32>
    %c0_118 = arith.constant 0 : index
    %c0_119 = arith.constant 0 : index
    %273 = vector.load %arg25[%c0_118, %c0_119] : memref<1x256xf32, #tpu.memory_space<vmem>>, vector<1x256xf32>
    %274 = vector.broadcast %273 : vector<1x256xf32> to vector<128x256xf32>
    %275 = arith.addf %272, %274 : vector<128x256xf32>
    %276 = arith.truncf %275 : vector<128x256xf32> to vector<128x256xbf16>
    %c0_120 = arith.constant 0 : index
    %c0_121 = arith.constant 0 : index
    %277 = vector.load %arg26[%c0_120, %c0_121] : memref<256x128xbf16, #tpu.memory_space<vmem>>, vector<256x128xbf16>
    %cst_122 = arith.constant dense<0.000000e+00> : vector<128x128xf32>
    %278 = tpu.matmul %276, %277, %cst_122 {dimension_numbers = #tpu.dot_dimension_numbers<[1], [0], [0], [1], [0, 0, 1, 1], [], []>} : vector<128x256xbf16>, vector<256x128xbf16>, vector<128x128xf32> -> vector<128x128xf32>
    %c0_123 = arith.constant 0 : index
    %c0_124 = arith.constant 0 : index
    %279 = vector.load %arg27[%c0_123, %c0_124] : memref<1x128xf32, #tpu.memory_space<vmem>>, vector<1x128xf32>
    %280 = vector.broadcast %279 : vector<1x128xf32> to vector<128x128xf32>
    %281 = arith.addf %278, %280 : vector<128x128xf32>
    %c0_125 = arith.constant 0 : index
    %c0_126 = arith.constant 0 : index
    %282 = vector.load %arg28[%c0_125, %c0_126] : memref<128x128xf32, #tpu.memory_space<vmem>>, vector<128x128xf32>
    tpu.vector_store %arg28[%c0_125, %c0_126], %281 {strides = array<i32>} : memref<128x128xf32, #tpu.memory_space<vmem>>, vector<128x128xf32>,
    return
  }
  func.func @transform_0(%arg0: i32) -> (i32, i32) {
    %c0_i32 = arith.constant 0 : i32
    %c0_i32_0 = arith.constant 0 : i32
    return %arg0, %c0_i32 : i32, i32
  }
  func.func @transform_1(%arg0: i32) -> (i32, i32) {
    %c0_i32 = arith.constant 0 : i32
    %c0_i32_0 = arith.constant 0 : i32
    %c0_i32_1 = arith.constant 0 : i32
    return %c0_i32, %c0_i32_0 : i32, i32
  }
  func.func @transform_2(%arg0: i32) -> (i32, i32) {
    %c0_i32 = arith.constant 0 : i32
    %c0_i32_0 = arith.constant 0 : i32
    %c0_i32_1 = arith.constant 0 : i32
    return %c0_i32, %c0_i32_0 : i32, i32
  }
  func.func @transform_3(%arg0: i32) -> (i32, i32) {
    %c0_i32 = arith.constant 0 : i32
    %c0_i32_0 = arith.constant 0 : i32
    %c0_i32_1 = arith.constant 0 : i32
    return %c0_i32, %c0_i32_0 : i32, i32
  }
  func.func @transform_4(%arg0: i32) -> (i32, i32) {
    %c0_i32 = arith.constant 0 : i32
    %c0_i32_0 = arith.constant 0 : i32
    %c0_i32_1 = arith.constant 0 : i32
    return %c0_i32, %c0_i32_0 : i32, i32
  }
  func.func @transform_5(%arg0: i32) -> (i32, i32) {
    %c0_i32 = arith.constant 0 : i32
    %c0_i32_0 = arith.constant 0 : i32
    %c0_i32_1 = arith.constant 0 : i32
    return %c0_i32, %c0_i32_0 : i32, i32
  }
  func.func @transform_6(%arg0: i32) -> (i32, i32) {
    %c0_i32 = arith.constant 0 : i32
    %c0_i32_0 = arith.constant 0 : i32
    %c0_i32_1 = arith.constant 0 : i32
    return %c0_i32, %c0_i32_0 : i32, i32
  }
  func.func @transform_7(%arg0: i32) -> (i32, i32) {
    %c0_i32 = arith.constant 0 : i32
    %c0_i32_0 = arith.constant 0 : i32
    %c0_i32_1 = arith.constant 0 : i32
    return %c0_i32, %c0_i32_0 : i32, i32
  }
  func.func @transform_8(%arg0: i32) -> (i32, i32) {
    %c0_i32 = arith.constant 0 : i32
    %c0_i32_0 = arith.constant 0 : i32
    %c0_i32_1 = arith.constant 0 : i32
    return %c0_i32, %c0_i32_0 : i32, i32
  }
  func.func @transform_9(%arg0: i32) -> (i32, i32) {
    %c0_i32 = arith.constant 0 : i32
    %c0_i32_0 = arith.constant 0 : i32
    %c0_i32_1 = arith.constant 0 : i32
    return %c0_i32, %c0_i32_0 : i32, i32
  }
  func.func @transform_10(%arg0: i32) -> (i32, i32) {
    %c0_i32 = arith.constant 0 : i32
    %c0_i32_0 = arith.constant 0 : i32
    %c0_i32_1 = arith.constant 0 : i32
    return %c0_i32, %c0_i32_0 : i32, i32
  }
  func.func @transform_11(%arg0: i32) -> (i32, i32) {
    %c0_i32 = arith.constant 0 : i32
    %c0_i32_0 = arith.constant 0 : i32
    %c0_i32_1 = arith.constant 0 : i32
    return %c0_i32, %c0_i32_0 : i32, i32
  }
  func.func @transform_12(%arg0: i32) -> (i32, i32) {
    %c0_i32 = arith.constant 0 : i32
    %c0_i32_0 = arith.constant 0 : i32
    %c0_i32_1 = arith.constant 0 : i32
    return %c0_i32, %c0_i32_0 : i32, i32
  }
  func.func @transform_13(%arg0: i32) -> (i32, i32) {
    %c0_i32 = arith.constant 0 : i32
    %c0_i32_0 = arith.constant 0 : i32
    %c0_i32_1 = arith.constant 0 : i32
    return %c0_i32, %c0_i32_0 : i32, i32
  }
  func.func @transform_14(%arg0: i32) -> (i32, i32) {
    %c0_i32 = arith.constant 0 : i32
    %c0_i32_0 = arith.constant 0 : i32
    %c0_i32_1 = arith.constant 0 : i32
    return %c0_i32, %c0_i32_0 : i32, i32
  }
  func.func @transform_15(%arg0: i32) -> (i32, i32) {
    %c0_i32 = arith.constant 0 : i32
    %c0_i32_0 = arith.constant 0 : i32
    %c0_i32_1 = arith.constant 0 : i32
    return %c0_i32, %c0_i32_0 : i32, i32
  }
  func.func @transform_16(%arg0: i32) -> (i32, i32) {
    %c0_i32 = arith.constant 0 : i32
    %c0_i32_0 = arith.constant 0 : i32
    %c0_i32_1 = arith.constant 0 : i32
    return %c0_i32, %c0_i32_0 : i32, i32
  }
  func.func @transform_17(%arg0: i32) -> (i32, i32) {
    %c0_i32 = arith.constant 0 : i32
    %c0_i32_0 = arith.constant 0 : i32
    %c0_i32_1 = arith.constant 0 : i32
    return %c0_i32, %c0_i32_0 : i32, i32
  }
  func.func @transform_18(%arg0: i32) -> (i32, i32) {
    %c0_i32 = arith.constant 0 : i32
    %c0_i32_0 = arith.constant 0 : i32
    %c0_i32_1 = arith.constant 0 : i32
    return %c0_i32, %c0_i32_0 : i32, i32
  }
  func.func @transform_19(%arg0: i32) -> (i32, i32) {
    %c0_i32 = arith.constant 0 : i32
    %c0_i32_0 = arith.constant 0 : i32
    %c0_i32_1 = arith.constant 0 : i32
    return %c0_i32, %c0_i32_0 : i32, i32
  }
  func.func @transform_20(%arg0: i32) -> (i32, i32) {
    %c0_i32 = arith.constant 0 : i32
    %c0_i32_0 = arith.constant 0 : i32
    %c0_i32_1 = arith.constant 0 : i32
    return %c0_i32, %c0_i32_0 : i32, i32
  }
  func.func @transform_21(%arg0: i32) -> (i32, i32) {
    %c0_i32 = arith.constant 0 : i32
    %c0_i32_0 = arith.constant 0 : i32
    %c0_i32_1 = arith.constant 0 : i32
    return %c0_i32, %c0_i32_0 : i32, i32
  }
  func.func @transform_22(%arg0: i32) -> (i32, i32) {
    %c0_i32 = arith.constant 0 : i32
    %c0_i32_0 = arith.constant 0 : i32
    %c0_i32_1 = arith.constant 0 : i32
    return %c0_i32, %c0_i32_0 : i32, i32
  }
  func.func @transform_23(%arg0: i32) -> (i32, i32) {
    %c0_i32 = arith.constant 0 : i32
    %c0_i32_0 = arith.constant 0 : i32
    %c0_i32_1 = arith.constant 0 : i32
    return %c0_i32, %c0_i32_0 : i32, i32
  }
  func.func @transform_24(%arg0: i32) -> (i32, i32) {
    %c0_i32 = arith.constant 0 : i32
    %c0_i32_0 = arith.constant 0 : i32
    %c0_i32_1 = arith.constant 0 : i32
    return %c0_i32, %c0_i32_0 : i32, i32
  }
  func.func @transform_25(%arg0: i32) -> (i32, i32) {
    %c0_i32 = arith.constant 0 : i32
    %c0_i32_0 = arith.constant 0 : i32
    %c0_i32_1 = arith.constant 0 : i32
    return %c0_i32, %c0_i32_0 : i32, i32
  }
  func.func @transform_26(%arg0: i32) -> (i32, i32) {
    %c0_i32 = arith.constant 0 : i32
    %c0_i32_0 = arith.constant 0 : i32
    %c0_i32_1 = arith.constant 0 : i32
    return %c0_i32, %c0_i32_0 : i32, i32
  }
  func.func @transform_27(%arg0: i32) -> (i32, i32) {
    %c0_i32 = arith.constant 0 : i32
    %c0_i32_0 = arith.constant 0 : i32
    return %arg0, %c0_i32 : i32, i32
  }
}

</mosaic_0001>

<llo_original>
// kernel: tpu_custom_call.1
$region0: #{tpu_custom_call.1}
  #allocation0 [shape = 'u32[]', space=smem, size = 0x4, offset = 0x4, fixed_abs, tag = 'smem constant byte address 0x4 - core index']
  #allocation1 [shape = 'u32[72,128]{1,0:T(1,128)}', space=vmem, size = 0x9000, scoped, tag = 'internal scratch']
  %s0 = inlined_call_operand.hbm [shape: bf16[128,128], index: 0, kind: input, shape index: {}]
  %s1 = inlined_call_operand.hbm [shape: bf16[67,128], index: 1, kind: input, shape index: {}]
  %s2 = inlined_call_operand.hbm [shape: bf16[140,128], index: 2, kind: input, shape index: {}]
  %s3 = inlined_call_operand.hbm [shape: bf16[152,128], index: 3, kind: input, shape index: {}]
  %s4 = inlined_call_operand.hbm [shape: bf16[176,128], index: 4, kind: input, shape index: {}]
  %s5 = inlined_call_operand.hbm [shape: bf16[224,128], index: 5, kind: input, shape index: {}]
  %s6 = inlined_call_operand.hbm [shape: bf16[320,128], index: 6, kind: input, shape index: {}]
  %s7 = inlined_call_operand.vmem [shape: f32[1,256], index: 7, kind: input, shape index: {}]
  %s8 = inlined_call_operand.vmem [shape: f32[1,256], index: 8, kind: input, shape index: {}]
  %s9 = inlined_call_operand.vmem [shape: f32[1,256], index: 9, kind: input, shape index: {}]
  %s10 = inlined_call_operand.vmem [shape: f32[1,256], index: 10, kind: input, shape index: {}]
  %s11 = inlined_call_operand.vmem [shape: f32[1,256], index: 11, kind: input, shape index: {}]
  %s12 = inlined_call_operand.hbm [shape: f32[1,256], index: 12, kind: input, shape index: {}]
  %s13 = inlined_call_operand.vmem [shape: f32[1,256], index: 13, kind: input, shape index: {}]
  %s14 = inlined_call_operand.hbm [shape: f32[1,256], index: 14, kind: input, shape index: {}]
  %s15 = inlined_call_operand.vmem [shape: f32[1,256], index: 15, kind: input, shape index: {}]
  %s16 = inlined_call_operand.hbm [shape: f32[1,256], index: 16, kind: input, shape index: {}]
  %s17 = inlined_call_operand.vmem [shape: f32[1,256], index: 17, kind: input, shape index: {}]
  %s18 = inlined_call_operand.hbm [shape: f32[1,256], index: 18, kind: input, shape index: {}]
  %s19 = inlined_call_operand.vmem [shape: f32[1,256], index: 19, kind: input, shape index: {}]
  %s20 = inlined_call_operand.hbm [shape: f32[1,256], index: 20, kind: input, shape index: {}]
  %s21 = inlined_call_operand.vmem [shape: f32[1,256], index: 21, kind: input, shape index: {}]
  %s22 = inlined_call_operand.hbm [shape: f32[1,256], index: 22, kind: input, shape index: {}]
  %s23 = inlined_call_operand.vmem [shape: f32[1,256], index: 23, kind: input, shape index: {}]
  %s24 = inlined_call_operand.hbm [shape: f32[1,256], index: 24, kind: input, shape index: {}]
  %s25 = inlined_call_operand.hbm [shape: bf16[256,128], index: 25, kind: input, shape index: {}]
  %s26 = inlined_call_operand.vmem [shape: f32[1,128], index: 26, kind: input, shape index: {}]
  %s27 = inlined_call_operand.hbm [shape: f32[128,128], index: 27, kind: output, shape index: {}]
  %s28 = sld [smem:[#allocation0]]
  $region178: #{tpu_custom_call.1} parent=0
    _
  %s30 = ssub.s32 1, %s28
  %s31 = scalar_select 0, %s30, %s28
  $region1: #{tpu_custom_call.1} parent=0
    #allocation2 [shape = 'u8[32768]{0}', space=vmem, size = 0x8000, scoped, tag = 'input window, operand 0, single buffered']
    #allocation3 [shape = 's32[1]{0}', space=sflag, size = 0x4, scoped, tag = 'scoped memory for tpu_custom_call.1']
    #allocation4 [shape = 's32[1]{0}', space=sflag, size = 0x4, scoped, tag = 'scoped memory for tpu_custom_call.1']
    #allocation5 [shape = 'u8[18432]{0}', space=vmem, size = 0x4800, scoped, tag = 'input window, operand 1, single buffered']
    #allocation6 [shape = 's32[1]{0}', space=sflag, size = 0x4, scoped, tag = 'scoped memory for tpu_custom_call.1']
    #allocation7 [shape = 'u8[36864]{0}', space=vmem, size = 0x9000, scoped, tag = 'input window, operand 2, single buffered']
    #allocation8 [shape = 'u8[38912]{0}', space=vmem, size = 0x9800, scoped, tag = 'input window, operand 3, single buffered']
    #allocation9 [shape = 's32[1]{0}', space=sflag, size = 0x4, scoped, tag = 'scoped memory for tpu_custom_call.1']
    #allocation10 [shape = 'u8[45056]{0}', space=vmem, size = 0xb000, scoped, tag = 'input window, operand 4, single buffered']
    #allocation11 [shape = 'u8[57344]{0}', space=vmem, size = 0xe000, scoped, tag = 'input window, operand 5, single buffered']
    #allocation12 [shape = 's32[1]{0}', space=sflag, size = 0x4, scoped, tag = 'scoped memory for tpu_custom_call.1']
    #allocation13 [shape = 'u8[81920]{0}', space=vmem, size = 0x14000, scoped, tag = 'input window, operand 6, single buffered']
    #allocation14 [shape = 'u8[1024]{0}', space=vmem, size = 0x400, scoped, tag = 'input window, operand 12, single buffered']
    #allocation15 [shape = 's32[1]{0}', space=sflag, size = 0x4, scoped, tag = 'scoped memory for tpu_custom_call.1']
    #allocation16 [shape = 'u8[1024]{0}', space=vmem, size = 0x400, scoped, tag = 'input window, operand 14, single buffered']
    #allocation17 [shape = 'u8[1024]{0}', space=vmem, size = 0x400, scoped, tag = 'input window, operand 16, single buffered']
    #allocation18 [shape = 's32[1]{0}', space=sflag, size = 0x4, scoped, tag = 'scoped memory for tpu_custom_call.1']
    #allocation19 [shape = 'u8[1024]{0}', space=vmem, size = 0x400, scoped, tag = 'input window, operand 18, single buffered']
    #allocation20 [shape = 'u8[1024]{0}', space=vmem, size = 0x400, scoped, tag = 'input window, operand 20, single buffered']
    #allocation21 [shape = 's32[1]{0}', space=sflag, size = 0x4, scoped, tag = 'scoped memory for tpu_custom_call.1']
    #allocation22 [shape = 'u8[1024]{0}', space=vmem, size = 0x400, scoped, tag = 'input window, operand 22, single buffered']
    #allocation23 [shape = 'u8[1024]{0}', space=vmem, size = 0x400, scoped, tag = 'input window, operand 24, single buffered']
    #allocation24 [shape = 's32[1]{0}', space=sflag, size = 0x4, scoped, tag = 'scoped memory for tpu_custom_call.1']
    #allocation25 [shape = 'u8[65536]{0}', space=vmem, size = 0x10000, scoped, tag = 'input window, operand 25, single buffered']
    #allocation26 [shape = 'u8[65536]{0}', space=vmem, size = 0x10000, scoped, tag = 'output window, operand 0, single buffered']
    %32 = vsyncpa [#allocation3], 0
    %33 = vsyncpa [#allocation6], 0
    %34 = vsyncpa [#allocation9], 0
    %35 = vsyncpa [#allocation12], 0
    %36 = vsyncpa [#allocation15], 0
    %37 = vsyncpa [#allocation18], 0
    %38 = vsyncpa [#allocation21], 0
    %39 = vsyncpa [#allocation24], 0
    %40 = vsyncpa [#allocation4], 0
    // Predicated region
    $region2: #{tpu_custom_call.1} parent=1 // pred_check
      _
    $region3: #{tpu_custom_call.1} parent=1 // pred_check_branch
      %42 = sbr.rel (0) target = $region5
    $region4: #{tpu_custom_call.1} parent=1 // pred_region
      %44 = vsyncadd [#allocation3], 0
      %s45 = sshll.u32 %s0, 4
      %s46 = int_to_ptr.hbm [resolvable:$true] %s45
      %s47 = sshll.u32 [#allocation2], 4
      %s48 = int_to_ptr.vmem [resolvable:$true] %s47
      %53 = dma.hbm_to_vmem [thread:$0]  %s46, 1024, %s48, [#allocation3], 64, 64, 4
    $region5: #{tpu_custom_call.1} parent=1 // pred_fallthru
      _
    // Predicated region
    $region6: #{tpu_custom_call.1} parent=1 // pred_check
      _
    $region7: #{tpu_custom_call.1} parent=1 // pred_check_branch
      %55 = sbr.rel (0) target = $region9
    $region8: #{tpu_custom_call.1} parent=1 // pred_region
      %57 = vsyncadd [#allocation6], 0
      %s58 = sshll.u32 %s1, 4
      %s59 = int_to_ptr.hbm [resolvable:$true] %s58
      %s60 = sshll.u32 [#allocation5], 4
      %s61 = int_to_ptr.vmem [resolvable:$true] %s60
      %66 = dma.hbm_to_vmem [thread:$0]  %s59, 576, %s61, [#allocation6], 64, 64, 4
    $region9: #{tpu_custom_call.1} parent=1 // pred_fallthru
      _
    // Predicated region
    $region10: #{tpu_custom_call.1} parent=1 // pred_check
      _
    $region11: #{tpu_custom_call.1} parent=1 // pred_check_branch
      %68 = sbr.rel (0) target = $region13
    $region12: #{tpu_custom_call.1} parent=1 // pred_region
      %70 = vsyncadd [#allocation6], 0
      %s71 = sshll.u32 %s2, 4
      %s72 = int_to_ptr.hbm [resolvable:$true] %s71
      %s73 = sshll.u32 [#allocation7], 4
      %s74 = int_to_ptr.vmem [resolvable:$true] %s73
      %79 = dma.hbm_to_vmem [thread:$0]  %s72, 1152, %s74, [#allocation6], 64, 64, 4
    $region13: #{tpu_custom_call.1} parent=1 // pred_fallthru
      _
    // Predicated region
    $region14: #{tpu_custom_call.1} parent=1 // pred_check
      _
    $region15: #{tpu_custom_call.1} parent=1 // pred_check_branch
      %81 = sbr.rel (0) target = $region17
    $region16: #{tpu_custom_call.1} parent=1 // pred_region
      %83 = vsyncadd [#allocation9], 0
      %s84 = sshll.u32 %s3, 4
      %s85 = int_to_ptr.hbm [resolvable:$true] %s84
      %s86 = sshll.u32 [#allocation8], 4
      %s87 = int_to_ptr.vmem [resolvable:$true] %s86
      %92 = dma.hbm_to_vmem [thread:$0]  %s85, 1216, %s87, [#allocation9], 64, 64, 4
    $region17: #{tpu_custom_call.1} parent=1 // pred_fallthru
      _
    // Predicated region
    $region18: #{tpu_custom_call.1} parent=1 // pred_check
      _
    $region19: #{tpu_custom_call.1} parent=1 // pred_check_branch
      %94 = sbr.rel (0) target = $region21
    $region20: #{tpu_custom_call.1} parent=1 // pred_region
      %96 = vsyncadd [#allocation9], 0
      %s97 = sshll.u32 %s4, 4
      %s98 = int_to_ptr.hbm [resolvable:$true] %s97
      %s99 = sshll.u32 [#allocation10], 4
      %s100 = int_to_ptr.vmem [resolvable:$true] %s99
      %105 = dma.hbm_to_vmem [thread:$0]  %s98, 1408, %s100, [#allocation9], 64, 64, 4
    $region21: #{tpu_custom_call.1} parent=1 // pred_fallthru
      _
    // Predicated region
    $region22: #{tpu_custom_call.1} parent=1 // pred_check
      _
    $region23: #{tpu_custom_call.1} parent=1 // pred_check_branch
      %107 = sbr.rel (0) target = $region25
    $region24: #{tpu_custom_call.1} parent=1 // pred_region
      %109 = vsyncadd [#allocation12], 0
      %s110 = sshll.u32 %s5, 4
      %s111 = int_to_ptr.hbm [resolvable:$true] %s110
      %s112 = sshll.u32 [#allocation11], 4
      %s113 = int_to_ptr.vmem [resolvable:$true] %s112
      %118 = dma.hbm_to_vmem [thread:$0]  %s111, 1792, %s113, [#allocation12], 64, 64, 4
    $region25: #{tpu_custom_call.1} parent=1 // pred_fallthru
      _
    // Predicated region
    $region26: #{tpu_custom_call.1} parent=1 // pred_check
      _
    $region27: #{tpu_custom_call.1} parent=1 // pred_check_branch
      %120 = sbr.rel (0) target = $region29
    $region28: #{tpu_custom_call.1} parent=1 // pred_region
      %122 = vsyncadd [#allocation12], 0
      %s123 = sshll.u32 %s6, 4
      %s124 = int_to_ptr.hbm [resolvable:$true] %s123
      %s125 = sshll.u32 [#allocation13], 4
      %s126 = int_to_ptr.vmem [resolvable:$true] %s125
      %131 = dma.hbm_to_vmem [thread:$0]  %s124, 2560, %s126, [#allocation12], 64, 64, 4
    $region29: #{tpu_custom_call.1} parent=1 // pred_fallthru
      _
    // Predicated region
    $region30: #{tpu_custom_call.1} parent=1 // pred_check
      _
    $region31: #{tpu_custom_call.1} parent=1 // pred_check_branch
      %133 = sbr.rel (0) target = $region33
    $region32: #{tpu_custom_call.1} parent=1 // pred_region
      _
    $region33: #{tpu_custom_call.1} parent=1 // pred_fallthru
      _
    // Predicated region
    $region34: #{tpu_custom_call.1} parent=1 // pred_check
      _
    $region35: #{tpu_custom_call.1} parent=1 // pred_check_branch
      %135 = sbr.rel (0) target = $region37
    $region36: #{tpu_custom_call.1} parent=1 // pred_region
      _
    $region37: #{tpu_custom_call.1} parent=1 // pred_fallthru
      _
    // Predicated region
    $region38: #{tpu_custom_call.1} parent=1 // pred_check
      _
    $region39: #{tpu_custom_call.1} parent=1 // pred_check_branch
      %137 = sbr.rel (0) target = $region41
    $region40: #{tpu_custom_call.1} parent=1 // pred_region
      _
    $region41: #{tpu_custom_call.1} parent=1 // pred_fallthru
      _
    // Predicated region
    $region42: #{tpu_custom_call.1} parent=1 // pred_check
      _
    $region43: #{tpu_custom_call.1} parent=1 // pred_check_branch
      %139 = sbr.rel (0) target = $region45
    $region44: #{tpu_custom_call.1} parent=1 // pred_region
      _
    $region45: #{tpu_custom_call.1} parent=1 // pred_fallthru
      _
    // Predicated region
    $region46: #{tpu_custom_call.1} parent=1 // pred_check
      _
    $region47: #{tpu_custom_call.1} parent=1 // pred_check_branch
      %141 = sbr.rel (0) target = $region49
    $region48: #{tpu_custom_call.1} parent=1 // pred_region
      _
    $region49: #{tpu_custom_call.1} parent=1 // pred_fallthru
      _
    // Predicated region
    $region50: #{tpu_custom_call.1} parent=1 // pred_check
      _
    $region51: #{tpu_custom_call.1} parent=1 // pred_check_branch
      %143 = sbr.rel (0) target = $region53
    $region52: #{tpu_custom_call.1} parent=1 // pred_region
      %145 = vsyncadd [#allocation15], 0
      %s147 = sshll.u32 %s12, 4
      %s148 = int_to_ptr.hbm [resolvable:$true] %s147
      %s149 = sshll.u32 [#allocation14], 4
      %s150 = int_to_ptr.vmem [resolvable:$true] %s149
      %152 = dma.hbm_to_vmem [thread:$0]  %s148, 32, %s150, [#allocation15]
    $region53: #{tpu_custom_call.1} parent=1 // pred_fallthru
      _
    // Predicated region
    $region54: #{tpu_custom_call.1} parent=1 // pred_check
      _
    $region55: #{tpu_custom_call.1} parent=1 // pred_check_branch
      %154 = sbr.rel (0) target = $region57
    $region56: #{tpu_custom_call.1} parent=1 // pred_region
      _
    $region57: #{tpu_custom_call.1} parent=1 // pred_fallthru
      _
    // Predicated region
    $region58: #{tpu_custom_call.1} parent=1 // pred_check
      _
    $region59: #{tpu_custom_call.1} parent=1 // pred_check_branch
      %156 = sbr.rel (0) target = $region61
    $region60: #{tpu_custom_call.1} parent=1 // pred_region
      %158 = vsyncadd [#allocation15], 0
      %s160 = sshll.u32 %s14, 4
      %s161 = int_to_ptr.hbm [resolvable:$true] %s160
      %s162 = sshll.u32 [#allocation16], 4
      %s163 = int_to_ptr.vmem [resolvable:$true] %s162
      %165 = dma.hbm_to_vmem [thread:$0]  %s161, 32, %s163, [#allocation15]
    $region61: #{tpu_custom_call.1} parent=1 // pred_fallthru
      _
    // Predicated region
    $region62: #{tpu_custom_call.1} parent=1 // pred_check
      _
    $region63: #{tpu_custom_call.1} parent=1 // pred_check_branch
      %167 = sbr.rel (0) target = $region65
    $region64: #{tpu_custom_call.1} parent=1 // pred_region
      _
    $region65: #{tpu_custom_call.1} parent=1 // pred_fallthru
      _
    // Predicated region
    $region66: #{tpu_custom_call.1} parent=1 // pred_check
      _
    $region67: #{tpu_custom_call.1} parent=1 // pred_check_branch
      %169 = sbr.rel (0) target = $region69
    $region68: #{tpu_custom_call.1} parent=1 // pred_region
      %171 = vsyncadd [#allocation18], 0
      %s173 = sshll.u32 %s16, 4
      %s174 = int_to_ptr.hbm [resolvable:$true] %s173
      %s175 = sshll.u32 [#allocation17], 4
      %s176 = int_to_ptr.vmem [resolvable:$true] %s175
      %178 = dma.hbm_to_vmem [thread:$0]  %s174, 32, %s176, [#allocation18]
    $region69: #{tpu_custom_call.1} parent=1 // pred_fallthru
      _
    // Predicated region
    $region70: #{tpu_custom_call.1} parent=1 // pred_check
      _
    $region71: #{tpu_custom_call.1} parent=1 // pred_check_branch
      %180 = sbr.rel (0) target = $region73
    $region72: #{tpu_custom_call.1} parent=1 // pred_region
      _
    $region73: #{tpu_custom_call.1} parent=1 // pred_fallthru
      _
    // Predicated region
    $region74: #{tpu_custom_call.1} parent=1 // pred_check
      _
    $region75: #{tpu_custom_call.1} parent=1 // pred_check_branch
      %182 = sbr.rel (0) target = $region77
    $region76: #{tpu_custom_call.1} parent=1 // pred_region
      %184 = vsyncadd [#allocation18], 0
      %s186 = sshll.u32 %s18, 4
      %s187 = int_to_ptr.hbm [resolvable:$true] %s186
      %s188 = sshll.u32 [#allocation19], 4
      %s189 = int_to_ptr.vmem [resolvable:$true] %s188
      %191 = dma.hbm_to_vmem [thread:$0]  %s187, 32, %s189, [#allocation18]
    $region77: #{tpu_custom_call.1} parent=1 // pred_fallthru
      _
    // Predicated region
    $region78: #{tpu_custom_call.1} parent=1 // pred_check
      _
    $region79: #{tpu_custom_call.1} parent=1 // pred_check_branch
      %193 = sbr.rel (0) target = $region81
    $region80: #{tpu_custom_call.1} parent=1 // pred_region
      _
    $region81: #{tpu_custom_call.1} parent=1 // pred_fallthru
      _
    // Predicated region
    $region82: #{tpu_custom_call.1} parent=1 // pred_check
      _
    $region83: #{tpu_custom_call.1} parent=1 // pred_check_branch
      %195 = sbr.rel (0) target = $region85
    $region84: #{tpu_custom_call.1} parent=1 // pred_region
      %197 = vsyncadd [#allocation21], 0
      %s199 = sshll.u32 %s20, 4
      %s200 = int_to_ptr.hbm [resolvable:$true] %s199
      %s201 = sshll.u32 [#allocation20], 4
      %s202 = int_to_ptr.vmem [resolvable:$true] %s201
      %204 = dma.hbm_to_vmem [thread:$0]  %s200, 32, %s202, [#allocation21]
    $region85: #{tpu_custom_call.1} parent=1 // pred_fallthru
      _
    // Predicated region
    $region86: #{tpu_custom_call.1} parent=1 // pred_check
      _
    $region87: #{tpu_custom_call.1} parent=1 // pred_check_branch
      %206 = sbr.rel (0) target = $region89
    $region88: #{tpu_custom_call.1} parent=1 // pred_region
      _
    $region89: #{tpu_custom_call.1} parent=1 // pred_fallthru
      _
    // Predicated region
    $region90: #{tpu_custom_call.1} parent=1 // pred_check
      _
    $region91: #{tpu_custom_call.1} parent=1 // pred_check_branch
      %208 = sbr.rel (0) target = $region93
    $region92: #{tpu_custom_call.1} parent=1 // pred_region
      %210 = vsyncadd [#allocation21], 0
      %s212 = sshll.u32 %s22, 4
      %s213 = int_to_ptr.hbm [resolvable:$true] %s212
      %s214 = sshll.u32 [#allocation22], 4
      %s215 = int_to_ptr.vmem [resolvable:$true] %s214
      %217 = dma.hbm_to_vmem [thread:$0]  %s213, 32, %s215, [#allocation21]
    $region93: #{tpu_custom_call.1} parent=1 // pred_fallthru
      _
    // Predicated region
    $region94: #{tpu_custom_call.1} parent=1 // pred_check
      _
    $region95: #{tpu_custom_call.1} parent=1 // pred_check_branch
      %219 = sbr.rel (0) target = $region97
    $region96: #{tpu_custom_call.1} parent=1 // pred_region
      _
    $region97: #{tpu_custom_call.1} parent=1 // pred_fallthru
      _
    // Predicated region
    $region98: #{tpu_custom_call.1} parent=1 // pred_check
      _
    $region99: #{tpu_custom_call.1} parent=1 // pred_check_branch
      %221 = sbr.rel (0) target = $region101
    $region100: #{tpu_custom_call.1} parent=1 // pred_region
      %223 = vsyncadd [#allocation24], 0
      %s225 = sshll.u32 %s24, 4
      %s226 = int_to_ptr.hbm [resolvable:$true] %s225
      %s227 = sshll.u32 [#allocation23], 4
      %s228 = int_to_ptr.vmem [resolvable:$true] %s227
      %230 = dma.hbm_to_vmem [thread:$0]  %s226, 32, %s228, [#allocation24]
    $region101: #{tpu_custom_call.1} parent=1 // pred_fallthru
      _
    // Predicated region
    $region102: #{tpu_custom_call.1} parent=1 // pred_check
      _
    $region103: #{tpu_custom_call.1} parent=1 // pred_check_branch
      %232 = sbr.rel (0) target = $region105
    $region104: #{tpu_custom_call.1} parent=1 // pred_region
      %234 = vsyncadd [#allocation24], 0
      %s235 = sshll.u32 %s25, 4
      %s236 = int_to_ptr.hbm [resolvable:$true] %s235
      %s237 = sshll.u32 [#allocation25], 4
      %s238 = int_to_ptr.vmem [resolvable:$true] %s237
      %243 = dma.hbm_to_vmem [thread:$0]  %s236, 2048, %s238, [#allocation24], 64, 64, 4
    $region105: #{tpu_custom_call.1} parent=1 // pred_fallthru
      _
    // Predicated region
    $region106: #{tpu_custom_call.1} parent=1 // pred_check
      _
    $region107: #{tpu_custom_call.1} parent=1 // pred_check_branch
      %245 = sbr.rel (0) target = $region109
    $region108: #{tpu_custom_call.1} parent=1 // pred_region
      _
    $region109: #{tpu_custom_call.1} parent=1 // pred_fallthru
      _
    // Predicated region
    $region110: #{tpu_custom_call.1} parent=1 // pred_check
      _
    $region111: #{tpu_custom_call.1} parent=1 // pred_check_branch
      %247 = sbr.rel (0) target = $region113
    $region112: #{tpu_custom_call.1} parent=1 // pred_region
      %249 = dma.done [#allocation3], 1024
    $region113: #{tpu_custom_call.1} parent=1 // pred_fallthru
      _
    // Predicated region
    $region114: #{tpu_custom_call.1} parent=1 // pred_check
      _
    $region115: #{tpu_custom_call.1} parent=1 // pred_check_branch
      %251 = sbr.rel (0) target = $region117
    $region116: #{tpu_custom_call.1} parent=1 // pred_region
      %253 = dma.done [#allocation6], 576
    $region117: #{tpu_custom_call.1} parent=1 // pred_fallthru
      _
    // Predicated region
    $region118: #{tpu_custom_call.1} parent=1 // pred_check
      _
    $region119: #{tpu_custom_call.1} parent=1 // pred_check_branch
      %255 = sbr.rel (0) target = $region121
    $region120: #{tpu_custom_call.1} parent=1 // pred_region
      %257 = dma.done [#allocation6], 1152
    $region121: #{tpu_custom_call.1} parent=1 // pred_fallthru
      _
    // Predicated region
    $region122: #{tpu_custom_call.1} parent=1 // pred_check
      _
    $region123: #{tpu_custom_call.1} parent=1 // pred_check_branch
      %259 = sbr.rel (0) target = $region125
    $region124: #{tpu_custom_call.1} parent=1 // pred_region
      %261 = dma.done [#allocation9], 1216
    $region125: #{tpu_custom_call.1} parent=1 // pred_fallthru
      _
    // Predicated region
    $region126: #{tpu_custom_call.1} parent=1 // pred_check
      _
    $region127: #{tpu_custom_call.1} parent=1 // pred_check_branch
      %263 = sbr.rel (0) target = $region129
    $region128: #{tpu_custom_call.1} parent=1 // pred_region
      %265 = dma.done [#allocation9], 1408
    $region129: #{tpu_custom_call.1} parent=1 // pred_fallthru
      _
    // Predicated region
    $region130: #{tpu_custom_call.1} parent=1 // pred_check
      _
    $region131: #{tpu_custom_call.1} parent=1 // pred_check_branch
      %267 = sbr.rel (0) target = $region133
    $region132: #{tpu_custom_call.1} parent=1 // pred_region
      %269 = dma.done [#allocation12], 1792
    $region133: #{tpu_custom_call.1} parent=1 // pred_fallthru
      _
    // Predicated region
    $region134: #{tpu_custom_call.1} parent=1 // pred_check
      _
    $region135: #{tpu_custom_call.1} parent=1 // pred_check_branch
      %271 = sbr.rel (0) target = $region137
    $region136: #{tpu_custom_call.1} parent=1 // pred_region
      %273 = dma.done [#allocation12], 2560
    $region137: #{tpu_custom_call.1} parent=1 // pred_fallthru
      _
    // Predicated region
    $region138: #{tpu_custom_call.1} parent=1 // pred_check
      _
    $region139: #{tpu_custom_call.1} parent=1 // pred_check_branch
      %275 = sbr.rel (0) target = $region141
    $region140: #{tpu_custom_call.1} parent=1 // pred_region
      %277 = dma.done [#allocation15], 32
    $region141: #{tpu_custom_call.1} parent=1 // pred_fallthru
      _
    // Predicated region
    $region142: #{tpu_custom_call.1} parent=1 // pred_check
      _
    $region143: #{tpu_custom_call.1} parent=1 // pred_check_branch
      %279 = sbr.rel (0) target = $region145
    $region144: #{tpu_custom_call.1} parent=1 // pred_region
      %281 = dma.done [#allocation15], 32
    $region145: #{tpu_custom_call.1} parent=1 // pred_fallthru
      _
    // Predicated region
    $region146: #{tpu_custom_call.1} parent=1 // pred_check
      _
    $region147: #{tpu_custom_call.1} parent=1 // pred_check_branch
      %283 = sbr.rel (0) target = $region149
    $region148: #{tpu_custom_call.1} parent=1 // pred_region
      %285 = dma.done [#allocation18], 32
    $region149: #{tpu_custom_call.1} parent=1 // pred_fallthru
      _
    // Predicated region
    $region150: #{tpu_custom_call.1} parent=1 // pred_check
      _
    $region151: #{tpu_custom_call.1} parent=1 // pred_check_branch
      %287 = sbr.rel (0) target = $region153
    $region152: #{tpu_custom_call.1} parent=1 // pred_region
      %289 = dma.done [#allocation18], 32
    $region153: #{tpu_custom_call.1} parent=1 // pred_fallthru
      _
    // Predicated region
    $region154: #{tpu_custom_call.1} parent=1 // pred_check
      _
    $region155: #{tpu_custom_call.1} parent=1 // pred_check_branch
      %291 = sbr.rel (0) target = $region157
    $region156: #{tpu_custom_call.1} parent=1 // pred_region
      %293 = dma.done [#allocation21], 32
    $region157: #{tpu_custom_call.1} parent=1 // pred_fallthru
      _
    // Predicated region
    $region158: #{tpu_custom_call.1} parent=1 // pred_check
      _
    $region159: #{tpu_custom_call.1} parent=1 // pred_check_branch
      %295 = sbr.rel (0) target = $region161
    $region160: #{tpu_custom_call.1} parent=1 // pred_region
      %297 = dma.done [#allocation21], 32
    $region161: #{tpu_custom_call.1} parent=1 // pred_fallthru
      _
    // Predicated region
    $region162: #{tpu_custom_call.1} parent=1 // pred_check
      _
    $region163: #{tpu_custom_call.1} parent=1 // pred_check_branch
      %299 = sbr.rel (0) target = $region165
    $region164: #{tpu_custom_call.1} parent=1 // pred_region
      %301 = dma.done [#allocation24], 32
    $region165: #{tpu_custom_call.1} parent=1 // pred_fallthru
      _
    // Predicated region
    $region166: #{tpu_custom_call.1} parent=1 // pred_check
      _
    $region167: #{tpu_custom_call.1} parent=1 // pred_check_branch
      %303 = sbr.rel (0) target = $region169
    $region168: #{tpu_custom_call.1} parent=1 // pred_region
      %305 = dma.done [#allocation24], 2048
    $region169: #{tpu_custom_call.1} parent=1 // pred_fallthru
      _
    %v307 = vld [vmem:[#allocation2] sm:$0xf]
    %v308 = vld [vmem:[#allocation2 + $0x4] sm:$0xf]
    %v309 = vld [vmem:[#allocation2 + $0x8] sm:$0xf]
    %v310 = vld [vmem:[#allocation2 + $0xc] sm:$0xf]
    %v311 = vld [vmem:[#allocation2 + $0x10] sm:$0xf]
    %v312 = vld [vmem:[#allocation2 + $0x14] sm:$0xf]
    %v313 = vld [vmem:[#allocation2 + $0x18] sm:$0xf]
    %v314 = vld [vmem:[#allocation2 + $0x1c] sm:$0xf]
    %v315 = vld [vmem:[#allocation2 + $0x20] sm:$0xf]
    %v316 = vld [vmem:[#allocation2 + $0x24] sm:$0xf]
    %v317 = vld [vmem:[#allocation2 + $0x28] sm:$0xf]
    %v318 = vld [vmem:[#allocation2 + $0x2c] sm:$0xf]
    %v319 = vld [vmem:[#allocation2 + $0x30] sm:$0xf]
    %v320 = vld [vmem:[#allocation2 + $0x34] sm:$0xf]
    %v321 = vld [vmem:[#allocation2 + $0x38] sm:$0xf]
    %v322 = vld [vmem:[#allocation2 + $0x3c] sm:$0xf]
    %v339 = vunpack.c.l.b16 %v307
    %v340 = vunpack.c.l.b16 %v308
    %v341 = vunpack.c.l.b16 %v309
    %v342 = vunpack.c.l.b16 %v310
    %v343 = vunpack.c.l.b16 %v311
    %v344 = vunpack.c.l.b16 %v312
    %v345 = vunpack.c.l.b16 %v313
    %v346 = vunpack.c.l.b16 %v314
    %v347 = vunpack.c.l.b16 %v315
    %v348 = vunpack.c.l.b16 %v316
    %v349 = vunpack.c.l.b16 %v317
    %v350 = vunpack.c.l.b16 %v318
    %v351 = vunpack.c.l.b16 %v319
    %v352 = vunpack.c.l.b16 %v320
    %v353 = vunpack.c.l.b16 %v321
    %v354 = vunpack.c.l.b16 %v322
    %v355 = vpack.c.b16 %v340, %v339
    %v356 = vpack.c.b16 %v342, %v341
    %v357 = vpack.c.b16 %v344, %v343
    %v358 = vpack.c.b16 %v346, %v345
    %v359 = vpack.c.b16 %v348, %v347
    %v360 = vpack.c.b16 %v350, %v349
    %v361 = vpack.c.b16 %v352, %v351
    %v362 = vpack.c.b16 %v354, %v353
    %363 = vrot.lane.b32.xlu0 %v355, 2
    %v364 = vpop.permute.xlu0 %363
    %365 = vrot.lane.b32.xlu0 %v356, 2
    %v366 = vpop.permute.xlu0 %365
    %367 = vrot.lane.b32.xlu0 %v357, 2
    %v368 = vpop.permute.xlu0 %367
    %369 = vrot.lane.b32.xlu0 %v358, 2
    %v370 = vpop.permute.xlu0 %369
    %371 = vrot.lane.b32.xlu0 %v359, 2
    %v372 = vpop.permute.xlu0 %371
    %373 = vrot.lane.b32.xlu0 %v360, 2
    %v374 = vpop.permute.xlu0 %373
    %375 = vrot.lane.b32.xlu0 %v361, 2
    %v376 = vpop.permute.xlu0 %375
    %377 = vrot.lane.b32.xlu0 %v362, 2
    %v378 = vpop.permute.xlu0 %377
    %vm379 = vcmask 15360
    %v382 = vsel %vm379, 0, %v364
    %v384 = vsel %vm379, 0, %v366
    %v386 = vsel %vm379, 0, %v368
    %v388 = vsel %vm379, 0, %v370
    %v390 = vsel %vm379, 0, %v372
    %v392 = vsel %vm379, 0, %v374
    %v394 = vsel %vm379, 0, %v376
    %v396 = vsel %vm379, 0, %v378
    %v397 = vsel %vm379, %v364, 0
    %v398 = vsel %vm379, %v366, 0
    %v399 = vsel %vm379, %v368, 0
    %v400 = vsel %vm379, %v370, 0
    %v401 = vsel %vm379, %v372, 0
    %v402 = vsel %vm379, %v374, 0
    %v403 = vsel %vm379, %v376, 0
    %v404 = vsel %vm379, %v378, 0
    %v405 = vld [vmem:[#allocation5] sm:$0xf]
    %v406 = vld [vmem:[#allocation5 + $0x4] sm:$0xf]
    %v407 = vld [vmem:[#allocation5 + $0x8] sm:$0xf]
    %v408 = vld [vmem:[#allocation5 + $0xc] sm:$0xf]
    %v409 = vld [vmem:[#allocation5 + $0x10] sm:$0xf]
    %v410 = vld [vmem:[#allocation5 + $0x14] sm:$0xf]
    %v411 = vld [vmem:[#allocation5 + $0x18] sm:$0xf]
    %v412 = vld [vmem:[#allocation5 + $0x1c] sm:$0xf]
    %v413 = vld [vmem:[#allocation5 + $0x20] sm:$0x3]
    %v423 = vunpack.c.l.b16 %v405
    %v424 = vunpack.c.l.b16 %v406
    %v425 = vunpack.c.l.b16 %v407
    %v426 = vunpack.c.l.b16 %v408
    %v427 = vunpack.c.l.b16 %v409
    %v428 = vunpack.c.l.b16 %v410
    %v429 = vunpack.c.l.b16 %v411
    %v430 = vunpack.c.l.b16 %v412
    %v431 = vunpack.c.l.b16 %v413
    %v432 = vpack.c.b16 %v424, %v423
    %v433 = vpack.c.b16 %v426, %v425
    %v434 = vpack.c.b16 %v428, %v427
    %v435 = vpack.c.b16 %v430, %v429
    %v436 = vpack.c.b16 %v431, %v431
    %vm441 = vcmask 547840
    %v442 = vsel %vm441, %v382, 0
    %v444 = vsel %vm441, %v384, 0
    %v446 = vsel %vm441, %v386, 0
    %v448 = vsel %vm441, %v388, 0
    %v450 = vsel %vm441, %v390, 0
    %v452 = vsel %vm441, %v392, 0
    %v454 = vsel %vm441, %v394, 0
    %v456 = vsel %vm441, %v396, 0
    %vm458 = vcmask 1040384
    %vm459 = vcmask 1041408
    %v460 = vsel %vm458, 4294967295, 65535
    %v461 = vsel %vm459, %v460, 0
    %v463 = vand.u32 %v436, %v461
    %465 = vmatpush.bf16.msra.mxu0 0
    %466 = vmatpush.bf16.msra.mxu0 0
    %467 = vmatpush.bf16.msra.mxu0 0
    %468 = vmatpush.bf16.msra.mxu0 %v463
    %469 = vmatpush.bf16.msra.mxu0 %v435
    %470 = vmatpush.bf16.msra.mxu0 %v434
    %471 = vmatpush.bf16.msra.mxu0 %v433
    %472 = vmatpush.bf16.msra.mxu0 %v432
    %473 = vmatmul.bf16.gmra.mxu0 %v442
    %v474 = vpop.f32.mrf.mxu0
    %v475 = vadd.f32 0.0, %v474
    %v476 = vpop.f32.mrf.mxu0
    %v477 = vadd.f32 0.0, %v476
    %478 = vmatmul.bf16.gmra.mxu0 %v444
    %v479 = vpop.f32.mrf.mxu0
    %v480 = vadd.f32 0.0, %v479
    %v481 = vpop.f32.mrf.mxu0
    %v482 = vadd.f32 0.0, %v481
    %483 = vmatmul.bf16.gmra.mxu0 %v446
    %v484 = vpop.f32.mrf.mxu0
    %v485 = vadd.f32 0.0, %v484
    %v486 = vpop.f32.mrf.mxu0
    %v487 = vadd.f32 0.0, %v486
    %488 = vmatmul.bf16.gmra.mxu0 %v448
    %v489 = vpop.f32.mrf.mxu0
    %v490 = vadd.f32 0.0, %v489
    %v491 = vpop.f32.mrf.mxu0
    %v492 = vadd.f32 0.0, %v491
    %493 = vmatmul.bf16.gmra.mxu0 %v450
    %v494 = vpop.f32.mrf.mxu0
    %v495 = vadd.f32 0.0, %v494
    %v496 = vpop.f32.mrf.mxu0
    %v497 = vadd.f32 0.0, %v496
    %498 = vmatmul.bf16.gmra.mxu0 %v452
    %v499 = vpop.f32.mrf.mxu0
    %v500 = vadd.f32 0.0, %v499
    %v501 = vpop.f32.mrf.mxu0
    %v502 = vadd.f32 0.0, %v501
    %503 = vmatmul.bf16.gmra.mxu0 %v454
    %v504 = vpop.f32.mrf.mxu0
    %v505 = vadd.f32 0.0, %v504
    %v506 = vpop.f32.mrf.mxu0
    %v507 = vadd.f32 0.0, %v506
    %508 = vmatmul.bf16.gmra.mxu0 %v456
    %v509 = vpop.f32.mrf.mxu0
    %v510 = vadd.f32 0.0, %v509
    %v511 = vpop.f32.mrf.mxu0
    %v512 = vadd.f32 0.0, %v511
    %513 = vdwg.mxu0
    %530 = vrot.lane.b32.xlu0 %v382, 64
    %v531 = vpop.permute.xlu0 %530
    %532 = vrot.lane.b32.xlu0 %v397, 64
    %v533 = vpop.permute.xlu0 %532
    %534 = vrot.lane.b32.xlu0 %v384, 64
    %v535 = vpop.permute.xlu0 %534
    %536 = vrot.lane.b32.xlu0 %v398, 64
    %v537 = vpop.permute.xlu0 %536
    %538 = vrot.lane.b32.xlu0 %v386, 64
    %v539 = vpop.permute.xlu0 %538
    %540 = vrot.lane.b32.xlu0 %v399, 64
    %v541 = vpop.permute.xlu0 %540
    %542 = vrot.lane.b32.xlu0 %v388, 64
    %v543 = vpop.permute.xlu0 %542
    %544 = vrot.lane.b32.xlu0 %v400, 64
    %v545 = vpop.permute.xlu0 %544
    %546 = vrot.lane.b32.xlu0 %v390, 64
    %v547 = vpop.permute.xlu0 %546
    %548 = vrot.lane.b32.xlu0 %v401, 64
    %v549 = vpop.permute.xlu0 %548
    %550 = vrot.lane.b32.xlu0 %v392, 64
    %v551 = vpop.permute.xlu0 %550
    %552 = vrot.lane.b32.xlu0 %v402, 64
    %v553 = vpop.permute.xlu0 %552
    %554 = vrot.lane.b32.xlu0 %v394, 64
    %v555 = vpop.permute.xlu0 %554
    %556 = vrot.lane.b32.xlu0 %v403, 64
    %v557 = vpop.permute.xlu0 %556
    %558 = vrot.lane.b32.xlu0 %v396, 64
    %v559 = vpop.permute.xlu0 %558
    %560 = vrot.lane.b32.xlu0 %v404, 64
    %v561 = vpop.permute.xlu0 %560
    %vm562 = vcmask 523264
    %v563 = vsel %vm562, %v531, %v533
    %v564 = vsel %vm562, %v535, %v537
    %v565 = vsel %vm562, %v539, %v541
    %v566 = vsel %vm562, %v543, %v545
    %v567 = vsel %vm562, %v547, %v549
    %v568 = vsel %vm562, %v551, %v553
    %v569 = vsel %vm562, %v555, %v557
    %v570 = vsel %vm562, %v559, %v561
    %v572 = vsel %vm441, %v563, 0
    %v575 = vsel %vm441, %v564, 0
    %v578 = vsel %vm441, %v565, 0
    %v581 = vsel %vm441, %v566, 0
    %v584 = vsel %vm441, %v567, 0
    %v587 = vsel %vm441, %v568, 0
    %v590 = vsel %vm441, %v569, 0
    %v593 = vsel %vm441, %v570, 0
    %595 = vmatpush.bf16.msra.mxu0 0
    %596 = vmatpush.bf16.msra.mxu0 0
    %597 = vmatpush.bf16.msra.mxu0 0
    %598 = vmatpush.bf16.msra.mxu0 %v463
    %599 = vmatpush.bf16.msra.mxu0 %v435
    %600 = vmatpush.bf16.msra.mxu0 %v434
    %601 = vmatpush.bf16.msra.mxu0 %v433
    %602 = vmatpush.bf16.msra.mxu0 %v432
    %603 = vmatmul.bf16.gmra.mxu0 %v572
    %v604 = vpop.f32.mrf.mxu0
    %v605 = vadd.f32 0.0, %v604
    %v606 = vpop.f32.mrf.mxu0
    %v607 = vadd.f32 0.0, %v606
    %608 = vmatmul.bf16.gmra.mxu0 %v575
    %v609 = vpop.f32.mrf.mxu0
    %v610 = vadd.f32 0.0, %v609
    %v611 = vpop.f32.mrf.mxu0
    %v612 = vadd.f32 0.0, %v611
    %613 = vmatmul.bf16.gmra.mxu0 %v578
    %v614 = vpop.f32.mrf.mxu0
    %v615 = vadd.f32 0.0, %v614
    %v616 = vpop.f32.mrf.mxu0
    %v617 = vadd.f32 0.0, %v616
    %618 = vmatmul.bf16.gmra.mxu0 %v581
    %v619 = vpop.f32.mrf.mxu0
    %v620 = vadd.f32 0.0, %v619
    %v621 = vpop.f32.mrf.mxu0
    %v622 = vadd.f32 0.0, %v621
    %623 = vmatmul.bf16.gmra.mxu0 %v584
    %v624 = vpop.f32.mrf.mxu0
    %v625 = vadd.f32 0.0, %v624
    %v626 = vpop.f32.mrf.mxu0
    %v627 = vadd.f32 0.0, %v626
    %628 = vmatmul.bf16.gmra.mxu0 %v587
    %v629 = vpop.f32.mrf.mxu0
    %v630 = vadd.f32 0.0, %v629
    %v631 = vpop.f32.mrf.mxu0
    %v632 = vadd.f32 0.0, %v631
    %633 = vmatmul.bf16.gmra.mxu0 %v590
    %v634 = vpop.f32.mrf.mxu0
    %v635 = vadd.f32 0.0, %v634
    %v636 = vpop.f32.mrf.mxu0
    %v637 = vadd.f32 0.0, %v636
    %638 = vmatmul.bf16.gmra.mxu0 %v593
    %v639 = vpop.f32.mrf.mxu0
    %v640 = vadd.f32 0.0, %v639
    %v641 = vpop.f32.mrf.mxu0
    %v642 = vadd.f32 0.0, %v641
    %643 = vdwg.mxu0
    %v644 = vld [vmem:[%s7] sm:$0x3]
    %v646 = vperm.slane %v644, 0
    %v647 = vperm.slane %v644, 1
    %v650 = vadd.f32 %v475, %v646
    %v651 = vadd.f32 %v605, %v647
    %v652 = vadd.f32 %v477, %v646
    %v653 = vadd.f32 %v607, %v647
    %v654 = vadd.f32 %v480, %v646
    %v655 = vadd.f32 %v610, %v647
    %v656 = vadd.f32 %v482, %v646
    %v657 = vadd.f32 %v612, %v647
    %v658 = vadd.f32 %v485, %v646
    %v659 = vadd.f32 %v615, %v647
    %v660 = vadd.f32 %v487, %v646
    %v661 = vadd.f32 %v617, %v647
    %v662 = vadd.f32 %v490, %v646
    %v663 = vadd.f32 %v620, %v647
    %v664 = vadd.f32 %v492, %v646
    %v665 = vadd.f32 %v622, %v647
    %v666 = vadd.f32 %v495, %v646
    %v667 = vadd.f32 %v625, %v647
    %v668 = vadd.f32 %v497, %v646
    %v669 = vadd.f32 %v627, %v647
    %v670 = vadd.f32 %v500, %v646
    %v671 = vadd.f32 %v630, %v647
    %v672 = vadd.f32 %v502, %v646
    %v673 = vadd.f32 %v632, %v647
    %v674 = vadd.f32 %v505, %v646
    %v675 = vadd.f32 %v635, %v647
    %v676 = vadd.f32 %v507, %v646
    %v677 = vadd.f32 %v637, %v647
    %v678 = vadd.f32 %v510, %v646
    %v679 = vadd.f32 %v640, %v647
    %v680 = vadd.f32 %v512, %v646
    %v681 = vadd.f32 %v642, %v647
    %vm682 = vcmp.gt.f32.partialorder %v650, 0.0
    %vm683 = vcmp.gt.f32.partialorder %v651, 0.0
    %vm684 = vcmp.gt.f32.partialorder %v652, 0.0
    %vm685 = vcmp.gt.f32.partialorder %v653, 0.0
    %vm686 = vcmp.gt.f32.partialorder %v654, 0.0
    %vm687 = vcmp.gt.f32.partialorder %v655, 0.0
    %vm688 = vcmp.gt.f32.partialorder %v656, 0.0
    %vm689 = vcmp.gt.f32.partialorder %v657, 0.0
    %vm690 = vcmp.gt.f32.partialorder %v658, 0.0
    %vm691 = vcmp.gt.f32.partialorder %v659, 0.0
    %vm692 = vcmp.gt.f32.partialorder %v660, 0.0
    %vm693 = vcmp.gt.f32.partialorder %v661, 0.0
    %vm694 = vcmp.gt.f32.partialorder %v662, 0.0
    %vm695 = vcmp.gt.f32.partialorder %v663, 0.0
    %vm696 = vcmp.gt.f32.partialorder %v664, 0.0
    %vm697 = vcmp.gt.f32.partialorder %v665, 0.0
    %vm698 = vcmp.gt.f32.partialorder %v666, 0.0
    %vm699 = vcmp.gt.f32.partialorder %v667, 0.0
    %vm700 = vcmp.gt.f32.partialorder %v668, 0.0
    %vm701 = vcmp.gt.f32.partialorder %v669, 0.0
    %vm702 = vcmp.gt.f32.partialorder %v670, 0.0
    %vm703 = vcmp.gt.f32.partialorder %v671, 0.0
    %vm704 = vcmp.gt.f32.partialorder %v672, 0.0
    %vm705 = vcmp.gt.f32.partialorder %v673, 0.0
    %vm706 = vcmp.gt.f32.partialorder %v674, 0.0
    %vm707 = vcmp.gt.f32.partialorder %v675, 0.0
    %vm708 = vcmp.gt.f32.partialorder %v676, 0.0
    %vm709 = vcmp.gt.f32.partialorder %v677, 0.0
    %vm710 = vcmp.gt.f32.partialorder %v678, 0.0
    %vm711 = vcmp.gt.f32.partialorder %v679, 0.0
    %vm712 = vcmp.gt.f32.partialorder %v680, 0.0
    %vm713 = vcmp.gt.f32.partialorder %v681, 0.0
    %v714 = vmin.f32 %v650, 0.0
    %v715 = vmin.f32 %v651, 0.0
    %v716 = vmin.f32 %v652, 0.0
    %v717 = vmin.f32 %v653, 0.0
    %v718 = vmin.f32 %v654, 0.0
    %v719 = vmin.f32 %v655, 0.0
    %v720 = vmin.f32 %v656, 0.0
    %v721 = vmin.f32 %v657, 0.0
    %v722 = vmin.f32 %v658, 0.0
    %v723 = vmin.f32 %v659, 0.0
    %v724 = vmin.f32 %v660, 0.0
    %v725 = vmin.f32 %v661, 0.0
    %v726 = vmin.f32 %v662, 0.0
    %v727 = vmin.f32 %v663, 0.0
    %v728 = vmin.f32 %v664, 0.0
    %v729 = vmin.f32 %v665, 0.0
    %v730 = vmin.f32 %v666, 0.0
    %v731 = vmin.f32 %v667, 0.0
    %v732 = vmin.f32 %v668, 0.0
    %v733 = vmin.f32 %v669, 0.0
    %v734 = vmin.f32 %v670, 0.0
    %v735 = vmin.f32 %v671, 0.0
    %v736 = vmin.f32 %v672, 0.0
    %v737 = vmin.f32 %v673, 0.0
    %v738 = vmin.f32 %v674, 0.0
    %v739 = vmin.f32 %v675, 0.0
    %v740 = vmin.f32 %v676, 0.0
    %v741 = vmin.f32 %v677, 0.0
    %v742 = vmin.f32 %v678, 0.0
    %v743 = vmin.f32 %v679, 0.0
    %v744 = vmin.f32 %v680, 0.0
    %v745 = vmin.f32 %v681, 0.0
    %v746 = vmul.f32 %v714, 1.442695
    %v747 = vpow.pop %v746
    %v748 = vmul.f32 %v715, 1.442695
    %v749 = vpow.pop %v748
    %v750 = vmul.f32 %v716, 1.442695
    %v751 = vpow.pop %v750
    %v752 = vmul.f32 %v717, 1.442695
    %v753 = vpow.pop %v752
    %v754 = vmul.f32 %v718, 1.442695
    %v755 = vpow.pop %v754
    %v756 = vmul.f32 %v719, 1.442695
    %v757 = vpow.pop %v756
    %v758 = vmul.f32 %v720, 1.442695
    %v759 = vpow.pop %v758
    %v760 = vmul.f32 %v721, 1.442695
    %v761 = vpow.pop %v760
    %v762 = vmul.f32 %v722, 1.442695
    %v763 = vpow.pop %v762
    %v764 = vmul.f32 %v723, 1.442695
    %v765 = vpow.pop %v764
    %v766 = vmul.f32 %v724, 1.442695
    %v767 = vpow.pop %v766
    %v768 = vmul.f32 %v725, 1.442695
    %v769 = vpow.pop %v768
    %v770 = vmul.f32 %v726, 1.442695
    %v771 = vpow.pop %v770
    %v772 = vmul.f32 %v727, 1.442695
    %v773 = vpow.pop %v772
    %v774 = vmul.f32 %v728, 1.442695
    %v775 = vpow.pop %v774
    %v776 = vmul.f32 %v729, 1.442695
    %v777 = vpow.pop %v776
    %v778 = vmul.f32 %v730, 1.442695
    %v779 = vpow.pop %v778
    %v780 = vmul.f32 %v731, 1.442695
    %v781 = vpow.pop %v780
    %v782 = vmul.f32 %v732, 1.442695
    %v783 = vpow.pop %v782
    %v784 = vmul.f32 %v733, 1.442695
    %v785 = vpow.pop %v784
    %v786 = vmul.f32 %v734, 1.442695
    %v787 = vpow.pop %v786
    %v788 = vmul.f32 %v735, 1.442695
    %v789 = vpow.pop %v788
    %v790 = vmul.f32 %v736, 1.442695
    %v791 = vpow.pop %v790
    %v792 = vmul.f32 %v737, 1.442695
    %v793 = vpow.pop %v792
    %v794 = vmul.f32 %v738, 1.442695
    %v795 = vpow.pop %v794
    %v796 = vmul.f32 %v739, 1.442695
    %v797 = vpow.pop %v796
    %v798 = vmul.f32 %v740, 1.442695
    %v799 = vpow.pop %v798
    %v800 = vmul.f32 %v741, 1.442695
    %v801 = vpow.pop %v800
    %v802 = vmul.f32 %v742, 1.442695
    %v803 = vpow.pop %v802
    %v804 = vmul.f32 %v743, 1.442695
    %v805 = vpow.pop %v804
    %v806 = vmul.f32 %v744, 1.442695
    %v807 = vpow.pop %v806
    %v808 = vmul.f32 %v745, 1.442695
    %v809 = vpow.pop %v808
    %v810 = vsub.f32 %v747, 1.0
    %v811 = vsub.f32 %v749, 1.0
    %v812 = vsub.f32 %v751, 1.0
    %v813 = vsub.f32 %v753, 1.0
    %v814 = vsub.f32 %v755, 1.0
    %v815 = vsub.f32 %v757, 1.0
    %v816 = vsub.f32 %v759, 1.0
    %v817 = vsub.f32 %v761, 1.0
    %v818 = vsub.f32 %v763, 1.0
    %v819 = vsub.f32 %v765, 1.0
    %v820 = vsub.f32 %v767, 1.0
    %v821 = vsub.f32 %v769, 1.0
    %v822 = vsub.f32 %v771, 1.0
    %v823 = vsub.f32 %v773, 1.0
    %v824 = vsub.f32 %v775, 1.0
    %v825 = vsub.f32 %v777, 1.0
    %v826 = vsub.f32 %v779, 1.0
    %v827 = vsub.f32 %v781, 1.0
    %v828 = vsub.f32 %v783, 1.0
    %v829 = vsub.f32 %v785, 1.0
    %v830 = vsub.f32 %v787, 1.0
    %v831 = vsub.f32 %v789, 1.0
    %v832 = vsub.f32 %v791, 1.0
    %v833 = vsub.f32 %v793, 1.0
    %v834 = vsub.f32 %v795, 1.0
    %v835 = vsub.f32 %v797, 1.0
    %v836 = vsub.f32 %v799, 1.0
    %v837 = vsub.f32 %v801, 1.0
    %v838 = vsub.f32 %v803, 1.0
    %v839 = vsub.f32 %v805, 1.0
    %v840 = vsub.f32 %v807, 1.0
    %v841 = vsub.f32 %v809, 1.0
    %v842 = vsel %vm682, %v650, %v810
    %v843 = vsel %vm683, %v651, %v811
    %v844 = vsel %vm684, %v652, %v812
    %v845 = vsel %vm685, %v653, %v813
    %v846 = vsel %vm686, %v654, %v814
    %v847 = vsel %vm687, %v655, %v815
    %v848 = vsel %vm688, %v656, %v816
    %v849 = vsel %vm689, %v657, %v817
    %v850 = vsel %vm690, %v658, %v818
    %v851 = vsel %vm691, %v659, %v819
    %v852 = vsel %vm692, %v660, %v820
    %v853 = vsel %vm693, %v661, %v821
    %v854 = vsel %vm694, %v662, %v822
    %v855 = vsel %vm695, %v663, %v823
    %v856 = vsel %vm696, %v664, %v824
    %v857 = vsel %vm697, %v665, %v825
    %v858 = vsel %vm698, %v666, %v826
    %v859 = vsel %vm699, %v667, %v827
    %v860 = vsel %vm700, %v668, %v828
    %v861 = vsel %vm701, %v669, %v829
    %v862 = vsel %vm702, %v670, %v830
    %v863 = vsel %vm703, %v671, %v831
    %v864 = vsel %vm704, %v672, %v832
    %v865 = vsel %vm705, %v673, %v833
    %v866 = vsel %vm706, %v674, %v834
    %v867 = vsel %vm707, %v675, %v835
    %v868 = vsel %vm708, %v676, %v836
    %v869 = vsel %vm709, %v677, %v837
    %v870 = vsel %vm710, %v678, %v838
    %v871 = vsel %vm711, %v679, %v839
    %v872 = vsel %vm712, %v680, %v840
    %v873 = vsel %vm713, %v681, %v841
    %v874 = vadd.f32 %v842, %v843
    %875 = vadd.xlane.f32.xlu0 %v874
    %v876 = vpop.xlane.xlu0 %875
    %v877 = vadd.f32 %v844, %v845
    %878 = vadd.xlane.f32.xlu0 %v877
    %v879 = vpop.xlane.xlu0 %878
    %v880 = vadd.f32 %v846, %v847
    %881 = vadd.xlane.f32.xlu0 %v880
    %v882 = vpop.xlane.xlu0 %881
    %v883 = vadd.f32 %v848, %v849
    %884 = vadd.xlane.f32.xlu0 %v883
    %v885 = vpop.xlane.xlu0 %884
    %v886 = vadd.f32 %v850, %v851
    %887 = vadd.xlane.f32.xlu0 %v886
    %v888 = vpop.xlane.xlu0 %887
    %v889 = vadd.f32 %v852, %v853
    %890 = vadd.xlane.f32.xlu0 %v889
    %v891 = vpop.xlane.xlu0 %890
    %v892 = vadd.f32 %v854, %v855
    %893 = vadd.xlane.f32.xlu0 %v892
    %v894 = vpop.xlane.xlu0 %893
    %v895 = vadd.f32 %v856, %v857
    %896 = vadd.xlane.f32.xlu0 %v895
    %v897 = vpop.xlane.xlu0 %896
    %v898 = vadd.f32 %v858, %v859
    %899 = vadd.xlane.f32.xlu0 %v898
    %v900 = vpop.xlane.xlu0 %899
    %v901 = vadd.f32 %v860, %v861
    %902 = vadd.xlane.f32.xlu0 %v901
    %v903 = vpop.xlane.xlu0 %902
    %v904 = vadd.f32 %v862, %v863
    %905 = vadd.xlane.f32.xlu0 %v904
    %v906 = vpop.xlane.xlu0 %905
    %v907 = vadd.f32 %v864, %v865
    %908 = vadd.xlane.f32.xlu0 %v907
    %v909 = vpop.xlane.xlu0 %908
    %v910 = vadd.f32 %v866, %v867
    %911 = vadd.xlane.f32.xlu0 %v910
    %v912 = vpop.xlane.xlu0 %911
    %v913 = vadd.f32 %v868, %v869
    %914 = vadd.xlane.f32.xlu0 %v913
    %v915 = vpop.xlane.xlu0 %914
    %v916 = vadd.f32 %v870, %v871
    %917 = vadd.xlane.f32.xlu0 %v916
    %v918 = vpop.xlane.xlu0 %917
    %v919 = vadd.f32 %v872, %v873
    %920 = vadd.xlane.f32.xlu0 %v919
    %v921 = vpop.xlane.xlu0 %920
    %v922 = vrcp.pop 256.0
    %v923 = vmul.f32 256.0, %v922
    %v924 = vsub.f32 1.0, %v923
    %v925 = vmul.f32 %v922, %v924
    %v926 = vadd.f32 %v922, %v925
    %vm927 = vweird.f32 %v922
    %v928 = vsel %vm927, %v922, %v926
    %v929 = vmul.f32 %v876, %v928
    %v930 = vmul.f32 %v879, %v928
    %v931 = vmul.f32 %v882, %v928
    %v932 = vmul.f32 %v885, %v928
    %v933 = vmul.f32 %v888, %v928
    %v934 = vmul.f32 %v891, %v928
    %v935 = vmul.f32 %v894, %v928
    %v936 = vmul.f32 %v897, %v928
    %v937 = vmul.f32 %v900, %v928
    %v938 = vmul.f32 %v903, %v928
    %v939 = vmul.f32 %v906, %v928
    %v940 = vmul.f32 %v909, %v928
    %v941 = vmul.f32 %v912, %v928
    %v942 = vmul.f32 %v915, %v928
    %v943 = vmul.f32 %v918, %v928
    %v944 = vmul.f32 %v921, %v928
    %v945 = vmul.f32 %v842, %v842
    %v946 = vmul.f32 %v843, %v843
    %v947 = vmul.f32 %v844, %v844
    %v948 = vmul.f32 %v845, %v845
    %v949 = vmul.f32 %v846, %v846
    %v950 = vmul.f32 %v847, %v847
    %v951 = vmul.f32 %v848, %v848
    %v952 = vmul.f32 %v849, %v849
    %v953 = vmul.f32 %v850, %v850
    %v954 = vmul.f32 %v851, %v851
    %v955 = vmul.f32 %v852, %v852
    %v956 = vmul.f32 %v853, %v853
    %v957 = vmul.f32 %v854, %v854
    %v958 = vmul.f32 %v855, %v855
    %v959 = vmul.f32 %v856, %v856
    %v960 = vmul.f32 %v857, %v857
    %v961 = vmul.f32 %v858, %v858
    %v962 = vmul.f32 %v859, %v859
    %v963 = vmul.f32 %v860, %v860
    %v964 = vmul.f32 %v861, %v861
    %v965 = vmul.f32 %v862, %v862
    %v966 = vmul.f32 %v863, %v863
    %v967 = vmul.f32 %v864, %v864
    %v968 = vmul.f32 %v865, %v865
    %v969 = vmul.f32 %v866, %v866
    %v970 = vmul.f32 %v867, %v867
    %v971 = vmul.f32 %v868, %v868
    %v972 = vmul.f32 %v869, %v869
    %v973 = vmul.f32 %v870, %v870
    %v974 = vmul.f32 %v871, %v871
    %v975 = vmul.f32 %v872, %v872
    %v976 = vmul.f32 %v873, %v873
    %v977 = vadd.f32 %v945, %v946
    %978 = vadd.xlane.f32.xlu0 %v977
    %v979 = vpop.xlane.xlu0 %978
    %v980 = vadd.f32 %v947, %v948
    %981 = vadd.xlane.f32.xlu0 %v980
    %v982 = vpop.xlane.xlu0 %981
    %v983 = vadd.f32 %v949, %v950
    %984 = vadd.xlane.f32.xlu0 %v983
    %v985 = vpop.xlane.xlu0 %984
    %v986 = vadd.f32 %v951, %v952
    %987 = vadd.xlane.f32.xlu0 %v986
    %v988 = vpop.xlane.xlu0 %987
    %v989 = vadd.f32 %v953, %v954
    %990 = vadd.xlane.f32.xlu0 %v989
    %v991 = vpop.xlane.xlu0 %990
    %v992 = vadd.f32 %v955, %v956
    %993 = vadd.xlane.f32.xlu0 %v992
    %v994 = vpop.xlane.xlu0 %993
    %v995 = vadd.f32 %v957, %v958
    %996 = vadd.xlane.f32.xlu0 %v995
    %v997 = vpop.xlane.xlu0 %996
    %v998 = vadd.f32 %v959, %v960
    %999 = vadd.xlane.f32.xlu0 %v998
    %v1000 = vpop.xlane.xlu0 %999
    %v1001 = vadd.f32 %v961, %v962
    %1002 = vadd.xlane.f32.xlu0 %v1001
    %v1003 = vpop.xlane.xlu0 %1002
    %v1004 = vadd.f32 %v963, %v964
    %1005 = vadd.xlane.f32.xlu0 %v1004
    %v1006 = vpop.xlane.xlu0 %1005
    %v1007 = vadd.f32 %v965, %v966
    %1008 = vadd.xlane.f32.xlu0 %v1007
    %v1009 = vpop.xlane.xlu0 %1008
    %v1010 = vadd.f32 %v967, %v968
    %1011 = vadd.xlane.f32.xlu0 %v1010
    %v1012 = vpop.xlane.xlu0 %1011
    %v1013 = vadd.f32 %v969, %v970
    %1014 = vadd.xlane.f32.xlu0 %v1013
    %v1015 = vpop.xlane.xlu0 %1014
    %v1016 = vadd.f32 %v971, %v972
    %1017 = vadd.xlane.f32.xlu0 %v1016
    %v1018 = vpop.xlane.xlu0 %1017
    %v1019 = vadd.f32 %v973, %v974
    %1020 = vadd.xlane.f32.xlu0 %v1019
    %v1021 = vpop.xlane.xlu0 %1020
    %v1022 = vadd.f32 %v975, %v976
    %1023 = vadd.xlane.f32.xlu0 %v1022
    %v1024 = vpop.xlane.xlu0 %1023
    %v1025 = vmul.f32 %v979, %v928
    %v1026 = vmul.f32 %v982, %v928
    %v1027 = vmul.f32 %v985, %v928
    %v1028 = vmul.f32 %v988, %v928
    %v1029 = vmul.f32 %v991, %v928
    %v1030 = vmul.f32 %v994, %v928
    %v1031 = vmul.f32 %v997, %v928
    %v1032 = vmul.f32 %v1000, %v928
    %v1033 = vmul.f32 %v1003, %v928
    %v1034 = vmul.f32 %v1006, %v928
    %v1035 = vmul.f32 %v1009, %v928
    %v1036 = vmul.f32 %v1012, %v928
    %v1037 = vmul.f32 %v1015, %v928
    %v1038 = vmul.f32 %v1018, %v928
    %v1039 = vmul.f32 %v1021, %v928
    %v1040 = vmul.f32 %v1024, %v928
    %v1041 = vmul.f32 %v929, %v929
    %v1042 = vmul.f32 %v930, %v930
    %v1043 = vmul.f32 %v931, %v931
    %v1044 = vmul.f32 %v932, %v932
    %v1045 = vmul.f32 %v933, %v933
    %v1046 = vmul.f32 %v934, %v934
    %v1047 = vmul.f32 %v935, %v935
    %v1048 = vmul.f32 %v936, %v936
    %v1049 = vmul.f32 %v937, %v937
    %v1050 = vmul.f32 %v938, %v938
    %v1051 = vmul.f32 %v939, %v939
    %v1052 = vmul.f32 %v940, %v940
    %v1053 = vmul.f32 %v941, %v941
    %v1054 = vmul.f32 %v942, %v942
    %v1055 = vmul.f32 %v943, %v943
    %v1056 = vmul.f32 %v944, %v944
    %v1057 = vsub.f32 %v1025, %v1041
    %v1058 = vsub.f32 %v1026, %v1042
    %v1059 = vsub.f32 %v1027, %v1043
    %v1060 = vsub.f32 %v1028, %v1044
    %v1061 = vsub.f32 %v1029, %v1045
    %v1062 = vsub.f32 %v1030, %v1046
    %v1063 = vsub.f32 %v1031, %v1047
    %v1064 = vsub.f32 %v1032, %v1048
    %v1065 = vsub.f32 %v1033, %v1049
    %v1066 = vsub.f32 %v1034, %v1050
    %v1067 = vsub.f32 %v1035, %v1051
    %v1068 = vsub.f32 %v1036, %v1052
    %v1069 = vsub.f32 %v1037, %v1053
    %v1070 = vsub.f32 %v1038, %v1054
    %v1071 = vsub.f32 %v1039, %v1055
    %v1072 = vsub.f32 %v1040, %v1056
    %v1073 = vmax.f32 %v1057, 0.0
    %v1074 = vmax.f32 %v1058, 0.0
    %v1075 = vmax.f32 %v1059, 0.0
    %v1076 = vmax.f32 %v1060, 0.0
    %v1077 = vmax.f32 %v1061, 0.0
    %v1078 = vmax.f32 %v1062, 0.0
    %v1079 = vmax.f32 %v1063, 0.0
    %v1080 = vmax.f32 %v1064, 0.0
    %v1081 = vmax.f32 %v1065, 0.0
    %v1082 = vmax.f32 %v1066, 0.0
    %v1083 = vmax.f32 %v1067, 0.0
    %v1084 = vmax.f32 %v1068, 0.0
    %v1085 = vmax.f32 %v1069, 0.0
    %v1086 = vmax.f32 %v1070, 0.0
    %v1087 = vmax.f32 %v1071, 0.0
    %v1088 = vmax.f32 %v1072, 0.0
    %v1089 = vsub.f32 %v842, %v929
    %v1090 = vsub.f32 %v843, %v929
    %v1091 = vsub.f32 %v844, %v930
    %v1092 = vsub.f32 %v845, %v930
    %v1093 = vsub.f32 %v846, %v931
    %v1094 = vsub.f32 %v847, %v931
    %v1095 = vsub.f32 %v848, %v932
    %v1096 = vsub.f32 %v849, %v932
    %v1097 = vsub.f32 %v850, %v933
    %v1098 = vsub.f32 %v851, %v933
    %v1099 = vsub.f32 %v852, %v934
    %v1100 = vsub.f32 %v853, %v934
    %v1101 = vsub.f32 %v854, %v935
    %v1102 = vsub.f32 %v855, %v935
    %v1103 = vsub.f32 %v856, %v936
    %v1104 = vsub.f32 %v857, %v936
    %v1105 = vsub.f32 %v858, %v937
    %v1106 = vsub.f32 %v859, %v937
    %v1107 = vsub.f32 %v860, %v938
    %v1108 = vsub.f32 %v861, %v938
    %v1109 = vsub.f32 %v862, %v939
    %v1110 = vsub.f32 %v863, %v939
    %v1111 = vsub.f32 %v864, %v940
    %v1112 = vsub.f32 %v865, %v940
    %v1113 = vsub.f32 %v866, %v941
    %v1114 = vsub.f32 %v867, %v941
    %v1115 = vsub.f32 %v868, %v942
    %v1116 = vsub.f32 %v869, %v942
    %v1117 = vsub.f32 %v870, %v943
    %v1118 = vsub.f32 %v871, %v943
    %v1119 = vsub.f32 %v872, %v944
    %v1120 = vsub.f32 %v873, %v944
    %v1121 = vadd.f32 %v1073, 1e-05
    %v1122 = vadd.f32 %v1074, 1e-05
    %v1123 = vadd.f32 %v1075, 1e-05
    %v1124 = vadd.f32 %v1076, 1e-05
    %v1125 = vadd.f32 %v1077, 1e-05
    %v1126 = vadd.f32 %v1078, 1e-05
    %v1127 = vadd.f32 %v1079, 1e-05
    %v1128 = vadd.f32 %v1080, 1e-05
    %v1129 = vadd.f32 %v1081, 1e-05
    %v1130 = vadd.f32 %v1082, 1e-05
    %v1131 = vadd.f32 %v1083, 1e-05
    %v1132 = vadd.f32 %v1084, 1e-05
    %v1133 = vadd.f32 %v1085, 1e-05
    %v1134 = vadd.f32 %v1086, 1e-05
    %v1135 = vadd.f32 %v1087, 1e-05
    %v1136 = vadd.f32 %v1088, 1e-05
    %v1137 = vrsqrt.pop %v1121
    %v1138 = vmul.f32 %v1137, %v1121
    %v1139 = vmul.f32 %v1138, %v1137
    %v1140 = vmul.f32 0.5, %v1139
    %v1141 = vsub.f32 1.5, %v1140
    %v1142 = vmul.f32 %v1137, %v1141
    %vm1143 = vweird.f32 %v1121
    %vm1144 = vweird.f32 %v1137
    %vm1145 = vmor %vm1143, %vm1144
    %v1146 = vsel %vm1145, %v1137, %v1142
    %v1147 = vrsqrt.pop %v1122
    %v1148 = vmul.f32 %v1147, %v1122
    %v1149 = vmul.f32 %v1148, %v1147
    %v1150 = vmul.f32 0.5, %v1149
    %v1151 = vsub.f32 1.5, %v1150
    %v1152 = vmul.f32 %v1147, %v1151
    %vm1153 = vweird.f32 %v1122
    %vm1154 = vweird.f32 %v1147
    %vm1155 = vmor %vm1153, %vm1154
    %v1156 = vsel %vm1155, %v1147, %v1152
    %v1157 = vrsqrt.pop %v1123
    %v1158 = vmul.f32 %v1157, %v1123
    %v1159 = vmul.f32 %v1158, %v1157
    %v1160 = vmul.f32 0.5, %v1159
    %v1161 = vsub.f32 1.5, %v1160
    %v1162 = vmul.f32 %v1157, %v1161
    %vm1163 = vweird.f32 %v1123
    %vm1164 = vweird.f32 %v1157
    %vm1165 = vmor %vm1163, %vm1164
    %v1166 = vsel %vm1165, %v1157, %v1162
    %v1167 = vrsqrt.pop %v1124
    %v1168 = vmul.f32 %v1167, %v1124
    %v1169 = vmul.f32 %v1168, %v1167
    %v1170 = vmul.f32 0.5, %v1169
    %v1171 = vsub.f32 1.5, %v1170
    %v1172 = vmul.f32 %v1167, %v1171
    %vm1173 = vweird.f32 %v1124
    %vm1174 = vweird.f32 %v1167
    %vm1175 = vmor %vm1173, %vm1174
    %v1176 = vsel %vm1175, %v1167, %v1172
    %v1177 = vrsqrt.pop %v1125
    %v1178 = vmul.f32 %v1177, %v1125
    %v1179 = vmul.f32 %v1178, %v1177
    %v1180 = vmul.f32 0.5, %v1179
    %v1181 = vsub.f32 1.5, %v1180
    %v1182 = vmul.f32 %v1177, %v1181
    %vm1183 = vweird.f32 %v1125
    %vm1184 = vweird.f32 %v1177
    %vm1185 = vmor %vm1183, %vm1184
    %v1186 = vsel %vm1185, %v1177, %v1182
    %v1187 = vrsqrt.pop %v1126
    %v1188 = vmul.f32 %v1187, %v1126
    %v1189 = vmul.f32 %v1188, %v1187
    %v1190 = vmul.f32 0.5, %v1189
    %v1191 = vsub.f32 1.5, %v1190
    %v1192 = vmul.f32 %v1187, %v1191
    %vm1193 = vweird.f32 %v1126
    %vm1194 = vweird.f32 %v1187
    %vm1195 = vmor %vm1193, %vm1194
    %v1196 = vsel %vm1195, %v1187, %v1192
    %v1197 = vrsqrt.pop %v1127
    %v1198 = vmul.f32 %v1197, %v1127
    %v1199 = vmul.f32 %v1198, %v1197
    %v1200 = vmul.f32 0.5, %v1199
    %v1201 = vsub.f32 1.5, %v1200
    %v1202 = vmul.f32 %v1197, %v1201
    %vm1203 = vweird.f32 %v1127
    %vm1204 = vweird.f32 %v1197
    %vm1205 = vmor %vm1203, %vm1204
    %v1206 = vsel %vm1205, %v1197, %v1202
    %v1207 = vrsqrt.pop %v1128
    %v1208 = vmul.f32 %v1207, %v1128
    %v1209 = vmul.f32 %v1208, %v1207
    %v1210 = vmul.f32 0.5, %v1209
    %v1211 = vsub.f32 1.5, %v1210
    %v1212 = vmul.f32 %v1207, %v1211
    %vm1213 = vweird.f32 %v1128
    %vm1214 = vweird.f32 %v1207
    %vm1215 = vmor %vm1213, %vm1214
    %v1216 = vsel %vm1215, %v1207, %v1212
    %v1217 = vrsqrt.pop %v1129
    %v1218 = vmul.f32 %v1217, %v1129
    %v1219 = vmul.f32 %v1218, %v1217
    %v1220 = vmul.f32 0.5, %v1219
    %v1221 = vsub.f32 1.5, %v1220
    %v1222 = vmul.f32 %v1217, %v1221
    %vm1223 = vweird.f32 %v1129
    %vm1224 = vweird.f32 %v1217
    %vm1225 = vmor %vm1223, %vm1224
    %v1226 = vsel %vm1225, %v1217, %v1222
    %v1227 = vrsqrt.pop %v1130
    %v1228 = vmul.f32 %v1227, %v1130
    %v1229 = vmul.f32 %v1228, %v1227
    %v1230 = vmul.f32 0.5, %v1229
    %v1231 = vsub.f32 1.5, %v1230
    %v1232 = vmul.f32 %v1227, %v1231
    %vm1233 = vweird.f32 %v1130
    %vm1234 = vweird.f32 %v1227
    %vm1235 = vmor %vm1233, %vm1234
    %v1236 = vsel %vm1235, %v1227, %v1232
    %v1237 = vrsqrt.pop %v1131
    %v1238 = vmul.f32 %v1237, %v1131
    %v1239 = vmul.f32 %v1238, %v1237
    %v1240 = vmul.f32 0.5, %v1239
    %v1241 = vsub.f32 1.5, %v1240
    %v1242 = vmul.f32 %v1237, %v1241
    %vm1243 = vweird.f32 %v1131
    %vm1244 = vweird.f32 %v1237
    %vm1245 = vmor %vm1243, %vm1244
    %v1246 = vsel %vm1245, %v1237, %v1242
    %v1247 = vrsqrt.pop %v1132
    %v1248 = vmul.f32 %v1247, %v1132
    %v1249 = vmul.f32 %v1248, %v1247
    %v1250 = vmul.f32 0.5, %v1249
    %v1251 = vsub.f32 1.5, %v1250
    %v1252 = vmul.f32 %v1247, %v1251
    %vm1253 = vweird.f32 %v1132
    %vm1254 = vweird.f32 %v1247
    %vm1255 = vmor %vm1253, %vm1254
    %v1256 = vsel %vm1255, %v1247, %v1252
    %v1257 = vrsqrt.pop %v1133
    %v1258 = vmul.f32 %v1257, %v1133
    %v1259 = vmul.f32 %v1258, %v1257
    %v1260 = vmul.f32 0.5, %v1259
    %v1261 = vsub.f32 1.5, %v1260
    %v1262 = vmul.f32 %v1257, %v1261
    %vm1263 = vweird.f32 %v1133
    %vm1264 = vweird.f32 %v1257
    %vm1265 = vmor %vm1263, %vm1264
    %v1266 = vsel %vm1265, %v1257, %v1262
    %v1267 = vrsqrt.pop %v1134
    %v1268 = vmul.f32 %v1267, %v1134
    %v1269 = vmul.f32 %v1268, %v1267
    %v1270 = vmul.f32 0.5, %v1269
    %v1271 = vsub.f32 1.5, %v1270
    %v1272 = vmul.f32 %v1267, %v1271
    %vm1273 = vweird.f32 %v1134
    %vm1274 = vweird.f32 %v1267
    %vm1275 = vmor %vm1273, %vm1274
    %v1276 = vsel %vm1275, %v1267, %v1272
    %v1277 = vrsqrt.pop %v1135
    %v1278 = vmul.f32 %v1277, %v1135
    %v1279 = vmul.f32 %v1278, %v1277
    %v1280 = vmul.f32 0.5, %v1279
    %v1281 = vsub.f32 1.5, %v1280
    %v1282 = vmul.f32 %v1277, %v1281
    %vm1283 = vweird.f32 %v1135
    %vm1284 = vweird.f32 %v1277
    %vm1285 = vmor %vm1283, %vm1284
    %v1286 = vsel %vm1285, %v1277, %v1282
    %v1287 = vrsqrt.pop %v1136
    %v1288 = vmul.f32 %v1287, %v1136
    %v1289 = vmul.f32 %v1288, %v1287
    %v1290 = vmul.f32 0.5, %v1289
    %v1291 = vsub.f32 1.5, %v1290
    %v1292 = vmul.f32 %v1287, %v1291
    %vm1293 = vweird.f32 %v1136
    %vm1294 = vweird.f32 %v1287
    %vm1295 = vmor %vm1293, %vm1294
    %v1296 = vsel %vm1295, %v1287, %v1292
    %v1297 = vmul.f32 %v1089, %v1146
    %v1298 = vmul.f32 %v1090, %v1146
    %v1299 = vmul.f32 %v1091, %v1156
    %v1300 = vmul.f32 %v1092, %v1156
    %v1301 = vmul.f32 %v1093, %v1166
    %v1302 = vmul.f32 %v1094, %v1166
    %v1303 = vmul.f32 %v1095, %v1176
    %v1304 = vmul.f32 %v1096, %v1176
    %v1305 = vmul.f32 %v1097, %v1186
    %v1306 = vmul.f32 %v1098, %v1186
    %v1307 = vmul.f32 %v1099, %v1196
    %v1308 = vmul.f32 %v1100, %v1196
    %v1309 = vmul.f32 %v1101, %v1206
    %v1310 = vmul.f32 %v1102, %v1206
    %v1311 = vmul.f32 %v1103, %v1216
    %v1312 = vmul.f32 %v1104, %v1216
    %v1313 = vmul.f32 %v1105, %v1226
    %v1314 = vmul.f32 %v1106, %v1226
    %v1315 = vmul.f32 %v1107, %v1236
    %v1316 = vmul.f32 %v1108, %v1236
    %v1317 = vmul.f32 %v1109, %v1246
    %v1318 = vmul.f32 %v1110, %v1246
    %v1319 = vmul.f32 %v1111, %v1256
    %v1320 = vmul.f32 %v1112, %v1256
    %v1321 = vmul.f32 %v1113, %v1266
    %v1322 = vmul.f32 %v1114, %v1266
    %v1323 = vmul.f32 %v1115, %v1276
    %v1324 = vmul.f32 %v1116, %v1276
    %v1325 = vmul.f32 %v1117, %v1286
    %v1326 = vmul.f32 %v1118, %v1286
    %v1327 = vmul.f32 %v1119, %v1296
    %v1328 = vmul.f32 %v1120, %v1296
    %v1329 = vld [vmem:[%s13] sm:$0x3]
    %v1331 = vperm.slane %v1329, 0
    %v1332 = vperm.slane %v1329, 1
    %v1335 = vmul.f32 %v1297, %v1331
    %v1336 = vmul.f32 %v1298, %v1332
    %v1337 = vmul.f32 %v1299, %v1331
    %v1338 = vmul.f32 %v1300, %v1332
    %v1339 = vmul.f32 %v1301, %v1331
    %v1340 = vmul.f32 %v1302, %v1332
    %v1341 = vmul.f32 %v1303, %v1331
    %v1342 = vmul.f32 %v1304, %v1332
    %v1343 = vmul.f32 %v1305, %v1331
    %v1344 = vmul.f32 %v1306, %v1332
    %v1345 = vmul.f32 %v1307, %v1331
    %v1346 = vmul.f32 %v1308, %v1332
    %v1347 = vmul.f32 %v1309, %v1331
    %v1348 = vmul.f32 %v1310, %v1332
    %v1349 = vmul.f32 %v1311, %v1331
    %v1350 = vmul.f32 %v1312, %v1332
    %v1351 = vmul.f32 %v1313, %v1331
    %v1352 = vmul.f32 %v1314, %v1332
    %v1353 = vmul.f32 %v1315, %v1331
    %v1354 = vmul.f32 %v1316, %v1332
    %v1355 = vmul.f32 %v1317, %v1331
    %v1356 = vmul.f32 %v1318, %v1332
    %v1357 = vmul.f32 %v1319, %v1331
    %v1358 = vmul.f32 %v1320, %v1332
    %v1359 = vmul.f32 %v1321, %v1331
    %v1360 = vmul.f32 %v1322, %v1332
    %v1361 = vmul.f32 %v1323, %v1331
    %v1362 = vmul.f32 %v1324, %v1332
    %v1363 = vmul.f32 %v1325, %v1331
    %v1364 = vmul.f32 %v1326, %v1332
    %v1365 = vmul.f32 %v1327, %v1331
    %v1366 = vmul.f32 %v1328, %v1332
    %v1367 = vld [vmem:[%s19] sm:$0x3]
    %v1369 = vperm.slane %v1367, 0
    %v1370 = vperm.slane %v1367, 1
    %v1373 = vadd.f32 %v1335, %v1369
    %v1374 = vadd.f32 %v1336, %v1370
    %v1375 = vadd.f32 %v1337, %v1369
    %v1376 = vadd.f32 %v1338, %v1370
    %v1377 = vadd.f32 %v1339, %v1369
    %v1378 = vadd.f32 %v1340, %v1370
    %v1379 = vadd.f32 %v1341, %v1369
    %v1380 = vadd.f32 %v1342, %v1370
    %v1381 = vadd.f32 %v1343, %v1369
    %v1382 = vadd.f32 %v1344, %v1370
    %v1383 = vadd.f32 %v1345, %v1369
    %v1384 = vadd.f32 %v1346, %v1370
    %v1385 = vadd.f32 %v1347, %v1369
    %v1386 = vadd.f32 %v1348, %v1370
    %v1387 = vadd.f32 %v1349, %v1369
    %v1388 = vadd.f32 %v1350, %v1370
    %v1389 = vadd.f32 %v1351, %v1369
    %v1390 = vadd.f32 %v1352, %v1370
    %v1391 = vadd.f32 %v1353, %v1369
    %v1392 = vadd.f32 %v1354, %v1370
    %v1393 = vadd.f32 %v1355, %v1369
    %v1394 = vadd.f32 %v1356, %v1370
    %v1395 = vadd.f32 %v1357, %v1369
    %v1396 = vadd.f32 %v1358, %v1370
    %v1397 = vadd.f32 %v1359, %v1369
    %v1398 = vadd.f32 %v1360, %v1370
    %v1399 = vadd.f32 %v1361, %v1369
    %v1400 = vadd.f32 %v1362, %v1370
    %v1401 = vadd.f32 %v1363, %v1369
    %v1402 = vadd.f32 %v1364, %v1370
    %v1403 = vadd.f32 %v1365, %v1369
    %v1404 = vadd.f32 %v1366, %v1370
    %v1405 = vpack.c.bf16 %v1374, %v1373
    %v1406 = vpack.c.bf16 %v1376, %v1375
    %v1407 = vpack.c.bf16 %v1378, %v1377
    %v1408 = vpack.c.bf16 %v1380, %v1379
    %v1409 = vpack.c.bf16 %v1382, %v1381
    %v1410 = vpack.c.bf16 %v1384, %v1383
    %v1411 = vpack.c.bf16 %v1386, %v1385
    %v1412 = vpack.c.bf16 %v1388, %v1387
    %v1413 = vpack.c.bf16 %v1390, %v1389
    %v1414 = vpack.c.bf16 %v1392, %v1391
    %v1415 = vpack.c.bf16 %v1394, %v1393
    %v1416 = vpack.c.bf16 %v1396, %v1395
    %v1417 = vpack.c.bf16 %v1398, %v1397
    %v1418 = vpack.c.bf16 %v1400, %v1399
    %v1419 = vpack.c.bf16 %v1402, %v1401
    %v1420 = vpack.c.bf16 %v1404, %v1403
    %v1437 = vunpack.c.l.b16 %v1405
    %v1438 = vunpack.c.h.b16 %v1405
    %v1439 = vunpack.c.l.b16 %v1406
    %v1440 = vunpack.c.h.b16 %v1406
    %v1441 = vunpack.c.l.b16 %v1407
    %v1442 = vunpack.c.h.b16 %v1407
    %v1443 = vunpack.c.l.b16 %v1408
    %v1444 = vunpack.c.h.b16 %v1408
    %v1445 = vunpack.c.l.b16 %v1409
    %v1446 = vunpack.c.h.b16 %v1409
    %v1447 = vunpack.c.l.b16 %v1410
    %v1448 = vunpack.c.h.b16 %v1410
    %v1449 = vunpack.c.l.b16 %v1411
    %v1450 = vunpack.c.h.b16 %v1411
    %v1451 = vunpack.c.l.b16 %v1412
    %v1452 = vunpack.c.h.b16 %v1412
    %v1453 = vunpack.c.l.b16 %v1413
    %v1454 = vunpack.c.h.b16 %v1413
    %v1455 = vunpack.c.l.b16 %v1414
    %v1456 = vunpack.c.h.b16 %v1414
    %v1457 = vunpack.c.l.b16 %v1415
    %v1458 = vunpack.c.h.b16 %v1415
    %v1459 = vunpack.c.l.b16 %v1416
    %v1460 = vunpack.c.h.b16 %v1416
    %v1461 = vunpack.c.l.b16 %v1417
    %v1462 = vunpack.c.h.b16 %v1417
    %v1463 = vunpack.c.l.b16 %v1418
    %v1464 = vunpack.c.h.b16 %v1418
    %v1465 = vunpack.c.l.b16 %v1419
    %v1466 = vunpack.c.h.b16 %v1419
    %v1467 = vunpack.c.l.b16 %v1420
    %v1468 = vunpack.c.h.b16 %v1420
    %v1469 = vpack.c.b16 %v1439, %v1437
    %v1470 = vpack.c.b16 %v1440, %v1438
    %v1471 = vpack.c.b16 %v1443, %v1441
    %v1472 = vpack.c.b16 %v1444, %v1442
    %v1473 = vpack.c.b16 %v1447, %v1445
    %v1474 = vpack.c.b16 %v1448, %v1446
    %v1475 = vpack.c.b16 %v1451, %v1449
    %v1476 = vpack.c.b16 %v1452, %v1450
    %v1477 = vpack.c.b16 %v1455, %v1453
    %v1478 = vpack.c.b16 %v1456, %v1454
    %v1479 = vpack.c.b16 %v1459, %v1457
    %v1480 = vpack.c.b16 %v1460, %v1458
    %v1481 = vpack.c.b16 %v1463, %v1461
    %v1482 = vpack.c.b16 %v1464, %v1462
    %v1483 = vpack.c.b16 %v1467, %v1465
    %v1484 = vpack.c.b16 %v1468, %v1466
    %1485 = vrot.lane.b32.xlu0 %v1469, 8
    %v1486 = vpop.permute.xlu0 %1485
    %1487 = vrot.lane.b32.xlu0 %v1470, 8
    %v1488 = vpop.permute.xlu0 %1487
    %1489 = vrot.lane.b32.xlu0 %v1471, 8
    %v1490 = vpop.permute.xlu0 %1489
    %1491 = vrot.lane.b32.xlu0 %v1472, 8
    %v1492 = vpop.permute.xlu0 %1491
    %1493 = vrot.lane.b32.xlu0 %v1473, 8
    %v1494 = vpop.permute.xlu0 %1493
    %1495 = vrot.lane.b32.xlu0 %v1474, 8
    %v1496 = vpop.permute.xlu0 %1495
    %1497 = vrot.lane.b32.xlu0 %v1475, 8
    %v1498 = vpop.permute.xlu0 %1497
    %1499 = vrot.lane.b32.xlu0 %v1476, 8
    %v1500 = vpop.permute.xlu0 %1499
    %1501 = vrot.lane.b32.xlu0 %v1477, 8
    %v1502 = vpop.permute.xlu0 %1501
    %1503 = vrot.lane.b32.xlu0 %v1478, 8
    %v1504 = vpop.permute.xlu0 %1503
    %1505 = vrot.lane.b32.xlu0 %v1479, 8
    %v1506 = vpop.permute.xlu0 %1505
    %1507 = vrot.lane.b32.xlu0 %v1480, 8
    %v1508 = vpop.permute.xlu0 %1507
    %1509 = vrot.lane.b32.xlu0 %v1481, 8
    %v1510 = vpop.permute.xlu0 %1509
    %1511 = vrot.lane.b32.xlu0 %v1482, 8
    %v1512 = vpop.permute.xlu0 %1511
    %1513 = vrot.lane.b32.xlu0 %v1483, 8
    %v1514 = vpop.permute.xlu0 %1513
    %1515 = vrot.lane.b32.xlu0 %v1484, 8
    %v1516 = vpop.permute.xlu0 %1515
    %vm1517 = vcmask 64512
    %v1518 = vsel %vm1517, %v1486, %v1488
    %v1519 = vsel %vm1517, %v1490, %v1492
    %v1520 = vsel %vm1517, %v1494, %v1496
    %v1521 = vsel %vm1517, %v1498, %v1500
    %v1522 = vsel %vm1517, %v1502, %v1504
    %v1523 = vsel %vm1517, %v1506, %v1508
    %v1524 = vsel %vm1517, %v1510, %v1512
    %v1525 = vsel %vm1517, %v1514, %v1516
    %vm1534 = vcmask 64512
    %v1536 = vsel %vm1534, 0, %v1486
    %v1539 = vsel %vm1534, 0, %v1490
    %v1542 = vsel %vm1534, 0, %v1494
    %v1545 = vsel %vm1534, 0, %v1498
    %v1548 = vsel %vm1534, 0, %v1502
    %v1551 = vsel %vm1534, 0, %v1506
    %v1554 = vsel %vm1534, 0, %v1510
    %v1557 = vsel %vm1534, 0, %v1514
    %v1560 = vsel %vm1534, %v1488, 0
    %v1562 = vsel %vm1534, %v1492, 0
    %v1564 = vsel %vm1534, %v1496, 0
    %v1566 = vsel %vm1534, %v1500, 0
    %v1568 = vsel %vm1534, %v1504, 0
    %v1570 = vsel %vm1534, %v1508, 0
    %v1572 = vsel %vm1534, %v1512, 0
    %v1574 = vsel %vm1534, %v1516, 0
    %v1575 = vld [vmem:[#allocation7] sm:$0xf]
    %v1576 = vld [vmem:[#allocation7 + $0x4] sm:$0xf]
    %v1577 = vld [vmem:[#allocation7 + $0x8] sm:$0xf]
    %v1578 = vld [vmem:[#allocation7 + $0xc] sm:$0xf]
    %v1579 = vld [vmem:[#allocation7 + $0x10] sm:$0xf]
    %v1580 = vld [vmem:[#allocation7 + $0x14] sm:$0xf]
    %v1581 = vld [vmem:[#allocation7 + $0x18] sm:$0xf]
    %v1582 = vld [vmem:[#allocation7 + $0x1c] sm:$0xf]
    %v1583 = vld [vmem:[#allocation7 + $0x20] sm:$0xf]
    %v1584 = vld [vmem:[#allocation7 + $0x24] sm:$0xf]
    %v1585 = vld [vmem:[#allocation7 + $0x28] sm:$0xf]
    %v1586 = vld [vmem:[#allocation7 + $0x2c] sm:$0xf]
    %v1587 = vld [vmem:[#allocation7 + $0x30] sm:$0xf]
    %v1588 = vld [vmem:[#allocation7 + $0x34] sm:$0xf]
    %v1589 = vld [vmem:[#allocation7 + $0x38] sm:$0xf]
    %v1590 = vld [vmem:[#allocation7 + $0x3c] sm:$0xf]
    %v1591 = vld [vmem:[#allocation7 + $0x40] sm:$0xf]
    %v1592 = vld [vmem:[#allocation7 + $0x44] sm:$0x3]
    %v1611 = vunpack.c.l.b16 %v1575
    %v1612 = vunpack.c.l.b16 %v1576
    %v1613 = vunpack.c.l.b16 %v1577
    %v1614 = vunpack.c.l.b16 %v1578
    %v1615 = vunpack.c.l.b16 %v1579
    %v1616 = vunpack.c.l.b16 %v1580
    %v1617 = vunpack.c.l.b16 %v1581
    %v1618 = vunpack.c.l.b16 %v1582
    %v1619 = vunpack.c.l.b16 %v1583
    %v1620 = vunpack.c.l.b16 %v1584
    %v1621 = vunpack.c.l.b16 %v1585
    %v1622 = vunpack.c.l.b16 %v1586
    %v1623 = vunpack.c.l.b16 %v1587
    %v1624 = vunpack.c.l.b16 %v1588
    %v1625 = vunpack.c.l.b16 %v1589
    %v1626 = vunpack.c.l.b16 %v1590
    %v1627 = vunpack.c.l.b16 %v1591
    %v1628 = vunpack.c.l.b16 %v1592
    %v1629 = vpack.c.b16 %v1612, %v1611
    %v1630 = vpack.c.b16 %v1614, %v1613
    %v1631 = vpack.c.b16 %v1616, %v1615
    %v1632 = vpack.c.b16 %v1618, %v1617
    %v1633 = vpack.c.b16 %v1620, %v1619
    %v1634 = vpack.c.b16 %v1622, %v1621
    %v1635 = vpack.c.b16 %v1624, %v1623
    %v1636 = vpack.c.b16 %v1626, %v1625
    %v1637 = vpack.c.b16 %v1628, %v1627
    %vm1646 = vcmask 97280
    %v1648 = vsel %vm1646, %v1518, 0
    %v1651 = vsel %vm1646, %v1519, 0
    %v1654 = vsel %vm1646, %v1520, 0
    %v1657 = vsel %vm1646, %v1521, 0
    %v1660 = vsel %vm1646, %v1522, 0
    %v1663 = vsel %vm1646, %v1523, 0
    %v1666 = vsel %vm1646, %v1524, 0
    %v1669 = vsel %vm1646, %v1525, 0
    %vm1671 = vcmask 1045504
    %v1673 = vsel %vm1671, %v1637, 0
    %1675 = vmatpush.bf16.msra.mxu0 %v1636
    %1676 = vmatpush.bf16.msra.mxu0 %v1635
    %1677 = vmatpush.bf16.msra.mxu0 %v1634
    %1678 = vmatpush.bf16.msra.mxu0 %v1633
    %1679 = vmatpush.bf16.msra.mxu0 %v1632
    %1680 = vmatpush.bf16.msra.mxu0 %v1631
    %1681 = vmatpush.bf16.msra.mxu0 %v1630
    %1682 = vmatpush.bf16.msra.mxu0 %v1629
    %1683 = vmatmul.bf16.gmra.mxu0 %v1536
    %v1684 = vpop.f32.mrf.mxu0
    %v1685 = vadd.f32 0.0, %v1684
    %v1686 = vpop.f32.mrf.mxu0
    %v1687 = vadd.f32 0.0, %v1686
    %1688 = vmatmul.bf16.gmra.mxu0 %v1539
    %v1689 = vpop.f32.mrf.mxu0
    %v1690 = vadd.f32 0.0, %v1689
    %v1691 = vpop.f32.mrf.mxu0
    %v1692 = vadd.f32 0.0, %v1691
    %1693 = vmatmul.bf16.gmra.mxu0 %v1542
    %v1694 = vpop.f32.mrf.mxu0
    %v1695 = vadd.f32 0.0, %v1694
    %v1696 = vpop.f32.mrf.mxu0
    %v1697 = vadd.f32 0.0, %v1696
    %1698 = vmatmul.bf16.gmra.mxu0 %v1545
    %v1699 = vpop.f32.mrf.mxu0
    %v1700 = vadd.f32 0.0, %v1699
    %v1701 = vpop.f32.mrf.mxu0
    %v1702 = vadd.f32 0.0, %v1701
    %1703 = vmatmul.bf16.gmra.mxu0 %v1548
    %v1704 = vpop.f32.mrf.mxu0
    %v1705 = vadd.f32 0.0, %v1704
    %v1706 = vpop.f32.mrf.mxu0
    %v1707 = vadd.f32 0.0, %v1706
    %1708 = vmatmul.bf16.gmra.mxu0 %v1551
    %v1709 = vpop.f32.mrf.mxu0
    %v1710 = vadd.f32 0.0, %v1709
    %v1711 = vpop.f32.mrf.mxu0
    %v1712 = vadd.f32 0.0, %v1711
    %1713 = vmatmul.bf16.gmra.mxu0 %v1554
    %v1714 = vpop.f32.mrf.mxu0
    %v1715 = vadd.f32 0.0, %v1714
    %v1716 = vpop.f32.mrf.mxu0
    %v1717 = vadd.f32 0.0, %v1716
    %1718 = vmatmul.bf16.gmra.mxu0 %v1557
    %v1719 = vpop.f32.mrf.mxu0
    %v1720 = vadd.f32 0.0, %v1719
    %v1721 = vpop.f32.mrf.mxu0
    %v1722 = vadd.f32 0.0, %v1721
    %1723 = vdwg.mxu0
    %1724 = vmatpush.bf16.msra.mxu0 0
    %1725 = vmatpush.bf16.msra.mxu0 0
    %1726 = vmatpush.bf16.msra.mxu0 0
    %1727 = vmatpush.bf16.msra.mxu0 0
    %1728 = vmatpush.bf16.msra.mxu0 0
    %1729 = vmatpush.bf16.msra.mxu0 0
    %1730 = vmatpush.bf16.msra.mxu0 0
    %1731 = vmatpush.bf16.msra.mxu0 %v1673
    %1732 = vmatmul.bf16.gmra.mxu0 %v1648
    %v1733 = vpop.f32.mrf.mxu0
    %v1734 = vadd.f32 %v1685, %v1733
    %v1735 = vpop.f32.mrf.mxu0
    %v1736 = vadd.f32 %v1687, %v1735
    %1737 = vmatmul.bf16.gmra.mxu0 %v1651
    %v1738 = vpop.f32.mrf.mxu0
    %v1739 = vadd.f32 %v1690, %v1738
    %v1740 = vpop.f32.mrf.mxu0
    %v1741 = vadd.f32 %v1692, %v1740
    %1742 = vmatmul.bf16.gmra.mxu0 %v1654
    %v1743 = vpop.f32.mrf.mxu0
    %v1744 = vadd.f32 %v1695, %v1743
    %v1745 = vpop.f32.mrf.mxu0
    %v1746 = vadd.f32 %v1697, %v1745
    %1747 = vmatmul.bf16.gmra.mxu0 %v1657
    %v1748 = vpop.f32.mrf.mxu0
    %v1749 = vadd.f32 %v1700, %v1748
    %v1750 = vpop.f32.mrf.mxu0
    %v1751 = vadd.f32 %v1702, %v1750
    %1752 = vmatmul.bf16.gmra.mxu0 %v1660
    %v1753 = vpop.f32.mrf.mxu0
    %v1754 = vadd.f32 %v1705, %v1753
    %v1755 = vpop.f32.mrf.mxu0
    %v1756 = vadd.f32 %v1707, %v1755
    %1757 = vmatmul.bf16.gmra.mxu0 %v1663
    %v1758 = vpop.f32.mrf.mxu0
    %v1759 = vadd.f32 %v1710, %v1758
    %v1760 = vpop.f32.mrf.mxu0
    %v1761 = vadd.f32 %v1712, %v1760
    %1762 = vmatmul.bf16.gmra.mxu0 %v1666
    %v1763 = vpop.f32.mrf.mxu0
    %v1764 = vadd.f32 %v1715, %v1763
    %v1765 = vpop.f32.mrf.mxu0
    %v1766 = vadd.f32 %v1717, %v1765
    %1767 = vmatmul.bf16.gmra.mxu0 %v1669
    %v1768 = vpop.f32.mrf.mxu0
    %v1769 = vadd.f32 %v1720, %v1768
    %v1770 = vpop.f32.mrf.mxu0
    %v1771 = vadd.f32 %v1722, %v1770
    %1772 = vdwg.mxu0
    %v1773 = vsel %vm1646, %v1560, 0
    %v1775 = vsel %vm1646, %v1562, 0
    %v1777 = vsel %vm1646, %v1564, 0
    %v1779 = vsel %vm1646, %v1566, 0
    %v1781 = vsel %vm1646, %v1568, 0
    %v1783 = vsel %vm1646, %v1570, 0
    %v1785 = vsel %vm1646, %v1572, 0
    %v1787 = vsel %vm1646, %v1574, 0
    %1789 = vmatpush.bf16.msra.mxu0 %v1636
    %1790 = vmatpush.bf16.msra.mxu0 %v1635
    %1791 = vmatpush.bf16.msra.mxu0 %v1634
    %1792 = vmatpush.bf16.msra.mxu0 %v1633
    %1793 = vmatpush.bf16.msra.mxu0 %v1632
    %1794 = vmatpush.bf16.msra.mxu0 %v1631
    %1795 = vmatpush.bf16.msra.mxu0 %v1630
    %1796 = vmatpush.bf16.msra.mxu0 %v1629
    %1797 = vmatmul.bf16.gmra.mxu0 %v1518
    %v1798 = vpop.f32.mrf.mxu0
    %v1799 = vadd.f32 0.0, %v1798
    %v1800 = vpop.f32.mrf.mxu0
    %v1801 = vadd.f32 0.0, %v1800
    %1802 = vmatmul.bf16.gmra.mxu0 %v1519
    %v1803 = vpop.f32.mrf.mxu0
    %v1804 = vadd.f32 0.0, %v1803
    %v1805 = vpop.f32.mrf.mxu0
    %v1806 = vadd.f32 0.0, %v1805
    %1807 = vmatmul.bf16.gmra.mxu0 %v1520
    %v1808 = vpop.f32.mrf.mxu0
    %v1809 = vadd.f32 0.0, %v1808
    %v1810 = vpop.f32.mrf.mxu0
    %v1811 = vadd.f32 0.0, %v1810
    %1812 = vmatmul.bf16.gmra.mxu0 %v1521
    %v1813 = vpop.f32.mrf.mxu0
    %v1814 = vadd.f32 0.0, %v1813
    %v1815 = vpop.f32.mrf.mxu0
    %v1816 = vadd.f32 0.0, %v1815
    %1817 = vmatmul.bf16.gmra.mxu0 %v1522
    %v1818 = vpop.f32.mrf.mxu0
    %v1819 = vadd.f32 0.0, %v1818
    %v1820 = vpop.f32.mrf.mxu0
    %v1821 = vadd.f32 0.0, %v1820
    %1822 = vmatmul.bf16.gmra.mxu0 %v1523
    %v1823 = vpop.f32.mrf.mxu0
    %v1824 = vadd.f32 0.0, %v1823
    %v1825 = vpop.f32.mrf.mxu0
    %v1826 = vadd.f32 0.0, %v1825
    %1827 = vmatmul.bf16.gmra.mxu0 %v1524
    %v1828 = vpop.f32.mrf.mxu0
    %v1829 = vadd.f32 0.0, %v1828
    %v1830 = vpop.f32.mrf.mxu0
    %v1831 = vadd.f32 0.0, %v1830
    %1832 = vmatmul.bf16.gmra.mxu0 %v1525
    %v1833 = vpop.f32.mrf.mxu0
    %v1834 = vadd.f32 0.0, %v1833
    %v1835 = vpop.f32.mrf.mxu0
    %v1836 = vadd.f32 0.0, %v1835
    %1837 = vdwg.mxu0
    %1838 = vmatpush.bf16.msra.mxu0 0
    %1839 = vmatpush.bf16.msra.mxu0 0
    %1840 = vmatpush.bf16.msra.mxu0 0
    %1841 = vmatpush.bf16.msra.mxu0 0
    %1842 = vmatpush.bf16.msra.mxu0 0
    %1843 = vmatpush.bf16.msra.mxu0 0
    %1844 = vmatpush.bf16.msra.mxu0 0
    %1845 = vmatpush.bf16.msra.mxu0 %v1673
    %1846 = vmatmul.bf16.gmra.mxu0 %v1773
    %v1847 = vpop.f32.mrf.mxu0
    %v1848 = vadd.f32 %v1799, %v1847
    %v1849 = vpop.f32.mrf.mxu0
    %v1850 = vadd.f32 %v1801, %v1849
    %1851 = vmatmul.bf16.gmra.mxu0 %v1775
    %v1852 = vpop.f32.mrf.mxu0
    %v1853 = vadd.f32 %v1804, %v1852
    %v1854 = vpop.f32.mrf.mxu0
    %v1855 = vadd.f32 %v1806, %v1854
    %1856 = vmatmul.bf16.gmra.mxu0 %v1777
    %v1857 = vpop.f32.mrf.mxu0
    %v1858 = vadd.f32 %v1809, %v1857
    %v1859 = vpop.f32.mrf.mxu0
    %v1860 = vadd.f32 %v1811, %v1859
    %1861 = vmatmul.bf16.gmra.mxu0 %v1779
    %v1862 = vpop.f32.mrf.mxu0
    %v1863 = vadd.f32 %v1814, %v1862
    %v1864 = vpop.f32.mrf.mxu0
    %v1865 = vadd.f32 %v1816, %v1864
    %1866 = vmatmul.bf16.gmra.mxu0 %v1781
    %v1867 = vpop.f32.mrf.mxu0
    %v1868 = vadd.f32 %v1819, %v1867
    %v1869 = vpop.f32.mrf.mxu0
    %v1870 = vadd.f32 %v1821, %v1869
    %1871 = vmatmul.bf16.gmra.mxu0 %v1783
    %v1872 = vpop.f32.mrf.mxu0
    %v1873 = vadd.f32 %v1824, %v1872
    %v1874 = vpop.f32.mrf.mxu0
    %v1875 = vadd.f32 %v1826, %v1874
    %1876 = vmatmul.bf16.gmra.mxu0 %v1785
    %v1877 = vpop.f32.mrf.mxu0
    %v1878 = vadd.f32 %v1829, %v1877
    %v1879 = vpop.f32.mrf.mxu0
    %v1880 = vadd.f32 %v1831, %v1879
    %1881 = vmatmul.bf16.gmra.mxu0 %v1787
    %v1882 = vpop.f32.mrf.mxu0
    %v1883 = vadd.f32 %v1834, %v1882
    %v1884 = vpop.f32.mrf.mxu0
    %v1885 = vadd.f32 %v1836, %v1884
    %1886 = vdwg.mxu0
    %v1887 = vld [vmem:[%s8] sm:$0x3]
    %v1889 = vperm.slane %v1887, 0
    %v1890 = vperm.slane %v1887, 1
    %v1893 = vadd.f32 %v1734, %v1889
    %v1894 = vadd.f32 %v1848, %v1890
    %v1895 = vadd.f32 %v1736, %v1889
    %v1896 = vadd.f32 %v1850, %v1890
    %v1897 = vadd.f32 %v1739, %v1889
    %v1898 = vadd.f32 %v1853, %v1890
    %v1899 = vadd.f32 %v1741, %v1889
    %v1900 = vadd.f32 %v1855, %v1890
    %v1901 = vadd.f32 %v1744, %v1889
    %v1902 = vadd.f32 %v1858, %v1890
    %v1903 = vadd.f32 %v1746, %v1889
    %v1904 = vadd.f32 %v1860, %v1890
    %v1905 = vadd.f32 %v1749, %v1889
    %v1906 = vadd.f32 %v1863, %v1890
    %v1907 = vadd.f32 %v1751, %v1889
    %v1908 = vadd.f32 %v1865, %v1890
    %v1909 = vadd.f32 %v1754, %v1889
    %v1910 = vadd.f32 %v1868, %v1890
    %v1911 = vadd.f32 %v1756, %v1889
    %v1912 = vadd.f32 %v1870, %v1890
    %v1913 = vadd.f32 %v1759, %v1889
    %v1914 = vadd.f32 %v1873, %v1890
    %v1915 = vadd.f32 %v1761, %v1889
    %v1916 = vadd.f32 %v1875, %v1890
    %v1917 = vadd.f32 %v1764, %v1889
    %v1918 = vadd.f32 %v1878, %v1890
    %v1919 = vadd.f32 %v1766, %v1889
    %v1920 = vadd.f32 %v1880, %v1890
    %v1921 = vadd.f32 %v1769, %v1889
    %v1922 = vadd.f32 %v1883, %v1890
    %v1923 = vadd.f32 %v1771, %v1889
    %v1924 = vadd.f32 %v1885, %v1890
    %vm1925 = vcmp.gt.f32.partialorder %v1893, 0.0
    %vm1926 = vcmp.gt.f32.partialorder %v1894, 0.0
    %vm1927 = vcmp.gt.f32.partialorder %v1895, 0.0
    %vm1928 = vcmp.gt.f32.partialorder %v1896, 0.0
    %vm1929 = vcmp.gt.f32.partialorder %v1897, 0.0
    %vm1930 = vcmp.gt.f32.partialorder %v1898, 0.0
    %vm1931 = vcmp.gt.f32.partialorder %v1899, 0.0
    %vm1932 = vcmp.gt.f32.partialorder %v1900, 0.0
    %vm1933 = vcmp.gt.f32.partialorder %v1901, 0.0
    %vm1934 = vcmp.gt.f32.partialorder %v1902, 0.0
    %vm1935 = vcmp.gt.f32.partialorder %v1903, 0.0
    %vm1936 = vcmp.gt.f32.partialorder %v1904, 0.0
    %vm1937 = vcmp.gt.f32.partialorder %v1905, 0.0
    %vm1938 = vcmp.gt.f32.partialorder %v1906, 0.0
    %vm1939 = vcmp.gt.f32.partialorder %v1907, 0.0
    %vm1940 = vcmp.gt.f32.partialorder %v1908, 0.0
    %vm1941 = vcmp.gt.f32.partialorder %v1909, 0.0
    %vm1942 = vcmp.gt.f32.partialorder %v1910, 0.0
    %vm1943 = vcmp.gt.f32.partialorder %v1911, 0.0
    %vm1944 = vcmp.gt.f32.partialorder %v1912, 0.0
    %vm1945 = vcmp.gt.f32.partialorder %v1913, 0.0
    %vm1946 = vcmp.gt.f32.partialorder %v1914, 0.0
    %vm1947 = vcmp.gt.f32.partialorder %v1915, 0.0
    %vm1948 = vcmp.gt.f32.partialorder %v1916, 0.0
    %vm1949 = vcmp.gt.f32.partialorder %v1917, 0.0
    %vm1950 = vcmp.gt.f32.partialorder %v1918, 0.0
    %vm1951 = vcmp.gt.f32.partialorder %v1919, 0.0
    %vm1952 = vcmp.gt.f32.partialorder %v1920, 0.0
    %vm1953 = vcmp.gt.f32.partialorder %v1921, 0.0
    %vm1954 = vcmp.gt.f32.partialorder %v1922, 0.0
    %vm1955 = vcmp.gt.f32.partialorder %v1923, 0.0
    %vm1956 = vcmp.gt.f32.partialorder %v1924, 0.0
    %v1957 = vmin.f32 %v1893, 0.0
    %v1958 = vmin.f32 %v1894, 0.0
    %v1959 = vmin.f32 %v1895, 0.0
    %v1960 = vmin.f32 %v1896, 0.0
    %v1961 = vmin.f32 %v1897, 0.0
    %v1962 = vmin.f32 %v1898, 0.0
    %v1963 = vmin.f32 %v1899, 0.0
    %v1964 = vmin.f32 %v1900, 0.0
    %v1965 = vmin.f32 %v1901, 0.0
    %v1966 = vmin.f32 %v1902, 0.0
    %v1967 = vmin.f32 %v1903, 0.0
    %v1968 = vmin.f32 %v1904, 0.0
    %v1969 = vmin.f32 %v1905, 0.0
    %v1970 = vmin.f32 %v1906, 0.0
    %v1971 = vmin.f32 %v1907, 0.0
    %v1972 = vmin.f32 %v1908, 0.0
    %v1973 = vmin.f32 %v1909, 0.0
    %v1974 = vmin.f32 %v1910, 0.0
    %v1975 = vmin.f32 %v1911, 0.0
    %v1976 = vmin.f32 %v1912, 0.0
    %v1977 = vmin.f32 %v1913, 0.0
    %v1978 = vmin.f32 %v1914, 0.0
    %v1979 = vmin.f32 %v1915, 0.0
    %v1980 = vmin.f32 %v1916, 0.0
    %v1981 = vmin.f32 %v1917, 0.0
    %v1982 = vmin.f32 %v1918, 0.0
    %v1983 = vmin.f32 %v1919, 0.0
    %v1984 = vmin.f32 %v1920, 0.0
    %v1985 = vmin.f32 %v1921, 0.0
    %v1986 = vmin.f32 %v1922, 0.0
    %v1987 = vmin.f32 %v1923, 0.0
    %v1988 = vmin.f32 %v1924, 0.0
    %v1989 = vmul.f32 %v1957, 1.442695
    %v1990 = vpow.pop %v1989
    %v1991 = vmul.f32 %v1958, 1.442695
    %v1992 = vpow.pop %v1991
    %v1993 = vmul.f32 %v1959, 1.442695
    %v1994 = vpow.pop %v1993
    %v1995 = vmul.f32 %v1960, 1.442695
    %v1996 = vpow.pop %v1995
    %v1997 = vmul.f32 %v1961, 1.442695
    %v1998 = vpow.pop %v1997
    %v1999 = vmul.f32 %v1962, 1.442695
    %v2000 = vpow.pop %v1999
    %v2001 = vmul.f32 %v1963, 1.442695
    %v2002 = vpow.pop %v2001
    %v2003 = vmul.f32 %v1964, 1.442695
    %v2004 = vpow.pop %v2003
    %v2005 = vmul.f32 %v1965, 1.442695
    %v2006 = vpow.pop %v2005
    %v2007 = vmul.f32 %v1966, 1.442695
    %v2008 = vpow.pop %v2007
    %v2009 = vmul.f32 %v1967, 1.442695
    %v2010 = vpow.pop %v2009
    %v2011 = vmul.f32 %v1968, 1.442695
    %v2012 = vpow.pop %v2011
    %v2013 = vmul.f32 %v1969, 1.442695
    %v2014 = vpow.pop %v2013
    %v2015 = vmul.f32 %v1970, 1.442695
    %v2016 = vpow.pop %v2015
    %v2017 = vmul.f32 %v1971, 1.442695
    %v2018 = vpow.pop %v2017
    %v2019 = vmul.f32 %v1972, 1.442695
    %v2020 = vpow.pop %v2019
    %v2021 = vmul.f32 %v1973, 1.442695
    %v2022 = vpow.pop %v2021
    %v2023 = vmul.f32 %v1974, 1.442695
    %v2024 = vpow.pop %v2023
    %v2025 = vmul.f32 %v1975, 1.442695
    %v2026 = vpow.pop %v2025
    %v2027 = vmul.f32 %v1976, 1.442695
    %v2028 = vpow.pop %v2027
    %v2029 = vmul.f32 %v1977, 1.442695
    %v2030 = vpow.pop %v2029
    %v2031 = vmul.f32 %v1978, 1.442695
    %v2032 = vpow.pop %v2031
    %v2033 = vmul.f32 %v1979, 1.442695
    %v2034 = vpow.pop %v2033
    %v2035 = vmul.f32 %v1980, 1.442695
    %v2036 = vpow.pop %v2035
    %v2037 = vmul.f32 %v1981, 1.442695
    %v2038 = vpow.pop %v2037
    %v2039 = vmul.f32 %v1982, 1.442695
    %v2040 = vpow.pop %v2039
    %v2041 = vmul.f32 %v1983, 1.442695
    %v2042 = vpow.pop %v2041
    %v2043 = vmul.f32 %v1984, 1.442695
    %v2044 = vpow.pop %v2043
    %v2045 = vmul.f32 %v1985, 1.442695
    %v2046 = vpow.pop %v2045
    %v2047 = vmul.f32 %v1986, 1.442695
    %v2048 = vpow.pop %v2047
    %v2049 = vmul.f32 %v1987, 1.442695
    %v2050 = vpow.pop %v2049
    %v2051 = vmul.f32 %v1988, 1.442695
    %v2052 = vpow.pop %v2051
    %v2053 = vsub.f32 %v1990, 1.0
    %v2054 = vsub.f32 %v1992, 1.0
    %v2055 = vsub.f32 %v1994, 1.0
    %v2056 = vsub.f32 %v1996, 1.0
    %v2057 = vsub.f32 %v1998, 1.0
    %v2058 = vsub.f32 %v2000, 1.0
    %v2059 = vsub.f32 %v2002, 1.0
    %v2060 = vsub.f32 %v2004, 1.0
    %v2061 = vsub.f32 %v2006, 1.0
    %v2062 = vsub.f32 %v2008, 1.0
    %v2063 = vsub.f32 %v2010, 1.0
    %v2064 = vsub.f32 %v2012, 1.0
    %v2065 = vsub.f32 %v2014, 1.0
    %v2066 = vsub.f32 %v2016, 1.0
    %v2067 = vsub.f32 %v2018, 1.0
    %v2068 = vsub.f32 %v2020, 1.0
    %v2069 = vsub.f32 %v2022, 1.0
    %v2070 = vsub.f32 %v2024, 1.0
    %v2071 = vsub.f32 %v2026, 1.0
    %v2072 = vsub.f32 %v2028, 1.0
    %v2073 = vsub.f32 %v2030, 1.0
    %v2074 = vsub.f32 %v2032, 1.0
    %v2075 = vsub.f32 %v2034, 1.0
    %v2076 = vsub.f32 %v2036, 1.0
    %v2077 = vsub.f32 %v2038, 1.0
    %v2078 = vsub.f32 %v2040, 1.0
    %v2079 = vsub.f32 %v2042, 1.0
    %v2080 = vsub.f32 %v2044, 1.0
    %v2081 = vsub.f32 %v2046, 1.0
    %v2082 = vsub.f32 %v2048, 1.0
    %v2083 = vsub.f32 %v2050, 1.0
    %v2084 = vsub.f32 %v2052, 1.0
    %v2085 = vsel %vm1925, %v1893, %v2053
    %v2086 = vsel %vm1926, %v1894, %v2054
    %v2087 = vsel %vm1927, %v1895, %v2055
    %v2088 = vsel %vm1928, %v1896, %v2056
    %v2089 = vsel %vm1929, %v1897, %v2057
    %v2090 = vsel %vm1930, %v1898, %v2058
    %v2091 = vsel %vm1931, %v1899, %v2059
    %v2092 = vsel %vm1932, %v1900, %v2060
    %v2093 = vsel %vm1933, %v1901, %v2061
    %v2094 = vsel %vm1934, %v1902, %v2062
    %v2095 = vsel %vm1935, %v1903, %v2063
    %v2096 = vsel %vm1936, %v1904, %v2064
    %v2097 = vsel %vm1937, %v1905, %v2065
    %v2098 = vsel %vm1938, %v1906, %v2066
    %v2099 = vsel %vm1939, %v1907, %v2067
    %v2100 = vsel %vm1940, %v1908, %v2068
    %v2101 = vsel %vm1941, %v1909, %v2069
    %v2102 = vsel %vm1942, %v1910, %v2070
    %v2103 = vsel %vm1943, %v1911, %v2071
    %v2104 = vsel %vm1944, %v1912, %v2072
    %v2105 = vsel %vm1945, %v1913, %v2073
    %v2106 = vsel %vm1946, %v1914, %v2074
    %v2107 = vsel %vm1947, %v1915, %v2075
    %v2108 = vsel %vm1948, %v1916, %v2076
    %v2109 = vsel %vm1949, %v1917, %v2077
    %v2110 = vsel %vm1950, %v1918, %v2078
    %v2111 = vsel %vm1951, %v1919, %v2079
    %v2112 = vsel %vm1952, %v1920, %v2080
    %v2113 = vsel %vm1953, %v1921, %v2081
    %v2114 = vsel %vm1954, %v1922, %v2082
    %v2115 = vsel %vm1955, %v1923, %v2083
    %v2116 = vsel %vm1956, %v1924, %v2084
    %v2117 = vadd.f32 %v2085, %v2086
    %2118 = vadd.xlane.f32.xlu0 %v2117
    %v2119 = vpop.xlane.xlu0 %2118
    %v2120 = vadd.f32 %v2087, %v2088
    %2121 = vadd.xlane.f32.xlu0 %v2120
    %v2122 = vpop.xlane.xlu0 %2121
    %v2123 = vadd.f32 %v2089, %v2090
    %2124 = vadd.xlane.f32.xlu0 %v2123
    %v2125 = vpop.xlane.xlu0 %2124
    %v2126 = vadd.f32 %v2091, %v2092
    %2127 = vadd.xlane.f32.xlu0 %v2126
    %v2128 = vpop.xlane.xlu0 %2127
    %v2129 = vadd.f32 %v2093, %v2094
    %2130 = vadd.xlane.f32.xlu0 %v2129
    %v2131 = vpop.xlane.xlu0 %2130
    %v2132 = vadd.f32 %v2095, %v2096
    %2133 = vadd.xlane.f32.xlu0 %v2132
    %v2134 = vpop.xlane.xlu0 %2133
    %v2135 = vadd.f32 %v2097, %v2098
    %2136 = vadd.xlane.f32.xlu0 %v2135
    %v2137 = vpop.xlane.xlu0 %2136
    %v2138 = vadd.f32 %v2099, %v2100
    %2139 = vadd.xlane.f32.xlu0 %v2138
    %v2140 = vpop.xlane.xlu0 %2139
    %v2141 = vadd.f32 %v2101, %v2102
    %2142 = vadd.xlane.f32.xlu0 %v2141
    %v2143 = vpop.xlane.xlu0 %2142
    %v2144 = vadd.f32 %v2103, %v2104
    %2145 = vadd.xlane.f32.xlu0 %v2144
    %v2146 = vpop.xlane.xlu0 %2145
    %v2147 = vadd.f32 %v2105, %v2106
    %2148 = vadd.xlane.f32.xlu0 %v2147
    %v2149 = vpop.xlane.xlu0 %2148
    %v2150 = vadd.f32 %v2107, %v2108
    %2151 = vadd.xlane.f32.xlu0 %v2150
    %v2152 = vpop.xlane.xlu0 %2151
    %v2153 = vadd.f32 %v2109, %v2110
    %2154 = vadd.xlane.f32.xlu0 %v2153
    %v2155 = vpop.xlane.xlu0 %2154
    %v2156 = vadd.f32 %v2111, %v2112
    %2157 = vadd.xlane.f32.xlu0 %v2156
    %v2158 = vpop.xlane.xlu0 %2157
    %v2159 = vadd.f32 %v2113, %v2114
    %2160 = vadd.xlane.f32.xlu0 %v2159
    %v2161 = vpop.xlane.xlu0 %2160
    %v2162 = vadd.f32 %v2115, %v2116
    %2163 = vadd.xlane.f32.xlu0 %v2162
    %v2164 = vpop.xlane.xlu0 %2163
    %v2165 = vmul.f32 %v2119, %v928
    %v2166 = vmul.f32 %v2122, %v928
    %v2167 = vmul.f32 %v2125, %v928
    %v2168 = vmul.f32 %v2128, %v928
    %v2169 = vmul.f32 %v2131, %v928
    %v2170 = vmul.f32 %v2134, %v928
    %v2171 = vmul.f32 %v2137, %v928
    %v2172 = vmul.f32 %v2140, %v928
    %v2173 = vmul.f32 %v2143, %v928
    %v2174 = vmul.f32 %v2146, %v928
    %v2175 = vmul.f32 %v2149, %v928
    %v2176 = vmul.f32 %v2152, %v928
    %v2177 = vmul.f32 %v2155, %v928
    %v2178 = vmul.f32 %v2158, %v928
    %v2179 = vmul.f32 %v2161, %v928
    %v2180 = vmul.f32 %v2164, %v928
    %v2181 = vmul.f32 %v2085, %v2085
    %v2182 = vmul.f32 %v2086, %v2086
    %v2183 = vmul.f32 %v2087, %v2087
    %v2184 = vmul.f32 %v2088, %v2088
    %v2185 = vmul.f32 %v2089, %v2089
    %v2186 = vmul.f32 %v2090, %v2090
    %v2187 = vmul.f32 %v2091, %v2091
    %v2188 = vmul.f32 %v2092, %v2092
    %v2189 = vmul.f32 %v2093, %v2093
    %v2190 = vmul.f32 %v2094, %v2094
    %v2191 = vmul.f32 %v2095, %v2095
    %v2192 = vmul.f32 %v2096, %v2096
    %v2193 = vmul.f32 %v2097, %v2097
    %v2194 = vmul.f32 %v2098, %v2098
    %v2195 = vmul.f32 %v2099, %v2099
    %v2196 = vmul.f32 %v2100, %v2100
    %v2197 = vmul.f32 %v2101, %v2101
    %v2198 = vmul.f32 %v2102, %v2102
    %v2199 = vmul.f32 %v2103, %v2103
    %v2200 = vmul.f32 %v2104, %v2104
    %v2201 = vmul.f32 %v2105, %v2105
    %v2202 = vmul.f32 %v2106, %v2106
    %v2203 = vmul.f32 %v2107, %v2107
    %v2204 = vmul.f32 %v2108, %v2108
    %v2205 = vmul.f32 %v2109, %v2109
    %v2206 = vmul.f32 %v2110, %v2110
    %v2207 = vmul.f32 %v2111, %v2111
    %v2208 = vmul.f32 %v2112, %v2112
    %v2209 = vmul.f32 %v2113, %v2113
    %v2210 = vmul.f32 %v2114, %v2114
    %v2211 = vmul.f32 %v2115, %v2115
    %v2212 = vmul.f32 %v2116, %v2116
    %v2213 = vadd.f32 %v2181, %v2182
    %2214 = vadd.xlane.f32.xlu0 %v2213
    %v2215 = vpop.xlane.xlu0 %2214
    %v2216 = vadd.f32 %v2183, %v2184
    %2217 = vadd.xlane.f32.xlu0 %v2216
    %v2218 = vpop.xlane.xlu0 %2217
    %v2219 = vadd.f32 %v2185, %v2186
    %2220 = vadd.xlane.f32.xlu0 %v2219
    %v2221 = vpop.xlane.xlu0 %2220
    %v2222 = vadd.f32 %v2187, %v2188
    %2223 = vadd.xlane.f32.xlu0 %v2222
    %v2224 = vpop.xlane.xlu0 %2223
    %v2225 = vadd.f32 %v2189, %v2190
    %2226 = vadd.xlane.f32.xlu0 %v2225
    %v2227 = vpop.xlane.xlu0 %2226
    %v2228 = vadd.f32 %v2191, %v2192
    %2229 = vadd.xlane.f32.xlu0 %v2228
    %v2230 = vpop.xlane.xlu0 %2229
    %v2231 = vadd.f32 %v2193, %v2194
    %2232 = vadd.xlane.f32.xlu0 %v2231
    %v2233 = vpop.xlane.xlu0 %2232
    %v2234 = vadd.f32 %v2195, %v2196
    %2235 = vadd.xlane.f32.xlu0 %v2234
    %v2236 = vpop.xlane.xlu0 %2235
    %v2237 = vadd.f32 %v2197, %v2198
    %2238 = vadd.xlane.f32.xlu0 %v2237
    %v2239 = vpop.xlane.xlu0 %2238
    %v2240 = vadd.f32 %v2199, %v2200
    %2241 = vadd.xlane.f32.xlu0 %v2240
    %v2242 = vpop.xlane.xlu0 %2241
    %v2243 = vadd.f32 %v2201, %v2202
    %2244 = vadd.xlane.f32.xlu0 %v2243
    %v2245 = vpop.xlane.xlu0 %2244
    %v2246 = vadd.f32 %v2203, %v2204
    %2247 = vadd.xlane.f32.xlu0 %v2246
    %v2248 = vpop.xlane.xlu0 %2247
    %v2249 = vadd.f32 %v2205, %v2206
    %2250 = vadd.xlane.f32.xlu0 %v2249
    %v2251 = vpop.xlane.xlu0 %2250
    %v2252 = vadd.f32 %v2207, %v2208
    %2253 = vadd.xlane.f32.xlu0 %v2252
    %v2254 = vpop.xlane.xlu0 %2253
    %v2255 = vadd.f32 %v2209, %v2210
    %2256 = vadd.xlane.f32.xlu0 %v2255
    %v2257 = vpop.xlane.xlu0 %2256
    %v2258 = vadd.f32 %v2211, %v2212
    %2259 = vadd.xlane.f32.xlu0 %v2258
    %v2260 = vpop.xlane.xlu0 %2259
    %v2261 = vmul.f32 %v2215, %v928
    %v2262 = vmul.f32 %v2218, %v928
    %v2263 = vmul.f32 %v2221, %v928
    %v2264 = vmul.f32 %v2224, %v928
    %v2265 = vmul.f32 %v2227, %v928
    %v2266 = vmul.f32 %v2230, %v928
    %v2267 = vmul.f32 %v2233, %v928
    %v2268 = vmul.f32 %v2236, %v928
    %v2269 = vmul.f32 %v2239, %v928
    %v2270 = vmul.f32 %v2242, %v928
    %v2271 = vmul.f32 %v2245, %v928
    %v2272 = vmul.f32 %v2248, %v928
    %v2273 = vmul.f32 %v2251, %v928
    %v2274 = vmul.f32 %v2254, %v928
    %v2275 = vmul.f32 %v2257, %v928
    %v2276 = vmul.f32 %v2260, %v928
    %v2277 = vmul.f32 %v2165, %v2165
    %v2278 = vmul.f32 %v2166, %v2166
    %v2279 = vmul.f32 %v2167, %v2167
    %v2280 = vmul.f32 %v2168, %v2168
    %v2281 = vmul.f32 %v2169, %v2169
    %v2282 = vmul.f32 %v2170, %v2170
    %v2283 = vmul.f32 %v2171, %v2171
    %v2284 = vmul.f32 %v2172, %v2172
    %v2285 = vmul.f32 %v2173, %v2173
    %v2286 = vmul.f32 %v2174, %v2174
    %v2287 = vmul.f32 %v2175, %v2175
    %v2288 = vmul.f32 %v2176, %v2176
    %v2289 = vmul.f32 %v2177, %v2177
    %v2290 = vmul.f32 %v2178, %v2178
    %v2291 = vmul.f32 %v2179, %v2179
    %v2292 = vmul.f32 %v2180, %v2180
    %v2293 = vsub.f32 %v2261, %v2277
    %v2294 = vsub.f32 %v2262, %v2278
    %v2295 = vsub.f32 %v2263, %v2279
    %v2296 = vsub.f32 %v2264, %v2280
    %v2297 = vsub.f32 %v2265, %v2281
    %v2298 = vsub.f32 %v2266, %v2282
    %v2299 = vsub.f32 %v2267, %v2283
    %v2300 = vsub.f32 %v2268, %v2284
    %v2301 = vsub.f32 %v2269, %v2285
    %v2302 = vsub.f32 %v2270, %v2286
    %v2303 = vsub.f32 %v2271, %v2287
    %v2304 = vsub.f32 %v2272, %v2288
    %v2305 = vsub.f32 %v2273, %v2289
    %v2306 = vsub.f32 %v2274, %v2290
    %v2307 = vsub.f32 %v2275, %v2291
    %v2308 = vsub.f32 %v2276, %v2292
    %v2309 = vmax.f32 %v2293, 0.0
    %v2310 = vmax.f32 %v2294, 0.0
    %v2311 = vmax.f32 %v2295, 0.0
    %v2312 = vmax.f32 %v2296, 0.0
    %v2313 = vmax.f32 %v2297, 0.0
    %v2314 = vmax.f32 %v2298, 0.0
    %v2315 = vmax.f32 %v2299, 0.0
    %v2316 = vmax.f32 %v2300, 0.0
    %v2317 = vmax.f32 %v2301, 0.0
    %v2318 = vmax.f32 %v2302, 0.0
    %v2319 = vmax.f32 %v2303, 0.0
    %v2320 = vmax.f32 %v2304, 0.0
    %v2321 = vmax.f32 %v2305, 0.0
    %v2322 = vmax.f32 %v2306, 0.0
    %v2323 = vmax.f32 %v2307, 0.0
    %v2324 = vmax.f32 %v2308, 0.0
    %v2325 = vsub.f32 %v2085, %v2165
    %v2326 = vsub.f32 %v2086, %v2165
    %v2327 = vsub.f32 %v2087, %v2166
    %v2328 = vsub.f32 %v2088, %v2166
    %v2329 = vsub.f32 %v2089, %v2167
    %v2330 = vsub.f32 %v2090, %v2167
    %v2331 = vsub.f32 %v2091, %v2168
    %v2332 = vsub.f32 %v2092, %v2168
    %v2333 = vsub.f32 %v2093, %v2169
    %v2334 = vsub.f32 %v2094, %v2169
    %v2335 = vsub.f32 %v2095, %v2170
    %v2336 = vsub.f32 %v2096, %v2170
    %v2337 = vsub.f32 %v2097, %v2171
    %v2338 = vsub.f32 %v2098, %v2171
    %v2339 = vsub.f32 %v2099, %v2172
    %v2340 = vsub.f32 %v2100, %v2172
    %v2341 = vsub.f32 %v2101, %v2173
    %v2342 = vsub.f32 %v2102, %v2173
    %v2343 = vsub.f32 %v2103, %v2174
    %v2344 = vsub.f32 %v2104, %v2174
    %v2345 = vsub.f32 %v2105, %v2175
    %v2346 = vsub.f32 %v2106, %v2175
    %v2347 = vsub.f32 %v2107, %v2176
    %v2348 = vsub.f32 %v2108, %v2176
    %v2349 = vsub.f32 %v2109, %v2177
    %v2350 = vsub.f32 %v2110, %v2177
    %v2351 = vsub.f32 %v2111, %v2178
    %v2352 = vsub.f32 %v2112, %v2178
    %v2353 = vsub.f32 %v2113, %v2179
    %v2354 = vsub.f32 %v2114, %v2179
    %v2355 = vsub.f32 %v2115, %v2180
    %v2356 = vsub.f32 %v2116, %v2180
    %v2357 = vadd.f32 %v2309, 1e-05
    %v2358 = vadd.f32 %v2310, 1e-05
    %v2359 = vadd.f32 %v2311, 1e-05
    %v2360 = vadd.f32 %v2312, 1e-05
    %v2361 = vadd.f32 %v2313, 1e-05
    %v2362 = vadd.f32 %v2314, 1e-05
    %v2363 = vadd.f32 %v2315, 1e-05
    %v2364 = vadd.f32 %v2316, 1e-05
    %v2365 = vadd.f32 %v2317, 1e-05
    %v2366 = vadd.f32 %v2318, 1e-05
    %v2367 = vadd.f32 %v2319, 1e-05
    %v2368 = vadd.f32 %v2320, 1e-05
    %v2369 = vadd.f32 %v2321, 1e-05
    %v2370 = vadd.f32 %v2322, 1e-05
    %v2371 = vadd.f32 %v2323, 1e-05
    %v2372 = vadd.f32 %v2324, 1e-05
    %v2373 = vrsqrt.pop %v2357
    %v2374 = vmul.f32 %v2373, %v2357
    %v2375 = vmul.f32 %v2374, %v2373
    %v2376 = vmul.f32 0.5, %v2375
    %v2377 = vsub.f32 1.5, %v2376
    %v2378 = vmul.f32 %v2373, %v2377
    %vm2379 = vweird.f32 %v2357
    %vm2380 = vweird.f32 %v2373
    %vm2381 = vmor %vm2379, %vm2380
    %v2382 = vsel %vm2381, %v2373, %v2378
    %v2383 = vrsqrt.pop %v2358
    %v2384 = vmul.f32 %v2383, %v2358
    %v2385 = vmul.f32 %v2384, %v2383
    %v2386 = vmul.f32 0.5, %v2385
    %v2387 = vsub.f32 1.5, %v2386
    %v2388 = vmul.f32 %v2383, %v2387
    %vm2389 = vweird.f32 %v2358
    %vm2390 = vweird.f32 %v2383
    %vm2391 = vmor %vm2389, %vm2390
    %v2392 = vsel %vm2391, %v2383, %v2388
    %v2393 = vrsqrt.pop %v2359
    %v2394 = vmul.f32 %v2393, %v2359
    %v2395 = vmul.f32 %v2394, %v2393
    %v2396 = vmul.f32 0.5, %v2395
    %v2397 = vsub.f32 1.5, %v2396
    %v2398 = vmul.f32 %v2393, %v2397
    %vm2399 = vweird.f32 %v2359
    %vm2400 = vweird.f32 %v2393
    %vm2401 = vmor %vm2399, %vm2400
    %v2402 = vsel %vm2401, %v2393, %v2398
    %v2403 = vrsqrt.pop %v2360
    %v2404 = vmul.f32 %v2403, %v2360
    %v2405 = vmul.f32 %v2404, %v2403
    %v2406 = vmul.f32 0.5, %v2405
    %v2407 = vsub.f32 1.5, %v2406
    %v2408 = vmul.f32 %v2403, %v2407
    %vm2409 = vweird.f32 %v2360
    %vm2410 = vweird.f32 %v2403
    %vm2411 = vmor %vm2409, %vm2410
    %v2412 = vsel %vm2411, %v2403, %v2408
    %v2413 = vrsqrt.pop %v2361
    %v2414 = vmul.f32 %v2413, %v2361
    %v2415 = vmul.f32 %v2414, %v2413
    %v2416 = vmul.f32 0.5, %v2415
    %v2417 = vsub.f32 1.5, %v2416
    %v2418 = vmul.f32 %v2413, %v2417
    %vm2419 = vweird.f32 %v2361
    %vm2420 = vweird.f32 %v2413
    %vm2421 = vmor %vm2419, %vm2420
    %v2422 = vsel %vm2421, %v2413, %v2418
    %v2423 = vrsqrt.pop %v2362
    %v2424 = vmul.f32 %v2423, %v2362
    %v2425 = vmul.f32 %v2424, %v2423
    %v2426 = vmul.f32 0.5, %v2425
    %v2427 = vsub.f32 1.5, %v2426
    %v2428 = vmul.f32 %v2423, %v2427
    %vm2429 = vweird.f32 %v2362
    %vm2430 = vweird.f32 %v2423
    %vm2431 = vmor %vm2429, %vm2430
    %v2432 = vsel %vm2431, %v2423, %v2428
    %v2433 = vrsqrt.pop %v2363
    %v2434 = vmul.f32 %v2433, %v2363
    %v2435 = vmul.f32 %v2434, %v2433
    %v2436 = vmul.f32 0.5, %v2435
    %v2437 = vsub.f32 1.5, %v2436
    %v2438 = vmul.f32 %v2433, %v2437
    %vm2439 = vweird.f32 %v2363
    %vm2440 = vweird.f32 %v2433
    %vm2441 = vmor %vm2439, %vm2440
    %v2442 = vsel %vm2441, %v2433, %v2438
    %v2443 = vrsqrt.pop %v2364
    %v2444 = vmul.f32 %v2443, %v2364
    %v2445 = vmul.f32 %v2444, %v2443
    %v2446 = vmul.f32 0.5, %v2445
    %v2447 = vsub.f32 1.5, %v2446
    %v2448 = vmul.f32 %v2443, %v2447
    %vm2449 = vweird.f32 %v2364
    %vm2450 = vweird.f32 %v2443
    %vm2451 = vmor %vm2449, %vm2450
    %v2452 = vsel %vm2451, %v2443, %v2448
    %v2453 = vrsqrt.pop %v2365
    %v2454 = vmul.f32 %v2453, %v2365
    %v2455 = vmul.f32 %v2454, %v2453
    %v2456 = vmul.f32 0.5, %v2455
    %v2457 = vsub.f32 1.5, %v2456
    %v2458 = vmul.f32 %v2453, %v2457
    %vm2459 = vweird.f32 %v2365
    %vm2460 = vweird.f32 %v2453
    %vm2461 = vmor %vm2459, %vm2460
    %v2462 = vsel %vm2461, %v2453, %v2458
    %v2463 = vrsqrt.pop %v2366
    %v2464 = vmul.f32 %v2463, %v2366
    %v2465 = vmul.f32 %v2464, %v2463
    %v2466 = vmul.f32 0.5, %v2465
    %v2467 = vsub.f32 1.5, %v2466
    %v2468 = vmul.f32 %v2463, %v2467
    %vm2469 = vweird.f32 %v2366
    %vm2470 = vweird.f32 %v2463
    %vm2471 = vmor %vm2469, %vm2470
    %v2472 = vsel %vm2471, %v2463, %v2468
    %v2473 = vrsqrt.pop %v2367
    %v2474 = vmul.f32 %v2473, %v2367
    %v2475 = vmul.f32 %v2474, %v2473
    %v2476 = vmul.f32 0.5, %v2475
    %v2477 = vsub.f32 1.5, %v2476
    %v2478 = vmul.f32 %v2473, %v2477
    %vm2479 = vweird.f32 %v2367
    %vm2480 = vweird.f32 %v2473
    %vm2481 = vmor %vm2479, %vm2480
    %v2482 = vsel %vm2481, %v2473, %v2478
    %v2483 = vrsqrt.pop %v2368
    %v2484 = vmul.f32 %v2483, %v2368
    %v2485 = vmul.f32 %v2484, %v2483
    %v2486 = vmul.f32 0.5, %v2485
    %v2487 = vsub.f32 1.5, %v2486
    %v2488 = vmul.f32 %v2483, %v2487
    %vm2489 = vweird.f32 %v2368
    %vm2490 = vweird.f32 %v2483
    %vm2491 = vmor %vm2489, %vm2490
    %v2492 = vsel %vm2491, %v2483, %v2488
    %v2493 = vrsqrt.pop %v2369
    %v2494 = vmul.f32 %v2493, %v2369
    %v2495 = vmul.f32 %v2494, %v2493
    %v2496 = vmul.f32 0.5, %v2495
    %v2497 = vsub.f32 1.5, %v2496
    %v2498 = vmul.f32 %v2493, %v2497
    %vm2499 = vweird.f32 %v2369
    %vm2500 = vweird.f32 %v2493
    %vm2501 = vmor %vm2499, %vm2500
    %v2502 = vsel %vm2501, %v2493, %v2498
    %v2503 = vrsqrt.pop %v2370
    %v2504 = vmul.f32 %v2503, %v2370
    %v2505 = vmul.f32 %v2504, %v2503
    %v2506 = vmul.f32 0.5, %v2505
    %v2507 = vsub.f32 1.5, %v2506
    %v2508 = vmul.f32 %v2503, %v2507
    %vm2509 = vweird.f32 %v2370
    %vm2510 = vweird.f32 %v2503
    %vm2511 = vmor %vm2509, %vm2510
    %v2512 = vsel %vm2511, %v2503, %v2508
    %v2513 = vrsqrt.pop %v2371
    %v2514 = vmul.f32 %v2513, %v2371
    %v2515 = vmul.f32 %v2514, %v2513
    %v2516 = vmul.f32 0.5, %v2515
    %v2517 = vsub.f32 1.5, %v2516
    %v2518 = vmul.f32 %v2513, %v2517
    %vm2519 = vweird.f32 %v2371
    %vm2520 = vweird.f32 %v2513
    %vm2521 = vmor %vm2519, %vm2520
    %v2522 = vsel %vm2521, %v2513, %v2518
    %v2523 = vrsqrt.pop %v2372
    %v2524 = vmul.f32 %v2523, %v2372
    %v2525 = vmul.f32 %v2524, %v2523
    %v2526 = vmul.f32 0.5, %v2525
    %v2527 = vsub.f32 1.5, %v2526
    %v2528 = vmul.f32 %v2523, %v2527
    %vm2529 = vweird.f32 %v2372
    %vm2530 = vweird.f32 %v2523
    %vm2531 = vmor %vm2529, %vm2530
    %v2532 = vsel %vm2531, %v2523, %v2528
    %v2533 = vmul.f32 %v2325, %v2382
    %v2534 = vmul.f32 %v2326, %v2382
    %v2535 = vmul.f32 %v2327, %v2392
    %v2536 = vmul.f32 %v2328, %v2392
    %v2537 = vmul.f32 %v2329, %v2402
    %v2538 = vmul.f32 %v2330, %v2402
    %v2539 = vmul.f32 %v2331, %v2412
    %v2540 = vmul.f32 %v2332, %v2412
    %v2541 = vmul.f32 %v2333, %v2422
    %v2542 = vmul.f32 %v2334, %v2422
    %v2543 = vmul.f32 %v2335, %v2432
    %v2544 = vmul.f32 %v2336, %v2432
    %v2545 = vmul.f32 %v2337, %v2442
    %v2546 = vmul.f32 %v2338, %v2442
    %v2547 = vmul.f32 %v2339, %v2452
    %v2548 = vmul.f32 %v2340, %v2452
    %v2549 = vmul.f32 %v2341, %v2462
    %v2550 = vmul.f32 %v2342, %v2462
    %v2551 = vmul.f32 %v2343, %v2472
    %v2552 = vmul.f32 %v2344, %v2472
    %v2553 = vmul.f32 %v2345, %v2482
    %v2554 = vmul.f32 %v2346, %v2482
    %v2555 = vmul.f32 %v2347, %v2492
    %v2556 = vmul.f32 %v2348, %v2492
    %v2557 = vmul.f32 %v2349, %v2502
    %v2558 = vmul.f32 %v2350, %v2502
    %v2559 = vmul.f32 %v2351, %v2512
    %v2560 = vmul.f32 %v2352, %v2512
    %v2561 = vmul.f32 %v2353, %v2522
    %v2562 = vmul.f32 %v2354, %v2522
    %v2563 = vmul.f32 %v2355, %v2532
    %v2564 = vmul.f32 %v2356, %v2532
    %v2565 = vld [vmem:[#allocation16] sm:$0x3]
    %v2567 = vperm.slane %v2565, 0
    %v2568 = vperm.slane %v2565, 1
    %v2571 = vmul.f32 %v2533, %v2567
    %v2572 = vmul.f32 %v2534, %v2568
    %v2573 = vmul.f32 %v2535, %v2567
    %v2574 = vmul.f32 %v2536, %v2568
    %v2575 = vmul.f32 %v2537, %v2567
    %v2576 = vmul.f32 %v2538, %v2568
    %v2577 = vmul.f32 %v2539, %v2567
    %v2578 = vmul.f32 %v2540, %v2568
    %v2579 = vmul.f32 %v2541, %v2567
    %v2580 = vmul.f32 %v2542, %v2568
    %v2581 = vmul.f32 %v2543, %v2567
    %v2582 = vmul.f32 %v2544, %v2568
    %v2583 = vmul.f32 %v2545, %v2567
    %v2584 = vmul.f32 %v2546, %v2568
    %v2585 = vmul.f32 %v2547, %v2567
    %v2586 = vmul.f32 %v2548, %v2568
    %v2587 = vmul.f32 %v2549, %v2567
    %v2588 = vmul.f32 %v2550, %v2568
    %v2589 = vmul.f32 %v2551, %v2567
    %v2590 = vmul.f32 %v2552, %v2568
    %v2591 = vmul.f32 %v2553, %v2567
    %v2592 = vmul.f32 %v2554, %v2568
    %v2593 = vmul.f32 %v2555, %v2567
    %v2594 = vmul.f32 %v2556, %v2568
    %v2595 = vmul.f32 %v2557, %v2567
    %v2596 = vmul.f32 %v2558, %v2568
    %v2597 = vmul.f32 %v2559, %v2567
    %v2598 = vmul.f32 %v2560, %v2568
    %v2599 = vmul.f32 %v2561, %v2567
    %v2600 = vmul.f32 %v2562, %v2568
    %v2601 = vmul.f32 %v2563, %v2567
    %v2602 = vmul.f32 %v2564, %v2568
    %v2603 = vld [vmem:[#allocation20] sm:$0x3]
    %v2605 = vperm.slane %v2603, 0
    %v2606 = vperm.slane %v2603, 1
    %v2609 = vadd.f32 %v2571, %v2605
    %v2610 = vadd.f32 %v2572, %v2606
    %v2611 = vadd.f32 %v2573, %v2605
    %v2612 = vadd.f32 %v2574, %v2606
    %v2613 = vadd.f32 %v2575, %v2605
    %v2614 = vadd.f32 %v2576, %v2606
    %v2615 = vadd.f32 %v2577, %v2605
    %v2616 = vadd.f32 %v2578, %v2606
    %v2617 = vadd.f32 %v2579, %v2605
    %v2618 = vadd.f32 %v2580, %v2606
    %v2619 = vadd.f32 %v2581, %v2605
    %v2620 = vadd.f32 %v2582, %v2606
    %v2621 = vadd.f32 %v2583, %v2605
    %v2622 = vadd.f32 %v2584, %v2606
    %v2623 = vadd.f32 %v2585, %v2605
    %v2624 = vadd.f32 %v2586, %v2606
    %v2625 = vadd.f32 %v2587, %v2605
    %v2626 = vadd.f32 %v2588, %v2606
    %v2627 = vadd.f32 %v2589, %v2605
    %v2628 = vadd.f32 %v2590, %v2606
    %v2629 = vadd.f32 %v2591, %v2605
    %v2630 = vadd.f32 %v2592, %v2606
    %v2631 = vadd.f32 %v2593, %v2605
    %v2632 = vadd.f32 %v2594, %v2606
    %v2633 = vadd.f32 %v2595, %v2605
    %v2634 = vadd.f32 %v2596, %v2606
    %v2635 = vadd.f32 %v2597, %v2605
    %v2636 = vadd.f32 %v2598, %v2606
    %v2637 = vadd.f32 %v2599, %v2605
    %v2638 = vadd.f32 %v2600, %v2606
    %v2639 = vadd.f32 %v2601, %v2605
    %v2640 = vadd.f32 %v2602, %v2606
    %v2641 = vpack.c.bf16 %v2610, %v2609
    %v2642 = vpack.c.bf16 %v2612, %v2611
    %v2643 = vpack.c.bf16 %v2614, %v2613
    %v2644 = vpack.c.bf16 %v2616, %v2615
    %v2645 = vpack.c.bf16 %v2618, %v2617
    %v2646 = vpack.c.bf16 %v2620, %v2619
    %v2647 = vpack.c.bf16 %v2622, %v2621
    %v2648 = vpack.c.bf16 %v2624, %v2623
    %v2649 = vpack.c.bf16 %v2626, %v2625
    %v2650 = vpack.c.bf16 %v2628, %v2627
    %v2651 = vpack.c.bf16 %v2630, %v2629
    %v2652 = vpack.c.bf16 %v2632, %v2631
    %v2653 = vpack.c.bf16 %v2634, %v2633
    %v2654 = vpack.c.bf16 %v2636, %v2635
    %v2655 = vpack.c.bf16 %v2638, %v2637
    %v2656 = vpack.c.bf16 %v2640, %v2639
    %v2673 = vunpack.c.l.b16 %v2641
    %v2674 = vunpack.c.h.b16 %v2641
    %v2675 = vunpack.c.l.b16 %v2642
    %v2676 = vunpack.c.h.b16 %v2642
    %v2677 = vunpack.c.l.b16 %v2643
    %v2678 = vunpack.c.h.b16 %v2643
    %v2679 = vunpack.c.l.b16 %v2644
    %v2680 = vunpack.c.h.b16 %v2644
    %v2681 = vunpack.c.l.b16 %v2645
    %v2682 = vunpack.c.h.b16 %v2645
    %v2683 = vunpack.c.l.b16 %v2646
    %v2684 = vunpack.c.h.b16 %v2646
    %v2685 = vunpack.c.l.b16 %v2647
    %v2686 = vunpack.c.h.b16 %v2647
    %v2687 = vunpack.c.l.b16 %v2648
    %v2688 = vunpack.c.h.b16 %v2648
    %v2689 = vunpack.c.l.b16 %v2649
    %v2690 = vunpack.c.h.b16 %v2649
    %v2691 = vunpack.c.l.b16 %v2650
    %v2692 = vunpack.c.h.b16 %v2650
    %v2693 = vunpack.c.l.b16 %v2651
    %v2694 = vunpack.c.h.b16 %v2651
    %v2695 = vunpack.c.l.b16 %v2652
    %v2696 = vunpack.c.h.b16 %v2652
    %v2697 = vunpack.c.l.b16 %v2653
    %v2698 = vunpack.c.h.b16 %v2653
    %v2699 = vunpack.c.l.b16 %v2654
    %v2700 = vunpack.c.h.b16 %v2654
    %v2701 = vunpack.c.l.b16 %v2655
    %v2702 = vunpack.c.h.b16 %v2655
    %v2703 = vunpack.c.l.b16 %v2656
    %v2704 = vunpack.c.h.b16 %v2656
    %v2705 = vpack.c.b16 %v2675, %v2673
    %v2706 = vpack.c.b16 %v2676, %v2674
    %v2707 = vpack.c.b16 %v2679, %v2677
    %v2708 = vpack.c.b16 %v2680, %v2678
    %v2709 = vpack.c.b16 %v2683, %v2681
    %v2710 = vpack.c.b16 %v2684, %v2682
    %v2711 = vpack.c.b16 %v2687, %v2685
    %v2712 = vpack.c.b16 %v2688, %v2686
    %v2713 = vpack.c.b16 %v2691, %v2689
    %v2714 = vpack.c.b16 %v2692, %v2690
    %v2715 = vpack.c.b16 %v2695, %v2693
    %v2716 = vpack.c.b16 %v2696, %v2694
    %v2717 = vpack.c.b16 %v2699, %v2697
    %v2718 = vpack.c.b16 %v2700, %v2698
    %v2719 = vpack.c.b16 %v2703, %v2701
    %v2720 = vpack.c.b16 %v2704, %v2702
    %2721 = vrot.lane.b32.xlu0 %v2705, 16
    %v2722 = vpop.permute.xlu0 %2721
    %2723 = vrot.lane.b32.xlu0 %v2706, 16
    %v2724 = vpop.permute.xlu0 %2723
    %2725 = vrot.lane.b32.xlu0 %v2707, 16
    %v2726 = vpop.permute.xlu0 %2725
    %2727 = vrot.lane.b32.xlu0 %v2708, 16
    %v2728 = vpop.permute.xlu0 %2727
    %2729 = vrot.lane.b32.xlu0 %v2709, 16
    %v2730 = vpop.permute.xlu0 %2729
    %2731 = vrot.lane.b32.xlu0 %v2710, 16
    %v2732 = vpop.permute.xlu0 %2731
    %2733 = vrot.lane.b32.xlu0 %v2711, 16
    %v2734 = vpop.permute.xlu0 %2733
    %2735 = vrot.lane.b32.xlu0 %v2712, 16
    %v2736 = vpop.permute.xlu0 %2735
    %2737 = vrot.lane.b32.xlu0 %v2713, 16
    %v2738 = vpop.permute.xlu0 %2737
    %2739 = vrot.lane.b32.xlu0 %v2714, 16
    %v2740 = vpop.permute.xlu0 %2739
    %2741 = vrot.lane.b32.xlu0 %v2715, 16
    %v2742 = vpop.permute.xlu0 %2741
    %2743 = vrot.lane.b32.xlu0 %v2716, 16
    %v2744 = vpop.permute.xlu0 %2743
    %2745 = vrot.lane.b32.xlu0 %v2717, 16
    %v2746 = vpop.permute.xlu0 %2745
    %2747 = vrot.lane.b32.xlu0 %v2718, 16
    %v2748 = vpop.permute.xlu0 %2747
    %2749 = vrot.lane.b32.xlu0 %v2719, 16
    %v2750 = vpop.permute.xlu0 %2749
    %2751 = vrot.lane.b32.xlu0 %v2720, 16
    %v2752 = vpop.permute.xlu0 %2751
    %vm2753 = vcmask 130048
    %v2754 = vsel %vm2753, %v2722, %v2724
    %v2755 = vsel %vm2753, %v2726, %v2728
    %v2756 = vsel %vm2753, %v2730, %v2732
    %v2757 = vsel %vm2753, %v2734, %v2736
    %v2758 = vsel %vm2753, %v2738, %v2740
    %v2759 = vsel %vm2753, %v2742, %v2744
    %v2760 = vsel %vm2753, %v2746, %v2748
    %v2761 = vsel %vm2753, %v2750, %v2752
    %vm2770 = vcmask 130048
    %v2772 = vsel %vm2770, 0, %v2722
    %v2775 = vsel %vm2770, 0, %v2726
    %v2778 = vsel %vm2770, 0, %v2730
    %v2781 = vsel %vm2770, 0, %v2734
    %v2784 = vsel %vm2770, 0, %v2738
    %v2787 = vsel %vm2770, 0, %v2742
    %v2790 = vsel %vm2770, 0, %v2746
    %v2793 = vsel %vm2770, 0, %v2750
    %v2796 = vsel %vm2770, %v2724, 0
    %v2798 = vsel %vm2770, %v2728, 0
    %v2800 = vsel %vm2770, %v2732, 0
    %v2802 = vsel %vm2770, %v2736, 0
    %v2804 = vsel %vm2770, %v2740, 0
    %v2806 = vsel %vm2770, %v2744, 0
    %v2808 = vsel %vm2770, %v2748, 0
    %v2810 = vsel %vm2770, %v2752, 0
    %v2811 = vld [vmem:[#allocation8] sm:$0xf]
    %v2812 = vld [vmem:[#allocation8 + $0x4] sm:$0xf]
    %v2813 = vld [vmem:[#allocation8 + $0x8] sm:$0xf]
    %v2814 = vld [vmem:[#allocation8 + $0xc] sm:$0xf]
    %v2815 = vld [vmem:[#allocation8 + $0x10] sm:$0xf]
    %v2816 = vld [vmem:[#allocation8 + $0x14] sm:$0xf]
    %v2817 = vld [vmem:[#allocation8 + $0x18] sm:$0xf]
    %v2818 = vld [vmem:[#allocation8 + $0x1c] sm:$0xf]
    %v2819 = vld [vmem:[#allocation8 + $0x20] sm:$0xf]
    %v2820 = vld [vmem:[#allocation8 + $0x24] sm:$0xf]
    %v2821 = vld [vmem:[#allocation8 + $0x28] sm:$0xf]
    %v2822 = vld [vmem:[#allocation8 + $0x2c] sm:$0xf]
    %v2823 = vld [vmem:[#allocation8 + $0x30] sm:$0xf]
    %v2824 = vld [vmem:[#allocation8 + $0x34] sm:$0xf]
    %v2825 = vld [vmem:[#allocation8 + $0x38] sm:$0xf]
    %v2826 = vld [vmem:[#allocation8 + $0x3c] sm:$0xf]
    %v2827 = vld [vmem:[#allocation8 + $0x40] sm:$0xf]
    %v2828 = vld [vmem:[#allocation8 + $0x44] sm:$0xf]
    %v2829 = vld [vmem:[#allocation8 + $0x48] sm:$0xf]
    %v2849 = vunpack.c.l.b16 %v2811
    %v2850 = vunpack.c.l.b16 %v2812
    %v2851 = vunpack.c.l.b16 %v2813
    %v2852 = vunpack.c.l.b16 %v2814
    %v2853 = vunpack.c.l.b16 %v2815
    %v2854 = vunpack.c.l.b16 %v2816
    %v2855 = vunpack.c.l.b16 %v2817
    %v2856 = vunpack.c.l.b16 %v2818
    %v2857 = vunpack.c.l.b16 %v2819
    %v2858 = vunpack.c.l.b16 %v2820
    %v2859 = vunpack.c.l.b16 %v2821
    %v2860 = vunpack.c.l.b16 %v2822
    %v2861 = vunpack.c.l.b16 %v2823
    %v2862 = vunpack.c.l.b16 %v2824
    %v2863 = vunpack.c.l.b16 %v2825
    %v2864 = vunpack.c.l.b16 %v2826
    %v2865 = vunpack.c.l.b16 %v2827
    %v2866 = vunpack.c.l.b16 %v2828
    %v2867 = vunpack.c.l.b16 %v2829
    %v2868 = vpack.c.b16 %v2850, %v2849
    %v2869 = vpack.c.b16 %v2852, %v2851
    %v2870 = vpack.c.b16 %v2854, %v2853
    %v2871 = vpack.c.b16 %v2856, %v2855
    %v2872 = vpack.c.b16 %v2858, %v2857
    %v2873 = vpack.c.b16 %v2860, %v2859
    %v2874 = vpack.c.b16 %v2862, %v2861
    %v2875 = vpack.c.b16 %v2864, %v2863
    %v2876 = vpack.c.b16 %v2866, %v2865
    %v2877 = vpack.c.b16 %v2867, %v2867
    %vm2887 = vcmask 195584
    %v2889 = vsel %vm2887, %v2754, 0
    %v2892 = vsel %vm2887, %v2755, 0
    %v2895 = vsel %vm2887, %v2756, 0
    %v2898 = vsel %vm2887, %v2757, 0
    %v2901 = vsel %vm2887, %v2758, 0
    %v2904 = vsel %vm2887, %v2759, 0
    %v2907 = vsel %vm2887, %v2760, 0
    %v2910 = vsel %vm2887, %v2761, 0
    %vm2912 = vcmask 1043456
    %v2914 = vsel %vm2912, %v2877, 0
    %2916 = vmatpush.bf16.msra.mxu0 %v2875
    %2917 = vmatpush.bf16.msra.mxu0 %v2874
    %2918 = vmatpush.bf16.msra.mxu0 %v2873
    %2919 = vmatpush.bf16.msra.mxu0 %v2872
    %2920 = vmatpush.bf16.msra.mxu0 %v2871
    %2921 = vmatpush.bf16.msra.mxu0 %v2870
    %2922 = vmatpush.bf16.msra.mxu0 %v2869
    %2923 = vmatpush.bf16.msra.mxu0 %v2868
    %2924 = vmatmul.bf16.gmra.mxu0 %v2772
    %v2925 = vpop.f32.mrf.mxu0
    %v2926 = vadd.f32 0.0, %v2925
    %v2927 = vpop.f32.mrf.mxu0
    %v2928 = vadd.f32 0.0, %v2927
    %2929 = vmatmul.bf16.gmra.mxu0 %v2775
    %v2930 = vpop.f32.mrf.mxu0
    %v2931 = vadd.f32 0.0, %v2930
    %v2932 = vpop.f32.mrf.mxu0
    %v2933 = vadd.f32 0.0, %v2932
    %2934 = vmatmul.bf16.gmra.mxu0 %v2778
    %v2935 = vpop.f32.mrf.mxu0
    %v2936 = vadd.f32 0.0, %v2935
    %v2937 = vpop.f32.mrf.mxu0
    %v2938 = vadd.f32 0.0, %v2937
    %2939 = vmatmul.bf16.gmra.mxu0 %v2781
    %v2940 = vpop.f32.mrf.mxu0
    %v2941 = vadd.f32 0.0, %v2940
    %v2942 = vpop.f32.mrf.mxu0
    %v2943 = vadd.f32 0.0, %v2942
    %2944 = vmatmul.bf16.gmra.mxu0 %v2784
    %v2945 = vpop.f32.mrf.mxu0
    %v2946 = vadd.f32 0.0, %v2945
    %v2947 = vpop.f32.mrf.mxu0
    %v2948 = vadd.f32 0.0, %v2947
    %2949 = vmatmul.bf16.gmra.mxu0 %v2787
    %v2950 = vpop.f32.mrf.mxu0
    %v2951 = vadd.f32 0.0, %v2950
    %v2952 = vpop.f32.mrf.mxu0
    %v2953 = vadd.f32 0.0, %v2952
    %2954 = vmatmul.bf16.gmra.mxu0 %v2790
    %v2955 = vpop.f32.mrf.mxu0
    %v2956 = vadd.f32 0.0, %v2955
    %v2957 = vpop.f32.mrf.mxu0
    %v2958 = vadd.f32 0.0, %v2957
    %2959 = vmatmul.bf16.gmra.mxu0 %v2793
    %v2960 = vpop.f32.mrf.mxu0
    %v2961 = vadd.f32 0.0, %v2960
    %v2962 = vpop.f32.mrf.mxu0
    %v2963 = vadd.f32 0.0, %v2962
    %2964 = vdwg.mxu0
    %2965 = vmatpush.bf16.msra.mxu0 0
    %2966 = vmatpush.bf16.msra.mxu0 0
    %2967 = vmatpush.bf16.msra.mxu0 0
    %2968 = vmatpush.bf16.msra.mxu0 0
    %2969 = vmatpush.bf16.msra.mxu0 0
    %2970 = vmatpush.bf16.msra.mxu0 0
    %2971 = vmatpush.bf16.msra.mxu0 %v2914
    %2972 = vmatpush.bf16.msra.mxu0 %v2876
    %2973 = vmatmul.bf16.gmra.mxu0 %v2889
    %v2974 = vpop.f32.mrf.mxu0
    %v2975 = vadd.f32 %v2926, %v2974
    %v2976 = vpop.f32.mrf.mxu0
    %v2977 = vadd.f32 %v2928, %v2976
    %2978 = vmatmul.bf16.gmra.mxu0 %v2892
    %v2979 = vpop.f32.mrf.mxu0
    %v2980 = vadd.f32 %v2931, %v2979
    %v2981 = vpop.f32.mrf.mxu0
    %v2982 = vadd.f32 %v2933, %v2981
    %2983 = vmatmul.bf16.gmra.mxu0 %v2895
    %v2984 = vpop.f32.mrf.mxu0
    %v2985 = vadd.f32 %v2936, %v2984
    %v2986 = vpop.f32.mrf.mxu0
    %v2987 = vadd.f32 %v2938, %v2986
    %2988 = vmatmul.bf16.gmra.mxu0 %v2898
    %v2989 = vpop.f32.mrf.mxu0
    %v2990 = vadd.f32 %v2941, %v2989
    %v2991 = vpop.f32.mrf.mxu0
    %v2992 = vadd.f32 %v2943, %v2991
    %2993 = vmatmul.bf16.gmra.mxu0 %v2901
    %v2994 = vpop.f32.mrf.mxu0
    %v2995 = vadd.f32 %v2946, %v2994
    %v2996 = vpop.f32.mrf.mxu0
    %v2997 = vadd.f32 %v2948, %v2996
    %2998 = vmatmul.bf16.gmra.mxu0 %v2904
    %v2999 = vpop.f32.mrf.mxu0
    %v3000 = vadd.f32 %v2951, %v2999
    %v3001 = vpop.f32.mrf.mxu0
    %v3002 = vadd.f32 %v2953, %v3001
    %3003 = vmatmul.bf16.gmra.mxu0 %v2907
    %v3004 = vpop.f32.mrf.mxu0
    %v3005 = vadd.f32 %v2956, %v3004
    %v3006 = vpop.f32.mrf.mxu0
    %v3007 = vadd.f32 %v2958, %v3006
    %3008 = vmatmul.bf16.gmra.mxu0 %v2910
    %v3009 = vpop.f32.mrf.mxu0
    %v3010 = vadd.f32 %v2961, %v3009
    %v3011 = vpop.f32.mrf.mxu0
    %v3012 = vadd.f32 %v2963, %v3011
    %3013 = vdwg.mxu0
    %v3014 = vsel %vm2887, %v2796, 0
    %v3016 = vsel %vm2887, %v2798, 0
    %v3018 = vsel %vm2887, %v2800, 0
    %v3020 = vsel %vm2887, %v2802, 0
    %v3022 = vsel %vm2887, %v2804, 0
    %v3024 = vsel %vm2887, %v2806, 0
    %v3026 = vsel %vm2887, %v2808, 0
    %v3028 = vsel %vm2887, %v2810, 0
    %3030 = vmatpush.bf16.msra.mxu0 %v2875
    %3031 = vmatpush.bf16.msra.mxu0 %v2874
    %3032 = vmatpush.bf16.msra.mxu0 %v2873
    %3033 = vmatpush.bf16.msra.mxu0 %v2872
    %3034 = vmatpush.bf16.msra.mxu0 %v2871
    %3035 = vmatpush.bf16.msra.mxu0 %v2870
    %3036 = vmatpush.bf16.msra.mxu0 %v2869
    %3037 = vmatpush.bf16.msra.mxu0 %v2868
    %3038 = vmatmul.bf16.gmra.mxu0 %v2754
    %v3039 = vpop.f32.mrf.mxu0
    %v3040 = vadd.f32 0.0, %v3039
    %v3041 = vpop.f32.mrf.mxu0
    %v3042 = vadd.f32 0.0, %v3041
    %3043 = vmatmul.bf16.gmra.mxu0 %v2755
    %v3044 = vpop.f32.mrf.mxu0
    %v3045 = vadd.f32 0.0, %v3044
    %v3046 = vpop.f32.mrf.mxu0
    %v3047 = vadd.f32 0.0, %v3046
    %3048 = vmatmul.bf16.gmra.mxu0 %v2756
    %v3049 = vpop.f32.mrf.mxu0
    %v3050 = vadd.f32 0.0, %v3049
    %v3051 = vpop.f32.mrf.mxu0
    %v3052 = vadd.f32 0.0, %v3051
    %3053 = vmatmul.bf16.gmra.mxu0 %v2757
    %v3054 = vpop.f32.mrf.mxu0
    %v3055 = vadd.f32 0.0, %v3054
    %v3056 = vpop.f32.mrf.mxu0
    %v3057 = vadd.f32 0.0, %v3056
    %3058 = vmatmul.bf16.gmra.mxu0 %v2758
    %v3059 = vpop.f32.mrf.mxu0
    %v3060 = vadd.f32 0.0, %v3059
    %v3061 = vpop.f32.mrf.mxu0
    %v3062 = vadd.f32 0.0, %v3061
    %3063 = vmatmul.bf16.gmra.mxu0 %v2759
    %v3064 = vpop.f32.mrf.mxu0
    %v3065 = vadd.f32 0.0, %v3064
    %v3066 = vpop.f32.mrf.mxu0
    %v3067 = vadd.f32 0.0, %v3066
    %3068 = vmatmul.bf16.gmra.mxu0 %v2760
    %v3069 = vpop.f32.mrf.mxu0
    %v3070 = vadd.f32 0.0, %v3069
    %v3071 = vpop.f32.mrf.mxu0
    %v3072 = vadd.f32 0.0, %v3071
    %3073 = vmatmul.bf16.gmra.mxu0 %v2761
    %v3074 = vpop.f32.mrf.mxu0
    %v3075 = vadd.f32 0.0, %v3074
    %v3076 = vpop.f32.mrf.mxu0
    %v3077 = vadd.f32 0.0, %v3076
    %3078 = vdwg.mxu0
    %3079 = vmatpush.bf16.msra.mxu0 0
    %3080 = vmatpush.bf16.msra.mxu0 0
    %3081 = vmatpush.bf16.msra.mxu0 0
    %3082 = vmatpush.bf16.msra.mxu0 0
    %3083 = vmatpush.bf16.msra.mxu0 0
    %3084 = vmatpush.bf16.msra.mxu0 0
    %3085 = vmatpush.bf16.msra.mxu0 %v2914
    %3086 = vmatpush.bf16.msra.mxu0 %v2876
    %3087 = vmatmul.bf16.gmra.mxu0 %v3014
    %v3088 = vpop.f32.mrf.mxu0
    %v3089 = vadd.f32 %v3040, %v3088
    %v3090 = vpop.f32.mrf.mxu0
    %v3091 = vadd.f32 %v3042, %v3090
    %3092 = vmatmul.bf16.gmra.mxu0 %v3016
    %v3093 = vpop.f32.mrf.mxu0
    %v3094 = vadd.f32 %v3045, %v3093
    %v3095 = vpop.f32.mrf.mxu0
    %v3096 = vadd.f32 %v3047, %v3095
    %3097 = vmatmul.bf16.gmra.mxu0 %v3018
    %v3098 = vpop.f32.mrf.mxu0
    %v3099 = vadd.f32 %v3050, %v3098
    %v3100 = vpop.f32.mrf.mxu0
    %v3101 = vadd.f32 %v3052, %v3100
    %3102 = vmatmul.bf16.gmra.mxu0 %v3020
    %v3103 = vpop.f32.mrf.mxu0
    %v3104 = vadd.f32 %v3055, %v3103
    %v3105 = vpop.f32.mrf.mxu0
    %v3106 = vadd.f32 %v3057, %v3105
    %3107 = vmatmul.bf16.gmra.mxu0 %v3022
    %v3108 = vpop.f32.mrf.mxu0
    %v3109 = vadd.f32 %v3060, %v3108
    %v3110 = vpop.f32.mrf.mxu0
    %v3111 = vadd.f32 %v3062, %v3110
    %3112 = vmatmul.bf16.gmra.mxu0 %v3024
    %v3113 = vpop.f32.mrf.mxu0
    %v3114 = vadd.f32 %v3065, %v3113
    %v3115 = vpop.f32.mrf.mxu0
    %v3116 = vadd.f32 %v3067, %v3115
    %3117 = vmatmul.bf16.gmra.mxu0 %v3026
    %v3118 = vpop.f32.mrf.mxu0
    %v3119 = vadd.f32 %v3070, %v3118
    %v3120 = vpop.f32.mrf.mxu0
    %v3121 = vadd.f32 %v3072, %v3120
    %3122 = vmatmul.bf16.gmra.mxu0 %v3028
    %v3123 = vpop.f32.mrf.mxu0
    %v3124 = vadd.f32 %v3075, %v3123
    %v3125 = vpop.f32.mrf.mxu0
    %v3126 = vadd.f32 %v3077, %v3125
    %3127 = vdwg.mxu0
    %v3128 = vld [vmem:[%s9] sm:$0x3]
    %v3130 = vperm.slane %v3128, 0
    %v3131 = vperm.slane %v3128, 1
    %v3134 = vadd.f32 %v2975, %v3130
    %v3135 = vadd.f32 %v3089, %v3131
    %v3136 = vadd.f32 %v2977, %v3130
    %v3137 = vadd.f32 %v3091, %v3131
    %v3138 = vadd.f32 %v2980, %v3130
    %v3139 = vadd.f32 %v3094, %v3131
    %v3140 = vadd.f32 %v2982, %v3130
    %v3141 = vadd.f32 %v3096, %v3131
    %v3142 = vadd.f32 %v2985, %v3130
    %v3143 = vadd.f32 %v3099, %v3131
    %v3144 = vadd.f32 %v2987, %v3130
    %v3145 = vadd.f32 %v3101, %v3131
    %v3146 = vadd.f32 %v2990, %v3130
    %v3147 = vadd.f32 %v3104, %v3131
    %v3148 = vadd.f32 %v2992, %v3130
    %v3149 = vadd.f32 %v3106, %v3131
    %v3150 = vadd.f32 %v2995, %v3130
    %v3151 = vadd.f32 %v3109, %v3131
    %v3152 = vadd.f32 %v2997, %v3130
    %v3153 = vadd.f32 %v3111, %v3131
    %v3154 = vadd.f32 %v3000, %v3130
    %v3155 = vadd.f32 %v3114, %v3131
    %v3156 = vadd.f32 %v3002, %v3130
    %v3157 = vadd.f32 %v3116, %v3131
    %v3158 = vadd.f32 %v3005, %v3130
    %v3159 = vadd.f32 %v3119, %v3131
    %v3160 = vadd.f32 %v3007, %v3130
    %v3161 = vadd.f32 %v3121, %v3131
    %v3162 = vadd.f32 %v3010, %v3130
    %v3163 = vadd.f32 %v3124, %v3131
    %v3164 = vadd.f32 %v3012, %v3130
    %v3165 = vadd.f32 %v3126, %v3131
    %vm3166 = vcmp.gt.f32.partialorder %v3134, 0.0
    %vm3167 = vcmp.gt.f32.partialorder %v3135, 0.0
    %vm3168 = vcmp.gt.f32.partialorder %v3136, 0.0
    %vm3169 = vcmp.gt.f32.partialorder %v3137, 0.0
    %vm3170 = vcmp.gt.f32.partialorder %v3138, 0.0
    %vm3171 = vcmp.gt.f32.partialorder %v3139, 0.0
    %vm3172 = vcmp.gt.f32.partialorder %v3140, 0.0
    %vm3173 = vcmp.gt.f32.partialorder %v3141, 0.0
    %vm3174 = vcmp.gt.f32.partialorder %v3142, 0.0
    %vm3175 = vcmp.gt.f32.partialorder %v3143, 0.0
    %vm3176 = vcmp.gt.f32.partialorder %v3144, 0.0
    %vm3177 = vcmp.gt.f32.partialorder %v3145, 0.0
    %vm3178 = vcmp.gt.f32.partialorder %v3146, 0.0
    %vm3179 = vcmp.gt.f32.partialorder %v3147, 0.0
    %vm3180 = vcmp.gt.f32.partialorder %v3148, 0.0
    %vm3181 = vcmp.gt.f32.partialorder %v3149, 0.0
    %vm3182 = vcmp.gt.f32.partialorder %v3150, 0.0
    %vm3183 = vcmp.gt.f32.partialorder %v3151, 0.0
    %vm3184 = vcmp.gt.f32.partialorder %v3152, 0.0
    %vm3185 = vcmp.gt.f32.partialorder %v3153, 0.0
    %vm3186 = vcmp.gt.f32.partialorder %v3154, 0.0
    %vm3187 = vcmp.gt.f32.partialorder %v3155, 0.0
    %vm3188 = vcmp.gt.f32.partialorder %v3156, 0.0
    %vm3189 = vcmp.gt.f32.partialorder %v3157, 0.0
    %vm3190 = vcmp.gt.f32.partialorder %v3158, 0.0
    %vm3191 = vcmp.gt.f32.partialorder %v3159, 0.0
    %vm3192 = vcmp.gt.f32.partialorder %v3160, 0.0
    %vm3193 = vcmp.gt.f32.partialorder %v3161, 0.0
    %vm3194 = vcmp.gt.f32.partialorder %v3162, 0.0
    %vm3195 = vcmp.gt.f32.partialorder %v3163, 0.0
    %vm3196 = vcmp.gt.f32.partialorder %v3164, 0.0
    %vm3197 = vcmp.gt.f32.partialorder %v3165, 0.0
    %v3198 = vmin.f32 %v3134, 0.0
    %v3199 = vmin.f32 %v3135, 0.0
    %v3200 = vmin.f32 %v3136, 0.0
    %v3201 = vmin.f32 %v3137, 0.0
    %v3202 = vmin.f32 %v3138, 0.0
    %v3203 = vmin.f32 %v3139, 0.0
    %v3204 = vmin.f32 %v3140, 0.0
    %v3205 = vmin.f32 %v3141, 0.0
    %v3206 = vmin.f32 %v3142, 0.0
    %v3207 = vmin.f32 %v3143, 0.0
    %v3208 = vmin.f32 %v3144, 0.0
    %v3209 = vmin.f32 %v3145, 0.0
    %v3210 = vmin.f32 %v3146, 0.0
    %v3211 = vmin.f32 %v3147, 0.0
    %v3212 = vmin.f32 %v3148, 0.0
    %v3213 = vmin.f32 %v3149, 0.0
    %v3214 = vmin.f32 %v3150, 0.0
    %v3215 = vmin.f32 %v3151, 0.0
    %v3216 = vmin.f32 %v3152, 0.0
    %v3217 = vmin.f32 %v3153, 0.0
    %v3218 = vmin.f32 %v3154, 0.0
    %v3219 = vmin.f32 %v3155, 0.0
    %v3220 = vmin.f32 %v3156, 0.0
    %v3221 = vmin.f32 %v3157, 0.0
    %v3222 = vmin.f32 %v3158, 0.0
    %v3223 = vmin.f32 %v3159, 0.0
    %v3224 = vmin.f32 %v3160, 0.0
    %v3225 = vmin.f32 %v3161, 0.0
    %v3226 = vmin.f32 %v3162, 0.0
    %v3227 = vmin.f32 %v3163, 0.0
    %v3228 = vmin.f32 %v3164, 0.0
    %v3229 = vmin.f32 %v3165, 0.0
    %v3230 = vmul.f32 %v3198, 1.442695
    %v3231 = vpow.pop %v3230
    %v3232 = vmul.f32 %v3199, 1.442695
    %v3233 = vpow.pop %v3232
    %v3234 = vmul.f32 %v3200, 1.442695
    %v3235 = vpow.pop %v3234
    %v3236 = vmul.f32 %v3201, 1.442695
    %v3237 = vpow.pop %v3236
    %v3238 = vmul.f32 %v3202, 1.442695
    %v3239 = vpow.pop %v3238
    %v3240 = vmul.f32 %v3203, 1.442695
    %v3241 = vpow.pop %v3240
    %v3242 = vmul.f32 %v3204, 1.442695
    %v3243 = vpow.pop %v3242
    %v3244 = vmul.f32 %v3205, 1.442695
    %v3245 = vpow.pop %v3244
    %v3246 = vmul.f32 %v3206, 1.442695
    %v3247 = vpow.pop %v3246
    %v3248 = vmul.f32 %v3207, 1.442695
    %v3249 = vpow.pop %v3248
    %v3250 = vmul.f32 %v3208, 1.442695
    %v3251 = vpow.pop %v3250
    %v3252 = vmul.f32 %v3209, 1.442695
    %v3253 = vpow.pop %v3252
    %v3254 = vmul.f32 %v3210, 1.442695
    %v3255 = vpow.pop %v3254
    %v3256 = vmul.f32 %v3211, 1.442695
    %v3257 = vpow.pop %v3256
    %v3258 = vmul.f32 %v3212, 1.442695
    %v3259 = vpow.pop %v3258
    %v3260 = vmul.f32 %v3213, 1.442695
    %v3261 = vpow.pop %v3260
    %v3262 = vmul.f32 %v3214, 1.442695
    %v3263 = vpow.pop %v3262
    %v3264 = vmul.f32 %v3215, 1.442695
    %v3265 = vpow.pop %v3264
    %v3266 = vmul.f32 %v3216, 1.442695
    %v3267 = vpow.pop %v3266
    %v3268 = vmul.f32 %v3217, 1.442695
    %v3269 = vpow.pop %v3268
    %v3270 = vmul.f32 %v3218, 1.442695
    %v3271 = vpow.pop %v3270
    %v3272 = vmul.f32 %v3219, 1.442695
    %v3273 = vpow.pop %v3272
    %v3274 = vmul.f32 %v3220, 1.442695
    %v3275 = vpow.pop %v3274
    %v3276 = vmul.f32 %v3221, 1.442695
    %v3277 = vpow.pop %v3276
    %v3278 = vmul.f32 %v3222, 1.442695
    %v3279 = vpow.pop %v3278
    %v3280 = vmul.f32 %v3223, 1.442695
    %v3281 = vpow.pop %v3280
    %v3282 = vmul.f32 %v3224, 1.442695
    %v3283 = vpow.pop %v3282
    %v3284 = vmul.f32 %v3225, 1.442695
    %v3285 = vpow.pop %v3284
    %v3286 = vmul.f32 %v3226, 1.442695
    %v3287 = vpow.pop %v3286
    %v3288 = vmul.f32 %v3227, 1.442695
    %v3289 = vpow.pop %v3288
    %v3290 = vmul.f32 %v3228, 1.442695
    %v3291 = vpow.pop %v3290
    %v3292 = vmul.f32 %v3229, 1.442695
    %v3293 = vpow.pop %v3292
    %v3294 = vsub.f32 %v3231, 1.0
    %v3295 = vsub.f32 %v3233, 1.0
    %v3296 = vsub.f32 %v3235, 1.0
    %v3297 = vsub.f32 %v3237, 1.0
    %v3298 = vsub.f32 %v3239, 1.0
    %v3299 = vsub.f32 %v3241, 1.0
    %v3300 = vsub.f32 %v3243, 1.0
    %v3301 = vsub.f32 %v3245, 1.0
    %v3302 = vsub.f32 %v3247, 1.0
    %v3303 = vsub.f32 %v3249, 1.0
    %v3304 = vsub.f32 %v3251, 1.0
    %v3305 = vsub.f32 %v3253, 1.0
    %v3306 = vsub.f32 %v3255, 1.0
    %v3307 = vsub.f32 %v3257, 1.0
    %v3308 = vsub.f32 %v3259, 1.0
    %v3309 = vsub.f32 %v3261, 1.0
    %v3310 = vsub.f32 %v3263, 1.0
    %v3311 = vsub.f32 %v3265, 1.0
    %v3312 = vsub.f32 %v3267, 1.0
    %v3313 = vsub.f32 %v3269, 1.0
    %v3314 = vsub.f32 %v3271, 1.0
    %v3315 = vsub.f32 %v3273, 1.0
    %v3316 = vsub.f32 %v3275, 1.0
    %v3317 = vsub.f32 %v3277, 1.0
    %v3318 = vsub.f32 %v3279, 1.0
    %v3319 = vsub.f32 %v3281, 1.0
    %v3320 = vsub.f32 %v3283, 1.0
    %v3321 = vsub.f32 %v3285, 1.0
    %v3322 = vsub.f32 %v3287, 1.0
    %v3323 = vsub.f32 %v3289, 1.0
    %v3324 = vsub.f32 %v3291, 1.0
    %v3325 = vsub.f32 %v3293, 1.0
    %v3326 = vsel %vm3166, %v3134, %v3294
    %v3327 = vsel %vm3167, %v3135, %v3295
    %v3328 = vsel %vm3168, %v3136, %v3296
    %v3329 = vsel %vm3169, %v3137, %v3297
    %v3330 = vsel %vm3170, %v3138, %v3298
    %v3331 = vsel %vm3171, %v3139, %v3299
    %v3332 = vsel %vm3172, %v3140, %v3300
    %v3333 = vsel %vm3173, %v3141, %v3301
    %v3334 = vsel %vm3174, %v3142, %v3302
    %v3335 = vsel %vm3175, %v3143, %v3303
    %v3336 = vsel %vm3176, %v3144, %v3304
    %v3337 = vsel %vm3177, %v3145, %v3305
    %v3338 = vsel %vm3178, %v3146, %v3306
    %v3339 = vsel %vm3179, %v3147, %v3307
    %v3340 = vsel %vm3180, %v3148, %v3308
    %v3341 = vsel %vm3181, %v3149, %v3309
    %v3342 = vsel %vm3182, %v3150, %v3310
    %v3343 = vsel %vm3183, %v3151, %v3311
    %v3344 = vsel %vm3184, %v3152, %v3312
    %v3345 = vsel %vm3185, %v3153, %v3313
    %v3346 = vsel %vm3186, %v3154, %v3314
    %v3347 = vsel %vm3187, %v3155, %v3315
    %v3348 = vsel %vm3188, %v3156, %v3316
    %v3349 = vsel %vm3189, %v3157, %v3317
    %v3350 = vsel %vm3190, %v3158, %v3318
    %v3351 = vsel %vm3191, %v3159, %v3319
    %v3352 = vsel %vm3192, %v3160, %v3320
    %v3353 = vsel %vm3193, %v3161, %v3321
    %v3354 = vsel %vm3194, %v3162, %v3322
    %v3355 = vsel %vm3195, %v3163, %v3323
    %v3356 = vsel %vm3196, %v3164, %v3324
    %v3357 = vsel %vm3197, %v3165, %v3325
    %v3358 = vadd.f32 %v3326, %v3327
    %3359 = vadd.xlane.f32.xlu0 %v3358
    %v3360 = vpop.xlane.xlu0 %3359
    %v3361 = vadd.f32 %v3328, %v3329
    %3362 = vadd.xlane.f32.xlu0 %v3361
    %v3363 = vpop.xlane.xlu0 %3362
    %v3364 = vadd.f32 %v3330, %v3331
    %3365 = vadd.xlane.f32.xlu0 %v3364
    %v3366 = vpop.xlane.xlu0 %3365
    %v3367 = vadd.f32 %v3332, %v3333
    %3368 = vadd.xlane.f32.xlu0 %v3367
    %v3369 = vpop.xlane.xlu0 %3368
    %v3370 = vadd.f32 %v3334, %v3335
    %3371 = vadd.xlane.f32.xlu0 %v3370
    %v3372 = vpop.xlane.xlu0 %3371
    %v3373 = vadd.f32 %v3336, %v3337
    %3374 = vadd.xlane.f32.xlu0 %v3373
    %v3375 = vpop.xlane.xlu0 %3374
    %v3376 = vadd.f32 %v3338, %v3339
    %3377 = vadd.xlane.f32.xlu0 %v3376
    %v3378 = vpop.xlane.xlu0 %3377
    %v3379 = vadd.f32 %v3340, %v3341
    %3380 = vadd.xlane.f32.xlu0 %v3379
    %v3381 = vpop.xlane.xlu0 %3380
    %v3382 = vadd.f32 %v3342, %v3343
    %3383 = vadd.xlane.f32.xlu0 %v3382
    %v3384 = vpop.xlane.xlu0 %3383
    %v3385 = vadd.f32 %v3344, %v3345
    %3386 = vadd.xlane.f32.xlu0 %v3385
    %v3387 = vpop.xlane.xlu0 %3386
    %v3388 = vadd.f32 %v3346, %v3347
    %3389 = vadd.xlane.f32.xlu0 %v3388
    %v3390 = vpop.xlane.xlu0 %3389
    %v3391 = vadd.f32 %v3348, %v3349
    %3392 = vadd.xlane.f32.xlu0 %v3391
    %v3393 = vpop.xlane.xlu0 %3392
    %v3394 = vadd.f32 %v3350, %v3351
    %3395 = vadd.xlane.f32.xlu0 %v3394
    %v3396 = vpop.xlane.xlu0 %3395
    %v3397 = vadd.f32 %v3352, %v3353
    %3398 = vadd.xlane.f32.xlu0 %v3397
    %v3399 = vpop.xlane.xlu0 %3398
    %v3400 = vadd.f32 %v3354, %v3355
    %3401 = vadd.xlane.f32.xlu0 %v3400
    %v3402 = vpop.xlane.xlu0 %3401
    %v3403 = vadd.f32 %v3356, %v3357
    %3404 = vadd.xlane.f32.xlu0 %v3403
    %v3405 = vpop.xlane.xlu0 %3404
    %v3406 = vmul.f32 %v3360, %v928
    %v3407 = vmul.f32 %v3363, %v928
    %v3408 = vmul.f32 %v3366, %v928
    %v3409 = vmul.f32 %v3369, %v928
    %v3410 = vmul.f32 %v3372, %v928
    %v3411 = vmul.f32 %v3375, %v928
    %v3412 = vmul.f32 %v3378, %v928
    %v3413 = vmul.f32 %v3381, %v928
    %v3414 = vmul.f32 %v3384, %v928
    %v3415 = vmul.f32 %v3387, %v928
    %v3416 = vmul.f32 %v3390, %v928
    %v3417 = vmul.f32 %v3393, %v928
    %v3418 = vmul.f32 %v3396, %v928
    %v3419 = vmul.f32 %v3399, %v928
    %v3420 = vmul.f32 %v3402, %v928
    %v3421 = vmul.f32 %v3405, %v928
    %v3422 = vmul.f32 %v3326, %v3326
    %v3423 = vmul.f32 %v3327, %v3327
    %v3424 = vmul.f32 %v3328, %v3328
    %v3425 = vmul.f32 %v3329, %v3329
    %v3426 = vmul.f32 %v3330, %v3330
    %v3427 = vmul.f32 %v3331, %v3331
    %v3428 = vmul.f32 %v3332, %v3332
    %v3429 = vmul.f32 %v3333, %v3333
    %v3430 = vmul.f32 %v3334, %v3334
    %v3431 = vmul.f32 %v3335, %v3335
    %v3432 = vmul.f32 %v3336, %v3336
    %v3433 = vmul.f32 %v3337, %v3337
    %v3434 = vmul.f32 %v3338, %v3338
    %v3435 = vmul.f32 %v3339, %v3339
    %v3436 = vmul.f32 %v3340, %v3340
    %v3437 = vmul.f32 %v3341, %v3341
    %v3438 = vmul.f32 %v3342, %v3342
    %v3439 = vmul.f32 %v3343, %v3343
    %v3440 = vmul.f32 %v3344, %v3344
    %v3441 = vmul.f32 %v3345, %v3345
    %v3442 = vmul.f32 %v3346, %v3346
    %v3443 = vmul.f32 %v3347, %v3347
    %v3444 = vmul.f32 %v3348, %v3348
    %v3445 = vmul.f32 %v3349, %v3349
    %v3446 = vmul.f32 %v3350, %v3350
    %v3447 = vmul.f32 %v3351, %v3351
    %v3448 = vmul.f32 %v3352, %v3352
    %v3449 = vmul.f32 %v3353, %v3353
    %v3450 = vmul.f32 %v3354, %v3354
    %v3451 = vmul.f32 %v3355, %v3355
    %v3452 = vmul.f32 %v3356, %v3356
    %v3453 = vmul.f32 %v3357, %v3357
    %v3454 = vadd.f32 %v3422, %v3423
    %3455 = vadd.xlane.f32.xlu0 %v3454
    %v3456 = vpop.xlane.xlu0 %3455
    %v3457 = vadd.f32 %v3424, %v3425
    %3458 = vadd.xlane.f32.xlu0 %v3457
    %v3459 = vpop.xlane.xlu0 %3458
    %v3460 = vadd.f32 %v3426, %v3427
    %3461 = vadd.xlane.f32.xlu0 %v3460
    %v3462 = vpop.xlane.xlu0 %3461
    %v3463 = vadd.f32 %v3428, %v3429
    %3464 = vadd.xlane.f32.xlu0 %v3463
    %v3465 = vpop.xlane.xlu0 %3464
    %v3466 = vadd.f32 %v3430, %v3431
    %3467 = vadd.xlane.f32.xlu0 %v3466
    %v3468 = vpop.xlane.xlu0 %3467
    %v3469 = vadd.f32 %v3432, %v3433
    %3470 = vadd.xlane.f32.xlu0 %v3469
    %v3471 = vpop.xlane.xlu0 %3470
    %v3472 = vadd.f32 %v3434, %v3435
    %3473 = vadd.xlane.f32.xlu0 %v3472
    %v3474 = vpop.xlane.xlu0 %3473
    %v3475 = vadd.f32 %v3436, %v3437
    %3476 = vadd.xlane.f32.xlu0 %v3475
    %v3477 = vpop.xlane.xlu0 %3476
    %v3478 = vadd.f32 %v3438, %v3439
    %3479 = vadd.xlane.f32.xlu0 %v3478
    %v3480 = vpop.xlane.xlu0 %3479
    %v3481 = vadd.f32 %v3440, %v3441
    %3482 = vadd.xlane.f32.xlu0 %v3481
    %v3483 = vpop.xlane.xlu0 %3482
    %v3484 = vadd.f32 %v3442, %v3443
    %3485 = vadd.xlane.f32.xlu0 %v3484
    %v3486 = vpop.xlane.xlu0 %3485
    %v3487 = vadd.f32 %v3444, %v3445
    %3488 = vadd.xlane.f32.xlu0 %v3487
    %v3489 = vpop.xlane.xlu0 %3488
    %v3490 = vadd.f32 %v3446, %v3447
    %3491 = vadd.xlane.f32.xlu0 %v3490
    %v3492 = vpop.xlane.xlu0 %3491
    %v3493 = vadd.f32 %v3448, %v3449
    %3494 = vadd.xlane.f32.xlu0 %v3493
    %v3495 = vpop.xlane.xlu0 %3494
    %v3496 = vadd.f32 %v3450, %v3451
    %3497 = vadd.xlane.f32.xlu0 %v3496
    %v3498 = vpop.xlane.xlu0 %3497
    %v3499 = vadd.f32 %v3452, %v3453
    %3500 = vadd.xlane.f32.xlu0 %v3499
    %v3501 = vpop.xlane.xlu0 %3500
    %v3502 = vmul.f32 %v3456, %v928
    %v3503 = vmul.f32 %v3459, %v928
    %v3504 = vmul.f32 %v3462, %v928
    %v3505 = vmul.f32 %v3465, %v928
    %v3506 = vmul.f32 %v3468, %v928
    %v3507 = vmul.f32 %v3471, %v928
    %v3508 = vmul.f32 %v3474, %v928
    %v3509 = vmul.f32 %v3477, %v928
    %v3510 = vmul.f32 %v3480, %v928
    %v3511 = vmul.f32 %v3483, %v928
    %v3512 = vmul.f32 %v3486, %v928
    %v3513 = vmul.f32 %v3489, %v928
    %v3514 = vmul.f32 %v3492, %v928
    %v3515 = vmul.f32 %v3495, %v928
    %v3516 = vmul.f32 %v3498, %v928
    %v3517 = vmul.f32 %v3501, %v928
    %v3518 = vmul.f32 %v3406, %v3406
    %v3519 = vmul.f32 %v3407, %v3407
    %v3520 = vmul.f32 %v3408, %v3408
    %v3521 = vmul.f32 %v3409, %v3409
    %v3522 = vmul.f32 %v3410, %v3410
    %v3523 = vmul.f32 %v3411, %v3411
    %v3524 = vmul.f32 %v3412, %v3412
    %v3525 = vmul.f32 %v3413, %v3413
    %v3526 = vmul.f32 %v3414, %v3414
    %v3527 = vmul.f32 %v3415, %v3415
    %v3528 = vmul.f32 %v3416, %v3416
    %v3529 = vmul.f32 %v3417, %v3417
    %v3530 = vmul.f32 %v3418, %v3418
    %v3531 = vmul.f32 %v3419, %v3419
    %v3532 = vmul.f32 %v3420, %v3420
    %v3533 = vmul.f32 %v3421, %v3421
    %v3534 = vsub.f32 %v3502, %v3518
    %v3535 = vsub.f32 %v3503, %v3519
    %v3536 = vsub.f32 %v3504, %v3520
    %v3537 = vsub.f32 %v3505, %v3521
    %v3538 = vsub.f32 %v3506, %v3522
    %v3539 = vsub.f32 %v3507, %v3523
    %v3540 = vsub.f32 %v3508, %v3524
    %v3541 = vsub.f32 %v3509, %v3525
    %v3542 = vsub.f32 %v3510, %v3526
    %v3543 = vsub.f32 %v3511, %v3527
    %v3544 = vsub.f32 %v3512, %v3528
    %v3545 = vsub.f32 %v3513, %v3529
    %v3546 = vsub.f32 %v3514, %v3530
    %v3547 = vsub.f32 %v3515, %v3531
    %v3548 = vsub.f32 %v3516, %v3532
    %v3549 = vsub.f32 %v3517, %v3533
    %v3550 = vmax.f32 %v3534, 0.0
    %v3551 = vmax.f32 %v3535, 0.0
    %v3552 = vmax.f32 %v3536, 0.0
    %v3553 = vmax.f32 %v3537, 0.0
    %v3554 = vmax.f32 %v3538, 0.0
    %v3555 = vmax.f32 %v3539, 0.0
    %v3556 = vmax.f32 %v3540, 0.0
    %v3557 = vmax.f32 %v3541, 0.0
    %v3558 = vmax.f32 %v3542, 0.0
    %v3559 = vmax.f32 %v3543, 0.0
    %v3560 = vmax.f32 %v3544, 0.0
    %v3561 = vmax.f32 %v3545, 0.0
    %v3562 = vmax.f32 %v3546, 0.0
    %v3563 = vmax.f32 %v3547, 0.0
    %v3564 = vmax.f32 %v3548, 0.0
    %v3565 = vmax.f32 %v3549, 0.0
    %v3566 = vsub.f32 %v3326, %v3406
    %v3567 = vsub.f32 %v3327, %v3406
    %v3568 = vsub.f32 %v3328, %v3407
    %v3569 = vsub.f32 %v3329, %v3407
    %v3570 = vsub.f32 %v3330, %v3408
    %v3571 = vsub.f32 %v3331, %v3408
    %v3572 = vsub.f32 %v3332, %v3409
    %v3573 = vsub.f32 %v3333, %v3409
    %v3574 = vsub.f32 %v3334, %v3410
    %v3575 = vsub.f32 %v3335, %v3410
    %v3576 = vsub.f32 %v3336, %v3411
    %v3577 = vsub.f32 %v3337, %v3411
    %v3578 = vsub.f32 %v3338, %v3412
    %v3579 = vsub.f32 %v3339, %v3412
    %v3580 = vsub.f32 %v3340, %v3413
    %v3581 = vsub.f32 %v3341, %v3413
    %v3582 = vsub.f32 %v3342, %v3414
    %v3583 = vsub.f32 %v3343, %v3414
    %v3584 = vsub.f32 %v3344, %v3415
    %v3585 = vsub.f32 %v3345, %v3415
    %v3586 = vsub.f32 %v3346, %v3416
    %v3587 = vsub.f32 %v3347, %v3416
    %v3588 = vsub.f32 %v3348, %v3417
    %v3589 = vsub.f32 %v3349, %v3417
    %v3590 = vsub.f32 %v3350, %v3418
    %v3591 = vsub.f32 %v3351, %v3418
    %v3592 = vsub.f32 %v3352, %v3419
    %v3593 = vsub.f32 %v3353, %v3419
    %v3594 = vsub.f32 %v3354, %v3420
    %v3595 = vsub.f32 %v3355, %v3420
    %v3596 = vsub.f32 %v3356, %v3421
    %v3597 = vsub.f32 %v3357, %v3421
    %v3598 = vadd.f32 %v3550, 1e-05
    %v3599 = vadd.f32 %v3551, 1e-05
    %v3600 = vadd.f32 %v3552, 1e-05
    %v3601 = vadd.f32 %v3553, 1e-05
    %v3602 = vadd.f32 %v3554, 1e-05
    %v3603 = vadd.f32 %v3555, 1e-05
    %v3604 = vadd.f32 %v3556, 1e-05
    %v3605 = vadd.f32 %v3557, 1e-05
    %v3606 = vadd.f32 %v3558, 1e-05
    %v3607 = vadd.f32 %v3559, 1e-05
    %v3608 = vadd.f32 %v3560, 1e-05
    %v3609 = vadd.f32 %v3561, 1e-05
    %v3610 = vadd.f32 %v3562, 1e-05
    %v3611 = vadd.f32 %v3563, 1e-05
    %v3612 = vadd.f32 %v3564, 1e-05
    %v3613 = vadd.f32 %v3565, 1e-05
    %v3614 = vrsqrt.pop %v3598
    %v3615 = vmul.f32 %v3614, %v3598
    %v3616 = vmul.f32 %v3615, %v3614
    %v3617 = vmul.f32 0.5, %v3616
    %v3618 = vsub.f32 1.5, %v3617
    %v3619 = vmul.f32 %v3614, %v3618
    %vm3620 = vweird.f32 %v3598
    %vm3621 = vweird.f32 %v3614
    %vm3622 = vmor %vm3620, %vm3621
    %v3623 = vsel %vm3622, %v3614, %v3619
    %v3624 = vrsqrt.pop %v3599
    %v3625 = vmul.f32 %v3624, %v3599
    %v3626 = vmul.f32 %v3625, %v3624
    %v3627 = vmul.f32 0.5, %v3626
    %v3628 = vsub.f32 1.5, %v3627
    %v3629 = vmul.f32 %v3624, %v3628
    %vm3630 = vweird.f32 %v3599
    %vm3631 = vweird.f32 %v3624
    %vm3632 = vmor %vm3630, %vm3631
    %v3633 = vsel %vm3632, %v3624, %v3629
    %v3634 = vrsqrt.pop %v3600
    %v3635 = vmul.f32 %v3634, %v3600
    %v3636 = vmul.f32 %v3635, %v3634
    %v3637 = vmul.f32 0.5, %v3636
    %v3638 = vsub.f32 1.5, %v3637
    %v3639 = vmul.f32 %v3634, %v3638
    %vm3640 = vweird.f32 %v3600
    %vm3641 = vweird.f32 %v3634
    %vm3642 = vmor %vm3640, %vm3641
    %v3643 = vsel %vm3642, %v3634, %v3639
    %v3644 = vrsqrt.pop %v3601
    %v3645 = vmul.f32 %v3644, %v3601
    %v3646 = vmul.f32 %v3645, %v3644
    %v3647 = vmul.f32 0.5, %v3646
    %v3648 = vsub.f32 1.5, %v3647
    %v3649 = vmul.f32 %v3644, %v3648
    %vm3650 = vweird.f32 %v3601
    %vm3651 = vweird.f32 %v3644
    %vm3652 = vmor %vm3650, %vm3651
    %v3653 = vsel %vm3652, %v3644, %v3649
    %v3654 = vrsqrt.pop %v3602
    %v3655 = vmul.f32 %v3654, %v3602
    %v3656 = vmul.f32 %v3655, %v3654
    %v3657 = vmul.f32 0.5, %v3656
    %v3658 = vsub.f32 1.5, %v3657
    %v3659 = vmul.f32 %v3654, %v3658
    %vm3660 = vweird.f32 %v3602
    %vm3661 = vweird.f32 %v3654
    %vm3662 = vmor %vm3660, %vm3661
    %v3663 = vsel %vm3662, %v3654, %v3659
    %v3664 = vrsqrt.pop %v3603
    %v3665 = vmul.f32 %v3664, %v3603
    %v3666 = vmul.f32 %v3665, %v3664
    %v3667 = vmul.f32 0.5, %v3666
    %v3668 = vsub.f32 1.5, %v3667
    %v3669 = vmul.f32 %v3664, %v3668
    %vm3670 = vweird.f32 %v3603
    %vm3671 = vweird.f32 %v3664
    %vm3672 = vmor %vm3670, %vm3671
    %v3673 = vsel %vm3672, %v3664, %v3669
    %v3674 = vrsqrt.pop %v3604
    %v3675 = vmul.f32 %v3674, %v3604
    %v3676 = vmul.f32 %v3675, %v3674
    %v3677 = vmul.f32 0.5, %v3676
    %v3678 = vsub.f32 1.5, %v3677
    %v3679 = vmul.f32 %v3674, %v3678
    %vm3680 = vweird.f32 %v3604
    %vm3681 = vweird.f32 %v3674
    %vm3682 = vmor %vm3680, %vm3681
    %v3683 = vsel %vm3682, %v3674, %v3679
    %v3684 = vrsqrt.pop %v3605
    %v3685 = vmul.f32 %v3684, %v3605
    %v3686 = vmul.f32 %v3685, %v3684
    %v3687 = vmul.f32 0.5, %v3686
    %v3688 = vsub.f32 1.5, %v3687
    %v3689 = vmul.f32 %v3684, %v3688
    %vm3690 = vweird.f32 %v3605
    %vm3691 = vweird.f32 %v3684
    %vm3692 = vmor %vm3690, %vm3691
    %v3693 = vsel %vm3692, %v3684, %v3689
    %v3694 = vrsqrt.pop %v3606
    %v3695 = vmul.f32 %v3694, %v3606
    %v3696 = vmul.f32 %v3695, %v3694
    %v3697 = vmul.f32 0.5, %v3696
    %v3698 = vsub.f32 1.5, %v3697
    %v3699 = vmul.f32 %v3694, %v3698
    %vm3700 = vweird.f32 %v3606
    %vm3701 = vweird.f32 %v3694
    %vm3702 = vmor %vm3700, %vm3701
    %v3703 = vsel %vm3702, %v3694, %v3699
    %v3704 = vrsqrt.pop %v3607
    %v3705 = vmul.f32 %v3704, %v3607
    %v3706 = vmul.f32 %v3705, %v3704
    %v3707 = vmul.f32 0.5, %v3706
    %v3708 = vsub.f32 1.5, %v3707
    %v3709 = vmul.f32 %v3704, %v3708
    %vm3710 = vweird.f32 %v3607
    %vm3711 = vweird.f32 %v3704
    %vm3712 = vmor %vm3710, %vm3711
    %v3713 = vsel %vm3712, %v3704, %v3709
    %v3714 = vrsqrt.pop %v3608
    %v3715 = vmul.f32 %v3714, %v3608
    %v3716 = vmul.f32 %v3715, %v3714
    %v3717 = vmul.f32 0.5, %v3716
    %v3718 = vsub.f32 1.5, %v3717
    %v3719 = vmul.f32 %v3714, %v3718
    %vm3720 = vweird.f32 %v3608
    %vm3721 = vweird.f32 %v3714
    %vm3722 = vmor %vm3720, %vm3721
    %v3723 = vsel %vm3722, %v3714, %v3719
    %v3724 = vrsqrt.pop %v3609
    %v3725 = vmul.f32 %v3724, %v3609
    %v3726 = vmul.f32 %v3725, %v3724
    %v3727 = vmul.f32 0.5, %v3726
    %v3728 = vsub.f32 1.5, %v3727
    %v3729 = vmul.f32 %v3724, %v3728
    %vm3730 = vweird.f32 %v3609
    %vm3731 = vweird.f32 %v3724
    %vm3732 = vmor %vm3730, %vm3731
    %v3733 = vsel %vm3732, %v3724, %v3729
    %v3734 = vrsqrt.pop %v3610
    %v3735 = vmul.f32 %v3734, %v3610
    %v3736 = vmul.f32 %v3735, %v3734
    %v3737 = vmul.f32 0.5, %v3736
    %v3738 = vsub.f32 1.5, %v3737
    %v3739 = vmul.f32 %v3734, %v3738
    %vm3740 = vweird.f32 %v3610
    %vm3741 = vweird.f32 %v3734
    %vm3742 = vmor %vm3740, %vm3741
    %v3743 = vsel %vm3742, %v3734, %v3739
    %v3744 = vrsqrt.pop %v3611
    %v3745 = vmul.f32 %v3744, %v3611
    %v3746 = vmul.f32 %v3745, %v3744
    %v3747 = vmul.f32 0.5, %v3746
    %v3748 = vsub.f32 1.5, %v3747
    %v3749 = vmul.f32 %v3744, %v3748
    %vm3750 = vweird.f32 %v3611
    %vm3751 = vweird.f32 %v3744
    %vm3752 = vmor %vm3750, %vm3751
    %v3753 = vsel %vm3752, %v3744, %v3749
    %v3754 = vrsqrt.pop %v3612
    %v3755 = vmul.f32 %v3754, %v3612
    %v3756 = vmul.f32 %v3755, %v3754
    %v3757 = vmul.f32 0.5, %v3756
    %v3758 = vsub.f32 1.5, %v3757
    %v3759 = vmul.f32 %v3754, %v3758
    %vm3760 = vweird.f32 %v3612
    %vm3761 = vweird.f32 %v3754
    %vm3762 = vmor %vm3760, %vm3761
    %v3763 = vsel %vm3762, %v3754, %v3759
    %v3764 = vrsqrt.pop %v3613
    %v3765 = vmul.f32 %v3764, %v3613
    %v3766 = vmul.f32 %v3765, %v3764
    %v3767 = vmul.f32 0.5, %v3766
    %v3768 = vsub.f32 1.5, %v3767
    %v3769 = vmul.f32 %v3764, %v3768
    %vm3770 = vweird.f32 %v3613
    %vm3771 = vweird.f32 %v3764
    %vm3772 = vmor %vm3770, %vm3771
    %v3773 = vsel %vm3772, %v3764, %v3769
    %v3774 = vmul.f32 %v3566, %v3623
    %v3775 = vmul.f32 %v3567, %v3623
    %v3776 = vmul.f32 %v3568, %v3633
    %v3777 = vmul.f32 %v3569, %v3633
    %v3778 = vmul.f32 %v3570, %v3643
    %v3779 = vmul.f32 %v3571, %v3643
    %v3780 = vmul.f32 %v3572, %v3653
    %v3781 = vmul.f32 %v3573, %v3653
    %v3782 = vmul.f32 %v3574, %v3663
    %v3783 = vmul.f32 %v3575, %v3663
    %v3784 = vmul.f32 %v3576, %v3673
    %v3785 = vmul.f32 %v3577, %v3673
    %v3786 = vmul.f32 %v3578, %v3683
    %v3787 = vmul.f32 %v3579, %v3683
    %v3788 = vmul.f32 %v3580, %v3693
    %v3789 = vmul.f32 %v3581, %v3693
    %v3790 = vmul.f32 %v3582, %v3703
    %v3791 = vmul.f32 %v3583, %v3703
    %v3792 = vmul.f32 %v3584, %v3713
    %v3793 = vmul.f32 %v3585, %v3713
    %v3794 = vmul.f32 %v3586, %v3723
    %v3795 = vmul.f32 %v3587, %v3723
    %v3796 = vmul.f32 %v3588, %v3733
    %v3797 = vmul.f32 %v3589, %v3733
    %v3798 = vmul.f32 %v3590, %v3743
    %v3799 = vmul.f32 %v3591, %v3743
    %v3800 = vmul.f32 %v3592, %v3753
    %v3801 = vmul.f32 %v3593, %v3753
    %v3802 = vmul.f32 %v3594, %v3763
    %v3803 = vmul.f32 %v3595, %v3763
    %v3804 = vmul.f32 %v3596, %v3773
    %v3805 = vmul.f32 %v3597, %v3773
    %v3806 = vld [vmem:[%s15] sm:$0x3]
    %v3808 = vperm.slane %v3806, 0
    %v3809 = vperm.slane %v3806, 1
    %v3812 = vmul.f32 %v3774, %v3808
    %v3813 = vmul.f32 %v3775, %v3809
    %v3814 = vmul.f32 %v3776, %v3808
    %v3815 = vmul.f32 %v3777, %v3809
    %v3816 = vmul.f32 %v3778, %v3808
    %v3817 = vmul.f32 %v3779, %v3809
    %v3818 = vmul.f32 %v3780, %v3808
    %v3819 = vmul.f32 %v3781, %v3809
    %v3820 = vmul.f32 %v3782, %v3808
    %v3821 = vmul.f32 %v3783, %v3809
    %v3822 = vmul.f32 %v3784, %v3808
    %v3823 = vmul.f32 %v3785, %v3809
    %v3824 = vmul.f32 %v3786, %v3808
    %v3825 = vmul.f32 %v3787, %v3809
    %v3826 = vmul.f32 %v3788, %v3808
    %v3827 = vmul.f32 %v3789, %v3809
    %v3828 = vmul.f32 %v3790, %v3808
    %v3829 = vmul.f32 %v3791, %v3809
    %v3830 = vmul.f32 %v3792, %v3808
    %v3831 = vmul.f32 %v3793, %v3809
    %v3832 = vmul.f32 %v3794, %v3808
    %v3833 = vmul.f32 %v3795, %v3809
    %v3834 = vmul.f32 %v3796, %v3808
    %v3835 = vmul.f32 %v3797, %v3809
    %v3836 = vmul.f32 %v3798, %v3808
    %v3837 = vmul.f32 %v3799, %v3809
    %v3838 = vmul.f32 %v3800, %v3808
    %v3839 = vmul.f32 %v3801, %v3809
    %v3840 = vmul.f32 %v3802, %v3808
    %v3841 = vmul.f32 %v3803, %v3809
    %v3842 = vmul.f32 %v3804, %v3808
    %v3843 = vmul.f32 %v3805, %v3809
    %v3844 = vld [vmem:[%s21] sm:$0x3]
    %v3846 = vperm.slane %v3844, 0
    %v3847 = vperm.slane %v3844, 1
    %v3850 = vadd.f32 %v3812, %v3846
    %v3851 = vadd.f32 %v3813, %v3847
    %v3852 = vadd.f32 %v3814, %v3846
    %v3853 = vadd.f32 %v3815, %v3847
    %v3854 = vadd.f32 %v3816, %v3846
    %v3855 = vadd.f32 %v3817, %v3847
    %v3856 = vadd.f32 %v3818, %v3846
    %v3857 = vadd.f32 %v3819, %v3847
    %v3858 = vadd.f32 %v3820, %v3846
    %v3859 = vadd.f32 %v3821, %v3847
    %v3860 = vadd.f32 %v3822, %v3846
    %v3861 = vadd.f32 %v3823, %v3847
    %v3862 = vadd.f32 %v3824, %v3846
    %v3863 = vadd.f32 %v3825, %v3847
    %v3864 = vadd.f32 %v3826, %v3846
    %v3865 = vadd.f32 %v3827, %v3847
    %v3866 = vadd.f32 %v3828, %v3846
    %v3867 = vadd.f32 %v3829, %v3847
    %v3868 = vadd.f32 %v3830, %v3846
    %v3869 = vadd.f32 %v3831, %v3847
    %v3870 = vadd.f32 %v3832, %v3846
    %v3871 = vadd.f32 %v3833, %v3847
    %v3872 = vadd.f32 %v3834, %v3846
    %v3873 = vadd.f32 %v3835, %v3847
    %v3874 = vadd.f32 %v3836, %v3846
    %v3875 = vadd.f32 %v3837, %v3847
    %v3876 = vadd.f32 %v3838, %v3846
    %v3877 = vadd.f32 %v3839, %v3847
    %v3878 = vadd.f32 %v3840, %v3846
    %v3879 = vadd.f32 %v3841, %v3847
    %v3880 = vadd.f32 %v3842, %v3846
    %v3881 = vadd.f32 %v3843, %v3847
    %v3882 = vpack.c.bf16 %v3851, %v3850
    %v3883 = vpack.c.bf16 %v3853, %v3852
    %v3884 = vpack.c.bf16 %v3855, %v3854
    %v3885 = vpack.c.bf16 %v3857, %v3856
    %v3886 = vpack.c.bf16 %v3859, %v3858
    %v3887 = vpack.c.bf16 %v3861, %v3860
    %v3888 = vpack.c.bf16 %v3863, %v3862
    %v3889 = vpack.c.bf16 %v3865, %v3864
    %v3890 = vpack.c.bf16 %v3867, %v3866
    %v3891 = vpack.c.bf16 %v3869, %v3868
    %v3892 = vpack.c.bf16 %v3871, %v3870
    %v3893 = vpack.c.bf16 %v3873, %v3872
    %v3894 = vpack.c.bf16 %v3875, %v3874
    %v3895 = vpack.c.bf16 %v3877, %v3876
    %v3896 = vpack.c.bf16 %v3879, %v3878
    %v3897 = vpack.c.bf16 %v3881, %v3880
    %v3914 = vunpack.c.l.b16 %v3882
    %v3915 = vunpack.c.h.b16 %v3882
    %v3916 = vunpack.c.l.b16 %v3883
    %v3917 = vunpack.c.h.b16 %v3883
    %v3918 = vunpack.c.l.b16 %v3884
    %v3919 = vunpack.c.h.b16 %v3884
    %v3920 = vunpack.c.l.b16 %v3885
    %v3921 = vunpack.c.h.b16 %v3885
    %v3922 = vunpack.c.l.b16 %v3886
    %v3923 = vunpack.c.h.b16 %v3886
    %v3924 = vunpack.c.l.b16 %v3887
    %v3925 = vunpack.c.h.b16 %v3887
    %v3926 = vunpack.c.l.b16 %v3888
    %v3927 = vunpack.c.h.b16 %v3888
    %v3928 = vunpack.c.l.b16 %v3889
    %v3929 = vunpack.c.h.b16 %v3889
    %v3930 = vunpack.c.l.b16 %v3890
    %v3931 = vunpack.c.h.b16 %v3890
    %v3932 = vunpack.c.l.b16 %v3891
    %v3933 = vunpack.c.h.b16 %v3891
    %v3934 = vunpack.c.l.b16 %v3892
    %v3935 = vunpack.c.h.b16 %v3892
    %v3936 = vunpack.c.l.b16 %v3893
    %v3937 = vunpack.c.h.b16 %v3893
    %v3938 = vunpack.c.l.b16 %v3894
    %v3939 = vunpack.c.h.b16 %v3894
    %v3940 = vunpack.c.l.b16 %v3895
    %v3941 = vunpack.c.h.b16 %v3895
    %v3942 = vunpack.c.l.b16 %v3896
    %v3943 = vunpack.c.h.b16 %v3896
    %v3944 = vunpack.c.l.b16 %v3897
    %v3945 = vunpack.c.h.b16 %v3897
    %v3946 = vpack.c.b16 %v3916, %v3914
    %v3947 = vpack.c.b16 %v3917, %v3915
    %v3948 = vpack.c.b16 %v3920, %v3918
    %v3949 = vpack.c.b16 %v3921, %v3919
    %v3950 = vpack.c.b16 %v3924, %v3922
    %v3951 = vpack.c.b16 %v3925, %v3923
    %v3952 = vpack.c.b16 %v3928, %v3926
    %v3953 = vpack.c.b16 %v3929, %v3927
    %v3954 = vpack.c.b16 %v3932, %v3930
    %v3955 = vpack.c.b16 %v3933, %v3931
    %v3956 = vpack.c.b16 %v3936, %v3934
    %v3957 = vpack.c.b16 %v3937, %v3935
    %v3958 = vpack.c.b16 %v3940, %v3938
    %v3959 = vpack.c.b16 %v3941, %v3939
    %v3960 = vpack.c.b16 %v3944, %v3942
    %v3961 = vpack.c.b16 %v3945, %v3943
    %3962 = vrot.lane.b32.xlu0 %v3946, 32
    %v3963 = vpop.permute.xlu0 %3962
    %3964 = vrot.lane.b32.xlu0 %v3947, 32
    %v3965 = vpop.permute.xlu0 %3964
    %3966 = vrot.lane.b32.xlu0 %v3948, 32
    %v3967 = vpop.permute.xlu0 %3966
    %3968 = vrot.lane.b32.xlu0 %v3949, 32
    %v3969 = vpop.permute.xlu0 %3968
    %3970 = vrot.lane.b32.xlu0 %v3950, 32
    %v3971 = vpop.permute.xlu0 %3970
    %3972 = vrot.lane.b32.xlu0 %v3951, 32
    %v3973 = vpop.permute.xlu0 %3972
    %3974 = vrot.lane.b32.xlu0 %v3952, 32
    %v3975 = vpop.permute.xlu0 %3974
    %3976 = vrot.lane.b32.xlu0 %v3953, 32
    %v3977 = vpop.permute.xlu0 %3976
    %3978 = vrot.lane.b32.xlu0 %v3954, 32
    %v3979 = vpop.permute.xlu0 %3978
    %3980 = vrot.lane.b32.xlu0 %v3955, 32
    %v3981 = vpop.permute.xlu0 %3980
    %3982 = vrot.lane.b32.xlu0 %v3956, 32
    %v3983 = vpop.permute.xlu0 %3982
    %3984 = vrot.lane.b32.xlu0 %v3957, 32
    %v3985 = vpop.permute.xlu0 %3984
    %3986 = vrot.lane.b32.xlu0 %v3958, 32
    %v3987 = vpop.permute.xlu0 %3986
    %3988 = vrot.lane.b32.xlu0 %v3959, 32
    %v3989 = vpop.permute.xlu0 %3988
    %3990 = vrot.lane.b32.xlu0 %v3960, 32
    %v3991 = vpop.permute.xlu0 %3990
    %3992 = vrot.lane.b32.xlu0 %v3961, 32
    %v3993 = vpop.permute.xlu0 %3992
    %vm3994 = vcmask 261120
    %v3995 = vsel %vm3994, %v3963, %v3965
    %v3996 = vsel %vm3994, %v3967, %v3969
    %v3997 = vsel %vm3994, %v3971, %v3973
    %v3998 = vsel %vm3994, %v3975, %v3977
    %v3999 = vsel %vm3994, %v3979, %v3981
    %v4000 = vsel %vm3994, %v3983, %v3985
    %v4001 = vsel %vm3994, %v3987, %v3989
    %v4002 = vsel %vm3994, %v3991, %v3993
    %vm4011 = vcmask 261120
    %v4013 = vsel %vm4011, 0, %v3963
    %v4016 = vsel %vm4011, 0, %v3967
    %v4019 = vsel %vm4011, 0, %v3971
    %v4022 = vsel %vm4011, 0, %v3975
    %v4025 = vsel %vm4011, 0, %v3979
    %v4028 = vsel %vm4011, 0, %v3983
    %v4031 = vsel %vm4011, 0, %v3987
    %v4034 = vsel %vm4011, 0, %v3991
    %v4037 = vsel %vm4011, %v3965, 0
    %v4039 = vsel %vm4011, %v3969, 0
    %v4041 = vsel %vm4011, %v3973, 0
    %v4043 = vsel %vm4011, %v3977, 0
    %v4045 = vsel %vm4011, %v3981, 0
    %v4047 = vsel %vm4011, %v3985, 0
    %v4049 = vsel %vm4011, %v3989, 0
    %v4051 = vsel %vm4011, %v3993, 0
    %v4052 = vld [vmem:[#allocation10] sm:$0xf]
    %v4053 = vld [vmem:[#allocation10 + $0x4] sm:$0xf]
    %v4054 = vld [vmem:[#allocation10 + $0x8] sm:$0xf]
    %v4055 = vld [vmem:[#allocation10 + $0xc] sm:$0xf]
    %v4056 = vld [vmem:[#allocation10 + $0x10] sm:$0xf]
    %v4057 = vld [vmem:[#allocation10 + $0x14] sm:$0xf]
    %v4058 = vld [vmem:[#allocation10 + $0x18] sm:$0xf]
    %v4059 = vld [vmem:[#allocation10 + $0x1c] sm:$0xf]
    %v4060 = vld [vmem:[#allocation10 + $0x20] sm:$0xf]
    %v4061 = vld [vmem:[#allocation10 + $0x24] sm:$0xf]
    %v4062 = vld [vmem:[#allocation10 + $0x28] sm:$0xf]
    %v4063 = vld [vmem:[#allocation10 + $0x2c] sm:$0xf]
    %v4064 = vld [vmem:[#allocation10 + $0x30] sm:$0xf]
    %v4065 = vld [vmem:[#allocation10 + $0x34] sm:$0xf]
    %v4066 = vld [vmem:[#allocation10 + $0x38] sm:$0xf]
    %v4067 = vld [vmem:[#allocation10 + $0x3c] sm:$0xf]
    %v4068 = vld [vmem:[#allocation10 + $0x40] sm:$0xf]
    %v4069 = vld [vmem:[#allocation10 + $0x44] sm:$0xf]
    %v4070 = vld [vmem:[#allocation10 + $0x48] sm:$0xf]
    %v4071 = vld [vmem:[#allocation10 + $0x4c] sm:$0xf]
    %v4072 = vld [vmem:[#allocation10 + $0x50] sm:$0xf]
    %v4073 = vld [vmem:[#allocation10 + $0x54] sm:$0xf]
    %v4096 = vunpack.c.l.b16 %v4052
    %v4097 = vunpack.c.l.b16 %v4053
    %v4098 = vunpack.c.l.b16 %v4054
    %v4099 = vunpack.c.l.b16 %v4055
    %v4100 = vunpack.c.l.b16 %v4056
    %v4101 = vunpack.c.l.b16 %v4057
    %v4102 = vunpack.c.l.b16 %v4058
    %v4103 = vunpack.c.l.b16 %v4059
    %v4104 = vunpack.c.l.b16 %v4060
    %v4105 = vunpack.c.l.b16 %v4061
    %v4106 = vunpack.c.l.b16 %v4062
    %v4107 = vunpack.c.l.b16 %v4063
    %v4108 = vunpack.c.l.b16 %v4064
    %v4109 = vunpack.c.l.b16 %v4065
    %v4110 = vunpack.c.l.b16 %v4066
    %v4111 = vunpack.c.l.b16 %v4067
    %v4112 = vunpack.c.l.b16 %v4068
    %v4113 = vunpack.c.l.b16 %v4069
    %v4114 = vunpack.c.l.b16 %v4070
    %v4115 = vunpack.c.l.b16 %v4071
    %v4116 = vunpack.c.l.b16 %v4072
    %v4117 = vunpack.c.l.b16 %v4073
    %v4118 = vpack.c.b16 %v4097, %v4096
    %v4119 = vpack.c.b16 %v4099, %v4098
    %v4120 = vpack.c.b16 %v4101, %v4100
    %v4121 = vpack.c.b16 %v4103, %v4102
    %v4122 = vpack.c.b16 %v4105, %v4104
    %v4123 = vpack.c.b16 %v4107, %v4106
    %v4124 = vpack.c.b16 %v4109, %v4108
    %v4125 = vpack.c.b16 %v4111, %v4110
    %v4126 = vpack.c.b16 %v4113, %v4112
    %v4127 = vpack.c.b16 %v4115, %v4114
    %v4128 = vpack.c.b16 %v4117, %v4116
    %vm4140 = vcmask 392192
    %v4142 = vsel %vm4140, %v3995, 0
    %v4145 = vsel %vm4140, %v3996, 0
    %v4148 = vsel %vm4140, %v3997, 0
    %v4151 = vsel %vm4140, %v3998, 0
    %v4154 = vsel %vm4140, %v3999, 0
    %v4157 = vsel %vm4140, %v4000, 0
    %v4160 = vsel %vm4140, %v4001, 0
    %v4163 = vsel %vm4140, %v4002, 0
    %4165 = vmatpush.bf16.msra.mxu0 %v4125
    %4166 = vmatpush.bf16.msra.mxu0 %v4124
    %4167 = vmatpush.bf16.msra.mxu0 %v4123
    %4168 = vmatpush.bf16.msra.mxu0 %v4122
    %4169 = vmatpush.bf16.msra.mxu0 %v4121
    %4170 = vmatpush.bf16.msra.mxu0 %v4120
    %4171 = vmatpush.bf16.msra.mxu0 %v4119
    %4172 = vmatpush.bf16.msra.mxu0 %v4118
    %4173 = vmatmul.bf16.gmra.mxu0 %v4013
    %v4174 = vpop.f32.mrf.mxu0
    %v4175 = vadd.f32 0.0, %v4174
    %v4176 = vpop.f32.mrf.mxu0
    %v4177 = vadd.f32 0.0, %v4176
    %4178 = vmatmul.bf16.gmra.mxu0 %v4016
    %v4179 = vpop.f32.mrf.mxu0
    %v4180 = vadd.f32 0.0, %v4179
    %v4181 = vpop.f32.mrf.mxu0
    %v4182 = vadd.f32 0.0, %v4181
    %4183 = vmatmul.bf16.gmra.mxu0 %v4019
    %v4184 = vpop.f32.mrf.mxu0
    %v4185 = vadd.f32 0.0, %v4184
    %v4186 = vpop.f32.mrf.mxu0
    %v4187 = vadd.f32 0.0, %v4186
    %4188 = vmatmul.bf16.gmra.mxu0 %v4022
    %v4189 = vpop.f32.mrf.mxu0
    %v4190 = vadd.f32 0.0, %v4189
    %v4191 = vpop.f32.mrf.mxu0
    %v4192 = vadd.f32 0.0, %v4191
    %4193 = vmatmul.bf16.gmra.mxu0 %v4025
    %v4194 = vpop.f32.mrf.mxu0
    %v4195 = vadd.f32 0.0, %v4194
    %v4196 = vpop.f32.mrf.mxu0
    %v4197 = vadd.f32 0.0, %v4196
    %4198 = vmatmul.bf16.gmra.mxu0 %v4028
    %v4199 = vpop.f32.mrf.mxu0
    %v4200 = vadd.f32 0.0, %v4199
    %v4201 = vpop.f32.mrf.mxu0
    %v4202 = vadd.f32 0.0, %v4201
    %4203 = vmatmul.bf16.gmra.mxu0 %v4031
    %v4204 = vpop.f32.mrf.mxu0
    %v4205 = vadd.f32 0.0, %v4204
    %v4206 = vpop.f32.mrf.mxu0
    %v4207 = vadd.f32 0.0, %v4206
    %4208 = vmatmul.bf16.gmra.mxu0 %v4034
    %v4209 = vpop.f32.mrf.mxu0
    %v4210 = vadd.f32 0.0, %v4209
    %v4211 = vpop.f32.mrf.mxu0
    %v4212 = vadd.f32 0.0, %v4211
    %4213 = vdwg.mxu0
    %4214 = vmatpush.bf16.msra.mxu0 0
    %4215 = vmatpush.bf16.msra.mxu0 0
    %4216 = vmatpush.bf16.msra.mxu0 0
    %4217 = vmatpush.bf16.msra.mxu0 0
    %4218 = vmatpush.bf16.msra.mxu0 0
    %4219 = vmatpush.bf16.msra.mxu0 %v4128
    %4220 = vmatpush.bf16.msra.mxu0 %v4127
    %4221 = vmatpush.bf16.msra.mxu0 %v4126
    %4222 = vmatmul.bf16.gmra.mxu0 %v4142
    %v4223 = vpop.f32.mrf.mxu0
    %v4224 = vadd.f32 %v4175, %v4223
    %v4225 = vpop.f32.mrf.mxu0
    %v4226 = vadd.f32 %v4177, %v4225
    %4227 = vmatmul.bf16.gmra.mxu0 %v4145
    %v4228 = vpop.f32.mrf.mxu0
    %v4229 = vadd.f32 %v4180, %v4228
    %v4230 = vpop.f32.mrf.mxu0
    %v4231 = vadd.f32 %v4182, %v4230
    %4232 = vmatmul.bf16.gmra.mxu0 %v4148
    %v4233 = vpop.f32.mrf.mxu0
    %v4234 = vadd.f32 %v4185, %v4233
    %v4235 = vpop.f32.mrf.mxu0
    %v4236 = vadd.f32 %v4187, %v4235
    %4237 = vmatmul.bf16.gmra.mxu0 %v4151
    %v4238 = vpop.f32.mrf.mxu0
    %v4239 = vadd.f32 %v4190, %v4238
    %v4240 = vpop.f32.mrf.mxu0
    %v4241 = vadd.f32 %v4192, %v4240
    %4242 = vmatmul.bf16.gmra.mxu0 %v4154
    %v4243 = vpop.f32.mrf.mxu0
    %v4244 = vadd.f32 %v4195, %v4243
    %v4245 = vpop.f32.mrf.mxu0
    %v4246 = vadd.f32 %v4197, %v4245
    %4247 = vmatmul.bf16.gmra.mxu0 %v4157
    %v4248 = vpop.f32.mrf.mxu0
    %v4249 = vadd.f32 %v4200, %v4248
    %v4250 = vpop.f32.mrf.mxu0
    %v4251 = vadd.f32 %v4202, %v4250
    %4252 = vmatmul.bf16.gmra.mxu0 %v4160
    %v4253 = vpop.f32.mrf.mxu0
    %v4254 = vadd.f32 %v4205, %v4253
    %v4255 = vpop.f32.mrf.mxu0
    %v4256 = vadd.f32 %v4207, %v4255
    %4257 = vmatmul.bf16.gmra.mxu0 %v4163
    %v4258 = vpop.f32.mrf.mxu0
    %v4259 = vadd.f32 %v4210, %v4258
    %v4260 = vpop.f32.mrf.mxu0
    %v4261 = vadd.f32 %v4212, %v4260
    %4262 = vdwg.mxu0
    %v4263 = vsel %vm4140, %v4037, 0
    %v4265 = vsel %vm4140, %v4039, 0
    %v4267 = vsel %vm4140, %v4041, 0
    %v4269 = vsel %vm4140, %v4043, 0
    %v4271 = vsel %vm4140, %v4045, 0
    %v4273 = vsel %vm4140, %v4047, 0
    %v4275 = vsel %vm4140, %v4049, 0
    %v4277 = vsel %vm4140, %v4051, 0
    %4279 = vmatpush.bf16.msra.mxu0 %v4125
    %4280 = vmatpush.bf16.msra.mxu0 %v4124
    %4281 = vmatpush.bf16.msra.mxu0 %v4123
    %4282 = vmatpush.bf16.msra.mxu0 %v4122
    %4283 = vmatpush.bf16.msra.mxu0 %v4121
    %4284 = vmatpush.bf16.msra.mxu0 %v4120
    %4285 = vmatpush.bf16.msra.mxu0 %v4119
    %4286 = vmatpush.bf16.msra.mxu0 %v4118
    %4287 = vmatmul.bf16.gmra.mxu0 %v3995
    %v4288 = vpop.f32.mrf.mxu0
    %v4289 = vadd.f32 0.0, %v4288
    %v4290 = vpop.f32.mrf.mxu0
    %v4291 = vadd.f32 0.0, %v4290
    %4292 = vmatmul.bf16.gmra.mxu0 %v3996
    %v4293 = vpop.f32.mrf.mxu0
    %v4294 = vadd.f32 0.0, %v4293
    %v4295 = vpop.f32.mrf.mxu0
    %v4296 = vadd.f32 0.0, %v4295
    %4297 = vmatmul.bf16.gmra.mxu0 %v3997
    %v4298 = vpop.f32.mrf.mxu0
    %v4299 = vadd.f32 0.0, %v4298
    %v4300 = vpop.f32.mrf.mxu0
    %v4301 = vadd.f32 0.0, %v4300
    %4302 = vmatmul.bf16.gmra.mxu0 %v3998
    %v4303 = vpop.f32.mrf.mxu0
    %v4304 = vadd.f32 0.0, %v4303
    %v4305 = vpop.f32.mrf.mxu0
    %v4306 = vadd.f32 0.0, %v4305
    %4307 = vmatmul.bf16.gmra.mxu0 %v3999
    %v4308 = vpop.f32.mrf.mxu0
    %v4309 = vadd.f32 0.0, %v4308
    %v4310 = vpop.f32.mrf.mxu0
    %v4311 = vadd.f32 0.0, %v4310
    %4312 = vmatmul.bf16.gmra.mxu0 %v4000
    %v4313 = vpop.f32.mrf.mxu0
    %v4314 = vadd.f32 0.0, %v4313
    %v4315 = vpop.f32.mrf.mxu0
    %v4316 = vadd.f32 0.0, %v4315
    %4317 = vmatmul.bf16.gmra.mxu0 %v4001
    %v4318 = vpop.f32.mrf.mxu0
    %v4319 = vadd.f32 0.0, %v4318
    %v4320 = vpop.f32.mrf.mxu0
    %v4321 = vadd.f32 0.0, %v4320
    %4322 = vmatmul.bf16.gmra.mxu0 %v4002
    %v4323 = vpop.f32.mrf.mxu0
    %v4324 = vadd.f32 0.0, %v4323
    %v4325 = vpop.f32.mrf.mxu0
    %v4326 = vadd.f32 0.0, %v4325
    %4327 = vdwg.mxu0
    %4328 = vmatpush.bf16.msra.mxu0 0
    %4329 = vmatpush.bf16.msra.mxu0 0
    %4330 = vmatpush.bf16.msra.mxu0 0
    %4331 = vmatpush.bf16.msra.mxu0 0
    %4332 = vmatpush.bf16.msra.mxu0 0
    %4333 = vmatpush.bf16.msra.mxu0 %v4128
    %4334 = vmatpush.bf16.msra.mxu0 %v4127
    %4335 = vmatpush.bf16.msra.mxu0 %v4126
    %4336 = vmatmul.bf16.gmra.mxu0 %v4263
    %v4337 = vpop.f32.mrf.mxu0
    %v4338 = vadd.f32 %v4289, %v4337
    %v4339 = vpop.f32.mrf.mxu0
    %v4340 = vadd.f32 %v4291, %v4339
    %4341 = vmatmul.bf16.gmra.mxu0 %v4265
    %v4342 = vpop.f32.mrf.mxu0
    %v4343 = vadd.f32 %v4294, %v4342
    %v4344 = vpop.f32.mrf.mxu0
    %v4345 = vadd.f32 %v4296, %v4344
    %4346 = vmatmul.bf16.gmra.mxu0 %v4267
    %v4347 = vpop.f32.mrf.mxu0
    %v4348 = vadd.f32 %v4299, %v4347
    %v4349 = vpop.f32.mrf.mxu0
    %v4350 = vadd.f32 %v4301, %v4349
    %4351 = vmatmul.bf16.gmra.mxu0 %v4269
    %v4352 = vpop.f32.mrf.mxu0
    %v4353 = vadd.f32 %v4304, %v4352
    %v4354 = vpop.f32.mrf.mxu0
    %v4355 = vadd.f32 %v4306, %v4354
    %4356 = vmatmul.bf16.gmra.mxu0 %v4271
    %v4357 = vpop.f32.mrf.mxu0
    %v4358 = vadd.f32 %v4309, %v4357
    %v4359 = vpop.f32.mrf.mxu0
    %v4360 = vadd.f32 %v4311, %v4359
    %4361 = vmatmul.bf16.gmra.mxu0 %v4273
    %v4362 = vpop.f32.mrf.mxu0
    %v4363 = vadd.f32 %v4314, %v4362
    %v4364 = vpop.f32.mrf.mxu0
    %v4365 = vadd.f32 %v4316, %v4364
    %4366 = vmatmul.bf16.gmra.mxu0 %v4275
    %v4367 = vpop.f32.mrf.mxu0
    %v4368 = vadd.f32 %v4319, %v4367
    %v4369 = vpop.f32.mrf.mxu0
    %v4370 = vadd.f32 %v4321, %v4369
    %4371 = vmatmul.bf16.gmra.mxu0 %v4277
    %v4372 = vpop.f32.mrf.mxu0
    %v4373 = vadd.f32 %v4324, %v4372
    %v4374 = vpop.f32.mrf.mxu0
    %v4375 = vadd.f32 %v4326, %v4374
    %4376 = vdwg.mxu0
    %v4377 = vld [vmem:[%s10] sm:$0x3]
    %v4379 = vperm.slane %v4377, 0
    %v4380 = vperm.slane %v4377, 1
    %v4383 = vadd.f32 %v4224, %v4379
    %v4384 = vadd.f32 %v4338, %v4380
    %v4385 = vadd.f32 %v4226, %v4379
    %v4386 = vadd.f32 %v4340, %v4380
    %v4387 = vadd.f32 %v4229, %v4379
    %v4388 = vadd.f32 %v4343, %v4380
    %v4389 = vadd.f32 %v4231, %v4379
    %v4390 = vadd.f32 %v4345, %v4380
    %v4391 = vadd.f32 %v4234, %v4379
    %v4392 = vadd.f32 %v4348, %v4380
    %v4393 = vadd.f32 %v4236, %v4379
    %v4394 = vadd.f32 %v4350, %v4380
    %v4395 = vadd.f32 %v4239, %v4379
    %v4396 = vadd.f32 %v4353, %v4380
    %v4397 = vadd.f32 %v4241, %v4379
    %v4398 = vadd.f32 %v4355, %v4380
    %v4399 = vadd.f32 %v4244, %v4379
    %v4400 = vadd.f32 %v4358, %v4380
    %v4401 = vadd.f32 %v4246, %v4379
    %v4402 = vadd.f32 %v4360, %v4380
    %v4403 = vadd.f32 %v4249, %v4379
    %v4404 = vadd.f32 %v4363, %v4380
    %v4405 = vadd.f32 %v4251, %v4379
    %v4406 = vadd.f32 %v4365, %v4380
    %v4407 = vadd.f32 %v4254, %v4379
    %v4408 = vadd.f32 %v4368, %v4380
    %v4409 = vadd.f32 %v4256, %v4379
    %v4410 = vadd.f32 %v4370, %v4380
    %v4411 = vadd.f32 %v4259, %v4379
    %v4412 = vadd.f32 %v4373, %v4380
    %v4413 = vadd.f32 %v4261, %v4379
    %v4414 = vadd.f32 %v4375, %v4380
    %vm4415 = vcmp.gt.f32.partialorder %v4383, 0.0
    %vm4416 = vcmp.gt.f32.partialorder %v4384, 0.0
    %vm4417 = vcmp.gt.f32.partialorder %v4385, 0.0
    %vm4418 = vcmp.gt.f32.partialorder %v4386, 0.0
    %vm4419 = vcmp.gt.f32.partialorder %v4387, 0.0
    %vm4420 = vcmp.gt.f32.partialorder %v4388, 0.0
    %vm4421 = vcmp.gt.f32.partialorder %v4389, 0.0
    %vm4422 = vcmp.gt.f32.partialorder %v4390, 0.0
    %vm4423 = vcmp.gt.f32.partialorder %v4391, 0.0
    %vm4424 = vcmp.gt.f32.partialorder %v4392, 0.0
    %vm4425 = vcmp.gt.f32.partialorder %v4393, 0.0
    %vm4426 = vcmp.gt.f32.partialorder %v4394, 0.0
    %vm4427 = vcmp.gt.f32.partialorder %v4395, 0.0
    %vm4428 = vcmp.gt.f32.partialorder %v4396, 0.0
    %vm4429 = vcmp.gt.f32.partialorder %v4397, 0.0
    %vm4430 = vcmp.gt.f32.partialorder %v4398, 0.0
    %vm4431 = vcmp.gt.f32.partialorder %v4399, 0.0
    %vm4432 = vcmp.gt.f32.partialorder %v4400, 0.0
    %vm4433 = vcmp.gt.f32.partialorder %v4401, 0.0
    %vm4434 = vcmp.gt.f32.partialorder %v4402, 0.0
    %vm4435 = vcmp.gt.f32.partialorder %v4403, 0.0
    %vm4436 = vcmp.gt.f32.partialorder %v4404, 0.0
    %vm4437 = vcmp.gt.f32.partialorder %v4405, 0.0
    %vm4438 = vcmp.gt.f32.partialorder %v4406, 0.0
    %vm4439 = vcmp.gt.f32.partialorder %v4407, 0.0
    %vm4440 = vcmp.gt.f32.partialorder %v4408, 0.0
    %vm4441 = vcmp.gt.f32.partialorder %v4409, 0.0
    %vm4442 = vcmp.gt.f32.partialorder %v4410, 0.0
    %vm4443 = vcmp.gt.f32.partialorder %v4411, 0.0
    %vm4444 = vcmp.gt.f32.partialorder %v4412, 0.0
    %vm4445 = vcmp.gt.f32.partialorder %v4413, 0.0
    %vm4446 = vcmp.gt.f32.partialorder %v4414, 0.0
    %v4447 = vmin.f32 %v4383, 0.0
    %v4448 = vmin.f32 %v4384, 0.0
    %v4449 = vmin.f32 %v4385, 0.0
    %v4450 = vmin.f32 %v4386, 0.0
    %v4451 = vmin.f32 %v4387, 0.0
    %v4452 = vmin.f32 %v4388, 0.0
    %v4453 = vmin.f32 %v4389, 0.0
    %v4454 = vmin.f32 %v4390, 0.0
    %v4455 = vmin.f32 %v4391, 0.0
    %v4456 = vmin.f32 %v4392, 0.0
    %v4457 = vmin.f32 %v4393, 0.0
    %v4458 = vmin.f32 %v4394, 0.0
    %v4459 = vmin.f32 %v4395, 0.0
    %v4460 = vmin.f32 %v4396, 0.0
    %v4461 = vmin.f32 %v4397, 0.0
    %v4462 = vmin.f32 %v4398, 0.0
    %v4463 = vmin.f32 %v4399, 0.0
    %v4464 = vmin.f32 %v4400, 0.0
    %v4465 = vmin.f32 %v4401, 0.0
    %v4466 = vmin.f32 %v4402, 0.0
    %v4467 = vmin.f32 %v4403, 0.0
    %v4468 = vmin.f32 %v4404, 0.0
    %v4469 = vmin.f32 %v4405, 0.0
    %v4470 = vmin.f32 %v4406, 0.0
    %v4471 = vmin.f32 %v4407, 0.0
    %v4472 = vmin.f32 %v4408, 0.0
    %v4473 = vmin.f32 %v4409, 0.0
    %v4474 = vmin.f32 %v4410, 0.0
    %v4475 = vmin.f32 %v4411, 0.0
    %v4476 = vmin.f32 %v4412, 0.0
    %v4477 = vmin.f32 %v4413, 0.0
    %v4478 = vmin.f32 %v4414, 0.0
    %v4479 = vmul.f32 %v4447, 1.442695
    %v4480 = vpow.pop %v4479
    %v4481 = vmul.f32 %v4448, 1.442695
    %v4482 = vpow.pop %v4481
    %v4483 = vmul.f32 %v4449, 1.442695
    %v4484 = vpow.pop %v4483
    %v4485 = vmul.f32 %v4450, 1.442695
    %v4486 = vpow.pop %v4485
    %v4487 = vmul.f32 %v4451, 1.442695
    %v4488 = vpow.pop %v4487
    %v4489 = vmul.f32 %v4452, 1.442695
    %v4490 = vpow.pop %v4489
    %v4491 = vmul.f32 %v4453, 1.442695
    %v4492 = vpow.pop %v4491
    %v4493 = vmul.f32 %v4454, 1.442695
    %v4494 = vpow.pop %v4493
    %v4495 = vmul.f32 %v4455, 1.442695
    %v4496 = vpow.pop %v4495
    %v4497 = vmul.f32 %v4456, 1.442695
    %v4498 = vpow.pop %v4497
    %v4499 = vmul.f32 %v4457, 1.442695
    %v4500 = vpow.pop %v4499
    %v4501 = vmul.f32 %v4458, 1.442695
    %v4502 = vpow.pop %v4501
    %v4503 = vmul.f32 %v4459, 1.442695
    %v4504 = vpow.pop %v4503
    %v4505 = vmul.f32 %v4460, 1.442695
    %v4506 = vpow.pop %v4505
    %v4507 = vmul.f32 %v4461, 1.442695
    %v4508 = vpow.pop %v4507
    %v4509 = vmul.f32 %v4462, 1.442695
    %v4510 = vpow.pop %v4509
    %v4511 = vmul.f32 %v4463, 1.442695
    %v4512 = vpow.pop %v4511
    %v4513 = vmul.f32 %v4464, 1.442695
    %v4514 = vpow.pop %v4513
    %v4515 = vmul.f32 %v4465, 1.442695
    %v4516 = vpow.pop %v4515
    %v4517 = vmul.f32 %v4466, 1.442695
    %v4518 = vpow.pop %v4517
    %v4519 = vmul.f32 %v4467, 1.442695
    %v4520 = vpow.pop %v4519
    %v4521 = vmul.f32 %v4468, 1.442695
    %v4522 = vpow.pop %v4521
    %v4523 = vmul.f32 %v4469, 1.442695
    %v4524 = vpow.pop %v4523
    %v4525 = vmul.f32 %v4470, 1.442695
    %v4526 = vpow.pop %v4525
    %v4527 = vmul.f32 %v4471, 1.442695
    %v4528 = vpow.pop %v4527
    %v4529 = vmul.f32 %v4472, 1.442695
    %v4530 = vpow.pop %v4529
    %v4531 = vmul.f32 %v4473, 1.442695
    %v4532 = vpow.pop %v4531
    %v4533 = vmul.f32 %v4474, 1.442695
    %v4534 = vpow.pop %v4533
    %v4535 = vmul.f32 %v4475, 1.442695
    %v4536 = vpow.pop %v4535
    %v4537 = vmul.f32 %v4476, 1.442695
    %v4538 = vpow.pop %v4537
    %v4539 = vmul.f32 %v4477, 1.442695
    %v4540 = vpow.pop %v4539
    %v4541 = vmul.f32 %v4478, 1.442695
    %v4542 = vpow.pop %v4541
    %v4543 = vsub.f32 %v4480, 1.0
    %v4544 = vsub.f32 %v4482, 1.0
    %v4545 = vsub.f32 %v4484, 1.0
    %v4546 = vsub.f32 %v4486, 1.0
    %v4547 = vsub.f32 %v4488, 1.0
    %v4548 = vsub.f32 %v4490, 1.0
    %v4549 = vsub.f32 %v4492, 1.0
    %v4550 = vsub.f32 %v4494, 1.0
    %v4551 = vsub.f32 %v4496, 1.0
    %v4552 = vsub.f32 %v4498, 1.0
    %v4553 = vsub.f32 %v4500, 1.0
    %v4554 = vsub.f32 %v4502, 1.0
    %v4555 = vsub.f32 %v4504, 1.0
    %v4556 = vsub.f32 %v4506, 1.0
    %v4557 = vsub.f32 %v4508, 1.0
    %v4558 = vsub.f32 %v4510, 1.0
    %v4559 = vsub.f32 %v4512, 1.0
    %v4560 = vsub.f32 %v4514, 1.0
    %v4561 = vsub.f32 %v4516, 1.0
    %v4562 = vsub.f32 %v4518, 1.0
    %v4563 = vsub.f32 %v4520, 1.0
    %v4564 = vsub.f32 %v4522, 1.0
    %v4565 = vsub.f32 %v4524, 1.0
    %v4566 = vsub.f32 %v4526, 1.0
    %v4567 = vsub.f32 %v4528, 1.0
    %v4568 = vsub.f32 %v4530, 1.0
    %v4569 = vsub.f32 %v4532, 1.0
    %v4570 = vsub.f32 %v4534, 1.0
    %v4571 = vsub.f32 %v4536, 1.0
    %v4572 = vsub.f32 %v4538, 1.0
    %v4573 = vsub.f32 %v4540, 1.0
    %v4574 = vsub.f32 %v4542, 1.0
    %v4575 = vsel %vm4415, %v4383, %v4543
    %v4576 = vsel %vm4416, %v4384, %v4544
    %v4577 = vsel %vm4417, %v4385, %v4545
    %v4578 = vsel %vm4418, %v4386, %v4546
    %v4579 = vsel %vm4419, %v4387, %v4547
    %v4580 = vsel %vm4420, %v4388, %v4548
    %v4581 = vsel %vm4421, %v4389, %v4549
    %v4582 = vsel %vm4422, %v4390, %v4550
    %v4583 = vsel %vm4423, %v4391, %v4551
    %v4584 = vsel %vm4424, %v4392, %v4552
    %v4585 = vsel %vm4425, %v4393, %v4553
    %v4586 = vsel %vm4426, %v4394, %v4554
    %v4587 = vsel %vm4427, %v4395, %v4555
    %v4588 = vsel %vm4428, %v4396, %v4556
    %v4589 = vsel %vm4429, %v4397, %v4557
    %v4590 = vsel %vm4430, %v4398, %v4558
    %v4591 = vsel %vm4431, %v4399, %v4559
    %v4592 = vsel %vm4432, %v4400, %v4560
    %v4593 = vsel %vm4433, %v4401, %v4561
    %v4594 = vsel %vm4434, %v4402, %v4562
    %v4595 = vsel %vm4435, %v4403, %v4563
    %v4596 = vsel %vm4436, %v4404, %v4564
    %v4597 = vsel %vm4437, %v4405, %v4565
    %v4598 = vsel %vm4438, %v4406, %v4566
    %v4599 = vsel %vm4439, %v4407, %v4567
    %v4600 = vsel %vm4440, %v4408, %v4568
    %v4601 = vsel %vm4441, %v4409, %v4569
    %v4602 = vsel %vm4442, %v4410, %v4570
    %v4603 = vsel %vm4443, %v4411, %v4571
    %v4604 = vsel %vm4444, %v4412, %v4572
    %v4605 = vsel %vm4445, %v4413, %v4573
    %v4606 = vsel %vm4446, %v4414, %v4574
    %v4607 = vadd.f32 %v4575, %v4576
    %4608 = vadd.xlane.f32.xlu0 %v4607
    %v4609 = vpop.xlane.xlu0 %4608
    %v4610 = vadd.f32 %v4577, %v4578
    %4611 = vadd.xlane.f32.xlu0 %v4610
    %v4612 = vpop.xlane.xlu0 %4611
    %v4613 = vadd.f32 %v4579, %v4580
    %4614 = vadd.xlane.f32.xlu0 %v4613
    %v4615 = vpop.xlane.xlu0 %4614
    %v4616 = vadd.f32 %v4581, %v4582
    %4617 = vadd.xlane.f32.xlu0 %v4616
    %v4618 = vpop.xlane.xlu0 %4617
    %v4619 = vadd.f32 %v4583, %v4584
    %4620 = vadd.xlane.f32.xlu0 %v4619
    %v4621 = vpop.xlane.xlu0 %4620
    %v4622 = vadd.f32 %v4585, %v4586
    %4623 = vadd.xlane.f32.xlu0 %v4622
    %v4624 = vpop.xlane.xlu0 %4623
    %v4625 = vadd.f32 %v4587, %v4588
    %4626 = vadd.xlane.f32.xlu0 %v4625
    %v4627 = vpop.xlane.xlu0 %4626
    %v4628 = vadd.f32 %v4589, %v4590
    %4629 = vadd.xlane.f32.xlu0 %v4628
    %v4630 = vpop.xlane.xlu0 %4629
    %v4631 = vadd.f32 %v4591, %v4592
    %4632 = vadd.xlane.f32.xlu0 %v4631
    %v4633 = vpop.xlane.xlu0 %4632
    %v4634 = vadd.f32 %v4593, %v4594
    %4635 = vadd.xlane.f32.xlu0 %v4634
    %v4636 = vpop.xlane.xlu0 %4635
    %v4637 = vadd.f32 %v4595, %v4596
    %4638 = vadd.xlane.f32.xlu0 %v4637
    %v4639 = vpop.xlane.xlu0 %4638
    %v4640 = vadd.f32 %v4597, %v4598
    %4641 = vadd.xlane.f32.xlu0 %v4640
    %v4642 = vpop.xlane.xlu0 %4641
    %v4643 = vadd.f32 %v4599, %v4600
    %4644 = vadd.xlane.f32.xlu0 %v4643
    %v4645 = vpop.xlane.xlu0 %4644
    %v4646 = vadd.f32 %v4601, %v4602
    %4647 = vadd.xlane.f32.xlu0 %v4646
    %v4648 = vpop.xlane.xlu0 %4647
    %v4649 = vadd.f32 %v4603, %v4604
    %4650 = vadd.xlane.f32.xlu0 %v4649
    %v4651 = vpop.xlane.xlu0 %4650
    %v4652 = vadd.f32 %v4605, %v4606
    %4653 = vadd.xlane.f32.xlu0 %v4652
    %v4654 = vpop.xlane.xlu0 %4653
    %v4655 = vmul.f32 %v4609, %v928
    %v4656 = vmul.f32 %v4612, %v928
    %v4657 = vmul.f32 %v4615, %v928
    %v4658 = vmul.f32 %v4618, %v928
    %v4659 = vmul.f32 %v4621, %v928
    %v4660 = vmul.f32 %v4624, %v928
    %v4661 = vmul.f32 %v4627, %v928
    %v4662 = vmul.f32 %v4630, %v928
    %v4663 = vmul.f32 %v4633, %v928
    %v4664 = vmul.f32 %v4636, %v928
    %v4665 = vmul.f32 %v4639, %v928
    %v4666 = vmul.f32 %v4642, %v928
    %v4667 = vmul.f32 %v4645, %v928
    %v4668 = vmul.f32 %v4648, %v928
    %v4669 = vmul.f32 %v4651, %v928
    %v4670 = vmul.f32 %v4654, %v928
    %v4671 = vmul.f32 %v4575, %v4575
    %v4672 = vmul.f32 %v4576, %v4576
    %v4673 = vmul.f32 %v4577, %v4577
    %v4674 = vmul.f32 %v4578, %v4578
    %v4675 = vmul.f32 %v4579, %v4579
    %v4676 = vmul.f32 %v4580, %v4580
    %v4677 = vmul.f32 %v4581, %v4581
    %v4678 = vmul.f32 %v4582, %v4582
    %v4679 = vmul.f32 %v4583, %v4583
    %v4680 = vmul.f32 %v4584, %v4584
    %v4681 = vmul.f32 %v4585, %v4585
    %v4682 = vmul.f32 %v4586, %v4586
    %v4683 = vmul.f32 %v4587, %v4587
    %v4684 = vmul.f32 %v4588, %v4588
    %v4685 = vmul.f32 %v4589, %v4589
    %v4686 = vmul.f32 %v4590, %v4590
    %v4687 = vmul.f32 %v4591, %v4591
    %v4688 = vmul.f32 %v4592, %v4592
    %v4689 = vmul.f32 %v4593, %v4593
    %v4690 = vmul.f32 %v4594, %v4594
    %v4691 = vmul.f32 %v4595, %v4595
    %v4692 = vmul.f32 %v4596, %v4596
    %v4693 = vmul.f32 %v4597, %v4597
    %v4694 = vmul.f32 %v4598, %v4598
    %v4695 = vmul.f32 %v4599, %v4599
    %v4696 = vmul.f32 %v4600, %v4600
    %v4697 = vmul.f32 %v4601, %v4601
    %v4698 = vmul.f32 %v4602, %v4602
    %v4699 = vmul.f32 %v4603, %v4603
    %v4700 = vmul.f32 %v4604, %v4604
    %v4701 = vmul.f32 %v4605, %v4605
    %v4702 = vmul.f32 %v4606, %v4606
    %v4703 = vadd.f32 %v4671, %v4672
    %4704 = vadd.xlane.f32.xlu0 %v4703
    %v4705 = vpop.xlane.xlu0 %4704
    %v4706 = vadd.f32 %v4673, %v4674
    %4707 = vadd.xlane.f32.xlu0 %v4706
    %v4708 = vpop.xlane.xlu0 %4707
    %v4709 = vadd.f32 %v4675, %v4676
    %4710 = vadd.xlane.f32.xlu0 %v4709
    %v4711 = vpop.xlane.xlu0 %4710
    %v4712 = vadd.f32 %v4677, %v4678
    %4713 = vadd.xlane.f32.xlu0 %v4712
    %v4714 = vpop.xlane.xlu0 %4713
    %v4715 = vadd.f32 %v4679, %v4680
    %4716 = vadd.xlane.f32.xlu0 %v4715
    %v4717 = vpop.xlane.xlu0 %4716
    %v4718 = vadd.f32 %v4681, %v4682
    %4719 = vadd.xlane.f32.xlu0 %v4718
    %v4720 = vpop.xlane.xlu0 %4719
    %v4721 = vadd.f32 %v4683, %v4684
    %4722 = vadd.xlane.f32.xlu0 %v4721
    %v4723 = vpop.xlane.xlu0 %4722
    %v4724 = vadd.f32 %v4685, %v4686
    %4725 = vadd.xlane.f32.xlu0 %v4724
    %v4726 = vpop.xlane.xlu0 %4725
    %v4727 = vadd.f32 %v4687, %v4688
    %4728 = vadd.xlane.f32.xlu0 %v4727
    %v4729 = vpop.xlane.xlu0 %4728
    %v4730 = vadd.f32 %v4689, %v4690
    %4731 = vadd.xlane.f32.xlu0 %v4730
    %v4732 = vpop.xlane.xlu0 %4731
    %v4733 = vadd.f32 %v4691, %v4692
    %4734 = vadd.xlane.f32.xlu0 %v4733
    %v4735 = vpop.xlane.xlu0 %4734
    %v4736 = vadd.f32 %v4693, %v4694
    %4737 = vadd.xlane.f32.xlu0 %v4736
    %v4738 = vpop.xlane.xlu0 %4737
    %v4739 = vadd.f32 %v4695, %v4696
    %4740 = vadd.xlane.f32.xlu0 %v4739
    %v4741 = vpop.xlane.xlu0 %4740
    %v4742 = vadd.f32 %v4697, %v4698
    %4743 = vadd.xlane.f32.xlu0 %v4742
    %v4744 = vpop.xlane.xlu0 %4743
    %v4745 = vadd.f32 %v4699, %v4700
    %4746 = vadd.xlane.f32.xlu0 %v4745
    %v4747 = vpop.xlane.xlu0 %4746
    %v4748 = vadd.f32 %v4701, %v4702
    %4749 = vadd.xlane.f32.xlu0 %v4748
    %v4750 = vpop.xlane.xlu0 %4749
    %v4751 = vmul.f32 %v4705, %v928
    %v4752 = vmul.f32 %v4708, %v928
    %v4753 = vmul.f32 %v4711, %v928
    %v4754 = vmul.f32 %v4714, %v928
    %v4755 = vmul.f32 %v4717, %v928
    %v4756 = vmul.f32 %v4720, %v928
    %v4757 = vmul.f32 %v4723, %v928
    %v4758 = vmul.f32 %v4726, %v928
    %v4759 = vmul.f32 %v4729, %v928
    %v4760 = vmul.f32 %v4732, %v928
    %v4761 = vmul.f32 %v4735, %v928
    %v4762 = vmul.f32 %v4738, %v928
    %v4763 = vmul.f32 %v4741, %v928
    %v4764 = vmul.f32 %v4744, %v928
    %v4765 = vmul.f32 %v4747, %v928
    %v4766 = vmul.f32 %v4750, %v928
    %v4767 = vmul.f32 %v4655, %v4655
    %v4768 = vmul.f32 %v4656, %v4656
    %v4769 = vmul.f32 %v4657, %v4657
    %v4770 = vmul.f32 %v4658, %v4658
    %v4771 = vmul.f32 %v4659, %v4659
    %v4772 = vmul.f32 %v4660, %v4660
    %v4773 = vmul.f32 %v4661, %v4661
    %v4774 = vmul.f32 %v4662, %v4662
    %v4775 = vmul.f32 %v4663, %v4663
    %v4776 = vmul.f32 %v4664, %v4664
    %v4777 = vmul.f32 %v4665, %v4665
    %v4778 = vmul.f32 %v4666, %v4666
    %v4779 = vmul.f32 %v4667, %v4667
    %v4780 = vmul.f32 %v4668, %v4668
    %v4781 = vmul.f32 %v4669, %v4669
    %v4782 = vmul.f32 %v4670, %v4670
    %v4783 = vsub.f32 %v4751, %v4767
    %v4784 = vsub.f32 %v4752, %v4768
    %v4785 = vsub.f32 %v4753, %v4769
    %v4786 = vsub.f32 %v4754, %v4770
    %v4787 = vsub.f32 %v4755, %v4771
    %v4788 = vsub.f32 %v4756, %v4772
    %v4789 = vsub.f32 %v4757, %v4773
    %v4790 = vsub.f32 %v4758, %v4774
    %v4791 = vsub.f32 %v4759, %v4775
    %v4792 = vsub.f32 %v4760, %v4776
    %v4793 = vsub.f32 %v4761, %v4777
    %v4794 = vsub.f32 %v4762, %v4778
    %v4795 = vsub.f32 %v4763, %v4779
    %v4796 = vsub.f32 %v4764, %v4780
    %v4797 = vsub.f32 %v4765, %v4781
    %v4798 = vsub.f32 %v4766, %v4782
    %v4799 = vmax.f32 %v4783, 0.0
    %v4800 = vmax.f32 %v4784, 0.0
    %v4801 = vmax.f32 %v4785, 0.0
    %v4802 = vmax.f32 %v4786, 0.0
    %v4803 = vmax.f32 %v4787, 0.0
    %v4804 = vmax.f32 %v4788, 0.0
    %v4805 = vmax.f32 %v4789, 0.0
    %v4806 = vmax.f32 %v4790, 0.0
    %v4807 = vmax.f32 %v4791, 0.0
    %v4808 = vmax.f32 %v4792, 0.0
    %v4809 = vmax.f32 %v4793, 0.0
    %v4810 = vmax.f32 %v4794, 0.0
    %v4811 = vmax.f32 %v4795, 0.0
    %v4812 = vmax.f32 %v4796, 0.0
    %v4813 = vmax.f32 %v4797, 0.0
    %v4814 = vmax.f32 %v4798, 0.0
    %v4815 = vsub.f32 %v4575, %v4655
    %v4816 = vsub.f32 %v4576, %v4655
    %v4817 = vsub.f32 %v4577, %v4656
    %v4818 = vsub.f32 %v4578, %v4656
    %v4819 = vsub.f32 %v4579, %v4657
    %v4820 = vsub.f32 %v4580, %v4657
    %v4821 = vsub.f32 %v4581, %v4658
    %v4822 = vsub.f32 %v4582, %v4658
    %v4823 = vsub.f32 %v4583, %v4659
    %v4824 = vsub.f32 %v4584, %v4659
    %v4825 = vsub.f32 %v4585, %v4660
    %v4826 = vsub.f32 %v4586, %v4660
    %v4827 = vsub.f32 %v4587, %v4661
    %v4828 = vsub.f32 %v4588, %v4661
    %v4829 = vsub.f32 %v4589, %v4662
    %v4830 = vsub.f32 %v4590, %v4662
    %v4831 = vsub.f32 %v4591, %v4663
    %v4832 = vsub.f32 %v4592, %v4663
    %v4833 = vsub.f32 %v4593, %v4664
    %v4834 = vsub.f32 %v4594, %v4664
    %v4835 = vsub.f32 %v4595, %v4665
    %v4836 = vsub.f32 %v4596, %v4665
    %v4837 = vsub.f32 %v4597, %v4666
    %v4838 = vsub.f32 %v4598, %v4666
    %v4839 = vsub.f32 %v4599, %v4667
    %v4840 = vsub.f32 %v4600, %v4667
    %v4841 = vsub.f32 %v4601, %v4668
    %v4842 = vsub.f32 %v4602, %v4668
    %v4843 = vsub.f32 %v4603, %v4669
    %v4844 = vsub.f32 %v4604, %v4669
    %v4845 = vsub.f32 %v4605, %v4670
    %v4846 = vsub.f32 %v4606, %v4670
    %v4847 = vadd.f32 %v4799, 1e-05
    %v4848 = vadd.f32 %v4800, 1e-05
    %v4849 = vadd.f32 %v4801, 1e-05
    %v4850 = vadd.f32 %v4802, 1e-05
    %v4851 = vadd.f32 %v4803, 1e-05
    %v4852 = vadd.f32 %v4804, 1e-05
    %v4853 = vadd.f32 %v4805, 1e-05
    %v4854 = vadd.f32 %v4806, 1e-05
    %v4855 = vadd.f32 %v4807, 1e-05
    %v4856 = vadd.f32 %v4808, 1e-05
    %v4857 = vadd.f32 %v4809, 1e-05
    %v4858 = vadd.f32 %v4810, 1e-05
    %v4859 = vadd.f32 %v4811, 1e-05
    %v4860 = vadd.f32 %v4812, 1e-05
    %v4861 = vadd.f32 %v4813, 1e-05
    %v4862 = vadd.f32 %v4814, 1e-05
    %v4863 = vrsqrt.pop %v4847
    %v4864 = vmul.f32 %v4863, %v4847
    %v4865 = vmul.f32 %v4864, %v4863
    %v4866 = vmul.f32 0.5, %v4865
    %v4867 = vsub.f32 1.5, %v4866
    %v4868 = vmul.f32 %v4863, %v4867
    %vm4869 = vweird.f32 %v4847
    %vm4870 = vweird.f32 %v4863
    %vm4871 = vmor %vm4869, %vm4870
    %v4872 = vsel %vm4871, %v4863, %v4868
    %v4873 = vrsqrt.pop %v4848
    %v4874 = vmul.f32 %v4873, %v4848
    %v4875 = vmul.f32 %v4874, %v4873
    %v4876 = vmul.f32 0.5, %v4875
    %v4877 = vsub.f32 1.5, %v4876
    %v4878 = vmul.f32 %v4873, %v4877
    %vm4879 = vweird.f32 %v4848
    %vm4880 = vweird.f32 %v4873
    %vm4881 = vmor %vm4879, %vm4880
    %v4882 = vsel %vm4881, %v4873, %v4878
    %v4883 = vrsqrt.pop %v4849
    %v4884 = vmul.f32 %v4883, %v4849
    %v4885 = vmul.f32 %v4884, %v4883
    %v4886 = vmul.f32 0.5, %v4885
    %v4887 = vsub.f32 1.5, %v4886
    %v4888 = vmul.f32 %v4883, %v4887
    %vm4889 = vweird.f32 %v4849
    %vm4890 = vweird.f32 %v4883
    %vm4891 = vmor %vm4889, %vm4890
    %v4892 = vsel %vm4891, %v4883, %v4888
    %v4893 = vrsqrt.pop %v4850
    %v4894 = vmul.f32 %v4893, %v4850
    %v4895 = vmul.f32 %v4894, %v4893
    %v4896 = vmul.f32 0.5, %v4895
    %v4897 = vsub.f32 1.5, %v4896
    %v4898 = vmul.f32 %v4893, %v4897
    %vm4899 = vweird.f32 %v4850
    %vm4900 = vweird.f32 %v4893
    %vm4901 = vmor %vm4899, %vm4900
    %v4902 = vsel %vm4901, %v4893, %v4898
    %v4903 = vrsqrt.pop %v4851
    %v4904 = vmul.f32 %v4903, %v4851
    %v4905 = vmul.f32 %v4904, %v4903
    %v4906 = vmul.f32 0.5, %v4905
    %v4907 = vsub.f32 1.5, %v4906
    %v4908 = vmul.f32 %v4903, %v4907
    %vm4909 = vweird.f32 %v4851
    %vm4910 = vweird.f32 %v4903
    %vm4911 = vmor %vm4909, %vm4910
    %v4912 = vsel %vm4911, %v4903, %v4908
    %v4913 = vrsqrt.pop %v4852
    %v4914 = vmul.f32 %v4913, %v4852
    %v4915 = vmul.f32 %v4914, %v4913
    %v4916 = vmul.f32 0.5, %v4915
    %v4917 = vsub.f32 1.5, %v4916
    %v4918 = vmul.f32 %v4913, %v4917
    %vm4919 = vweird.f32 %v4852
    %vm4920 = vweird.f32 %v4913
    %vm4921 = vmor %vm4919, %vm4920
    %v4922 = vsel %vm4921, %v4913, %v4918
    %v4923 = vrsqrt.pop %v4853
    %v4924 = vmul.f32 %v4923, %v4853
    %v4925 = vmul.f32 %v4924, %v4923
    %v4926 = vmul.f32 0.5, %v4925
    %v4927 = vsub.f32 1.5, %v4926
    %v4928 = vmul.f32 %v4923, %v4927
    %vm4929 = vweird.f32 %v4853
    %vm4930 = vweird.f32 %v4923
    %vm4931 = vmor %vm4929, %vm4930
    %v4932 = vsel %vm4931, %v4923, %v4928
    %v4933 = vrsqrt.pop %v4854
    %v4934 = vmul.f32 %v4933, %v4854
    %v4935 = vmul.f32 %v4934, %v4933
    %v4936 = vmul.f32 0.5, %v4935
    %v4937 = vsub.f32 1.5, %v4936
    %v4938 = vmul.f32 %v4933, %v4937
    %vm4939 = vweird.f32 %v4854
    %vm4940 = vweird.f32 %v4933
    %vm4941 = vmor %vm4939, %vm4940
    %v4942 = vsel %vm4941, %v4933, %v4938
    %v4943 = vrsqrt.pop %v4855
    %v4944 = vmul.f32 %v4943, %v4855
    %v4945 = vmul.f32 %v4944, %v4943
    %v4946 = vmul.f32 0.5, %v4945
    %v4947 = vsub.f32 1.5, %v4946
    %v4948 = vmul.f32 %v4943, %v4947
    %vm4949 = vweird.f32 %v4855
    %vm4950 = vweird.f32 %v4943
    %vm4951 = vmor %vm4949, %vm4950
    %v4952 = vsel %vm4951, %v4943, %v4948
    %v4953 = vrsqrt.pop %v4856
    %v4954 = vmul.f32 %v4953, %v4856
    %v4955 = vmul.f32 %v4954, %v4953
    %v4956 = vmul.f32 0.5, %v4955
    %v4957 = vsub.f32 1.5, %v4956
    %v4958 = vmul.f32 %v4953, %v4957
    %vm4959 = vweird.f32 %v4856
    %vm4960 = vweird.f32 %v4953
    %vm4961 = vmor %vm4959, %vm4960
    %v4962 = vsel %vm4961, %v4953, %v4958
    %v4963 = vrsqrt.pop %v4857
    %v4964 = vmul.f32 %v4963, %v4857
    %v4965 = vmul.f32 %v4964, %v4963
    %v4966 = vmul.f32 0.5, %v4965
    %v4967 = vsub.f32 1.5, %v4966
    %v4968 = vmul.f32 %v4963, %v4967
    %vm4969 = vweird.f32 %v4857
    %vm4970 = vweird.f32 %v4963
    %vm4971 = vmor %vm4969, %vm4970
    %v4972 = vsel %vm4971, %v4963, %v4968
    %v4973 = vrsqrt.pop %v4858
    %v4974 = vmul.f32 %v4973, %v4858
    %v4975 = vmul.f32 %v4974, %v4973
    %v4976 = vmul.f32 0.5, %v4975
    %v4977 = vsub.f32 1.5, %v4976
    %v4978 = vmul.f32 %v4973, %v4977
    %vm4979 = vweird.f32 %v4858
    %vm4980 = vweird.f32 %v4973
    %vm4981 = vmor %vm4979, %vm4980
    %v4982 = vsel %vm4981, %v4973, %v4978
    %v4983 = vrsqrt.pop %v4859
    %v4984 = vmul.f32 %v4983, %v4859
    %v4985 = vmul.f32 %v4984, %v4983
    %v4986 = vmul.f32 0.5, %v4985
    %v4987 = vsub.f32 1.5, %v4986
    %v4988 = vmul.f32 %v4983, %v4987
    %vm4989 = vweird.f32 %v4859
    %vm4990 = vweird.f32 %v4983
    %vm4991 = vmor %vm4989, %vm4990
    %v4992 = vsel %vm4991, %v4983, %v4988
    %v4993 = vrsqrt.pop %v4860
    %v4994 = vmul.f32 %v4993, %v4860
    %v4995 = vmul.f32 %v4994, %v4993
    %v4996 = vmul.f32 0.5, %v4995
    %v4997 = vsub.f32 1.5, %v4996
    %v4998 = vmul.f32 %v4993, %v4997
    %vm4999 = vweird.f32 %v4860
    %vm5000 = vweird.f32 %v4993
    %vm5001 = vmor %vm4999, %vm5000
    %v5002 = vsel %vm5001, %v4993, %v4998
    %v5003 = vrsqrt.pop %v4861
    %v5004 = vmul.f32 %v5003, %v4861
    %v5005 = vmul.f32 %v5004, %v5003
    %v5006 = vmul.f32 0.5, %v5005
    %v5007 = vsub.f32 1.5, %v5006
    %v5008 = vmul.f32 %v5003, %v5007
    %vm5009 = vweird.f32 %v4861
    %vm5010 = vweird.f32 %v5003
    %vm5011 = vmor %vm5009, %vm5010
    %v5012 = vsel %vm5011, %v5003, %v5008
    %v5013 = vrsqrt.pop %v4862
    %v5014 = vmul.f32 %v5013, %v4862
    %v5015 = vmul.f32 %v5014, %v5013
    %v5016 = vmul.f32 0.5, %v5015
    %v5017 = vsub.f32 1.5, %v5016
    %v5018 = vmul.f32 %v5013, %v5017
    %vm5019 = vweird.f32 %v4862
    %vm5020 = vweird.f32 %v5013
    %vm5021 = vmor %vm5019, %vm5020
    %v5022 = vsel %vm5021, %v5013, %v5018
    %v5023 = vmul.f32 %v4815, %v4872
    %v5024 = vmul.f32 %v4816, %v4872
    %v5025 = vmul.f32 %v4817, %v4882
    %v5026 = vmul.f32 %v4818, %v4882
    %v5027 = vmul.f32 %v4819, %v4892
    %v5028 = vmul.f32 %v4820, %v4892
    %v5029 = vmul.f32 %v4821, %v4902
    %v5030 = vmul.f32 %v4822, %v4902
    %v5031 = vmul.f32 %v4823, %v4912
    %v5032 = vmul.f32 %v4824, %v4912
    %v5033 = vmul.f32 %v4825, %v4922
    %v5034 = vmul.f32 %v4826, %v4922
    %v5035 = vmul.f32 %v4827, %v4932
    %v5036 = vmul.f32 %v4828, %v4932
    %v5037 = vmul.f32 %v4829, %v4942
    %v5038 = vmul.f32 %v4830, %v4942
    %v5039 = vmul.f32 %v4831, %v4952
    %v5040 = vmul.f32 %v4832, %v4952
    %v5041 = vmul.f32 %v4833, %v4962
    %v5042 = vmul.f32 %v4834, %v4962
    %v5043 = vmul.f32 %v4835, %v4972
    %v5044 = vmul.f32 %v4836, %v4972
    %v5045 = vmul.f32 %v4837, %v4982
    %v5046 = vmul.f32 %v4838, %v4982
    %v5047 = vmul.f32 %v4839, %v4992
    %v5048 = vmul.f32 %v4840, %v4992
    %v5049 = vmul.f32 %v4841, %v5002
    %v5050 = vmul.f32 %v4842, %v5002
    %v5051 = vmul.f32 %v4843, %v5012
    %v5052 = vmul.f32 %v4844, %v5012
    %v5053 = vmul.f32 %v4845, %v5022
    %v5054 = vmul.f32 %v4846, %v5022
    %v5055 = vld [vmem:[#allocation17] sm:$0x3]
    %v5057 = vperm.slane %v5055, 0
    %v5058 = vperm.slane %v5055, 1
    %v5061 = vmul.f32 %v5023, %v5057
    %v5062 = vmul.f32 %v5024, %v5058
    %v5063 = vmul.f32 %v5025, %v5057
    %v5064 = vmul.f32 %v5026, %v5058
    %v5065 = vmul.f32 %v5027, %v5057
    %v5066 = vmul.f32 %v5028, %v5058
    %v5067 = vmul.f32 %v5029, %v5057
    %v5068 = vmul.f32 %v5030, %v5058
    %v5069 = vmul.f32 %v5031, %v5057
    %v5070 = vmul.f32 %v5032, %v5058
    %v5071 = vmul.f32 %v5033, %v5057
    %v5072 = vmul.f32 %v5034, %v5058
    %v5073 = vmul.f32 %v5035, %v5057
    %v5074 = vmul.f32 %v5036, %v5058
    %v5075 = vmul.f32 %v5037, %v5057
    %v5076 = vmul.f32 %v5038, %v5058
    %v5077 = vmul.f32 %v5039, %v5057
    %v5078 = vmul.f32 %v5040, %v5058
    %v5079 = vmul.f32 %v5041, %v5057
    %v5080 = vmul.f32 %v5042, %v5058
    %v5081 = vmul.f32 %v5043, %v5057
    %v5082 = vmul.f32 %v5044, %v5058
    %v5083 = vmul.f32 %v5045, %v5057
    %v5084 = vmul.f32 %v5046, %v5058
    %v5085 = vmul.f32 %v5047, %v5057
    %v5086 = vmul.f32 %v5048, %v5058
    %v5087 = vmul.f32 %v5049, %v5057
    %v5088 = vmul.f32 %v5050, %v5058
    %v5089 = vmul.f32 %v5051, %v5057
    %v5090 = vmul.f32 %v5052, %v5058
    %v5091 = vmul.f32 %v5053, %v5057
    %v5092 = vmul.f32 %v5054, %v5058
    %v5093 = vld [vmem:[#allocation22] sm:$0x3]
    %v5095 = vperm.slane %v5093, 0
    %v5096 = vperm.slane %v5093, 1
    %v5099 = vadd.f32 %v5061, %v5095
    %v5100 = vadd.f32 %v5062, %v5096
    %v5101 = vadd.f32 %v5063, %v5095
    %v5102 = vadd.f32 %v5064, %v5096
    %v5103 = vadd.f32 %v5065, %v5095
    %v5104 = vadd.f32 %v5066, %v5096
    %v5105 = vadd.f32 %v5067, %v5095
    %v5106 = vadd.f32 %v5068, %v5096
    %v5107 = vadd.f32 %v5069, %v5095
    %v5108 = vadd.f32 %v5070, %v5096
    %v5109 = vadd.f32 %v5071, %v5095
    %v5110 = vadd.f32 %v5072, %v5096
    %v5111 = vadd.f32 %v5073, %v5095
    %v5112 = vadd.f32 %v5074, %v5096
    %v5113 = vadd.f32 %v5075, %v5095
    %v5114 = vadd.f32 %v5076, %v5096
    %v5115 = vadd.f32 %v5077, %v5095
    %v5116 = vadd.f32 %v5078, %v5096
    %v5117 = vadd.f32 %v5079, %v5095
    %v5118 = vadd.f32 %v5080, %v5096
    %v5119 = vadd.f32 %v5081, %v5095
    %v5120 = vadd.f32 %v5082, %v5096
    %v5121 = vadd.f32 %v5083, %v5095
    %v5122 = vadd.f32 %v5084, %v5096
    %v5123 = vadd.f32 %v5085, %v5095
    %v5124 = vadd.f32 %v5086, %v5096
    %v5125 = vadd.f32 %v5087, %v5095
    %v5126 = vadd.f32 %v5088, %v5096
    %v5127 = vadd.f32 %v5089, %v5095
    %v5128 = vadd.f32 %v5090, %v5096
    %v5129 = vadd.f32 %v5091, %v5095
    %v5130 = vadd.f32 %v5092, %v5096
    %v5131 = vpack.c.bf16 %v5100, %v5099
    %v5132 = vpack.c.bf16 %v5102, %v5101
    %v5133 = vpack.c.bf16 %v5104, %v5103
    %v5134 = vpack.c.bf16 %v5106, %v5105
    %v5135 = vpack.c.bf16 %v5108, %v5107
    %v5136 = vpack.c.bf16 %v5110, %v5109
    %v5137 = vpack.c.bf16 %v5112, %v5111
    %v5138 = vpack.c.bf16 %v5114, %v5113
    %v5139 = vpack.c.bf16 %v5116, %v5115
    %v5140 = vpack.c.bf16 %v5118, %v5117
    %v5141 = vpack.c.bf16 %v5120, %v5119
    %v5142 = vpack.c.bf16 %v5122, %v5121
    %v5143 = vpack.c.bf16 %v5124, %v5123
    %v5144 = vpack.c.bf16 %v5126, %v5125
    %v5145 = vpack.c.bf16 %v5128, %v5127
    %v5146 = vpack.c.bf16 %v5130, %v5129
    %v5163 = vunpack.c.l.b16 %v5131
    %v5164 = vunpack.c.h.b16 %v5131
    %v5165 = vunpack.c.l.b16 %v5132
    %v5166 = vunpack.c.h.b16 %v5132
    %v5167 = vunpack.c.l.b16 %v5133
    %v5168 = vunpack.c.h.b16 %v5133
    %v5169 = vunpack.c.l.b16 %v5134
    %v5170 = vunpack.c.h.b16 %v5134
    %v5171 = vunpack.c.l.b16 %v5135
    %v5172 = vunpack.c.h.b16 %v5135
    %v5173 = vunpack.c.l.b16 %v5136
    %v5174 = vunpack.c.h.b16 %v5136
    %v5175 = vunpack.c.l.b16 %v5137
    %v5176 = vunpack.c.h.b16 %v5137
    %v5177 = vunpack.c.l.b16 %v5138
    %v5178 = vunpack.c.h.b16 %v5138
    %v5179 = vunpack.c.l.b16 %v5139
    %v5180 = vunpack.c.h.b16 %v5139
    %v5181 = vunpack.c.l.b16 %v5140
    %v5182 = vunpack.c.h.b16 %v5140
    %v5183 = vunpack.c.l.b16 %v5141
    %v5184 = vunpack.c.h.b16 %v5141
    %v5185 = vunpack.c.l.b16 %v5142
    %v5186 = vunpack.c.h.b16 %v5142
    %v5187 = vunpack.c.l.b16 %v5143
    %v5188 = vunpack.c.h.b16 %v5143
    %v5189 = vunpack.c.l.b16 %v5144
    %v5190 = vunpack.c.h.b16 %v5144
    %v5191 = vunpack.c.l.b16 %v5145
    %v5192 = vunpack.c.h.b16 %v5145
    %v5193 = vunpack.c.l.b16 %v5146
    %v5194 = vunpack.c.h.b16 %v5146
    %v5195 = vpack.c.b16 %v5165, %v5163
    %v5196 = vpack.c.b16 %v5166, %v5164
    %v5197 = vpack.c.b16 %v5169, %v5167
    %v5198 = vpack.c.b16 %v5170, %v5168
    %v5199 = vpack.c.b16 %v5173, %v5171
    %v5200 = vpack.c.b16 %v5174, %v5172
    %v5201 = vpack.c.b16 %v5177, %v5175
    %v5202 = vpack.c.b16 %v5178, %v5176
    %v5203 = vpack.c.b16 %v5181, %v5179
    %v5204 = vpack.c.b16 %v5182, %v5180
    %v5205 = vpack.c.b16 %v5185, %v5183
    %v5206 = vpack.c.b16 %v5186, %v5184
    %v5207 = vpack.c.b16 %v5189, %v5187
    %v5208 = vpack.c.b16 %v5190, %v5188
    %v5209 = vpack.c.b16 %v5193, %v5191
    %v5210 = vpack.c.b16 %v5194, %v5192
    %5211 = vrot.lane.b32.xlu0 %v5195, 64
    %v5212 = vpop.permute.xlu0 %5211
    %5213 = vrot.lane.b32.xlu0 %v5196, 64
    %v5214 = vpop.permute.xlu0 %5213
    %5215 = vrot.lane.b32.xlu0 %v5197, 64
    %v5216 = vpop.permute.xlu0 %5215
    %5217 = vrot.lane.b32.xlu0 %v5198, 64
    %v5218 = vpop.permute.xlu0 %5217
    %5219 = vrot.lane.b32.xlu0 %v5199, 64
    %v5220 = vpop.permute.xlu0 %5219
    %5221 = vrot.lane.b32.xlu0 %v5200, 64
    %v5222 = vpop.permute.xlu0 %5221
    %5223 = vrot.lane.b32.xlu0 %v5201, 64
    %v5224 = vpop.permute.xlu0 %5223
    %5225 = vrot.lane.b32.xlu0 %v5202, 64
    %v5226 = vpop.permute.xlu0 %5225
    %5227 = vrot.lane.b32.xlu0 %v5203, 64
    %v5228 = vpop.permute.xlu0 %5227
    %5229 = vrot.lane.b32.xlu0 %v5204, 64
    %v5230 = vpop.permute.xlu0 %5229
    %5231 = vrot.lane.b32.xlu0 %v5205, 64
    %v5232 = vpop.permute.xlu0 %5231
    %5233 = vrot.lane.b32.xlu0 %v5206, 64
    %v5234 = vpop.permute.xlu0 %5233
    %5235 = vrot.lane.b32.xlu0 %v5207, 64
    %v5236 = vpop.permute.xlu0 %5235
    %5237 = vrot.lane.b32.xlu0 %v5208, 64
    %v5238 = vpop.permute.xlu0 %5237
    %5239 = vrot.lane.b32.xlu0 %v5209, 64
    %v5240 = vpop.permute.xlu0 %5239
    %5241 = vrot.lane.b32.xlu0 %v5210, 64
    %v5242 = vpop.permute.xlu0 %5241
    %v5243 = vsel %vm562, %v5212, %v5214
    %v5244 = vsel %vm562, %v5216, %v5218
    %v5245 = vsel %vm562, %v5220, %v5222
    %v5246 = vsel %vm562, %v5224, %v5226
    %v5247 = vsel %vm562, %v5228, %v5230
    %v5248 = vsel %vm562, %v5232, %v5234
    %v5249 = vsel %vm562, %v5236, %v5238
    %v5250 = vsel %vm562, %v5240, %v5242
    %vm5259 = vcmask 523264
    %v5261 = vsel %vm5259, 0, %v5212
    %v5264 = vsel %vm5259, 0, %v5216
    %v5267 = vsel %vm5259, 0, %v5220
    %v5270 = vsel %vm5259, 0, %v5224
    %v5273 = vsel %vm5259, 0, %v5228
    %v5276 = vsel %vm5259, 0, %v5232
    %v5279 = vsel %vm5259, 0, %v5236
    %v5282 = vsel %vm5259, 0, %v5240
    %v5285 = vsel %vm5259, %v5214, 0
    %v5287 = vsel %vm5259, %v5218, 0
    %v5289 = vsel %vm5259, %v5222, 0
    %v5291 = vsel %vm5259, %v5226, 0
    %v5293 = vsel %vm5259, %v5230, 0
    %v5295 = vsel %vm5259, %v5234, 0
    %v5297 = vsel %vm5259, %v5238, 0
    %v5299 = vsel %vm5259, %v5242, 0
    %v5300 = vld [vmem:[#allocation11] sm:$0xf]
    %v5301 = vld [vmem:[#allocation11 + $0x4] sm:$0xf]
    %v5302 = vld [vmem:[#allocation11 + $0x8] sm:$0xf]
    %v5303 = vld [vmem:[#allocation11 + $0xc] sm:$0xf]
    %v5304 = vld [vmem:[#allocation11 + $0x10] sm:$0xf]
    %v5305 = vld [vmem:[#allocation11 + $0x14] sm:$0xf]
    %v5306 = vld [vmem:[#allocation11 + $0x18] sm:$0xf]
    %v5307 = vld [vmem:[#allocation11 + $0x1c] sm:$0xf]
    %v5308 = vld [vmem:[#allocation11 + $0x20] sm:$0xf]
    %v5309 = vld [vmem:[#allocation11 + $0x24] sm:$0xf]
    %v5310 = vld [vmem:[#allocation11 + $0x28] sm:$0xf]
    %v5311 = vld [vmem:[#allocation11 + $0x2c] sm:$0xf]
    %v5312 = vld [vmem:[#allocation11 + $0x30] sm:$0xf]
    %v5313 = vld [vmem:[#allocation11 + $0x34] sm:$0xf]
    %v5314 = vld [vmem:[#allocation11 + $0x38] sm:$0xf]
    %v5315 = vld [vmem:[#allocation11 + $0x3c] sm:$0xf]
    %v5316 = vld [vmem:[#allocation11 + $0x40] sm:$0xf]
    %v5317 = vld [vmem:[#allocation11 + $0x44] sm:$0xf]
    %v5318 = vld [vmem:[#allocation11 + $0x48] sm:$0xf]
    %v5319 = vld [vmem:[#allocation11 + $0x4c] sm:$0xf]
    %v5320 = vld [vmem:[#allocation11 + $0x50] sm:$0xf]
    %v5321 = vld [vmem:[#allocation11 + $0x54] sm:$0xf]
    %v5322 = vld [vmem:[#allocation11 + $0x58] sm:$0xf]
    %v5323 = vld [vmem:[#allocation11 + $0x5c] sm:$0xf]
    %v5324 = vld [vmem:[#allocation11 + $0x60] sm:$0xf]
    %v5325 = vld [vmem:[#allocation11 + $0x64] sm:$0xf]
    %v5326 = vld [vmem:[#allocation11 + $0x68] sm:$0xf]
    %v5327 = vld [vmem:[#allocation11 + $0x6c] sm:$0xf]
    %v5356 = vunpack.c.l.b16 %v5300
    %v5357 = vunpack.c.l.b16 %v5301
    %v5358 = vunpack.c.l.b16 %v5302
    %v5359 = vunpack.c.l.b16 %v5303
    %v5360 = vunpack.c.l.b16 %v5304
    %v5361 = vunpack.c.l.b16 %v5305
    %v5362 = vunpack.c.l.b16 %v5306
    %v5363 = vunpack.c.l.b16 %v5307
    %v5364 = vunpack.c.l.b16 %v5308
    %v5365 = vunpack.c.l.b16 %v5309
    %v5366 = vunpack.c.l.b16 %v5310
    %v5367 = vunpack.c.l.b16 %v5311
    %v5368 = vunpack.c.l.b16 %v5312
    %v5369 = vunpack.c.l.b16 %v5313
    %v5370 = vunpack.c.l.b16 %v5314
    %v5371 = vunpack.c.l.b16 %v5315
    %v5372 = vunpack.c.l.b16 %v5316
    %v5373 = vunpack.c.l.b16 %v5317
    %v5374 = vunpack.c.l.b16 %v5318
    %v5375 = vunpack.c.l.b16 %v5319
    %v5376 = vunpack.c.l.b16 %v5320
    %v5377 = vunpack.c.l.b16 %v5321
    %v5378 = vunpack.c.l.b16 %v5322
    %v5379 = vunpack.c.l.b16 %v5323
    %v5380 = vunpack.c.l.b16 %v5324
    %v5381 = vunpack.c.l.b16 %v5325
    %v5382 = vunpack.c.l.b16 %v5326
    %v5383 = vunpack.c.l.b16 %v5327
    %v5384 = vpack.c.b16 %v5357, %v5356
    %v5385 = vpack.c.b16 %v5359, %v5358
    %v5386 = vpack.c.b16 %v5361, %v5360
    %v5387 = vpack.c.b16 %v5363, %v5362
    %v5388 = vpack.c.b16 %v5365, %v5364
    %v5389 = vpack.c.b16 %v5367, %v5366
    %v5390 = vpack.c.b16 %v5369, %v5368
    %v5391 = vpack.c.b16 %v5371, %v5370
    %v5392 = vpack.c.b16 %v5373, %v5372
    %v5393 = vpack.c.b16 %v5375, %v5374
    %v5394 = vpack.c.b16 %v5377, %v5376
    %v5395 = vpack.c.b16 %v5379, %v5378
    %v5396 = vpack.c.b16 %v5381, %v5380
    %v5397 = vpack.c.b16 %v5383, %v5382
    %vm5412 = vcmask 785408
    %v5414 = vsel %vm5412, %v5243, 0
    %v5417 = vsel %vm5412, %v5244, 0
    %v5420 = vsel %vm5412, %v5245, 0
    %v5423 = vsel %vm5412, %v5246, 0
    %v5426 = vsel %vm5412, %v5247, 0
    %v5429 = vsel %vm5412, %v5248, 0
    %v5432 = vsel %vm5412, %v5249, 0
    %v5435 = vsel %vm5412, %v5250, 0
    %5437 = vmatpush.bf16.msra.mxu0 %v5391
    %5438 = vmatpush.bf16.msra.mxu0 %v5390
    %5439 = vmatpush.bf16.msra.mxu0 %v5389
    %5440 = vmatpush.bf16.msra.mxu0 %v5388
    %5441 = vmatpush.bf16.msra.mxu0 %v5387
    %5442 = vmatpush.bf16.msra.mxu0 %v5386
    %5443 = vmatpush.bf16.msra.mxu0 %v5385
    %5444 = vmatpush.bf16.msra.mxu0 %v5384
    %5445 = vmatmul.bf16.gmra.mxu0 %v5261
    %v5446 = vpop.f32.mrf.mxu0
    %v5447 = vadd.f32 0.0, %v5446
    %v5448 = vpop.f32.mrf.mxu0
    %v5449 = vadd.f32 0.0, %v5448
    %5450 = vmatmul.bf16.gmra.mxu0 %v5264
    %v5451 = vpop.f32.mrf.mxu0
    %v5452 = vadd.f32 0.0, %v5451
    %v5453 = vpop.f32.mrf.mxu0
    %v5454 = vadd.f32 0.0, %v5453
    %5455 = vmatmul.bf16.gmra.mxu0 %v5267
    %v5456 = vpop.f32.mrf.mxu0
    %v5457 = vadd.f32 0.0, %v5456
    %v5458 = vpop.f32.mrf.mxu0
    %v5459 = vadd.f32 0.0, %v5458
    %5460 = vmatmul.bf16.gmra.mxu0 %v5270
    %v5461 = vpop.f32.mrf.mxu0
    %v5462 = vadd.f32 0.0, %v5461
    %v5463 = vpop.f32.mrf.mxu0
    %v5464 = vadd.f32 0.0, %v5463
    %5465 = vmatmul.bf16.gmra.mxu0 %v5273
    %v5466 = vpop.f32.mrf.mxu0
    %v5467 = vadd.f32 0.0, %v5466
    %v5468 = vpop.f32.mrf.mxu0
    %v5469 = vadd.f32 0.0, %v5468
    %5470 = vmatmul.bf16.gmra.mxu0 %v5276
    %v5471 = vpop.f32.mrf.mxu0
    %v5472 = vadd.f32 0.0, %v5471
    %v5473 = vpop.f32.mrf.mxu0
    %v5474 = vadd.f32 0.0, %v5473
    %5475 = vmatmul.bf16.gmra.mxu0 %v5279
    %v5476 = vpop.f32.mrf.mxu0
    %v5477 = vadd.f32 0.0, %v5476
    %v5478 = vpop.f32.mrf.mxu0
    %v5479 = vadd.f32 0.0, %v5478
    %5480 = vmatmul.bf16.gmra.mxu0 %v5282
    %v5481 = vpop.f32.mrf.mxu0
    %v5482 = vadd.f32 0.0, %v5481
    %v5483 = vpop.f32.mrf.mxu0
    %v5484 = vadd.f32 0.0, %v5483
    %5485 = vdwg.mxu0
    %5486 = vmatpush.bf16.msra.mxu0 0
    %5487 = vmatpush.bf16.msra.mxu0 0
    %5488 = vmatpush.bf16.msra.mxu0 %v5397
    %5489 = vmatpush.bf16.msra.mxu0 %v5396
    %5490 = vmatpush.bf16.msra.mxu0 %v5395
    %5491 = vmatpush.bf16.msra.mxu0 %v5394
    %5492 = vmatpush.bf16.msra.mxu0 %v5393
    %5493 = vmatpush.bf16.msra.mxu0 %v5392
    %5494 = vmatmul.bf16.gmra.mxu0 %v5414
    %v5495 = vpop.f32.mrf.mxu0
    %v5496 = vadd.f32 %v5447, %v5495
    %v5497 = vpop.f32.mrf.mxu0
    %v5498 = vadd.f32 %v5449, %v5497
    %5499 = vmatmul.bf16.gmra.mxu0 %v5417
    %v5500 = vpop.f32.mrf.mxu0
    %v5501 = vadd.f32 %v5452, %v5500
    %v5502 = vpop.f32.mrf.mxu0
    %v5503 = vadd.f32 %v5454, %v5502
    %5504 = vmatmul.bf16.gmra.mxu0 %v5420
    %v5505 = vpop.f32.mrf.mxu0
    %v5506 = vadd.f32 %v5457, %v5505
    %v5507 = vpop.f32.mrf.mxu0
    %v5508 = vadd.f32 %v5459, %v5507
    %5509 = vmatmul.bf16.gmra.mxu0 %v5423
    %v5510 = vpop.f32.mrf.mxu0
    %v5511 = vadd.f32 %v5462, %v5510
    %v5512 = vpop.f32.mrf.mxu0
    %v5513 = vadd.f32 %v5464, %v5512
    %5514 = vmatmul.bf16.gmra.mxu0 %v5426
    %v5515 = vpop.f32.mrf.mxu0
    %v5516 = vadd.f32 %v5467, %v5515
    %v5517 = vpop.f32.mrf.mxu0
    %v5518 = vadd.f32 %v5469, %v5517
    %5519 = vmatmul.bf16.gmra.mxu0 %v5429
    %v5520 = vpop.f32.mrf.mxu0
    %v5521 = vadd.f32 %v5472, %v5520
    %v5522 = vpop.f32.mrf.mxu0
    %v5523 = vadd.f32 %v5474, %v5522
    %5524 = vmatmul.bf16.gmra.mxu0 %v5432
    %v5525 = vpop.f32.mrf.mxu0
    %v5526 = vadd.f32 %v5477, %v5525
    %v5527 = vpop.f32.mrf.mxu0
    %v5528 = vadd.f32 %v5479, %v5527
    %5529 = vmatmul.bf16.gmra.mxu0 %v5435
    %v5530 = vpop.f32.mrf.mxu0
    %v5531 = vadd.f32 %v5482, %v5530
    %v5532 = vpop.f32.mrf.mxu0
    %v5533 = vadd.f32 %v5484, %v5532
    %5534 = vdwg.mxu0
    %v5535 = vsel %vm5412, %v5285, 0
    %v5537 = vsel %vm5412, %v5287, 0
    %v5539 = vsel %vm5412, %v5289, 0
    %v5541 = vsel %vm5412, %v5291, 0
    %v5543 = vsel %vm5412, %v5293, 0
    %v5545 = vsel %vm5412, %v5295, 0
    %v5547 = vsel %vm5412, %v5297, 0
    %v5549 = vsel %vm5412, %v5299, 0
    %5551 = vmatpush.bf16.msra.mxu0 %v5391
    %5552 = vmatpush.bf16.msra.mxu0 %v5390
    %5553 = vmatpush.bf16.msra.mxu0 %v5389
    %5554 = vmatpush.bf16.msra.mxu0 %v5388
    %5555 = vmatpush.bf16.msra.mxu0 %v5387
    %5556 = vmatpush.bf16.msra.mxu0 %v5386
    %5557 = vmatpush.bf16.msra.mxu0 %v5385
    %5558 = vmatpush.bf16.msra.mxu0 %v5384
    %5559 = vmatmul.bf16.gmra.mxu0 %v5243
    %v5560 = vpop.f32.mrf.mxu0
    %v5561 = vadd.f32 0.0, %v5560
    %v5562 = vpop.f32.mrf.mxu0
    %v5563 = vadd.f32 0.0, %v5562
    %5564 = vmatmul.bf16.gmra.mxu0 %v5244
    %v5565 = vpop.f32.mrf.mxu0
    %v5566 = vadd.f32 0.0, %v5565
    %v5567 = vpop.f32.mrf.mxu0
    %v5568 = vadd.f32 0.0, %v5567
    %5569 = vmatmul.bf16.gmra.mxu0 %v5245
    %v5570 = vpop.f32.mrf.mxu0
    %v5571 = vadd.f32 0.0, %v5570
    %v5572 = vpop.f32.mrf.mxu0
    %v5573 = vadd.f32 0.0, %v5572
    %5574 = vmatmul.bf16.gmra.mxu0 %v5246
    %v5575 = vpop.f32.mrf.mxu0
    %v5576 = vadd.f32 0.0, %v5575
    %v5577 = vpop.f32.mrf.mxu0
    %v5578 = vadd.f32 0.0, %v5577
    %5579 = vmatmul.bf16.gmra.mxu0 %v5247
    %v5580 = vpop.f32.mrf.mxu0
    %v5581 = vadd.f32 0.0, %v5580
    %v5582 = vpop.f32.mrf.mxu0
    %v5583 = vadd.f32 0.0, %v5582
    %5584 = vmatmul.bf16.gmra.mxu0 %v5248
    %v5585 = vpop.f32.mrf.mxu0
    %v5586 = vadd.f32 0.0, %v5585
    %v5587 = vpop.f32.mrf.mxu0
    %v5588 = vadd.f32 0.0, %v5587
    %5589 = vmatmul.bf16.gmra.mxu0 %v5249
    %v5590 = vpop.f32.mrf.mxu0
    %v5591 = vadd.f32 0.0, %v5590
    %v5592 = vpop.f32.mrf.mxu0
    %v5593 = vadd.f32 0.0, %v5592
    %5594 = vmatmul.bf16.gmra.mxu0 %v5250
    %v5595 = vpop.f32.mrf.mxu0
    %v5596 = vadd.f32 0.0, %v5595
    %v5597 = vpop.f32.mrf.mxu0
    %v5598 = vadd.f32 0.0, %v5597
    %5599 = vdwg.mxu0
    %5600 = vmatpush.bf16.msra.mxu0 0
    %5601 = vmatpush.bf16.msra.mxu0 0
    %5602 = vmatpush.bf16.msra.mxu0 %v5397
    %5603 = vmatpush.bf16.msra.mxu0 %v5396
    %5604 = vmatpush.bf16.msra.mxu0 %v5395
    %5605 = vmatpush.bf16.msra.mxu0 %v5394
    %5606 = vmatpush.bf16.msra.mxu0 %v5393
    %5607 = vmatpush.bf16.msra.mxu0 %v5392
    %5608 = vmatmul.bf16.gmra.mxu0 %v5535
    %v5609 = vpop.f32.mrf.mxu0
    %v5610 = vadd.f32 %v5561, %v5609
    %v5611 = vpop.f32.mrf.mxu0
    %v5612 = vadd.f32 %v5563, %v5611
    %5613 = vmatmul.bf16.gmra.mxu0 %v5537
    %v5614 = vpop.f32.mrf.mxu0
    %v5615 = vadd.f32 %v5566, %v5614
    %v5616 = vpop.f32.mrf.mxu0
    %v5617 = vadd.f32 %v5568, %v5616
    %5618 = vmatmul.bf16.gmra.mxu0 %v5539
    %v5619 = vpop.f32.mrf.mxu0
    %v5620 = vadd.f32 %v5571, %v5619
    %v5621 = vpop.f32.mrf.mxu0
    %v5622 = vadd.f32 %v5573, %v5621
    %5623 = vmatmul.bf16.gmra.mxu0 %v5541
    %v5624 = vpop.f32.mrf.mxu0
    %v5625 = vadd.f32 %v5576, %v5624
    %v5626 = vpop.f32.mrf.mxu0
    %v5627 = vadd.f32 %v5578, %v5626
    %5628 = vmatmul.bf16.gmra.mxu0 %v5543
    %v5629 = vpop.f32.mrf.mxu0
    %v5630 = vadd.f32 %v5581, %v5629
    %v5631 = vpop.f32.mrf.mxu0
    %v5632 = vadd.f32 %v5583, %v5631
    %5633 = vmatmul.bf16.gmra.mxu0 %v5545
    %v5634 = vpop.f32.mrf.mxu0
    %v5635 = vadd.f32 %v5586, %v5634
    %v5636 = vpop.f32.mrf.mxu0
    %v5637 = vadd.f32 %v5588, %v5636
    %5638 = vmatmul.bf16.gmra.mxu0 %v5547
    %v5639 = vpop.f32.mrf.mxu0
    %v5640 = vadd.f32 %v5591, %v5639
    %v5641 = vpop.f32.mrf.mxu0
    %v5642 = vadd.f32 %v5593, %v5641
    %5643 = vmatmul.bf16.gmra.mxu0 %v5549
    %v5644 = vpop.f32.mrf.mxu0
    %v5645 = vadd.f32 %v5596, %v5644
    %v5646 = vpop.f32.mrf.mxu0
    %v5647 = vadd.f32 %v5598, %v5646
    %5648 = vdwg.mxu0
    %v5649 = vld [vmem:[%s11] sm:$0x3]
    %v5651 = vperm.slane %v5649, 0
    %v5652 = vperm.slane %v5649, 1
    %v5655 = vadd.f32 %v5496, %v5651
    %v5656 = vadd.f32 %v5610, %v5652
    %v5657 = vadd.f32 %v5498, %v5651
    %v5658 = vadd.f32 %v5612, %v5652
    %v5659 = vadd.f32 %v5501, %v5651
    %v5660 = vadd.f32 %v5615, %v5652
    %v5661 = vadd.f32 %v5503, %v5651
    %v5662 = vadd.f32 %v5617, %v5652
    %v5663 = vadd.f32 %v5506, %v5651
    %v5664 = vadd.f32 %v5620, %v5652
    %v5665 = vadd.f32 %v5508, %v5651
    %v5666 = vadd.f32 %v5622, %v5652
    %v5667 = vadd.f32 %v5511, %v5651
    %v5668 = vadd.f32 %v5625, %v5652
    %v5669 = vadd.f32 %v5513, %v5651
    %v5670 = vadd.f32 %v5627, %v5652
    %v5671 = vadd.f32 %v5516, %v5651
    %v5672 = vadd.f32 %v5630, %v5652
    %v5673 = vadd.f32 %v5518, %v5651
    %v5674 = vadd.f32 %v5632, %v5652
    %v5675 = vadd.f32 %v5521, %v5651
    %v5676 = vadd.f32 %v5635, %v5652
    %v5677 = vadd.f32 %v5523, %v5651
    %v5678 = vadd.f32 %v5637, %v5652
    %v5679 = vadd.f32 %v5526, %v5651
    %v5680 = vadd.f32 %v5640, %v5652
    %v5681 = vadd.f32 %v5528, %v5651
    %v5682 = vadd.f32 %v5642, %v5652
    %v5683 = vadd.f32 %v5531, %v5651
    %v5684 = vadd.f32 %v5645, %v5652
    %v5685 = vadd.f32 %v5533, %v5651
    %v5686 = vadd.f32 %v5647, %v5652
    %vm5687 = vcmp.gt.f32.partialorder %v5655, 0.0
    %vm5688 = vcmp.gt.f32.partialorder %v5656, 0.0
    %vm5689 = vcmp.gt.f32.partialorder %v5657, 0.0
    %vm5690 = vcmp.gt.f32.partialorder %v5658, 0.0
    %vm5691 = vcmp.gt.f32.partialorder %v5659, 0.0
    %vm5692 = vcmp.gt.f32.partialorder %v5660, 0.0
    %vm5693 = vcmp.gt.f32.partialorder %v5661, 0.0
    %vm5694 = vcmp.gt.f32.partialorder %v5662, 0.0
    %vm5695 = vcmp.gt.f32.partialorder %v5663, 0.0
    %vm5696 = vcmp.gt.f32.partialorder %v5664, 0.0
    %vm5697 = vcmp.gt.f32.partialorder %v5665, 0.0
    %vm5698 = vcmp.gt.f32.partialorder %v5666, 0.0
    %vm5699 = vcmp.gt.f32.partialorder %v5667, 0.0
    %vm5700 = vcmp.gt.f32.partialorder %v5668, 0.0
    %vm5701 = vcmp.gt.f32.partialorder %v5669, 0.0
    %vm5702 = vcmp.gt.f32.partialorder %v5670, 0.0
    %vm5703 = vcmp.gt.f32.partialorder %v5671, 0.0
    %vm5704 = vcmp.gt.f32.partialorder %v5672, 0.0
    %vm5705 = vcmp.gt.f32.partialorder %v5673, 0.0
    %vm5706 = vcmp.gt.f32.partialorder %v5674, 0.0
    %vm5707 = vcmp.gt.f32.partialorder %v5675, 0.0
    %vm5708 = vcmp.gt.f32.partialorder %v5676, 0.0
    %vm5709 = vcmp.gt.f32.partialorder %v5677, 0.0
    %vm5710 = vcmp.gt.f32.partialorder %v5678, 0.0
    %vm5711 = vcmp.gt.f32.partialorder %v5679, 0.0
    %vm5712 = vcmp.gt.f32.partialorder %v5680, 0.0
    %vm5713 = vcmp.gt.f32.partialorder %v5681, 0.0
    %vm5714 = vcmp.gt.f32.partialorder %v5682, 0.0
    %vm5715 = vcmp.gt.f32.partialorder %v5683, 0.0
    %vm5716 = vcmp.gt.f32.partialorder %v5684, 0.0
    %vm5717 = vcmp.gt.f32.partialorder %v5685, 0.0
    %vm5718 = vcmp.gt.f32.partialorder %v5686, 0.0
    %v5719 = vmin.f32 %v5655, 0.0
    %v5720 = vmin.f32 %v5656, 0.0
    %v5721 = vmin.f32 %v5657, 0.0
    %v5722 = vmin.f32 %v5658, 0.0
    %v5723 = vmin.f32 %v5659, 0.0
    %v5724 = vmin.f32 %v5660, 0.0
    %v5725 = vmin.f32 %v5661, 0.0
    %v5726 = vmin.f32 %v5662, 0.0
    %v5727 = vmin.f32 %v5663, 0.0
    %v5728 = vmin.f32 %v5664, 0.0
    %v5729 = vmin.f32 %v5665, 0.0
    %v5730 = vmin.f32 %v5666, 0.0
    %v5731 = vmin.f32 %v5667, 0.0
    %v5732 = vmin.f32 %v5668, 0.0
    %v5733 = vmin.f32 %v5669, 0.0
    %v5734 = vmin.f32 %v5670, 0.0
    %v5735 = vmin.f32 %v5671, 0.0
    %v5736 = vmin.f32 %v5672, 0.0
    %v5737 = vmin.f32 %v5673, 0.0
    %v5738 = vmin.f32 %v5674, 0.0
    %v5739 = vmin.f32 %v5675, 0.0
    %v5740 = vmin.f32 %v5676, 0.0
    %v5741 = vmin.f32 %v5677, 0.0
    %v5742 = vmin.f32 %v5678, 0.0
    %v5743 = vmin.f32 %v5679, 0.0
    %v5744 = vmin.f32 %v5680, 0.0
    %v5745 = vmin.f32 %v5681, 0.0
    %v5746 = vmin.f32 %v5682, 0.0
    %v5747 = vmin.f32 %v5683, 0.0
    %v5748 = vmin.f32 %v5684, 0.0
    %v5749 = vmin.f32 %v5685, 0.0
    %v5750 = vmin.f32 %v5686, 0.0
    %v5751 = vmul.f32 %v5719, 1.442695
    %v5752 = vpow.pop %v5751
    %v5753 = vmul.f32 %v5720, 1.442695
    %v5754 = vpow.pop %v5753
    %v5755 = vmul.f32 %v5721, 1.442695
    %v5756 = vpow.pop %v5755
    %v5757 = vmul.f32 %v5722, 1.442695
    %v5758 = vpow.pop %v5757
    %v5759 = vmul.f32 %v5723, 1.442695
    %v5760 = vpow.pop %v5759
    %v5761 = vmul.f32 %v5724, 1.442695
    %v5762 = vpow.pop %v5761
    %v5763 = vmul.f32 %v5725, 1.442695
    %v5764 = vpow.pop %v5763
    %v5765 = vmul.f32 %v5726, 1.442695
    %v5766 = vpow.pop %v5765
    %v5767 = vmul.f32 %v5727, 1.442695
    %v5768 = vpow.pop %v5767
    %v5769 = vmul.f32 %v5728, 1.442695
    %v5770 = vpow.pop %v5769
    %v5771 = vmul.f32 %v5729, 1.442695
    %v5772 = vpow.pop %v5771
    %v5773 = vmul.f32 %v5730, 1.442695
    %v5774 = vpow.pop %v5773
    %v5775 = vmul.f32 %v5731, 1.442695
    %v5776 = vpow.pop %v5775
    %v5777 = vmul.f32 %v5732, 1.442695
    %v5778 = vpow.pop %v5777
    %v5779 = vmul.f32 %v5733, 1.442695
    %v5780 = vpow.pop %v5779
    %v5781 = vmul.f32 %v5734, 1.442695
    %v5782 = vpow.pop %v5781
    %v5783 = vmul.f32 %v5735, 1.442695
    %v5784 = vpow.pop %v5783
    %v5785 = vmul.f32 %v5736, 1.442695
    %v5786 = vpow.pop %v5785
    %v5787 = vmul.f32 %v5737, 1.442695
    %v5788 = vpow.pop %v5787
    %v5789 = vmul.f32 %v5738, 1.442695
    %v5790 = vpow.pop %v5789
    %v5791 = vmul.f32 %v5739, 1.442695
    %v5792 = vpow.pop %v5791
    %v5793 = vmul.f32 %v5740, 1.442695
    %v5794 = vpow.pop %v5793
    %v5795 = vmul.f32 %v5741, 1.442695
    %v5796 = vpow.pop %v5795
    %v5797 = vmul.f32 %v5742, 1.442695
    %v5798 = vpow.pop %v5797
    %v5799 = vmul.f32 %v5743, 1.442695
    %v5800 = vpow.pop %v5799
    %v5801 = vmul.f32 %v5744, 1.442695
    %v5802 = vpow.pop %v5801
    %v5803 = vmul.f32 %v5745, 1.442695
    %v5804 = vpow.pop %v5803
    %v5805 = vmul.f32 %v5746, 1.442695
    %v5806 = vpow.pop %v5805
    %v5807 = vmul.f32 %v5747, 1.442695
    %v5808 = vpow.pop %v5807
    %v5809 = vmul.f32 %v5748, 1.442695
    %v5810 = vpow.pop %v5809
    %v5811 = vmul.f32 %v5749, 1.442695
    %v5812 = vpow.pop %v5811
    %v5813 = vmul.f32 %v5750, 1.442695
    %v5814 = vpow.pop %v5813
    %v5815 = vsub.f32 %v5752, 1.0
    %v5816 = vsub.f32 %v5754, 1.0
    %v5817 = vsub.f32 %v5756, 1.0
    %v5818 = vsub.f32 %v5758, 1.0
    %v5819 = vsub.f32 %v5760, 1.0
    %v5820 = vsub.f32 %v5762, 1.0
    %v5821 = vsub.f32 %v5764, 1.0
    %v5822 = vsub.f32 %v5766, 1.0
    %v5823 = vsub.f32 %v5768, 1.0
    %v5824 = vsub.f32 %v5770, 1.0
    %v5825 = vsub.f32 %v5772, 1.0
    %v5826 = vsub.f32 %v5774, 1.0
    %v5827 = vsub.f32 %v5776, 1.0
    %v5828 = vsub.f32 %v5778, 1.0
    %v5829 = vsub.f32 %v5780, 1.0
    %v5830 = vsub.f32 %v5782, 1.0
    %v5831 = vsub.f32 %v5784, 1.0
    %v5832 = vsub.f32 %v5786, 1.0
    %v5833 = vsub.f32 %v5788, 1.0
    %v5834 = vsub.f32 %v5790, 1.0
    %v5835 = vsub.f32 %v5792, 1.0
    %v5836 = vsub.f32 %v5794, 1.0
    %v5837 = vsub.f32 %v5796, 1.0
    %v5838 = vsub.f32 %v5798, 1.0
    %v5839 = vsub.f32 %v5800, 1.0
    %v5840 = vsub.f32 %v5802, 1.0
    %v5841 = vsub.f32 %v5804, 1.0
    %v5842 = vsub.f32 %v5806, 1.0
    %v5843 = vsub.f32 %v5808, 1.0
    %v5844 = vsub.f32 %v5810, 1.0
    %v5845 = vsub.f32 %v5812, 1.0
    %v5846 = vsub.f32 %v5814, 1.0
    %v5847 = vsel %vm5687, %v5655, %v5815
    %v5848 = vsel %vm5688, %v5656, %v5816
    %v5849 = vsel %vm5689, %v5657, %v5817
    %v5850 = vsel %vm5690, %v5658, %v5818
    %v5851 = vsel %vm5691, %v5659, %v5819
    %v5852 = vsel %vm5692, %v5660, %v5820
    %v5853 = vsel %vm5693, %v5661, %v5821
    %v5854 = vsel %vm5694, %v5662, %v5822
    %v5855 = vsel %vm5695, %v5663, %v5823
    %v5856 = vsel %vm5696, %v5664, %v5824
    %v5857 = vsel %vm5697, %v5665, %v5825
    %v5858 = vsel %vm5698, %v5666, %v5826
    %v5859 = vsel %vm5699, %v5667, %v5827
    %v5860 = vsel %vm5700, %v5668, %v5828
    %v5861 = vsel %vm5701, %v5669, %v5829
    %v5862 = vsel %vm5702, %v5670, %v5830
    %v5863 = vsel %vm5703, %v5671, %v5831
    %v5864 = vsel %vm5704, %v5672, %v5832
    %v5865 = vsel %vm5705, %v5673, %v5833
    %v5866 = vsel %vm5706, %v5674, %v5834
    %v5867 = vsel %vm5707, %v5675, %v5835
    %v5868 = vsel %vm5708, %v5676, %v5836
    %v5869 = vsel %vm5709, %v5677, %v5837
    %v5870 = vsel %vm5710, %v5678, %v5838
    %v5871 = vsel %vm5711, %v5679, %v5839
    %v5872 = vsel %vm5712, %v5680, %v5840
    %v5873 = vsel %vm5713, %v5681, %v5841
    %v5874 = vsel %vm5714, %v5682, %v5842
    %v5875 = vsel %vm5715, %v5683, %v5843
    %v5876 = vsel %vm5716, %v5684, %v5844
    %v5877 = vsel %vm5717, %v5685, %v5845
    %v5878 = vsel %vm5718, %v5686, %v5846
    %v5879 = vadd.f32 %v5847, %v5848
    %5880 = vadd.xlane.f32.xlu0 %v5879
    %v5881 = vpop.xlane.xlu0 %5880
    %v5882 = vadd.f32 %v5849, %v5850
    %5883 = vadd.xlane.f32.xlu0 %v5882
    %v5884 = vpop.xlane.xlu0 %5883
    %v5885 = vadd.f32 %v5851, %v5852
    %5886 = vadd.xlane.f32.xlu0 %v5885
    %v5887 = vpop.xlane.xlu0 %5886
    %v5888 = vadd.f32 %v5853, %v5854
    %5889 = vadd.xlane.f32.xlu0 %v5888
    %v5890 = vpop.xlane.xlu0 %5889
    %v5891 = vadd.f32 %v5855, %v5856
    %5892 = vadd.xlane.f32.xlu0 %v5891
    %v5893 = vpop.xlane.xlu0 %5892
    %v5894 = vadd.f32 %v5857, %v5858
    %5895 = vadd.xlane.f32.xlu0 %v5894
    %v5896 = vpop.xlane.xlu0 %5895
    %v5897 = vadd.f32 %v5859, %v5860
    %5898 = vadd.xlane.f32.xlu0 %v5897
    %v5899 = vpop.xlane.xlu0 %5898
    %v5900 = vadd.f32 %v5861, %v5862
    %5901 = vadd.xlane.f32.xlu0 %v5900
    %v5902 = vpop.xlane.xlu0 %5901
    %v5903 = vadd.f32 %v5863, %v5864
    %5904 = vadd.xlane.f32.xlu0 %v5903
    %v5905 = vpop.xlane.xlu0 %5904
    %v5906 = vadd.f32 %v5865, %v5866
    %5907 = vadd.xlane.f32.xlu0 %v5906
    %v5908 = vpop.xlane.xlu0 %5907
    %v5909 = vadd.f32 %v5867, %v5868
    %5910 = vadd.xlane.f32.xlu0 %v5909
    %v5911 = vpop.xlane.xlu0 %5910
    %v5912 = vadd.f32 %v5869, %v5870
    %5913 = vadd.xlane.f32.xlu0 %v5912
    %v5914 = vpop.xlane.xlu0 %5913
    %v5915 = vadd.f32 %v5871, %v5872
    %5916 = vadd.xlane.f32.xlu0 %v5915
    %v5917 = vpop.xlane.xlu0 %5916
    %v5918 = vadd.f32 %v5873, %v5874
    %5919 = vadd.xlane.f32.xlu0 %v5918
    %v5920 = vpop.xlane.xlu0 %5919
    %v5921 = vadd.f32 %v5875, %v5876
    %5922 = vadd.xlane.f32.xlu0 %v5921
    %v5923 = vpop.xlane.xlu0 %5922
    %v5924 = vadd.f32 %v5877, %v5878
    %5925 = vadd.xlane.f32.xlu0 %v5924
    %v5926 = vpop.xlane.xlu0 %5925
    %v5927 = vmul.f32 %v5881, %v928
    %v5928 = vmul.f32 %v5884, %v928
    %v5929 = vmul.f32 %v5887, %v928
    %v5930 = vmul.f32 %v5890, %v928
    %v5931 = vmul.f32 %v5893, %v928
    %v5932 = vmul.f32 %v5896, %v928
    %v5933 = vmul.f32 %v5899, %v928
    %v5934 = vmul.f32 %v5902, %v928
    %v5935 = vmul.f32 %v5905, %v928
    %v5936 = vmul.f32 %v5908, %v928
    %v5937 = vmul.f32 %v5911, %v928
    %v5938 = vmul.f32 %v5914, %v928
    %v5939 = vmul.f32 %v5917, %v928
    %v5940 = vmul.f32 %v5920, %v928
    %v5941 = vmul.f32 %v5923, %v928
    %v5942 = vmul.f32 %v5926, %v928
    %v5943 = vmul.f32 %v5847, %v5847
    %v5944 = vmul.f32 %v5848, %v5848
    %v5945 = vmul.f32 %v5849, %v5849
    %v5946 = vmul.f32 %v5850, %v5850
    %v5947 = vmul.f32 %v5851, %v5851
    %v5948 = vmul.f32 %v5852, %v5852
    %v5949 = vmul.f32 %v5853, %v5853
    %v5950 = vmul.f32 %v5854, %v5854
    %v5951 = vmul.f32 %v5855, %v5855
    %v5952 = vmul.f32 %v5856, %v5856
    %v5953 = vmul.f32 %v5857, %v5857
    %v5954 = vmul.f32 %v5858, %v5858
    %v5955 = vmul.f32 %v5859, %v5859
    %v5956 = vmul.f32 %v5860, %v5860
    %v5957 = vmul.f32 %v5861, %v5861
    %v5958 = vmul.f32 %v5862, %v5862
    %v5959 = vmul.f32 %v5863, %v5863
    %v5960 = vmul.f32 %v5864, %v5864
    %v5961 = vmul.f32 %v5865, %v5865
    %v5962 = vmul.f32 %v5866, %v5866
    %v5963 = vmul.f32 %v5867, %v5867
    %v5964 = vmul.f32 %v5868, %v5868
    %v5965 = vmul.f32 %v5869, %v5869
    %v5966 = vmul.f32 %v5870, %v5870
    %v5967 = vmul.f32 %v5871, %v5871
    %v5968 = vmul.f32 %v5872, %v5872
    %v5969 = vmul.f32 %v5873, %v5873
    %v5970 = vmul.f32 %v5874, %v5874
    %v5971 = vmul.f32 %v5875, %v5875
    %v5972 = vmul.f32 %v5876, %v5876
    %v5973 = vmul.f32 %v5877, %v5877
    %v5974 = vmul.f32 %v5878, %v5878
    %v5975 = vadd.f32 %v5943, %v5944
    %5976 = vadd.xlane.f32.xlu0 %v5975
    %v5977 = vpop.xlane.xlu0 %5976
    %v5978 = vadd.f32 %v5945, %v5946
    %5979 = vadd.xlane.f32.xlu0 %v5978
    %v5980 = vpop.xlane.xlu0 %5979
    %v5981 = vadd.f32 %v5947, %v5948
    %5982 = vadd.xlane.f32.xlu0 %v5981
    %v5983 = vpop.xlane.xlu0 %5982
    %v5984 = vadd.f32 %v5949, %v5950
    %5985 = vadd.xlane.f32.xlu0 %v5984
    %v5986 = vpop.xlane.xlu0 %5985
    %v5987 = vadd.f32 %v5951, %v5952
    %5988 = vadd.xlane.f32.xlu0 %v5987
    %v5989 = vpop.xlane.xlu0 %5988
    %v5990 = vadd.f32 %v5953, %v5954
    %5991 = vadd.xlane.f32.xlu0 %v5990
    %v5992 = vpop.xlane.xlu0 %5991
    %v5993 = vadd.f32 %v5955, %v5956
    %5994 = vadd.xlane.f32.xlu0 %v5993
    %v5995 = vpop.xlane.xlu0 %5994
    %v5996 = vadd.f32 %v5957, %v5958
    %5997 = vadd.xlane.f32.xlu0 %v5996
    %v5998 = vpop.xlane.xlu0 %5997
    %v5999 = vadd.f32 %v5959, %v5960
    %6000 = vadd.xlane.f32.xlu0 %v5999
    %v6001 = vpop.xlane.xlu0 %6000
    %v6002 = vadd.f32 %v5961, %v5962
    %6003 = vadd.xlane.f32.xlu0 %v6002
    %v6004 = vpop.xlane.xlu0 %6003
    %v6005 = vadd.f32 %v5963, %v5964
    %6006 = vadd.xlane.f32.xlu0 %v6005
    %v6007 = vpop.xlane.xlu0 %6006
    %v6008 = vadd.f32 %v5965, %v5966
    %6009 = vadd.xlane.f32.xlu0 %v6008
    %v6010 = vpop.xlane.xlu0 %6009
    %v6011 = vadd.f32 %v5967, %v5968
    %6012 = vadd.xlane.f32.xlu0 %v6011
    %v6013 = vpop.xlane.xlu0 %6012
    %v6014 = vadd.f32 %v5969, %v5970
    %6015 = vadd.xlane.f32.xlu0 %v6014
    %v6016 = vpop.xlane.xlu0 %6015
    %v6017 = vadd.f32 %v5971, %v5972
    %6018 = vadd.xlane.f32.xlu0 %v6017
    %v6019 = vpop.xlane.xlu0 %6018
    %v6020 = vadd.f32 %v5973, %v5974
    %6021 = vadd.xlane.f32.xlu0 %v6020
    %v6022 = vpop.xlane.xlu0 %6021
    %v6023 = vmul.f32 %v5977, %v928
    %v6024 = vmul.f32 %v5980, %v928
    %v6025 = vmul.f32 %v5983, %v928
    %v6026 = vmul.f32 %v5986, %v928
    %v6027 = vmul.f32 %v5989, %v928
    %v6028 = vmul.f32 %v5992, %v928
    %v6029 = vmul.f32 %v5995, %v928
    %v6030 = vmul.f32 %v5998, %v928
    %v6031 = vmul.f32 %v6001, %v928
    %v6032 = vmul.f32 %v6004, %v928
    %v6033 = vmul.f32 %v6007, %v928
    %v6034 = vmul.f32 %v6010, %v928
    %v6035 = vmul.f32 %v6013, %v928
    %v6036 = vmul.f32 %v6016, %v928
    %v6037 = vmul.f32 %v6019, %v928
    %v6038 = vmul.f32 %v6022, %v928
    %v6039 = vmul.f32 %v5927, %v5927
    %v6040 = vmul.f32 %v5928, %v5928
    %v6041 = vmul.f32 %v5929, %v5929
    %v6042 = vmul.f32 %v5930, %v5930
    %v6043 = vmul.f32 %v5931, %v5931
    %v6044 = vmul.f32 %v5932, %v5932
    %v6045 = vmul.f32 %v5933, %v5933
    %v6046 = vmul.f32 %v5934, %v5934
    %v6047 = vmul.f32 %v5935, %v5935
    %v6048 = vmul.f32 %v5936, %v5936
    %v6049 = vmul.f32 %v5937, %v5937
    %v6050 = vmul.f32 %v5938, %v5938
    %v6051 = vmul.f32 %v5939, %v5939
    %v6052 = vmul.f32 %v5940, %v5940
    %v6053 = vmul.f32 %v5941, %v5941
    %v6054 = vmul.f32 %v5942, %v5942
    %v6055 = vsub.f32 %v6023, %v6039
    %v6056 = vsub.f32 %v6024, %v6040
    %v6057 = vsub.f32 %v6025, %v6041
    %v6058 = vsub.f32 %v6026, %v6042
    %v6059 = vsub.f32 %v6027, %v6043
    %v6060 = vsub.f32 %v6028, %v6044
    %v6061 = vsub.f32 %v6029, %v6045
    %v6062 = vsub.f32 %v6030, %v6046
    %v6063 = vsub.f32 %v6031, %v6047
    %v6064 = vsub.f32 %v6032, %v6048
    %v6065 = vsub.f32 %v6033, %v6049
    %v6066 = vsub.f32 %v6034, %v6050
    %v6067 = vsub.f32 %v6035, %v6051
    %v6068 = vsub.f32 %v6036, %v6052
    %v6069 = vsub.f32 %v6037, %v6053
    %v6070 = vsub.f32 %v6038, %v6054
    %v6071 = vmax.f32 %v6055, 0.0
    %v6072 = vmax.f32 %v6056, 0.0
    %v6073 = vmax.f32 %v6057, 0.0
    %v6074 = vmax.f32 %v6058, 0.0
    %v6075 = vmax.f32 %v6059, 0.0
    %v6076 = vmax.f32 %v6060, 0.0
    %v6077 = vmax.f32 %v6061, 0.0
    %v6078 = vmax.f32 %v6062, 0.0
    %v6079 = vmax.f32 %v6063, 0.0
    %v6080 = vmax.f32 %v6064, 0.0
    %v6081 = vmax.f32 %v6065, 0.0
    %v6082 = vmax.f32 %v6066, 0.0
    %v6083 = vmax.f32 %v6067, 0.0
    %v6084 = vmax.f32 %v6068, 0.0
    %v6085 = vmax.f32 %v6069, 0.0
    %v6086 = vmax.f32 %v6070, 0.0
    %v6087 = vsub.f32 %v5847, %v5927
    %v6088 = vsub.f32 %v5848, %v5927
    %v6089 = vsub.f32 %v5849, %v5928
    %v6090 = vsub.f32 %v5850, %v5928
    %v6091 = vsub.f32 %v5851, %v5929
    %v6092 = vsub.f32 %v5852, %v5929
    %v6093 = vsub.f32 %v5853, %v5930
    %v6094 = vsub.f32 %v5854, %v5930
    %v6095 = vsub.f32 %v5855, %v5931
    %v6096 = vsub.f32 %v5856, %v5931
    %v6097 = vsub.f32 %v5857, %v5932
    %v6098 = vsub.f32 %v5858, %v5932
    %v6099 = vsub.f32 %v5859, %v5933
    %v6100 = vsub.f32 %v5860, %v5933
    %v6101 = vsub.f32 %v5861, %v5934
    %v6102 = vsub.f32 %v5862, %v5934
    %v6103 = vsub.f32 %v5863, %v5935
    %v6104 = vsub.f32 %v5864, %v5935
    %v6105 = vsub.f32 %v5865, %v5936
    %v6106 = vsub.f32 %v5866, %v5936
    %v6107 = vsub.f32 %v5867, %v5937
    %v6108 = vsub.f32 %v5868, %v5937
    %v6109 = vsub.f32 %v5869, %v5938
    %v6110 = vsub.f32 %v5870, %v5938
    %v6111 = vsub.f32 %v5871, %v5939
    %v6112 = vsub.f32 %v5872, %v5939
    %v6113 = vsub.f32 %v5873, %v5940
    %v6114 = vsub.f32 %v5874, %v5940
    %v6115 = vsub.f32 %v5875, %v5941
    %v6116 = vsub.f32 %v5876, %v5941
    %v6117 = vsub.f32 %v5877, %v5942
    %v6118 = vsub.f32 %v5878, %v5942
    %v6119 = vadd.f32 %v6071, 1e-05
    %v6120 = vadd.f32 %v6072, 1e-05
    %v6121 = vadd.f32 %v6073, 1e-05
    %v6122 = vadd.f32 %v6074, 1e-05
    %v6123 = vadd.f32 %v6075, 1e-05
    %v6124 = vadd.f32 %v6076, 1e-05
    %v6125 = vadd.f32 %v6077, 1e-05
    %v6126 = vadd.f32 %v6078, 1e-05
    %v6127 = vadd.f32 %v6079, 1e-05
    %v6128 = vadd.f32 %v6080, 1e-05
    %v6129 = vadd.f32 %v6081, 1e-05
    %v6130 = vadd.f32 %v6082, 1e-05
    %v6131 = vadd.f32 %v6083, 1e-05
    %v6132 = vadd.f32 %v6084, 1e-05
    %v6133 = vadd.f32 %v6085, 1e-05
    %v6134 = vadd.f32 %v6086, 1e-05
    %v6135 = vrsqrt.pop %v6119
    %v6136 = vmul.f32 %v6135, %v6119
    %v6137 = vmul.f32 %v6136, %v6135
    %v6138 = vmul.f32 0.5, %v6137
    %v6139 = vsub.f32 1.5, %v6138
    %v6140 = vmul.f32 %v6135, %v6139
    %vm6141 = vweird.f32 %v6119
    %vm6142 = vweird.f32 %v6135
    %vm6143 = vmor %vm6141, %vm6142
    %v6144 = vsel %vm6143, %v6135, %v6140
    %v6145 = vrsqrt.pop %v6120
    %v6146 = vmul.f32 %v6145, %v6120
    %v6147 = vmul.f32 %v6146, %v6145
    %v6148 = vmul.f32 0.5, %v6147
    %v6149 = vsub.f32 1.5, %v6148
    %v6150 = vmul.f32 %v6145, %v6149
    %vm6151 = vweird.f32 %v6120
    %vm6152 = vweird.f32 %v6145
    %vm6153 = vmor %vm6151, %vm6152
    %v6154 = vsel %vm6153, %v6145, %v6150
    %v6155 = vrsqrt.pop %v6121
    %v6156 = vmul.f32 %v6155, %v6121
    %v6157 = vmul.f32 %v6156, %v6155
    %v6158 = vmul.f32 0.5, %v6157
    %v6159 = vsub.f32 1.5, %v6158
    %v6160 = vmul.f32 %v6155, %v6159
    %vm6161 = vweird.f32 %v6121
    %vm6162 = vweird.f32 %v6155
    %vm6163 = vmor %vm6161, %vm6162
    %v6164 = vsel %vm6163, %v6155, %v6160
    %v6165 = vrsqrt.pop %v6122
    %v6166 = vmul.f32 %v6165, %v6122
    %v6167 = vmul.f32 %v6166, %v6165
    %v6168 = vmul.f32 0.5, %v6167
    %v6169 = vsub.f32 1.5, %v6168
    %v6170 = vmul.f32 %v6165, %v6169
    %vm6171 = vweird.f32 %v6122
    %vm6172 = vweird.f32 %v6165
    %vm6173 = vmor %vm6171, %vm6172
    %v6174 = vsel %vm6173, %v6165, %v6170
    %v6175 = vrsqrt.pop %v6123
    %v6176 = vmul.f32 %v6175, %v6123
    %v6177 = vmul.f32 %v6176, %v6175
    %v6178 = vmul.f32 0.5, %v6177
    %v6179 = vsub.f32 1.5, %v6178
    %v6180 = vmul.f32 %v6175, %v6179
    %vm6181 = vweird.f32 %v6123
    %vm6182 = vweird.f32 %v6175
    %vm6183 = vmor %vm6181, %vm6182
    %v6184 = vsel %vm6183, %v6175, %v6180
    %v6185 = vrsqrt.pop %v6124
    %v6186 = vmul.f32 %v6185, %v6124
    %v6187 = vmul.f32 %v6186, %v6185
    %v6188 = vmul.f32 0.5, %v6187
    %v6189 = vsub.f32 1.5, %v6188
    %v6190 = vmul.f32 %v6185, %v6189
    %vm6191 = vweird.f32 %v6124
    %vm6192 = vweird.f32 %v6185
    %vm6193 = vmor %vm6191, %vm6192
    %v6194 = vsel %vm6193, %v6185, %v6190
    %v6195 = vrsqrt.pop %v6125
    %v6196 = vmul.f32 %v6195, %v6125
    %v6197 = vmul.f32 %v6196, %v6195
    %v6198 = vmul.f32 0.5, %v6197
    %v6199 = vsub.f32 1.5, %v6198
    %v6200 = vmul.f32 %v6195, %v6199
    %vm6201 = vweird.f32 %v6125
    %vm6202 = vweird.f32 %v6195
    %vm6203 = vmor %vm6201, %vm6202
    %v6204 = vsel %vm6203, %v6195, %v6200
    %v6205 = vrsqrt.pop %v6126
    %v6206 = vmul.f32 %v6205, %v6126
    %v6207 = vmul.f32 %v6206, %v6205
    %v6208 = vmul.f32 0.5, %v6207
    %v6209 = vsub.f32 1.5, %v6208
    %v6210 = vmul.f32 %v6205, %v6209
    %vm6211 = vweird.f32 %v6126
    %vm6212 = vweird.f32 %v6205
    %vm6213 = vmor %vm6211, %vm6212
    %v6214 = vsel %vm6213, %v6205, %v6210
    %v6215 = vrsqrt.pop %v6127
    %v6216 = vmul.f32 %v6215, %v6127
    %v6217 = vmul.f32 %v6216, %v6215
    %v6218 = vmul.f32 0.5, %v6217
    %v6219 = vsub.f32 1.5, %v6218
    %v6220 = vmul.f32 %v6215, %v6219
    %vm6221 = vweird.f32 %v6127
    %vm6222 = vweird.f32 %v6215
    %vm6223 = vmor %vm6221, %vm6222
    %v6224 = vsel %vm6223, %v6215, %v6220
    %v6225 = vrsqrt.pop %v6128
    %v6226 = vmul.f32 %v6225, %v6128
    %v6227 = vmul.f32 %v6226, %v6225
    %v6228 = vmul.f32 0.5, %v6227
    %v6229 = vsub.f32 1.5, %v6228
    %v6230 = vmul.f32 %v6225, %v6229
    %vm6231 = vweird.f32 %v6128
    %vm6232 = vweird.f32 %v6225
    %vm6233 = vmor %vm6231, %vm6232
    %v6234 = vsel %vm6233, %v6225, %v6230
    %v6235 = vrsqrt.pop %v6129
    %v6236 = vmul.f32 %v6235, %v6129
    %v6237 = vmul.f32 %v6236, %v6235
    %v6238 = vmul.f32 0.5, %v6237
    %v6239 = vsub.f32 1.5, %v6238
    %v6240 = vmul.f32 %v6235, %v6239
    %vm6241 = vweird.f32 %v6129
    %vm6242 = vweird.f32 %v6235
    %vm6243 = vmor %vm6241, %vm6242
    %v6244 = vsel %vm6243, %v6235, %v6240
    %v6245 = vrsqrt.pop %v6130
    %v6246 = vmul.f32 %v6245, %v6130
    %v6247 = vmul.f32 %v6246, %v6245
    %v6248 = vmul.f32 0.5, %v6247
    %v6249 = vsub.f32 1.5, %v6248
    %v6250 = vmul.f32 %v6245, %v6249
    %vm6251 = vweird.f32 %v6130
    %vm6252 = vweird.f32 %v6245
    %vm6253 = vmor %vm6251, %vm6252
    %v6254 = vsel %vm6253, %v6245, %v6250
    %v6255 = vrsqrt.pop %v6131
    %v6256 = vmul.f32 %v6255, %v6131
    %v6257 = vmul.f32 %v6256, %v6255
    %v6258 = vmul.f32 0.5, %v6257
    %v6259 = vsub.f32 1.5, %v6258
    %v6260 = vmul.f32 %v6255, %v6259
    %vm6261 = vweird.f32 %v6131
    %vm6262 = vweird.f32 %v6255
    %vm6263 = vmor %vm6261, %vm6262
    %v6264 = vsel %vm6263, %v6255, %v6260
    %v6265 = vrsqrt.pop %v6132
    %v6266 = vmul.f32 %v6265, %v6132
    %v6267 = vmul.f32 %v6266, %v6265
    %v6268 = vmul.f32 0.5, %v6267
    %v6269 = vsub.f32 1.5, %v6268
    %v6270 = vmul.f32 %v6265, %v6269
    %vm6271 = vweird.f32 %v6132
    %vm6272 = vweird.f32 %v6265
    %vm6273 = vmor %vm6271, %vm6272
    %v6274 = vsel %vm6273, %v6265, %v6270
    %v6275 = vrsqrt.pop %v6133
    %v6276 = vmul.f32 %v6275, %v6133
    %v6277 = vmul.f32 %v6276, %v6275
    %v6278 = vmul.f32 0.5, %v6277
    %v6279 = vsub.f32 1.5, %v6278
    %v6280 = vmul.f32 %v6275, %v6279
    %vm6281 = vweird.f32 %v6133
    %vm6282 = vweird.f32 %v6275
    %vm6283 = vmor %vm6281, %vm6282
    %v6284 = vsel %vm6283, %v6275, %v6280
    %v6285 = vrsqrt.pop %v6134
    %v6286 = vmul.f32 %v6285, %v6134
    %v6287 = vmul.f32 %v6286, %v6285
    %v6288 = vmul.f32 0.5, %v6287
    %v6289 = vsub.f32 1.5, %v6288
    %v6290 = vmul.f32 %v6285, %v6289
    %vm6291 = vweird.f32 %v6134
    %vm6292 = vweird.f32 %v6285
    %vm6293 = vmor %vm6291, %vm6292
    %v6294 = vsel %vm6293, %v6285, %v6290
    %v6295 = vmul.f32 %v6087, %v6144
    %v6296 = vmul.f32 %v6088, %v6144
    %v6297 = vmul.f32 %v6089, %v6154
    %v6298 = vmul.f32 %v6090, %v6154
    %v6299 = vmul.f32 %v6091, %v6164
    %v6300 = vmul.f32 %v6092, %v6164
    %v6301 = vmul.f32 %v6093, %v6174
    %v6302 = vmul.f32 %v6094, %v6174
    %v6303 = vmul.f32 %v6095, %v6184
    %v6304 = vmul.f32 %v6096, %v6184
    %v6305 = vmul.f32 %v6097, %v6194
    %v6306 = vmul.f32 %v6098, %v6194
    %v6307 = vmul.f32 %v6099, %v6204
    %v6308 = vmul.f32 %v6100, %v6204
    %v6309 = vmul.f32 %v6101, %v6214
    %v6310 = vmul.f32 %v6102, %v6214
    %v6311 = vmul.f32 %v6103, %v6224
    %v6312 = vmul.f32 %v6104, %v6224
    %v6313 = vmul.f32 %v6105, %v6234
    %v6314 = vmul.f32 %v6106, %v6234
    %v6315 = vmul.f32 %v6107, %v6244
    %v6316 = vmul.f32 %v6108, %v6244
    %v6317 = vmul.f32 %v6109, %v6254
    %v6318 = vmul.f32 %v6110, %v6254
    %v6319 = vmul.f32 %v6111, %v6264
    %v6320 = vmul.f32 %v6112, %v6264
    %v6321 = vmul.f32 %v6113, %v6274
    %v6322 = vmul.f32 %v6114, %v6274
    %v6323 = vmul.f32 %v6115, %v6284
    %v6324 = vmul.f32 %v6116, %v6284
    %v6325 = vmul.f32 %v6117, %v6294
    %v6326 = vmul.f32 %v6118, %v6294
    %v6327 = vld [vmem:[%s17] sm:$0x3]
    %v6329 = vperm.slane %v6327, 0
    %v6330 = vperm.slane %v6327, 1
    %v6333 = vmul.f32 %v6295, %v6329
    %v6334 = vmul.f32 %v6296, %v6330
    %v6335 = vmul.f32 %v6297, %v6329
    %v6336 = vmul.f32 %v6298, %v6330
    %v6337 = vmul.f32 %v6299, %v6329
    %v6338 = vmul.f32 %v6300, %v6330
    %v6339 = vmul.f32 %v6301, %v6329
    %v6340 = vmul.f32 %v6302, %v6330
    %v6341 = vmul.f32 %v6303, %v6329
    %v6342 = vmul.f32 %v6304, %v6330
    %v6343 = vmul.f32 %v6305, %v6329
    %v6344 = vmul.f32 %v6306, %v6330
    %v6345 = vmul.f32 %v6307, %v6329
    %v6346 = vmul.f32 %v6308, %v6330
    %v6347 = vmul.f32 %v6309, %v6329
    %v6348 = vmul.f32 %v6310, %v6330
    %v6349 = vmul.f32 %v6311, %v6329
    %v6350 = vmul.f32 %v6312, %v6330
    %v6351 = vmul.f32 %v6313, %v6329
    %v6352 = vmul.f32 %v6314, %v6330
    %v6353 = vmul.f32 %v6315, %v6329
    %v6354 = vmul.f32 %v6316, %v6330
    %v6355 = vmul.f32 %v6317, %v6329
    %v6356 = vmul.f32 %v6318, %v6330
    %v6357 = vmul.f32 %v6319, %v6329
    %v6358 = vmul.f32 %v6320, %v6330
    %v6359 = vmul.f32 %v6321, %v6329
    %v6360 = vmul.f32 %v6322, %v6330
    %v6361 = vmul.f32 %v6323, %v6329
    %v6362 = vmul.f32 %v6324, %v6330
    %v6363 = vmul.f32 %v6325, %v6329
    %v6364 = vmul.f32 %v6326, %v6330
    %v6365 = vld [vmem:[%s23] sm:$0x3]
    %v6367 = vperm.slane %v6365, 0
    %v6368 = vperm.slane %v6365, 1
    %v6371 = vadd.f32 %v6333, %v6367
    %v6372 = vadd.f32 %v6334, %v6368
    %v6373 = vadd.f32 %v6335, %v6367
    %v6374 = vadd.f32 %v6336, %v6368
    %v6375 = vadd.f32 %v6337, %v6367
    %v6376 = vadd.f32 %v6338, %v6368
    %v6377 = vadd.f32 %v6339, %v6367
    %v6378 = vadd.f32 %v6340, %v6368
    %v6379 = vadd.f32 %v6341, %v6367
    %v6380 = vadd.f32 %v6342, %v6368
    %v6381 = vadd.f32 %v6343, %v6367
    %v6382 = vadd.f32 %v6344, %v6368
    %v6383 = vadd.f32 %v6345, %v6367
    %v6384 = vadd.f32 %v6346, %v6368
    %v6385 = vadd.f32 %v6347, %v6367
    %v6386 = vadd.f32 %v6348, %v6368
    %v6387 = vadd.f32 %v6349, %v6367
    %v6388 = vadd.f32 %v6350, %v6368
    %v6389 = vadd.f32 %v6351, %v6367
    %v6390 = vadd.f32 %v6352, %v6368
    %v6391 = vadd.f32 %v6353, %v6367
    %v6392 = vadd.f32 %v6354, %v6368
    %v6393 = vadd.f32 %v6355, %v6367
    %v6394 = vadd.f32 %v6356, %v6368
    %v6395 = vadd.f32 %v6357, %v6367
    %v6396 = vadd.f32 %v6358, %v6368
    %v6397 = vadd.f32 %v6359, %v6367
    %v6398 = vadd.f32 %v6360, %v6368
    %v6399 = vadd.f32 %v6361, %v6367
    %v6400 = vadd.f32 %v6362, %v6368
    %v6401 = vadd.f32 %v6363, %v6367
    %v6402 = vadd.f32 %v6364, %v6368
    %v6403 = vpack.c.bf16 %v6372, %v6371
    %v6404 = vpack.c.bf16 %v6374, %v6373
    %v6405 = vpack.c.bf16 %v6376, %v6375
    %v6406 = vpack.c.bf16 %v6378, %v6377
    %v6407 = vpack.c.bf16 %v6380, %v6379
    %v6408 = vpack.c.bf16 %v6382, %v6381
    %v6409 = vpack.c.bf16 %v6384, %v6383
    %v6410 = vpack.c.bf16 %v6386, %v6385
    %v6411 = vpack.c.bf16 %v6388, %v6387
    %v6412 = vpack.c.bf16 %v6390, %v6389
    %v6413 = vpack.c.bf16 %v6392, %v6391
    %v6414 = vpack.c.bf16 %v6394, %v6393
    %v6415 = vpack.c.bf16 %v6396, %v6395
    %v6416 = vpack.c.bf16 %v6398, %v6397
    %v6417 = vpack.c.bf16 %v6400, %v6399
    %v6418 = vpack.c.bf16 %v6402, %v6401
    %v6435 = vunpack.c.l.b16 %v6403
    %v6436 = vunpack.c.h.b16 %v6403
    %v6437 = vunpack.c.l.b16 %v6404
    %v6438 = vunpack.c.h.b16 %v6404
    %v6439 = vunpack.c.l.b16 %v6405
    %v6440 = vunpack.c.h.b16 %v6405
    %v6441 = vunpack.c.l.b16 %v6406
    %v6442 = vunpack.c.h.b16 %v6406
    %v6443 = vunpack.c.l.b16 %v6407
    %v6444 = vunpack.c.h.b16 %v6407
    %v6445 = vunpack.c.l.b16 %v6408
    %v6446 = vunpack.c.h.b16 %v6408
    %v6447 = vunpack.c.l.b16 %v6409
    %v6448 = vunpack.c.h.b16 %v6409
    %v6449 = vunpack.c.l.b16 %v6410
    %v6450 = vunpack.c.h.b16 %v6410
    %v6451 = vunpack.c.l.b16 %v6411
    %v6452 = vunpack.c.h.b16 %v6411
    %v6453 = vunpack.c.l.b16 %v6412
    %v6454 = vunpack.c.h.b16 %v6412
    %v6455 = vunpack.c.l.b16 %v6413
    %v6456 = vunpack.c.h.b16 %v6413
    %v6457 = vunpack.c.l.b16 %v6414
    %v6458 = vunpack.c.h.b16 %v6414
    %v6459 = vunpack.c.l.b16 %v6415
    %v6460 = vunpack.c.h.b16 %v6415
    %v6461 = vunpack.c.l.b16 %v6416
    %v6462 = vunpack.c.h.b16 %v6416
    %v6463 = vunpack.c.l.b16 %v6417
    %v6464 = vunpack.c.h.b16 %v6417
    %v6465 = vunpack.c.l.b16 %v6418
    %v6466 = vunpack.c.h.b16 %v6418
    %v6467 = vpack.c.b16 %v6437, %v6435
    %v6468 = vpack.c.b16 %v6438, %v6436
    %v6469 = vpack.c.b16 %v6441, %v6439
    %v6470 = vpack.c.b16 %v6442, %v6440
    %v6471 = vpack.c.b16 %v6445, %v6443
    %v6472 = vpack.c.b16 %v6446, %v6444
    %v6473 = vpack.c.b16 %v6449, %v6447
    %v6474 = vpack.c.b16 %v6450, %v6448
    %v6475 = vpack.c.b16 %v6453, %v6451
    %v6476 = vpack.c.b16 %v6454, %v6452
    %v6477 = vpack.c.b16 %v6457, %v6455
    %v6478 = vpack.c.b16 %v6458, %v6456
    %v6479 = vpack.c.b16 %v6461, %v6459
    %v6480 = vpack.c.b16 %v6462, %v6460
    %v6481 = vpack.c.b16 %v6465, %v6463
    %v6482 = vpack.c.b16 %v6466, %v6464
    %v6499 = vld [vmem:[#allocation13] sm:$0xf]
    %v6500 = vld [vmem:[#allocation13 + $0x4] sm:$0xf]
    %v6501 = vld [vmem:[#allocation13 + $0x8] sm:$0xf]
    %v6502 = vld [vmem:[#allocation13 + $0xc] sm:$0xf]
    %v6503 = vld [vmem:[#allocation13 + $0x10] sm:$0xf]
    %v6504 = vld [vmem:[#allocation13 + $0x14] sm:$0xf]
    %v6505 = vld [vmem:[#allocation13 + $0x18] sm:$0xf]
    %v6506 = vld [vmem:[#allocation13 + $0x1c] sm:$0xf]
    %v6507 = vld [vmem:[#allocation13 + $0x20] sm:$0xf]
    %v6508 = vld [vmem:[#allocation13 + $0x24] sm:$0xf]
    %v6509 = vld [vmem:[#allocation13 + $0x28] sm:$0xf]
    %v6510 = vld [vmem:[#allocation13 + $0x2c] sm:$0xf]
    %v6511 = vld [vmem:[#allocation13 + $0x30] sm:$0xf]
    %v6512 = vld [vmem:[#allocation13 + $0x34] sm:$0xf]
    %v6513 = vld [vmem:[#allocation13 + $0x38] sm:$0xf]
    %v6514 = vld [vmem:[#allocation13 + $0x3c] sm:$0xf]
    %v6515 = vld [vmem:[#allocation13 + $0x40] sm:$0xf]
    %v6516 = vld [vmem:[#allocation13 + $0x44] sm:$0xf]
    %v6517 = vld [vmem:[#allocation13 + $0x48] sm:$0xf]
    %v6518 = vld [vmem:[#allocation13 + $0x4c] sm:$0xf]
    %v6519 = vld [vmem:[#allocation13 + $0x50] sm:$0xf]
    %v6520 = vld [vmem:[#allocation13 + $0x54] sm:$0xf]
    %v6521 = vld [vmem:[#allocation13 + $0x58] sm:$0xf]
    %v6522 = vld [vmem:[#allocation13 + $0x5c] sm:$0xf]
    %v6523 = vld [vmem:[#allocation13 + $0x60] sm:$0xf]
    %v6524 = vld [vmem:[#allocation13 + $0x64] sm:$0xf]
    %v6525 = vld [vmem:[#allocation13 + $0x68] sm:$0xf]
    %v6526 = vld [vmem:[#allocation13 + $0x6c] sm:$0xf]
    %v6527 = vld [vmem:[#allocation13 + $0x70] sm:$0xf]
    %v6528 = vld [vmem:[#allocation13 + $0x74] sm:$0xf]
    %v6529 = vld [vmem:[#allocation13 + $0x78] sm:$0xf]
    %v6530 = vld [vmem:[#allocation13 + $0x7c] sm:$0xf]
    %v6531 = vld [vmem:[#allocation13 + $0x80] sm:$0xf]
    %v6532 = vld [vmem:[#allocation13 + $0x84] sm:$0xf]
    %v6533 = vld [vmem:[#allocation13 + $0x88] sm:$0xf]
    %v6534 = vld [vmem:[#allocation13 + $0x8c] sm:$0xf]
    %v6535 = vld [vmem:[#allocation13 + $0x90] sm:$0xf]
    %v6536 = vld [vmem:[#allocation13 + $0x94] sm:$0xf]
    %v6537 = vld [vmem:[#allocation13 + $0x98] sm:$0xf]
    %v6538 = vld [vmem:[#allocation13 + $0x9c] sm:$0xf]
    %v6579 = vunpack.c.l.b16 %v6499
    %v6580 = vunpack.c.l.b16 %v6500
    %v6581 = vunpack.c.l.b16 %v6501
    %v6582 = vunpack.c.l.b16 %v6502
    %v6583 = vunpack.c.l.b16 %v6503
    %v6584 = vunpack.c.l.b16 %v6504
    %v6585 = vunpack.c.l.b16 %v6505
    %v6586 = vunpack.c.l.b16 %v6506
    %v6587 = vunpack.c.l.b16 %v6507
    %v6588 = vunpack.c.l.b16 %v6508
    %v6589 = vunpack.c.l.b16 %v6509
    %v6590 = vunpack.c.l.b16 %v6510
    %v6591 = vunpack.c.l.b16 %v6511
    %v6592 = vunpack.c.l.b16 %v6512
    %v6593 = vunpack.c.l.b16 %v6513
    %v6594 = vunpack.c.l.b16 %v6514
    %v6595 = vunpack.c.l.b16 %v6515
    %v6596 = vunpack.c.l.b16 %v6516
    %v6597 = vunpack.c.l.b16 %v6517
    %v6598 = vunpack.c.l.b16 %v6518
    %v6599 = vunpack.c.l.b16 %v6519
    %v6600 = vunpack.c.l.b16 %v6520
    %v6601 = vunpack.c.l.b16 %v6521
    %v6602 = vunpack.c.l.b16 %v6522
    %v6603 = vunpack.c.l.b16 %v6523
    %v6604 = vunpack.c.l.b16 %v6524
    %v6605 = vunpack.c.l.b16 %v6525
    %v6606 = vunpack.c.l.b16 %v6526
    %v6607 = vunpack.c.l.b16 %v6527
    %v6608 = vunpack.c.l.b16 %v6528
    %v6609 = vunpack.c.l.b16 %v6529
    %v6610 = vunpack.c.l.b16 %v6530
    %v6611 = vunpack.c.l.b16 %v6531
    %v6612 = vunpack.c.l.b16 %v6532
    %v6613 = vunpack.c.l.b16 %v6533
    %v6614 = vunpack.c.l.b16 %v6534
    %v6615 = vunpack.c.l.b16 %v6535
    %v6616 = vunpack.c.l.b16 %v6536
    %v6617 = vunpack.c.l.b16 %v6537
    %v6618 = vunpack.c.l.b16 %v6538
    %v6619 = vpack.c.b16 %v6580, %v6579
    %v6620 = vpack.c.b16 %v6582, %v6581
    %v6621 = vpack.c.b16 %v6584, %v6583
    %v6622 = vpack.c.b16 %v6586, %v6585
    %v6623 = vpack.c.b16 %v6588, %v6587
    %v6624 = vpack.c.b16 %v6590, %v6589
    %v6625 = vpack.c.b16 %v6592, %v6591
    %v6626 = vpack.c.b16 %v6594, %v6593
    %v6627 = vpack.c.b16 %v6596, %v6595
    %v6628 = vpack.c.b16 %v6598, %v6597
    %v6629 = vpack.c.b16 %v6600, %v6599
    %v6630 = vpack.c.b16 %v6602, %v6601
    %v6631 = vpack.c.b16 %v6604, %v6603
    %v6632 = vpack.c.b16 %v6606, %v6605
    %v6633 = vpack.c.b16 %v6608, %v6607
    %v6634 = vpack.c.b16 %v6610, %v6609
    %v6635 = vpack.c.b16 %v6612, %v6611
    %v6636 = vpack.c.b16 %v6614, %v6613
    %v6637 = vpack.c.b16 %v6616, %v6615
    %v6638 = vpack.c.b16 %v6618, %v6617
    %v6660 = vsel %vm5259, %v6468, 0
    %v6663 = vsel %vm5259, %v6470, 0
    %v6666 = vsel %vm5259, %v6472, 0
    %v6669 = vsel %vm5259, %v6474, 0
    %v6672 = vsel %vm5259, %v6476, 0
    %v6675 = vsel %vm5259, %v6478, 0
    %v6678 = vsel %vm5259, %v6480, 0
    %v6681 = vsel %vm5259, %v6482, 0
    %6683 = vmatpush.bf16.msra.mxu0 %v6626
    %6684 = vmatpush.bf16.msra.mxu0 %v6625
    %6685 = vmatpush.bf16.msra.mxu0 %v6624
    %6686 = vmatpush.bf16.msra.mxu0 %v6623
    %6687 = vmatpush.bf16.msra.mxu0 %v6622
    %6688 = vmatpush.bf16.msra.mxu0 %v6621
    %6689 = vmatpush.bf16.msra.mxu0 %v6620
    %6690 = vmatpush.bf16.msra.mxu0 %v6619
    %6691 = vmatmul.bf16.gmra.mxu0 0
    %v6692 = vpop.f32.mrf.mxu0
    %v6693 = vadd.f32 0.0, %v6692
    %v6694 = vpop.f32.mrf.mxu0
    %v6695 = vadd.f32 0.0, %v6694
    %6696 = vmatmul.bf16.gmra.mxu0 0
    %v6697 = vpop.f32.mrf.mxu0
    %v6698 = vadd.f32 0.0, %v6697
    %v6699 = vpop.f32.mrf.mxu0
    %v6700 = vadd.f32 0.0, %v6699
    %6701 = vmatmul.bf16.gmra.mxu0 0
    %v6702 = vpop.f32.mrf.mxu0
    %v6703 = vadd.f32 0.0, %v6702
    %v6704 = vpop.f32.mrf.mxu0
    %v6705 = vadd.f32 0.0, %v6704
    %6706 = vmatmul.bf16.gmra.mxu0 0
    %v6707 = vpop.f32.mrf.mxu0
    %v6708 = vadd.f32 0.0, %v6707
    %v6709 = vpop.f32.mrf.mxu0
    %v6710 = vadd.f32 0.0, %v6709
    %6711 = vmatmul.bf16.gmra.mxu0 0
    %v6712 = vpop.f32.mrf.mxu0
    %v6713 = vadd.f32 0.0, %v6712
    %v6714 = vpop.f32.mrf.mxu0
    %v6715 = vadd.f32 0.0, %v6714
    %6716 = vmatmul.bf16.gmra.mxu0 0
    %v6717 = vpop.f32.mrf.mxu0
    %v6718 = vadd.f32 0.0, %v6717
    %v6719 = vpop.f32.mrf.mxu0
    %v6720 = vadd.f32 0.0, %v6719
    %6721 = vmatmul.bf16.gmra.mxu0 0
    %v6722 = vpop.f32.mrf.mxu0
    %v6723 = vadd.f32 0.0, %v6722
    %v6724 = vpop.f32.mrf.mxu0
    %v6725 = vadd.f32 0.0, %v6724
    %6726 = vmatmul.bf16.gmra.mxu0 0
    %v6727 = vpop.f32.mrf.mxu0
    %v6728 = vadd.f32 0.0, %v6727
    %v6729 = vpop.f32.mrf.mxu0
    %v6730 = vadd.f32 0.0, %v6729
    %6731 = vdwg.mxu0
    %6732 = vmatpush.bf16.msra.mxu0 %v6634
    %6733 = vmatpush.bf16.msra.mxu0 %v6633
    %6734 = vmatpush.bf16.msra.mxu0 %v6632
    %6735 = vmatpush.bf16.msra.mxu0 %v6631
    %6736 = vmatpush.bf16.msra.mxu0 %v6630
    %6737 = vmatpush.bf16.msra.mxu0 %v6629
    %6738 = vmatpush.bf16.msra.mxu0 %v6628
    %6739 = vmatpush.bf16.msra.mxu0 %v6627
    %6740 = vmatmul.bf16.gmra.mxu0 %v6467
    %v6741 = vpop.f32.mrf.mxu0
    %v6742 = vadd.f32 %v6693, %v6741
    %v6743 = vpop.f32.mrf.mxu0
    %v6744 = vadd.f32 %v6695, %v6743
    %6745 = vmatmul.bf16.gmra.mxu0 %v6469
    %v6746 = vpop.f32.mrf.mxu0
    %v6747 = vadd.f32 %v6698, %v6746
    %v6748 = vpop.f32.mrf.mxu0
    %v6749 = vadd.f32 %v6700, %v6748
    %6750 = vmatmul.bf16.gmra.mxu0 %v6471
    %v6751 = vpop.f32.mrf.mxu0
    %v6752 = vadd.f32 %v6703, %v6751
    %v6753 = vpop.f32.mrf.mxu0
    %v6754 = vadd.f32 %v6705, %v6753
    %6755 = vmatmul.bf16.gmra.mxu0 %v6473
    %v6756 = vpop.f32.mrf.mxu0
    %v6757 = vadd.f32 %v6708, %v6756
    %v6758 = vpop.f32.mrf.mxu0
    %v6759 = vadd.f32 %v6710, %v6758
    %6760 = vmatmul.bf16.gmra.mxu0 %v6475
    %v6761 = vpop.f32.mrf.mxu0
    %v6762 = vadd.f32 %v6713, %v6761
    %v6763 = vpop.f32.mrf.mxu0
    %v6764 = vadd.f32 %v6715, %v6763
    %6765 = vmatmul.bf16.gmra.mxu0 %v6477
    %v6766 = vpop.f32.mrf.mxu0
    %v6767 = vadd.f32 %v6718, %v6766
    %v6768 = vpop.f32.mrf.mxu0
    %v6769 = vadd.f32 %v6720, %v6768
    %6770 = vmatmul.bf16.gmra.mxu0 %v6479
    %v6771 = vpop.f32.mrf.mxu0
    %v6772 = vadd.f32 %v6723, %v6771
    %v6773 = vpop.f32.mrf.mxu0
    %v6774 = vadd.f32 %v6725, %v6773
    %6775 = vmatmul.bf16.gmra.mxu0 %v6481
    %v6776 = vpop.f32.mrf.mxu0
    %v6777 = vadd.f32 %v6728, %v6776
    %v6778 = vpop.f32.mrf.mxu0
    %v6779 = vadd.f32 %v6730, %v6778
    %6780 = vdwg.mxu0
    %6781 = vmatpush.bf16.msra.mxu0 0
    %6782 = vmatpush.bf16.msra.mxu0 0
    %6783 = vmatpush.bf16.msra.mxu0 0
    %6784 = vmatpush.bf16.msra.mxu0 0
    %6785 = vmatpush.bf16.msra.mxu0 %v6638
    %6786 = vmatpush.bf16.msra.mxu0 %v6637
    %6787 = vmatpush.bf16.msra.mxu0 %v6636
    %6788 = vmatpush.bf16.msra.mxu0 %v6635
    %6789 = vmatmul.bf16.gmra.mxu0 %v6660
    %v6790 = vpop.f32.mrf.mxu0
    %v6791 = vadd.f32 %v6742, %v6790
    %v6792 = vpop.f32.mrf.mxu0
    %v6793 = vadd.f32 %v6744, %v6792
    %6794 = vmatmul.bf16.gmra.mxu0 %v6663
    %v6795 = vpop.f32.mrf.mxu0
    %v6796 = vadd.f32 %v6747, %v6795
    %v6797 = vpop.f32.mrf.mxu0
    %v6798 = vadd.f32 %v6749, %v6797
    %6799 = vmatmul.bf16.gmra.mxu0 %v6666
    %v6800 = vpop.f32.mrf.mxu0
    %v6801 = vadd.f32 %v6752, %v6800
    %v6802 = vpop.f32.mrf.mxu0
    %v6803 = vadd.f32 %v6754, %v6802
    %6804 = vmatmul.bf16.gmra.mxu0 %v6669
    %v6805 = vpop.f32.mrf.mxu0
    %v6806 = vadd.f32 %v6757, %v6805
    %v6807 = vpop.f32.mrf.mxu0
    %v6808 = vadd.f32 %v6759, %v6807
    %6809 = vmatmul.bf16.gmra.mxu0 %v6672
    %v6810 = vpop.f32.mrf.mxu0
    %v6811 = vadd.f32 %v6762, %v6810
    %v6812 = vpop.f32.mrf.mxu0
    %v6813 = vadd.f32 %v6764, %v6812
    %6814 = vmatmul.bf16.gmra.mxu0 %v6675
    %v6815 = vpop.f32.mrf.mxu0
    %v6816 = vadd.f32 %v6767, %v6815
    %v6817 = vpop.f32.mrf.mxu0
    %v6818 = vadd.f32 %v6769, %v6817
    %6819 = vmatmul.bf16.gmra.mxu0 %v6678
    %v6820 = vpop.f32.mrf.mxu0
    %v6821 = vadd.f32 %v6772, %v6820
    %v6822 = vpop.f32.mrf.mxu0
    %v6823 = vadd.f32 %v6774, %v6822
    %6824 = vmatmul.bf16.gmra.mxu0 %v6681
    %v6825 = vpop.f32.mrf.mxu0
    %v6826 = vadd.f32 %v6777, %v6825
    %v6827 = vpop.f32.mrf.mxu0
    %v6828 = vadd.f32 %v6779, %v6827
    %6829 = vdwg.mxu0
    %v6830 = vsel %vm5259, 0, 0
    %6832 = vmatpush.bf16.msra.mxu0 %v6626
    %6833 = vmatpush.bf16.msra.mxu0 %v6625
    %6834 = vmatpush.bf16.msra.mxu0 %v6624
    %6835 = vmatpush.bf16.msra.mxu0 %v6623
    %6836 = vmatpush.bf16.msra.mxu0 %v6622
    %6837 = vmatpush.bf16.msra.mxu0 %v6621
    %6838 = vmatpush.bf16.msra.mxu0 %v6620
    %6839 = vmatpush.bf16.msra.mxu0 %v6619
    %6840 = vmatmul.bf16.gmra.mxu0 %v6467
    %v6841 = vpop.f32.mrf.mxu0
    %v6842 = vadd.f32 0.0, %v6841
    %v6843 = vpop.f32.mrf.mxu0
    %v6844 = vadd.f32 0.0, %v6843
    %6845 = vmatmul.bf16.gmra.mxu0 %v6469
    %v6846 = vpop.f32.mrf.mxu0
    %v6847 = vadd.f32 0.0, %v6846
    %v6848 = vpop.f32.mrf.mxu0
    %v6849 = vadd.f32 0.0, %v6848
    %6850 = vmatmul.bf16.gmra.mxu0 %v6471
    %v6851 = vpop.f32.mrf.mxu0
    %v6852 = vadd.f32 0.0, %v6851
    %v6853 = vpop.f32.mrf.mxu0
    %v6854 = vadd.f32 0.0, %v6853
    %6855 = vmatmul.bf16.gmra.mxu0 %v6473
    %v6856 = vpop.f32.mrf.mxu0
    %v6857 = vadd.f32 0.0, %v6856
    %v6858 = vpop.f32.mrf.mxu0
    %v6859 = vadd.f32 0.0, %v6858
    %6860 = vmatmul.bf16.gmra.mxu0 %v6475
    %v6861 = vpop.f32.mrf.mxu0
    %v6862 = vadd.f32 0.0, %v6861
    %v6863 = vpop.f32.mrf.mxu0
    %v6864 = vadd.f32 0.0, %v6863
    %6865 = vmatmul.bf16.gmra.mxu0 %v6477
    %v6866 = vpop.f32.mrf.mxu0
    %v6867 = vadd.f32 0.0, %v6866
    %v6868 = vpop.f32.mrf.mxu0
    %v6869 = vadd.f32 0.0, %v6868
    %6870 = vmatmul.bf16.gmra.mxu0 %v6479
    %v6871 = vpop.f32.mrf.mxu0
    %v6872 = vadd.f32 0.0, %v6871
    %v6873 = vpop.f32.mrf.mxu0
    %v6874 = vadd.f32 0.0, %v6873
    %6875 = vmatmul.bf16.gmra.mxu0 %v6481
    %v6876 = vpop.f32.mrf.mxu0
    %v6877 = vadd.f32 0.0, %v6876
    %v6878 = vpop.f32.mrf.mxu0
    %v6879 = vadd.f32 0.0, %v6878
    %6880 = vdwg.mxu0
    %6881 = vmatpush.bf16.msra.mxu0 %v6634
    %6882 = vmatpush.bf16.msra.mxu0 %v6633
    %6883 = vmatpush.bf16.msra.mxu0 %v6632
    %6884 = vmatpush.bf16.msra.mxu0 %v6631
    %6885 = vmatpush.bf16.msra.mxu0 %v6630
    %6886 = vmatpush.bf16.msra.mxu0 %v6629
    %6887 = vmatpush.bf16.msra.mxu0 %v6628
    %6888 = vmatpush.bf16.msra.mxu0 %v6627
    %6889 = vmatmul.bf16.gmra.mxu0 %v6468
    %v6890 = vpop.f32.mrf.mxu0
    %v6891 = vadd.f32 %v6842, %v6890
    %v6892 = vpop.f32.mrf.mxu0
    %v6893 = vadd.f32 %v6844, %v6892
    %6894 = vmatmul.bf16.gmra.mxu0 %v6470
    %v6895 = vpop.f32.mrf.mxu0
    %v6896 = vadd.f32 %v6847, %v6895
    %v6897 = vpop.f32.mrf.mxu0
    %v6898 = vadd.f32 %v6849, %v6897
    %6899 = vmatmul.bf16.gmra.mxu0 %v6472
    %v6900 = vpop.f32.mrf.mxu0
    %v6901 = vadd.f32 %v6852, %v6900
    %v6902 = vpop.f32.mrf.mxu0
    %v6903 = vadd.f32 %v6854, %v6902
    %6904 = vmatmul.bf16.gmra.mxu0 %v6474
    %v6905 = vpop.f32.mrf.mxu0
    %v6906 = vadd.f32 %v6857, %v6905
    %v6907 = vpop.f32.mrf.mxu0
    %v6908 = vadd.f32 %v6859, %v6907
    %6909 = vmatmul.bf16.gmra.mxu0 %v6476
    %v6910 = vpop.f32.mrf.mxu0
    %v6911 = vadd.f32 %v6862, %v6910
    %v6912 = vpop.f32.mrf.mxu0
    %v6913 = vadd.f32 %v6864, %v6912
    %6914 = vmatmul.bf16.gmra.mxu0 %v6478
    %v6915 = vpop.f32.mrf.mxu0
    %v6916 = vadd.f32 %v6867, %v6915
    %v6917 = vpop.f32.mrf.mxu0
    %v6918 = vadd.f32 %v6869, %v6917
    %6919 = vmatmul.bf16.gmra.mxu0 %v6480
    %v6920 = vpop.f32.mrf.mxu0
    %v6921 = vadd.f32 %v6872, %v6920
    %v6922 = vpop.f32.mrf.mxu0
    %v6923 = vadd.f32 %v6874, %v6922
    %6924 = vmatmul.bf16.gmra.mxu0 %v6482
    %v6925 = vpop.f32.mrf.mxu0
    %v6926 = vadd.f32 %v6877, %v6925
    %v6927 = vpop.f32.mrf.mxu0
    %v6928 = vadd.f32 %v6879, %v6927
    %6929 = vdwg.mxu0
    %6930 = vmatpush.bf16.msra.mxu0 0
    %6931 = vmatpush.bf16.msra.mxu0 0
    %6932 = vmatpush.bf16.msra.mxu0 0
    %6933 = vmatpush.bf16.msra.mxu0 0
    %6934 = vmatpush.bf16.msra.mxu0 %v6638
    %6935 = vmatpush.bf16.msra.mxu0 %v6637
    %6936 = vmatpush.bf16.msra.mxu0 %v6636
    %6937 = vmatpush.bf16.msra.mxu0 %v6635
    %6938 = vmatmul.bf16.gmra.mxu0 %v6830
    %v6939 = vpop.f32.mrf.mxu0
    %v6940 = vadd.f32 %v6891, %v6939
    %v6941 = vpop.f32.mrf.mxu0
    %v6942 = vadd.f32 %v6893, %v6941
    %6943 = vmatmul.bf16.gmra.mxu0 %v6830
    %v6944 = vpop.f32.mrf.mxu0
    %v6945 = vadd.f32 %v6896, %v6944
    %v6946 = vpop.f32.mrf.mxu0
    %v6947 = vadd.f32 %v6898, %v6946
    %6948 = vmatmul.bf16.gmra.mxu0 %v6830
    %v6949 = vpop.f32.mrf.mxu0
    %v6950 = vadd.f32 %v6901, %v6949
    %v6951 = vpop.f32.mrf.mxu0
    %v6952 = vadd.f32 %v6903, %v6951
    %6953 = vmatmul.bf16.gmra.mxu0 %v6830
    %v6954 = vpop.f32.mrf.mxu0
    %v6955 = vadd.f32 %v6906, %v6954
    %v6956 = vpop.f32.mrf.mxu0
    %v6957 = vadd.f32 %v6908, %v6956
    %6958 = vmatmul.bf16.gmra.mxu0 %v6830
    %v6959 = vpop.f32.mrf.mxu0
    %v6960 = vadd.f32 %v6911, %v6959
    %v6961 = vpop.f32.mrf.mxu0
    %v6962 = vadd.f32 %v6913, %v6961
    %6963 = vmatmul.bf16.gmra.mxu0 %v6830
    %v6964 = vpop.f32.mrf.mxu0
    %v6965 = vadd.f32 %v6916, %v6964
    %v6966 = vpop.f32.mrf.mxu0
    %v6967 = vadd.f32 %v6918, %v6966
    %6968 = vmatmul.bf16.gmra.mxu0 %v6830
    %v6969 = vpop.f32.mrf.mxu0
    %v6970 = vadd.f32 %v6921, %v6969
    %v6971 = vpop.f32.mrf.mxu0
    %v6972 = vadd.f32 %v6923, %v6971
    %6973 = vmatmul.bf16.gmra.mxu0 %v6830
    %v6974 = vpop.f32.mrf.mxu0
    %v6975 = vadd.f32 %v6926, %v6974
    %v6976 = vpop.f32.mrf.mxu0
    %v6977 = vadd.f32 %v6928, %v6976
    %6978 = vdwg.mxu0
    %v6979 = vld [vmem:[#allocation14] sm:$0x3]
    %v6981 = vperm.slane %v6979, 0
    %v6982 = vperm.slane %v6979, 1
    %v6985 = vadd.f32 %v6791, %v6981
    %v6986 = vadd.f32 %v6940, %v6982
    %v6987 = vadd.f32 %v6793, %v6981
    %v6988 = vadd.f32 %v6942, %v6982
    %v6989 = vadd.f32 %v6796, %v6981
    %v6990 = vadd.f32 %v6945, %v6982
    %v6991 = vadd.f32 %v6798, %v6981
    %v6992 = vadd.f32 %v6947, %v6982
    %v6993 = vadd.f32 %v6801, %v6981
    %v6994 = vadd.f32 %v6950, %v6982
    %v6995 = vadd.f32 %v6803, %v6981
    %v6996 = vadd.f32 %v6952, %v6982
    %v6997 = vadd.f32 %v6806, %v6981
    %v6998 = vadd.f32 %v6955, %v6982
    %v6999 = vadd.f32 %v6808, %v6981
    %v7000 = vadd.f32 %v6957, %v6982
    %v7001 = vadd.f32 %v6811, %v6981
    %v7002 = vadd.f32 %v6960, %v6982
    %v7003 = vadd.f32 %v6813, %v6981
    %v7004 = vadd.f32 %v6962, %v6982
    %v7005 = vadd.f32 %v6816, %v6981
    %v7006 = vadd.f32 %v6965, %v6982
    %v7007 = vadd.f32 %v6818, %v6981
    %v7008 = vadd.f32 %v6967, %v6982
    %v7009 = vadd.f32 %v6821, %v6981
    %v7010 = vadd.f32 %v6970, %v6982
    %v7011 = vadd.f32 %v6823, %v6981
    %v7012 = vadd.f32 %v6972, %v6982
    %v7013 = vadd.f32 %v6826, %v6981
    %v7014 = vadd.f32 %v6975, %v6982
    %v7015 = vadd.f32 %v6828, %v6981
    %v7016 = vadd.f32 %v6977, %v6982
    %vm7017 = vcmp.gt.f32.partialorder %v6985, 0.0
    %vm7018 = vcmp.gt.f32.partialorder %v6986, 0.0
    %vm7019 = vcmp.gt.f32.partialorder %v6987, 0.0
    %vm7020 = vcmp.gt.f32.partialorder %v6988, 0.0
    %vm7021 = vcmp.gt.f32.partialorder %v6989, 0.0
    %vm7022 = vcmp.gt.f32.partialorder %v6990, 0.0
    %vm7023 = vcmp.gt.f32.partialorder %v6991, 0.0
    %vm7024 = vcmp.gt.f32.partialorder %v6992, 0.0
    %vm7025 = vcmp.gt.f32.partialorder %v6993, 0.0
    %vm7026 = vcmp.gt.f32.partialorder %v6994, 0.0
    %vm7027 = vcmp.gt.f32.partialorder %v6995, 0.0
    %vm7028 = vcmp.gt.f32.partialorder %v6996, 0.0
    %vm7029 = vcmp.gt.f32.partialorder %v6997, 0.0
    %vm7030 = vcmp.gt.f32.partialorder %v6998, 0.0
    %vm7031 = vcmp.gt.f32.partialorder %v6999, 0.0
    %vm7032 = vcmp.gt.f32.partialorder %v7000, 0.0
    %vm7033 = vcmp.gt.f32.partialorder %v7001, 0.0
    %vm7034 = vcmp.gt.f32.partialorder %v7002, 0.0
    %vm7035 = vcmp.gt.f32.partialorder %v7003, 0.0
    %vm7036 = vcmp.gt.f32.partialorder %v7004, 0.0
    %vm7037 = vcmp.gt.f32.partialorder %v7005, 0.0
    %vm7038 = vcmp.gt.f32.partialorder %v7006, 0.0
    %vm7039 = vcmp.gt.f32.partialorder %v7007, 0.0
    %vm7040 = vcmp.gt.f32.partialorder %v7008, 0.0
    %vm7041 = vcmp.gt.f32.partialorder %v7009, 0.0
    %vm7042 = vcmp.gt.f32.partialorder %v7010, 0.0
    %vm7043 = vcmp.gt.f32.partialorder %v7011, 0.0
    %vm7044 = vcmp.gt.f32.partialorder %v7012, 0.0
    %vm7045 = vcmp.gt.f32.partialorder %v7013, 0.0
    %vm7046 = vcmp.gt.f32.partialorder %v7014, 0.0
    %vm7047 = vcmp.gt.f32.partialorder %v7015, 0.0
    %vm7048 = vcmp.gt.f32.partialorder %v7016, 0.0
    %v7049 = vmin.f32 %v6985, 0.0
    %v7050 = vmin.f32 %v6986, 0.0
    %v7051 = vmin.f32 %v6987, 0.0
    %v7052 = vmin.f32 %v6988, 0.0
    %v7053 = vmin.f32 %v6989, 0.0
    %v7054 = vmin.f32 %v6990, 0.0
    %v7055 = vmin.f32 %v6991, 0.0
    %v7056 = vmin.f32 %v6992, 0.0
    %v7057 = vmin.f32 %v6993, 0.0
    %v7058 = vmin.f32 %v6994, 0.0
    %v7059 = vmin.f32 %v6995, 0.0
    %v7060 = vmin.f32 %v6996, 0.0
    %v7061 = vmin.f32 %v6997, 0.0
    %v7062 = vmin.f32 %v6998, 0.0
    %v7063 = vmin.f32 %v6999, 0.0
    %v7064 = vmin.f32 %v7000, 0.0
    %v7065 = vmin.f32 %v7001, 0.0
    %v7066 = vmin.f32 %v7002, 0.0
    %v7067 = vmin.f32 %v7003, 0.0
    %v7068 = vmin.f32 %v7004, 0.0
    %v7069 = vmin.f32 %v7005, 0.0
    %v7070 = vmin.f32 %v7006, 0.0
    %v7071 = vmin.f32 %v7007, 0.0
    %v7072 = vmin.f32 %v7008, 0.0
    %v7073 = vmin.f32 %v7009, 0.0
    %v7074 = vmin.f32 %v7010, 0.0
    %v7075 = vmin.f32 %v7011, 0.0
    %v7076 = vmin.f32 %v7012, 0.0
    %v7077 = vmin.f32 %v7013, 0.0
    %v7078 = vmin.f32 %v7014, 0.0
    %v7079 = vmin.f32 %v7015, 0.0
    %v7080 = vmin.f32 %v7016, 0.0
    %v7081 = vmul.f32 %v7049, 1.442695
    %v7082 = vpow.pop %v7081
    %v7083 = vmul.f32 %v7050, 1.442695
    %v7084 = vpow.pop %v7083
    %v7085 = vmul.f32 %v7051, 1.442695
    %v7086 = vpow.pop %v7085
    %v7087 = vmul.f32 %v7052, 1.442695
    %v7088 = vpow.pop %v7087
    %v7089 = vmul.f32 %v7053, 1.442695
    %v7090 = vpow.pop %v7089
    %v7091 = vmul.f32 %v7054, 1.442695
    %v7092 = vpow.pop %v7091
    %v7093 = vmul.f32 %v7055, 1.442695
    %v7094 = vpow.pop %v7093
    %v7095 = vmul.f32 %v7056, 1.442695
    %v7096 = vpow.pop %v7095
    %v7097 = vmul.f32 %v7057, 1.442695
    %v7098 = vpow.pop %v7097
    %v7099 = vmul.f32 %v7058, 1.442695
    %v7100 = vpow.pop %v7099
    %v7101 = vmul.f32 %v7059, 1.442695
    %v7102 = vpow.pop %v7101
    %v7103 = vmul.f32 %v7060, 1.442695
    %v7104 = vpow.pop %v7103
    %v7105 = vmul.f32 %v7061, 1.442695
    %v7106 = vpow.pop %v7105
    %v7107 = vmul.f32 %v7062, 1.442695
    %v7108 = vpow.pop %v7107
    %v7109 = vmul.f32 %v7063, 1.442695
    %v7110 = vpow.pop %v7109
    %v7111 = vmul.f32 %v7064, 1.442695
    %v7112 = vpow.pop %v7111
    %v7113 = vmul.f32 %v7065, 1.442695
    %v7114 = vpow.pop %v7113
    %v7115 = vmul.f32 %v7066, 1.442695
    %v7116 = vpow.pop %v7115
    %v7117 = vmul.f32 %v7067, 1.442695
    %v7118 = vpow.pop %v7117
    %v7119 = vmul.f32 %v7068, 1.442695
    %v7120 = vpow.pop %v7119
    %v7121 = vmul.f32 %v7069, 1.442695
    %v7122 = vpow.pop %v7121
    %v7123 = vmul.f32 %v7070, 1.442695
    %v7124 = vpow.pop %v7123
    %v7125 = vmul.f32 %v7071, 1.442695
    %v7126 = vpow.pop %v7125
    %v7127 = vmul.f32 %v7072, 1.442695
    %v7128 = vpow.pop %v7127
    %v7129 = vmul.f32 %v7073, 1.442695
    %v7130 = vpow.pop %v7129
    %v7131 = vmul.f32 %v7074, 1.442695
    %v7132 = vpow.pop %v7131
    %v7133 = vmul.f32 %v7075, 1.442695
    %v7134 = vpow.pop %v7133
    %v7135 = vmul.f32 %v7076, 1.442695
    %v7136 = vpow.pop %v7135
    %v7137 = vmul.f32 %v7077, 1.442695
    %v7138 = vpow.pop %v7137
    %v7139 = vmul.f32 %v7078, 1.442695
    %v7140 = vpow.pop %v7139
    %v7141 = vmul.f32 %v7079, 1.442695
    %v7142 = vpow.pop %v7141
    %v7143 = vmul.f32 %v7080, 1.442695
    %v7144 = vpow.pop %v7143
    %v7145 = vsub.f32 %v7082, 1.0
    %v7146 = vsub.f32 %v7084, 1.0
    %v7147 = vsub.f32 %v7086, 1.0
    %v7148 = vsub.f32 %v7088, 1.0
    %v7149 = vsub.f32 %v7090, 1.0
    %v7150 = vsub.f32 %v7092, 1.0
    %v7151 = vsub.f32 %v7094, 1.0
    %v7152 = vsub.f32 %v7096, 1.0
    %v7153 = vsub.f32 %v7098, 1.0
    %v7154 = vsub.f32 %v7100, 1.0
    %v7155 = vsub.f32 %v7102, 1.0
    %v7156 = vsub.f32 %v7104, 1.0
    %v7157 = vsub.f32 %v7106, 1.0
    %v7158 = vsub.f32 %v7108, 1.0
    %v7159 = vsub.f32 %v7110, 1.0
    %v7160 = vsub.f32 %v7112, 1.0
    %v7161 = vsub.f32 %v7114, 1.0
    %v7162 = vsub.f32 %v7116, 1.0
    %v7163 = vsub.f32 %v7118, 1.0
    %v7164 = vsub.f32 %v7120, 1.0
    %v7165 = vsub.f32 %v7122, 1.0
    %v7166 = vsub.f32 %v7124, 1.0
    %v7167 = vsub.f32 %v7126, 1.0
    %v7168 = vsub.f32 %v7128, 1.0
    %v7169 = vsub.f32 %v7130, 1.0
    %v7170 = vsub.f32 %v7132, 1.0
    %v7171 = vsub.f32 %v7134, 1.0
    %v7172 = vsub.f32 %v7136, 1.0
    %v7173 = vsub.f32 %v7138, 1.0
    %v7174 = vsub.f32 %v7140, 1.0
    %v7175 = vsub.f32 %v7142, 1.0
    %v7176 = vsub.f32 %v7144, 1.0
    %v7177 = vsel %vm7017, %v6985, %v7145
    %v7178 = vsel %vm7018, %v6986, %v7146
    %v7179 = vsel %vm7019, %v6987, %v7147
    %v7180 = vsel %vm7020, %v6988, %v7148
    %v7181 = vsel %vm7021, %v6989, %v7149
    %v7182 = vsel %vm7022, %v6990, %v7150
    %v7183 = vsel %vm7023, %v6991, %v7151
    %v7184 = vsel %vm7024, %v6992, %v7152
    %v7185 = vsel %vm7025, %v6993, %v7153
    %v7186 = vsel %vm7026, %v6994, %v7154
    %v7187 = vsel %vm7027, %v6995, %v7155
    %v7188 = vsel %vm7028, %v6996, %v7156
    %v7189 = vsel %vm7029, %v6997, %v7157
    %v7190 = vsel %vm7030, %v6998, %v7158
    %v7191 = vsel %vm7031, %v6999, %v7159
    %v7192 = vsel %vm7032, %v7000, %v7160
    %v7193 = vsel %vm7033, %v7001, %v7161
    %v7194 = vsel %vm7034, %v7002, %v7162
    %v7195 = vsel %vm7035, %v7003, %v7163
    %v7196 = vsel %vm7036, %v7004, %v7164
    %v7197 = vsel %vm7037, %v7005, %v7165
    %v7198 = vsel %vm7038, %v7006, %v7166
    %v7199 = vsel %vm7039, %v7007, %v7167
    %v7200 = vsel %vm7040, %v7008, %v7168
    %v7201 = vsel %vm7041, %v7009, %v7169
    %v7202 = vsel %vm7042, %v7010, %v7170
    %v7203 = vsel %vm7043, %v7011, %v7171
    %v7204 = vsel %vm7044, %v7012, %v7172
    %v7205 = vsel %vm7045, %v7013, %v7173
    %v7206 = vsel %vm7046, %v7014, %v7174
    %v7207 = vsel %vm7047, %v7015, %v7175
    %v7208 = vsel %vm7048, %v7016, %v7176
    %v7209 = vadd.f32 %v7177, %v7178
    %7210 = vadd.xlane.f32.xlu0 %v7209
    %v7211 = vpop.xlane.xlu0 %7210
    %v7212 = vadd.f32 %v7179, %v7180
    %7213 = vadd.xlane.f32.xlu0 %v7212
    %v7214 = vpop.xlane.xlu0 %7213
    %v7215 = vadd.f32 %v7181, %v7182
    %7216 = vadd.xlane.f32.xlu0 %v7215
    %v7217 = vpop.xlane.xlu0 %7216
    %v7218 = vadd.f32 %v7183, %v7184
    %7219 = vadd.xlane.f32.xlu0 %v7218
    %v7220 = vpop.xlane.xlu0 %7219
    %v7221 = vadd.f32 %v7185, %v7186
    %7222 = vadd.xlane.f32.xlu0 %v7221
    %v7223 = vpop.xlane.xlu0 %7222
    %v7224 = vadd.f32 %v7187, %v7188
    %7225 = vadd.xlane.f32.xlu0 %v7224
    %v7226 = vpop.xlane.xlu0 %7225
    %v7227 = vadd.f32 %v7189, %v7190
    %7228 = vadd.xlane.f32.xlu0 %v7227
    %v7229 = vpop.xlane.xlu0 %7228
    %v7230 = vadd.f32 %v7191, %v7192
    %7231 = vadd.xlane.f32.xlu0 %v7230
    %v7232 = vpop.xlane.xlu0 %7231
    %v7233 = vadd.f32 %v7193, %v7194
    %7234 = vadd.xlane.f32.xlu0 %v7233
    %v7235 = vpop.xlane.xlu0 %7234
    %v7236 = vadd.f32 %v7195, %v7196
    %7237 = vadd.xlane.f32.xlu0 %v7236
    %v7238 = vpop.xlane.xlu0 %7237
    %v7239 = vadd.f32 %v7197, %v7198
    %7240 = vadd.xlane.f32.xlu0 %v7239
    %v7241 = vpop.xlane.xlu0 %7240
    %v7242 = vadd.f32 %v7199, %v7200
    %7243 = vadd.xlane.f32.xlu0 %v7242
    %v7244 = vpop.xlane.xlu0 %7243
    %v7245 = vadd.f32 %v7201, %v7202
    %7246 = vadd.xlane.f32.xlu0 %v7245
    %v7247 = vpop.xlane.xlu0 %7246
    %v7248 = vadd.f32 %v7203, %v7204
    %7249 = vadd.xlane.f32.xlu0 %v7248
    %v7250 = vpop.xlane.xlu0 %7249
    %v7251 = vadd.f32 %v7205, %v7206
    %7252 = vadd.xlane.f32.xlu0 %v7251
    %v7253 = vpop.xlane.xlu0 %7252
    %v7254 = vadd.f32 %v7207, %v7208
    %7255 = vadd.xlane.f32.xlu0 %v7254
    %v7256 = vpop.xlane.xlu0 %7255
    %v7257 = vmul.f32 %v7211, %v928
    %v7258 = vmul.f32 %v7214, %v928
    %v7259 = vmul.f32 %v7217, %v928
    %v7260 = vmul.f32 %v7220, %v928
    %v7261 = vmul.f32 %v7223, %v928
    %v7262 = vmul.f32 %v7226, %v928
    %v7263 = vmul.f32 %v7229, %v928
    %v7264 = vmul.f32 %v7232, %v928
    %v7265 = vmul.f32 %v7235, %v928
    %v7266 = vmul.f32 %v7238, %v928
    %v7267 = vmul.f32 %v7241, %v928
    %v7268 = vmul.f32 %v7244, %v928
    %v7269 = vmul.f32 %v7247, %v928
    %v7270 = vmul.f32 %v7250, %v928
    %v7271 = vmul.f32 %v7253, %v928
    %v7272 = vmul.f32 %v7256, %v928
    %v7273 = vmul.f32 %v7177, %v7177
    %v7274 = vmul.f32 %v7178, %v7178
    %v7275 = vmul.f32 %v7179, %v7179
    %v7276 = vmul.f32 %v7180, %v7180
    %v7277 = vmul.f32 %v7181, %v7181
    %v7278 = vmul.f32 %v7182, %v7182
    %v7279 = vmul.f32 %v7183, %v7183
    %v7280 = vmul.f32 %v7184, %v7184
    %v7281 = vmul.f32 %v7185, %v7185
    %v7282 = vmul.f32 %v7186, %v7186
    %v7283 = vmul.f32 %v7187, %v7187
    %v7284 = vmul.f32 %v7188, %v7188
    %v7285 = vmul.f32 %v7189, %v7189
    %v7286 = vmul.f32 %v7190, %v7190
    %v7287 = vmul.f32 %v7191, %v7191
    %v7288 = vmul.f32 %v7192, %v7192
    %v7289 = vmul.f32 %v7193, %v7193
    %v7290 = vmul.f32 %v7194, %v7194
    %v7291 = vmul.f32 %v7195, %v7195
    %v7292 = vmul.f32 %v7196, %v7196
    %v7293 = vmul.f32 %v7197, %v7197
    %v7294 = vmul.f32 %v7198, %v7198
    %v7295 = vmul.f32 %v7199, %v7199
    %v7296 = vmul.f32 %v7200, %v7200
    %v7297 = vmul.f32 %v7201, %v7201
    %v7298 = vmul.f32 %v7202, %v7202
    %v7299 = vmul.f32 %v7203, %v7203
    %v7300 = vmul.f32 %v7204, %v7204
    %v7301 = vmul.f32 %v7205, %v7205
    %v7302 = vmul.f32 %v7206, %v7206
    %v7303 = vmul.f32 %v7207, %v7207
    %v7304 = vmul.f32 %v7208, %v7208
    %v7305 = vadd.f32 %v7273, %v7274
    %7306 = vadd.xlane.f32.xlu0 %v7305
    %v7307 = vpop.xlane.xlu0 %7306
    %v7308 = vadd.f32 %v7275, %v7276
    %7309 = vadd.xlane.f32.xlu0 %v7308
    %v7310 = vpop.xlane.xlu0 %7309
    %v7311 = vadd.f32 %v7277, %v7278
    %7312 = vadd.xlane.f32.xlu0 %v7311
    %v7313 = vpop.xlane.xlu0 %7312
    %v7314 = vadd.f32 %v7279, %v7280
    %7315 = vadd.xlane.f32.xlu0 %v7314
    %v7316 = vpop.xlane.xlu0 %7315
    %v7317 = vadd.f32 %v7281, %v7282
    %7318 = vadd.xlane.f32.xlu0 %v7317
    %v7319 = vpop.xlane.xlu0 %7318
    %v7320 = vadd.f32 %v7283, %v7284
    %7321 = vadd.xlane.f32.xlu0 %v7320
    %v7322 = vpop.xlane.xlu0 %7321
    %v7323 = vadd.f32 %v7285, %v7286
    %7324 = vadd.xlane.f32.xlu0 %v7323
    %v7325 = vpop.xlane.xlu0 %7324
    %v7326 = vadd.f32 %v7287, %v7288
    %7327 = vadd.xlane.f32.xlu0 %v7326
    %v7328 = vpop.xlane.xlu0 %7327
    %v7329 = vadd.f32 %v7289, %v7290
    %7330 = vadd.xlane.f32.xlu0 %v7329
    %v7331 = vpop.xlane.xlu0 %7330
    %v7332 = vadd.f32 %v7291, %v7292
    %7333 = vadd.xlane.f32.xlu0 %v7332
    %v7334 = vpop.xlane.xlu0 %7333
    %v7335 = vadd.f32 %v7293, %v7294
    %7336 = vadd.xlane.f32.xlu0 %v7335
    %v7337 = vpop.xlane.xlu0 %7336
    %v7338 = vadd.f32 %v7295, %v7296
    %7339 = vadd.xlane.f32.xlu0 %v7338
    %v7340 = vpop.xlane.xlu0 %7339
    %v7341 = vadd.f32 %v7297, %v7298
    %7342 = vadd.xlane.f32.xlu0 %v7341
    %v7343 = vpop.xlane.xlu0 %7342
    %v7344 = vadd.f32 %v7299, %v7300
    %7345 = vadd.xlane.f32.xlu0 %v7344
    %v7346 = vpop.xlane.xlu0 %7345
    %v7347 = vadd.f32 %v7301, %v7302
    %7348 = vadd.xlane.f32.xlu0 %v7347
    %v7349 = vpop.xlane.xlu0 %7348
    %v7350 = vadd.f32 %v7303, %v7304
    %7351 = vadd.xlane.f32.xlu0 %v7350
    %v7352 = vpop.xlane.xlu0 %7351
    %v7353 = vmul.f32 %v7307, %v928
    %v7354 = vmul.f32 %v7310, %v928
    %v7355 = vmul.f32 %v7313, %v928
    %v7356 = vmul.f32 %v7316, %v928
    %v7357 = vmul.f32 %v7319, %v928
    %v7358 = vmul.f32 %v7322, %v928
    %v7359 = vmul.f32 %v7325, %v928
    %v7360 = vmul.f32 %v7328, %v928
    %v7361 = vmul.f32 %v7331, %v928
    %v7362 = vmul.f32 %v7334, %v928
    %v7363 = vmul.f32 %v7337, %v928
    %v7364 = vmul.f32 %v7340, %v928
    %v7365 = vmul.f32 %v7343, %v928
    %v7366 = vmul.f32 %v7346, %v928
    %v7367 = vmul.f32 %v7349, %v928
    %v7368 = vmul.f32 %v7352, %v928
    %v7369 = vmul.f32 %v7257, %v7257
    %v7370 = vmul.f32 %v7258, %v7258
    %v7371 = vmul.f32 %v7259, %v7259
    %v7372 = vmul.f32 %v7260, %v7260
    %v7373 = vmul.f32 %v7261, %v7261
    %v7374 = vmul.f32 %v7262, %v7262
    %v7375 = vmul.f32 %v7263, %v7263
    %v7376 = vmul.f32 %v7264, %v7264
    %v7377 = vmul.f32 %v7265, %v7265
    %v7378 = vmul.f32 %v7266, %v7266
    %v7379 = vmul.f32 %v7267, %v7267
    %v7380 = vmul.f32 %v7268, %v7268
    %v7381 = vmul.f32 %v7269, %v7269
    %v7382 = vmul.f32 %v7270, %v7270
    %v7383 = vmul.f32 %v7271, %v7271
    %v7384 = vmul.f32 %v7272, %v7272
    %v7385 = vsub.f32 %v7353, %v7369
    %v7386 = vsub.f32 %v7354, %v7370
    %v7387 = vsub.f32 %v7355, %v7371
    %v7388 = vsub.f32 %v7356, %v7372
    %v7389 = vsub.f32 %v7357, %v7373
    %v7390 = vsub.f32 %v7358, %v7374
    %v7391 = vsub.f32 %v7359, %v7375
    %v7392 = vsub.f32 %v7360, %v7376
    %v7393 = vsub.f32 %v7361, %v7377
    %v7394 = vsub.f32 %v7362, %v7378
    %v7395 = vsub.f32 %v7363, %v7379
    %v7396 = vsub.f32 %v7364, %v7380
    %v7397 = vsub.f32 %v7365, %v7381
    %v7398 = vsub.f32 %v7366, %v7382
    %v7399 = vsub.f32 %v7367, %v7383
    %v7400 = vsub.f32 %v7368, %v7384
    %v7401 = vmax.f32 %v7385, 0.0
    %v7402 = vmax.f32 %v7386, 0.0
    %v7403 = vmax.f32 %v7387, 0.0
    %v7404 = vmax.f32 %v7388, 0.0
    %v7405 = vmax.f32 %v7389, 0.0
    %v7406 = vmax.f32 %v7390, 0.0
    %v7407 = vmax.f32 %v7391, 0.0
    %v7408 = vmax.f32 %v7392, 0.0
    %v7409 = vmax.f32 %v7393, 0.0
    %v7410 = vmax.f32 %v7394, 0.0
    %v7411 = vmax.f32 %v7395, 0.0
    %v7412 = vmax.f32 %v7396, 0.0
    %v7413 = vmax.f32 %v7397, 0.0
    %v7414 = vmax.f32 %v7398, 0.0
    %v7415 = vmax.f32 %v7399, 0.0
    %v7416 = vmax.f32 %v7400, 0.0
    %v7417 = vsub.f32 %v7177, %v7257
    %v7418 = vsub.f32 %v7178, %v7257
    %v7419 = vsub.f32 %v7179, %v7258
    %v7420 = vsub.f32 %v7180, %v7258
    %v7421 = vsub.f32 %v7181, %v7259
    %v7422 = vsub.f32 %v7182, %v7259
    %v7423 = vsub.f32 %v7183, %v7260
    %v7424 = vsub.f32 %v7184, %v7260
    %v7425 = vsub.f32 %v7185, %v7261
    %v7426 = vsub.f32 %v7186, %v7261
    %v7427 = vsub.f32 %v7187, %v7262
    %v7428 = vsub.f32 %v7188, %v7262
    %v7429 = vsub.f32 %v7189, %v7263
    %v7430 = vsub.f32 %v7190, %v7263
    %v7431 = vsub.f32 %v7191, %v7264
    %v7432 = vsub.f32 %v7192, %v7264
    %v7433 = vsub.f32 %v7193, %v7265
    %v7434 = vsub.f32 %v7194, %v7265
    %v7435 = vsub.f32 %v7195, %v7266
    %v7436 = vsub.f32 %v7196, %v7266
    %v7437 = vsub.f32 %v7197, %v7267
    %v7438 = vsub.f32 %v7198, %v7267
    %v7439 = vsub.f32 %v7199, %v7268
    %v7440 = vsub.f32 %v7200, %v7268
    %v7441 = vsub.f32 %v7201, %v7269
    %v7442 = vsub.f32 %v7202, %v7269
    %v7443 = vsub.f32 %v7203, %v7270
    %v7444 = vsub.f32 %v7204, %v7270
    %v7445 = vsub.f32 %v7205, %v7271
    %v7446 = vsub.f32 %v7206, %v7271
    %v7447 = vsub.f32 %v7207, %v7272
    %v7448 = vsub.f32 %v7208, %v7272
    %v7449 = vadd.f32 %v7401, 1e-05
    %v7450 = vadd.f32 %v7402, 1e-05
    %v7451 = vadd.f32 %v7403, 1e-05
    %v7452 = vadd.f32 %v7404, 1e-05
    %v7453 = vadd.f32 %v7405, 1e-05
    %v7454 = vadd.f32 %v7406, 1e-05
    %v7455 = vadd.f32 %v7407, 1e-05
    %v7456 = vadd.f32 %v7408, 1e-05
    %v7457 = vadd.f32 %v7409, 1e-05
    %v7458 = vadd.f32 %v7410, 1e-05
    %v7459 = vadd.f32 %v7411, 1e-05
    %v7460 = vadd.f32 %v7412, 1e-05
    %v7461 = vadd.f32 %v7413, 1e-05
    %v7462 = vadd.f32 %v7414, 1e-05
    %v7463 = vadd.f32 %v7415, 1e-05
    %v7464 = vadd.f32 %v7416, 1e-05
    %v7465 = vrsqrt.pop %v7449
    %v7466 = vmul.f32 %v7465, %v7449
    %v7467 = vmul.f32 %v7466, %v7465
    %v7468 = vmul.f32 0.5, %v7467
    %v7469 = vsub.f32 1.5, %v7468
    %v7470 = vmul.f32 %v7465, %v7469
    %vm7471 = vweird.f32 %v7449
    %vm7472 = vweird.f32 %v7465
    %vm7473 = vmor %vm7471, %vm7472
    %v7474 = vsel %vm7473, %v7465, %v7470
    %v7475 = vrsqrt.pop %v7450
    %v7476 = vmul.f32 %v7475, %v7450
    %v7477 = vmul.f32 %v7476, %v7475
    %v7478 = vmul.f32 0.5, %v7477
    %v7479 = vsub.f32 1.5, %v7478
    %v7480 = vmul.f32 %v7475, %v7479
    %vm7481 = vweird.f32 %v7450
    %vm7482 = vweird.f32 %v7475
    %vm7483 = vmor %vm7481, %vm7482
    %v7484 = vsel %vm7483, %v7475, %v7480
    %v7485 = vrsqrt.pop %v7451
    %v7486 = vmul.f32 %v7485, %v7451
    %v7487 = vmul.f32 %v7486, %v7485
    %v7488 = vmul.f32 0.5, %v7487
    %v7489 = vsub.f32 1.5, %v7488
    %v7490 = vmul.f32 %v7485, %v7489
    %vm7491 = vweird.f32 %v7451
    %vm7492 = vweird.f32 %v7485
    %vm7493 = vmor %vm7491, %vm7492
    %v7494 = vsel %vm7493, %v7485, %v7490
    %v7495 = vrsqrt.pop %v7452
    %v7496 = vmul.f32 %v7495, %v7452
    %v7497 = vmul.f32 %v7496, %v7495
    %v7498 = vmul.f32 0.5, %v7497
    %v7499 = vsub.f32 1.5, %v7498
    %v7500 = vmul.f32 %v7495, %v7499
    %vm7501 = vweird.f32 %v7452
    %vm7502 = vweird.f32 %v7495
    %vm7503 = vmor %vm7501, %vm7502
    %v7504 = vsel %vm7503, %v7495, %v7500
    %v7505 = vrsqrt.pop %v7453
    %v7506 = vmul.f32 %v7505, %v7453
    %v7507 = vmul.f32 %v7506, %v7505
    %v7508 = vmul.f32 0.5, %v7507
    %v7509 = vsub.f32 1.5, %v7508
    %v7510 = vmul.f32 %v7505, %v7509
    %vm7511 = vweird.f32 %v7453
    %vm7512 = vweird.f32 %v7505
    %vm7513 = vmor %vm7511, %vm7512
    %v7514 = vsel %vm7513, %v7505, %v7510
    %v7515 = vrsqrt.pop %v7454
    %v7516 = vmul.f32 %v7515, %v7454
    %v7517 = vmul.f32 %v7516, %v7515
    %v7518 = vmul.f32 0.5, %v7517
    %v7519 = vsub.f32 1.5, %v7518
    %v7520 = vmul.f32 %v7515, %v7519
    %vm7521 = vweird.f32 %v7454
    %vm7522 = vweird.f32 %v7515
    %vm7523 = vmor %vm7521, %vm7522
    %v7524 = vsel %vm7523, %v7515, %v7520
    %v7525 = vrsqrt.pop %v7455
    %v7526 = vmul.f32 %v7525, %v7455
    %v7527 = vmul.f32 %v7526, %v7525
    %v7528 = vmul.f32 0.5, %v7527
    %v7529 = vsub.f32 1.5, %v7528
    %v7530 = vmul.f32 %v7525, %v7529
    %vm7531 = vweird.f32 %v7455
    %vm7532 = vweird.f32 %v7525
    %vm7533 = vmor %vm7531, %vm7532
    %v7534 = vsel %vm7533, %v7525, %v7530
    %v7535 = vrsqrt.pop %v7456
    %v7536 = vmul.f32 %v7535, %v7456
    %v7537 = vmul.f32 %v7536, %v7535
    %v7538 = vmul.f32 0.5, %v7537
    %v7539 = vsub.f32 1.5, %v7538
    %v7540 = vmul.f32 %v7535, %v7539
    %vm7541 = vweird.f32 %v7456
    %vm7542 = vweird.f32 %v7535
    %vm7543 = vmor %vm7541, %vm7542
    %v7544 = vsel %vm7543, %v7535, %v7540
    %v7545 = vrsqrt.pop %v7457
    %v7546 = vmul.f32 %v7545, %v7457
    %v7547 = vmul.f32 %v7546, %v7545
    %v7548 = vmul.f32 0.5, %v7547
    %v7549 = vsub.f32 1.5, %v7548
    %v7550 = vmul.f32 %v7545, %v7549
    %vm7551 = vweird.f32 %v7457
    %vm7552 = vweird.f32 %v7545
    %vm7553 = vmor %vm7551, %vm7552
    %v7554 = vsel %vm7553, %v7545, %v7550
    %v7555 = vrsqrt.pop %v7458
    %v7556 = vmul.f32 %v7555, %v7458
    %v7557 = vmul.f32 %v7556, %v7555
    %v7558 = vmul.f32 0.5, %v7557
    %v7559 = vsub.f32 1.5, %v7558
    %v7560 = vmul.f32 %v7555, %v7559
    %vm7561 = vweird.f32 %v7458
    %vm7562 = vweird.f32 %v7555
    %vm7563 = vmor %vm7561, %vm7562
    %v7564 = vsel %vm7563, %v7555, %v7560
    %v7565 = vrsqrt.pop %v7459
    %v7566 = vmul.f32 %v7565, %v7459
    %v7567 = vmul.f32 %v7566, %v7565
    %v7568 = vmul.f32 0.5, %v7567
    %v7569 = vsub.f32 1.5, %v7568
    %v7570 = vmul.f32 %v7565, %v7569
    %vm7571 = vweird.f32 %v7459
    %vm7572 = vweird.f32 %v7565
    %vm7573 = vmor %vm7571, %vm7572
    %v7574 = vsel %vm7573, %v7565, %v7570
    %v7575 = vrsqrt.pop %v7460
    %v7576 = vmul.f32 %v7575, %v7460
    %v7577 = vmul.f32 %v7576, %v7575
    %v7578 = vmul.f32 0.5, %v7577
    %v7579 = vsub.f32 1.5, %v7578
    %v7580 = vmul.f32 %v7575, %v7579
    %vm7581 = vweird.f32 %v7460
    %vm7582 = vweird.f32 %v7575
    %vm7583 = vmor %vm7581, %vm7582
    %v7584 = vsel %vm7583, %v7575, %v7580
    %v7585 = vrsqrt.pop %v7461
    %v7586 = vmul.f32 %v7585, %v7461
    %v7587 = vmul.f32 %v7586, %v7585
    %v7588 = vmul.f32 0.5, %v7587
    %v7589 = vsub.f32 1.5, %v7588
    %v7590 = vmul.f32 %v7585, %v7589
    %vm7591 = vweird.f32 %v7461
    %vm7592 = vweird.f32 %v7585
    %vm7593 = vmor %vm7591, %vm7592
    %v7594 = vsel %vm7593, %v7585, %v7590
    %v7595 = vrsqrt.pop %v7462
    %v7596 = vmul.f32 %v7595, %v7462
    %v7597 = vmul.f32 %v7596, %v7595
    %v7598 = vmul.f32 0.5, %v7597
    %v7599 = vsub.f32 1.5, %v7598
    %v7600 = vmul.f32 %v7595, %v7599
    %vm7601 = vweird.f32 %v7462
    %vm7602 = vweird.f32 %v7595
    %vm7603 = vmor %vm7601, %vm7602
    %v7604 = vsel %vm7603, %v7595, %v7600
    %v7605 = vrsqrt.pop %v7463
    %v7606 = vmul.f32 %v7605, %v7463
    %v7607 = vmul.f32 %v7606, %v7605
    %v7608 = vmul.f32 0.5, %v7607
    %v7609 = vsub.f32 1.5, %v7608
    %v7610 = vmul.f32 %v7605, %v7609
    %vm7611 = vweird.f32 %v7463
    %vm7612 = vweird.f32 %v7605
    %vm7613 = vmor %vm7611, %vm7612
    %v7614 = vsel %vm7613, %v7605, %v7610
    %v7615 = vrsqrt.pop %v7464
    %v7616 = vmul.f32 %v7615, %v7464
    %v7617 = vmul.f32 %v7616, %v7615
    %v7618 = vmul.f32 0.5, %v7617
    %v7619 = vsub.f32 1.5, %v7618
    %v7620 = vmul.f32 %v7615, %v7619
    %vm7621 = vweird.f32 %v7464
    %vm7622 = vweird.f32 %v7615
    %vm7623 = vmor %vm7621, %vm7622
    %v7624 = vsel %vm7623, %v7615, %v7620
    %v7625 = vmul.f32 %v7417, %v7474
    %v7626 = vmul.f32 %v7418, %v7474
    %v7627 = vmul.f32 %v7419, %v7484
    %v7628 = vmul.f32 %v7420, %v7484
    %v7629 = vmul.f32 %v7421, %v7494
    %v7630 = vmul.f32 %v7422, %v7494
    %v7631 = vmul.f32 %v7423, %v7504
    %v7632 = vmul.f32 %v7424, %v7504
    %v7633 = vmul.f32 %v7425, %v7514
    %v7634 = vmul.f32 %v7426, %v7514
    %v7635 = vmul.f32 %v7427, %v7524
    %v7636 = vmul.f32 %v7428, %v7524
    %v7637 = vmul.f32 %v7429, %v7534
    %v7638 = vmul.f32 %v7430, %v7534
    %v7639 = vmul.f32 %v7431, %v7544
    %v7640 = vmul.f32 %v7432, %v7544
    %v7641 = vmul.f32 %v7433, %v7554
    %v7642 = vmul.f32 %v7434, %v7554
    %v7643 = vmul.f32 %v7435, %v7564
    %v7644 = vmul.f32 %v7436, %v7564
    %v7645 = vmul.f32 %v7437, %v7574
    %v7646 = vmul.f32 %v7438, %v7574
    %v7647 = vmul.f32 %v7439, %v7584
    %v7648 = vmul.f32 %v7440, %v7584
    %v7649 = vmul.f32 %v7441, %v7594
    %v7650 = vmul.f32 %v7442, %v7594
    %v7651 = vmul.f32 %v7443, %v7604
    %v7652 = vmul.f32 %v7444, %v7604
    %v7653 = vmul.f32 %v7445, %v7614
    %v7654 = vmul.f32 %v7446, %v7614
    %v7655 = vmul.f32 %v7447, %v7624
    %v7656 = vmul.f32 %v7448, %v7624
    %v7657 = vld [vmem:[#allocation19] sm:$0x3]
    %v7659 = vperm.slane %v7657, 0
    %v7660 = vperm.slane %v7657, 1
    %v7663 = vmul.f32 %v7625, %v7659
    %v7664 = vmul.f32 %v7626, %v7660
    %v7665 = vmul.f32 %v7627, %v7659
    %v7666 = vmul.f32 %v7628, %v7660
    %v7667 = vmul.f32 %v7629, %v7659
    %v7668 = vmul.f32 %v7630, %v7660
    %v7669 = vmul.f32 %v7631, %v7659
    %v7670 = vmul.f32 %v7632, %v7660
    %v7671 = vmul.f32 %v7633, %v7659
    %v7672 = vmul.f32 %v7634, %v7660
    %v7673 = vmul.f32 %v7635, %v7659
    %v7674 = vmul.f32 %v7636, %v7660
    %v7675 = vmul.f32 %v7637, %v7659
    %v7676 = vmul.f32 %v7638, %v7660
    %v7677 = vmul.f32 %v7639, %v7659
    %v7678 = vmul.f32 %v7640, %v7660
    %v7679 = vmul.f32 %v7641, %v7659
    %v7680 = vmul.f32 %v7642, %v7660
    %v7681 = vmul.f32 %v7643, %v7659
    %v7682 = vmul.f32 %v7644, %v7660
    %v7683 = vmul.f32 %v7645, %v7659
    %v7684 = vmul.f32 %v7646, %v7660
    %v7685 = vmul.f32 %v7647, %v7659
    %v7686 = vmul.f32 %v7648, %v7660
    %v7687 = vmul.f32 %v7649, %v7659
    %v7688 = vmul.f32 %v7650, %v7660
    %v7689 = vmul.f32 %v7651, %v7659
    %v7690 = vmul.f32 %v7652, %v7660
    %v7691 = vmul.f32 %v7653, %v7659
    %v7692 = vmul.f32 %v7654, %v7660
    %v7693 = vmul.f32 %v7655, %v7659
    %v7694 = vmul.f32 %v7656, %v7660
    %v7695 = vld [vmem:[#allocation23] sm:$0x3]
    %v7697 = vperm.slane %v7695, 0
    %v7698 = vperm.slane %v7695, 1
    %v7701 = vadd.f32 %v7663, %v7697
    %v7702 = vadd.f32 %v7664, %v7698
    %v7703 = vadd.f32 %v7665, %v7697
    %v7704 = vadd.f32 %v7666, %v7698
    %v7705 = vadd.f32 %v7667, %v7697
    %v7706 = vadd.f32 %v7668, %v7698
    %v7707 = vadd.f32 %v7669, %v7697
    %v7708 = vadd.f32 %v7670, %v7698
    %v7709 = vadd.f32 %v7671, %v7697
    %v7710 = vadd.f32 %v7672, %v7698
    %v7711 = vadd.f32 %v7673, %v7697
    %v7712 = vadd.f32 %v7674, %v7698
    %v7713 = vadd.f32 %v7675, %v7697
    %v7714 = vadd.f32 %v7676, %v7698
    %v7715 = vadd.f32 %v7677, %v7697
    %v7716 = vadd.f32 %v7678, %v7698
    %v7717 = vadd.f32 %v7679, %v7697
    %v7718 = vadd.f32 %v7680, %v7698
    %v7719 = vadd.f32 %v7681, %v7697
    %v7720 = vadd.f32 %v7682, %v7698
    %v7721 = vadd.f32 %v7683, %v7697
    %v7722 = vadd.f32 %v7684, %v7698
    %v7723 = vadd.f32 %v7685, %v7697
    %v7724 = vadd.f32 %v7686, %v7698
    %v7725 = vadd.f32 %v7687, %v7697
    %v7726 = vadd.f32 %v7688, %v7698
    %v7727 = vadd.f32 %v7689, %v7697
    %v7728 = vadd.f32 %v7690, %v7698
    %v7729 = vadd.f32 %v7691, %v7697
    %v7730 = vadd.f32 %v7692, %v7698
    %v7731 = vadd.f32 %v7693, %v7697
    %v7732 = vadd.f32 %v7694, %v7698
    %v7733 = vpack.c.bf16 %v7703, %v7701
    %v7734 = vpack.c.bf16 %v7704, %v7702
    %v7735 = vpack.c.bf16 %v7707, %v7705
    %v7736 = vpack.c.bf16 %v7708, %v7706
    %v7737 = vpack.c.bf16 %v7711, %v7709
    %v7738 = vpack.c.bf16 %v7712, %v7710
    %v7739 = vpack.c.bf16 %v7715, %v7713
    %v7740 = vpack.c.bf16 %v7716, %v7714
    %v7741 = vpack.c.bf16 %v7719, %v7717
    %v7742 = vpack.c.bf16 %v7720, %v7718
    %v7743 = vpack.c.bf16 %v7723, %v7721
    %v7744 = vpack.c.bf16 %v7724, %v7722
    %v7745 = vpack.c.bf16 %v7727, %v7725
    %v7746 = vpack.c.bf16 %v7728, %v7726
    %v7747 = vpack.c.bf16 %v7731, %v7729
    %v7748 = vpack.c.bf16 %v7732, %v7730
    %v7749 = vld [vmem:[#allocation25] sm:$0xf]
    %v7750 = vld [vmem:[#allocation25 + $0x4] sm:$0xf]
    %v7751 = vld [vmem:[#allocation25 + $0x8] sm:$0xf]
    %v7752 = vld [vmem:[#allocation25 + $0xc] sm:$0xf]
    %v7753 = vld [vmem:[#allocation25 + $0x10] sm:$0xf]
    %v7754 = vld [vmem:[#allocation25 + $0x14] sm:$0xf]
    %v7755 = vld [vmem:[#allocation25 + $0x18] sm:$0xf]
    %v7756 = vld [vmem:[#allocation25 + $0x1c] sm:$0xf]
    %v7757 = vld [vmem:[#allocation25 + $0x20] sm:$0xf]
    %v7758 = vld [vmem:[#allocation25 + $0x24] sm:$0xf]
    %v7759 = vld [vmem:[#allocation25 + $0x28] sm:$0xf]
    %v7760 = vld [vmem:[#allocation25 + $0x2c] sm:$0xf]
    %v7761 = vld [vmem:[#allocation25 + $0x30] sm:$0xf]
    %v7762 = vld [vmem:[#allocation25 + $0x34] sm:$0xf]
    %v7763 = vld [vmem:[#allocation25 + $0x38] sm:$0xf]
    %v7764 = vld [vmem:[#allocation25 + $0x3c] sm:$0xf]
    %v7765 = vld [vmem:[#allocation25 + $0x40] sm:$0xf]
    %v7766 = vld [vmem:[#allocation25 + $0x44] sm:$0xf]
    %v7767 = vld [vmem:[#allocation25 + $0x48] sm:$0xf]
    %v7768 = vld [vmem:[#allocation25 + $0x4c] sm:$0xf]
    %v7769 = vld [vmem:[#allocation25 + $0x50] sm:$0xf]
    %v7770 = vld [vmem:[#allocation25 + $0x54] sm:$0xf]
    %v7771 = vld [vmem:[#allocation25 + $0x58] sm:$0xf]
    %v7772 = vld [vmem:[#allocation25 + $0x5c] sm:$0xf]
    %v7773 = vld [vmem:[#allocation25 + $0x60] sm:$0xf]
    %v7774 = vld [vmem:[#allocation25 + $0x64] sm:$0xf]
    %v7775 = vld [vmem:[#allocation25 + $0x68] sm:$0xf]
    %v7776 = vld [vmem:[#allocation25 + $0x6c] sm:$0xf]
    %v7777 = vld [vmem:[#allocation25 + $0x70] sm:$0xf]
    %v7778 = vld [vmem:[#allocation25 + $0x74] sm:$0xf]
    %v7779 = vld [vmem:[#allocation25 + $0x78] sm:$0xf]
    %v7780 = vld [vmem:[#allocation25 + $0x7c] sm:$0xf]
    %v7781 = vld [vmem:[%s26] sm:$0x1]
    %v7783 = vperm.slane %v7781, 0
    %v7817 = vunpack.c.l.b16 %v7749
    %v7818 = vunpack.c.l.b16 %v7750
    %v7819 = vunpack.c.l.b16 %v7751
    %v7820 = vunpack.c.l.b16 %v7752
    %v7821 = vunpack.c.l.b16 %v7753
    %v7822 = vunpack.c.l.b16 %v7754
    %v7823 = vunpack.c.l.b16 %v7755
    %v7824 = vunpack.c.l.b16 %v7756
    %v7825 = vunpack.c.l.b16 %v7757
    %v7826 = vunpack.c.l.b16 %v7758
    %v7827 = vunpack.c.l.b16 %v7759
    %v7828 = vunpack.c.l.b16 %v7760
    %v7829 = vunpack.c.l.b16 %v7761
    %v7830 = vunpack.c.l.b16 %v7762
    %v7831 = vunpack.c.l.b16 %v7763
    %v7832 = vunpack.c.l.b16 %v7764
    %v7833 = vunpack.c.l.b16 %v7765
    %v7834 = vunpack.c.l.b16 %v7766
    %v7835 = vunpack.c.l.b16 %v7767
    %v7836 = vunpack.c.l.b16 %v7768
    %v7837 = vunpack.c.l.b16 %v7769
    %v7838 = vunpack.c.l.b16 %v7770
    %v7839 = vunpack.c.l.b16 %v7771
    %v7840 = vunpack.c.l.b16 %v7772
    %v7841 = vunpack.c.l.b16 %v7773
    %v7842 = vunpack.c.l.b16 %v7774
    %v7843 = vunpack.c.l.b16 %v7775
    %v7844 = vunpack.c.l.b16 %v7776
    %v7845 = vunpack.c.l.b16 %v7777
    %v7846 = vunpack.c.l.b16 %v7778
    %v7847 = vunpack.c.l.b16 %v7779
    %v7848 = vunpack.c.l.b16 %v7780
    %v7849 = vpack.c.b16 %v7818, %v7817
    %v7850 = vpack.c.b16 %v7820, %v7819
    %v7851 = vpack.c.b16 %v7822, %v7821
    %v7852 = vpack.c.b16 %v7824, %v7823
    %v7853 = vpack.c.b16 %v7826, %v7825
    %v7854 = vpack.c.b16 %v7828, %v7827
    %v7855 = vpack.c.b16 %v7830, %v7829
    %v7856 = vpack.c.b16 %v7832, %v7831
    %v7857 = vpack.c.b16 %v7834, %v7833
    %v7858 = vpack.c.b16 %v7836, %v7835
    %v7859 = vpack.c.b16 %v7838, %v7837
    %v7860 = vpack.c.b16 %v7840, %v7839
    %v7861 = vpack.c.b16 %v7842, %v7841
    %v7862 = vpack.c.b16 %v7844, %v7843
    %v7863 = vpack.c.b16 %v7846, %v7845
    %v7864 = vpack.c.b16 %v7848, %v7847
    %7881 = vmatpush.bf16.msra.mxu0 %v7856
    %7882 = vmatpush.bf16.msra.mxu0 %v7855
    %7883 = vmatpush.bf16.msra.mxu0 %v7854
    %7884 = vmatpush.bf16.msra.mxu0 %v7853
    %7885 = vmatpush.bf16.msra.mxu0 %v7852
    %7886 = vmatpush.bf16.msra.mxu0 %v7851
    %7887 = vmatpush.bf16.msra.mxu0 %v7850
    %7888 = vmatpush.bf16.msra.mxu0 %v7849
    %7889 = vmatmul.bf16.gmra.mxu0 %v7733
    %v7890 = vpop.f32.mrf.mxu0
    %v7891 = vadd.f32 %v7783, %v7890
    %v7892 = vpop.f32.mrf.mxu0
    %v7893 = vadd.f32 %v7783, %v7892
    %7894 = vmatmul.bf16.gmra.mxu0 %v7735
    %v7895 = vpop.f32.mrf.mxu0
    %v7896 = vadd.f32 %v7783, %v7895
    %v7897 = vpop.f32.mrf.mxu0
    %v7898 = vadd.f32 %v7783, %v7897
    %7899 = vmatmul.bf16.gmra.mxu0 %v7737
    %v7900 = vpop.f32.mrf.mxu0
    %v7901 = vadd.f32 %v7783, %v7900
    %v7902 = vpop.f32.mrf.mxu0
    %v7903 = vadd.f32 %v7783, %v7902
    %7904 = vmatmul.bf16.gmra.mxu0 %v7739
    %v7905 = vpop.f32.mrf.mxu0
    %v7906 = vadd.f32 %v7783, %v7905
    %v7907 = vpop.f32.mrf.mxu0
    %v7908 = vadd.f32 %v7783, %v7907
    %7909 = vmatmul.bf16.gmra.mxu0 %v7741
    %v7910 = vpop.f32.mrf.mxu0
    %v7911 = vadd.f32 %v7783, %v7910
    %v7912 = vpop.f32.mrf.mxu0
    %v7913 = vadd.f32 %v7783, %v7912
    %7914 = vmatmul.bf16.gmra.mxu0 %v7743
    %v7915 = vpop.f32.mrf.mxu0
    %v7916 = vadd.f32 %v7783, %v7915
    %v7917 = vpop.f32.mrf.mxu0
    %v7918 = vadd.f32 %v7783, %v7917
    %7919 = vmatmul.bf16.gmra.mxu0 %v7745
    %v7920 = vpop.f32.mrf.mxu0
    %v7921 = vadd.f32 %v7783, %v7920
    %v7922 = vpop.f32.mrf.mxu0
    %v7923 = vadd.f32 %v7783, %v7922
    %7924 = vmatmul.bf16.gmra.mxu0 %v7747
    %v7925 = vpop.f32.mrf.mxu0
    %v7926 = vadd.f32 %v7783, %v7925
    %v7927 = vpop.f32.mrf.mxu0
    %v7928 = vadd.f32 %v7783, %v7927
    %7929 = vdwg.mxu0
    %7930 = vmatpush.bf16.msra.mxu0 %v7864
    %7931 = vmatpush.bf16.msra.mxu0 %v7863
    %7932 = vmatpush.bf16.msra.mxu0 %v7862
    %7933 = vmatpush.bf16.msra.mxu0 %v7861
    %7934 = vmatpush.bf16.msra.mxu0 %v7860
    %7935 = vmatpush.bf16.msra.mxu0 %v7859
    %7936 = vmatpush.bf16.msra.mxu0 %v7858
    %7937 = vmatpush.bf16.msra.mxu0 %v7857
    %7938 = vmatmul.bf16.gmra.mxu0 %v7734
    %v7939 = vpop.f32.mrf.mxu0
    %v7940 = vadd.f32 %v7891, %v7939
    %v7941 = vpop.f32.mrf.mxu0
    %v7942 = vadd.f32 %v7893, %v7941
    %7943 = vmatmul.bf16.gmra.mxu0 %v7736
    %v7944 = vpop.f32.mrf.mxu0
    %v7945 = vadd.f32 %v7896, %v7944
    %v7946 = vpop.f32.mrf.mxu0
    %v7947 = vadd.f32 %v7898, %v7946
    %7948 = vmatmul.bf16.gmra.mxu0 %v7738
    %v7949 = vpop.f32.mrf.mxu0
    %v7950 = vadd.f32 %v7901, %v7949
    %v7951 = vpop.f32.mrf.mxu0
    %v7952 = vadd.f32 %v7903, %v7951
    %7953 = vmatmul.bf16.gmra.mxu0 %v7740
    %v7954 = vpop.f32.mrf.mxu0
    %v7955 = vadd.f32 %v7906, %v7954
    %v7956 = vpop.f32.mrf.mxu0
    %v7957 = vadd.f32 %v7908, %v7956
    %7958 = vmatmul.bf16.gmra.mxu0 %v7742
    %v7959 = vpop.f32.mrf.mxu0
    %v7960 = vadd.f32 %v7911, %v7959
    %v7961 = vpop.f32.mrf.mxu0
    %v7962 = vadd.f32 %v7913, %v7961
    %7963 = vmatmul.bf16.gmra.mxu0 %v7744
    %v7964 = vpop.f32.mrf.mxu0
    %v7965 = vadd.f32 %v7916, %v7964
    %v7966 = vpop.f32.mrf.mxu0
    %v7967 = vadd.f32 %v7918, %v7966
    %7968 = vmatmul.bf16.gmra.mxu0 %v7746
    %v7969 = vpop.f32.mrf.mxu0
    %v7970 = vadd.f32 %v7921, %v7969
    %v7971 = vpop.f32.mrf.mxu0
    %v7972 = vadd.f32 %v7923, %v7971
    %7973 = vmatmul.bf16.gmra.mxu0 %v7748
    %v7974 = vpop.f32.mrf.mxu0
    %v7975 = vadd.f32 %v7926, %v7974
    %v7976 = vpop.f32.mrf.mxu0
    %v7977 = vadd.f32 %v7928, %v7976
    %7978 = vdwg.mxu0
    %7979 = vst [vmem:[#allocation26] sm:$0xff] %v7940
    %7980 = vst [vmem:[#allocation26 + $0x8] sm:$0xff] %v7942
    %7981 = vst [vmem:[#allocation26 + $0x10] sm:$0xff] %v7945
    %7982 = vst [vmem:[#allocation26 + $0x18] sm:$0xff] %v7947
    %7983 = vst [vmem:[#allocation26 + $0x20] sm:$0xff] %v7950
    %7984 = vst [vmem:[#allocation26 + $0x28] sm:$0xff] %v7952
    %7985 = vst [vmem:[#allocation26 + $0x30] sm:$0xff] %v7955
    %7986 = vst [vmem:[#allocation26 + $0x38] sm:$0xff] %v7957
    %7987 = vst [vmem:[#allocation26 + $0x40] sm:$0xff] %v7960
    %7988 = vst [vmem:[#allocation26 + $0x48] sm:$0xff] %v7962
    %7989 = vst [vmem:[#allocation26 + $0x50] sm:$0xff] %v7965
    %7990 = vst [vmem:[#allocation26 + $0x58] sm:$0xff] %v7967
    %7991 = vst [vmem:[#allocation26 + $0x60] sm:$0xff] %v7970
    %7992 = vst [vmem:[#allocation26 + $0x68] sm:$0xff] %v7972
    %7993 = vst [vmem:[#allocation26 + $0x70] sm:$0xff] %v7975
    %7994 = vst [vmem:[#allocation26 + $0x78] sm:$0xff] %v7977
    // Predicated region
    $region170: #{tpu_custom_call.1} parent=1 // pred_check
      _
    $region171: #{tpu_custom_call.1} parent=1 // pred_check_branch
      %7996 = sbr.rel (0) target = $region173
    $region172: #{tpu_custom_call.1} parent=1 // pred_region
      %7998 = vsyncadd [#allocation4], 0
      %s7999 = sshll.u32 [#allocation26], 4
      %s8000 = int_to_ptr.vmem [resolvable:$true] %s7999
      %s8001 = sshll.u32 %s27, 4
      %s8002 = int_to_ptr.hbm [resolvable:$true] %s8001
      %8007 = dma.vmem_to_hbm [thread:$0]  %s8000, 2048, %s8002, [#allocation4], 128, 128, 8
    $region173: #{tpu_custom_call.1} parent=1 // pred_fallthru
      _
    // Predicated region
    $region174: #{tpu_custom_call.1} parent=1 // pred_check
      _
    $region175: #{tpu_custom_call.1} parent=1 // pred_check_branch
      %8009 = sbr.rel (0) target = $region177
    $region176: #{tpu_custom_call.1} parent=1 // pred_region
      %8011 = dma.done [#allocation4], 2048
    $region177: #{tpu_custom_call.1} parent=1 // pred_fallthru
      _
    %8012 = vsyncpa [#allocation3], 1
    %8013 = vsyncpa [#allocation6], 1
    %8014 = vsyncpa [#allocation9], 1
    %8015 = vsyncpa [#allocation12], 1
    %8016 = vsyncpa [#allocation15], 1
    %8017 = vsyncpa [#allocation18], 1
    %8018 = vsyncpa [#allocation21], 1
    %8019 = vsyncpa [#allocation24], 1
    %8020 = vsyncpa [#allocation4], 1

</llo_original>
